<compile_context>
chip_gen: v7x
topology: tpu7x:2x2x1
jax: 0.10.0
libtpu: 0.0.40
codegen_flags: <defaults>
</compile_context>

<pallas_src>
import math

import jax
import jax.numpy as jnp
import numpy as np
from jax.experimental import pallas as pl
from jax.experimental.pallas import tpu as pltpu

# ---- hyperparameters (straight from DummyModel.__init__) -------------------
SEQ_LEN = 1000
ALPHABET = 4
LABEL = 8
NFILT = 50
KSIZE = 19
POOL = 3
POOL_STRIDE = 3
HIDDEN = 100
EPS = 1e-5

CONV_LEN = SEQ_LEN - KSIZE + 1                                   # 982
POOL_LEN = (CONV_LEN - (POOL - 1) - 1) // POOL_STRIDE + 1        # 327
FLAT = NFILT * POOL_LEN                                          # 16350 (PyTorch flat size)
CK = ALPHABET * KSIZE                                            # 76

# ---- padded sizes -----------------------------------------------------------
CK_PAD = 128                    # conv contraction dim (76 -> 128, zero-padded)
NFILT_PAD = 128                 # conv matmul output lane dim (50 -> 128)
POOL_LEN_PAD = 328              # pool positions padded to a multiple of 8
M_PAD = POOL * POOL_LEN_PAD     # 984 patch rows (phase-major)
HIDDEN_PAD = 128                # MLP hidden dim (100 -> 128)
FLAT2 = POOL_LEN_PAD * NFILT    # 16400: conv-output flat length == MLP contraction dim
SEQ_PAD = SEQ_LEN + 8           # 1008, keeps every strided im2col slice in bounds


# ---------------------------------------------------------------------------
# Kernel 1: Conv1d (per-pool-phase im2col matmuls) + folded-BN shift + ReLU + MaxPool(3,3).
#           One grid step per batch element ("parallel" -> both v7x TensorCores).
# ---------------------------------------------------------------------------
def conv_bn_relu_pool_kernel(patch_ref, w_ref, shift_ref, out_ref):
    # patch_ref: (1, M_PAD, CK_PAD) bf16   w_ref: (CK_PAD, NFILT_PAD) bf16 (BN scale folded in)
    # shift_ref: (1, NFILT_PAD) f32        out_ref: (1, POOL_LEN_PAD, NFILT) bf16
    w = w_ref[...]
    shift = shift_ref[...]
    pooled = None
    for r in range(POOL):   # unrolled: 3 aligned (328,128)x(128,128) MXU passes, running max
        phase = patch_ref[0, pl.ds(r * POOL_LEN_PAD, POOL_LEN_PAD), :]
        conv = jnp.dot(phase, w, preferred_element_type=jnp.float32)
        act = jnp.maximum(conv + shift, 0.0)                     # BN shift + ReLU
        pooled = act if pooled is None else jnp.maximum(pooled, act)
    # Zero the padded pool position (row 327) so the flat vector seen by the MLP is exact.
    row = jax.lax.broadcasted_iota(jnp.int32, (POOL_LEN_PAD, NFILT_PAD), 0)
    pooled = jnp.where(row < POOL_LEN, pooled, 0.0)
    out_ref[0] = pooled[:, :NFILT].astype(out_ref.dtype)


# ---------------------------------------------------------------------------
# Kernel 2: Linear(16400 -> 128) + bias + ReLU + [Dropout = identity]
#           + Linear(128 -> 8) + Softplus, in a single invocation (W1-DMA bound).
# ---------------------------------------------------------------------------
def mlp_kernel(flat_ref, w1_ref, b1_ref, w2_ref, b2_ref, out_ref):
    h = jnp.dot(flat_ref[...], w1_ref[...], preferred_element_type=jnp.float32)
    h = jnp.maximum(h + b1_ref[...], 0.0)                        # bias + ReLU (dropout = id)
    y = jnp.dot(h, w2_ref[...], preferred_element_type=jnp.float32) + b2_ref[...]
    # PyTorch Softplus (beta=1, threshold=20)
    out_ref[...] = jnp.where(y > 20.0, y, jnp.log1p(jnp.exp(jnp.minimum(y, 20.0))))


# ---------------------------------------------------------------------------
# One-time parameter preparation (BN folding, reordering, padding, bf16 casts).
# ---------------------------------------------------------------------------
def prepare_params(params):
    wc, bc = params["conv_w"], params["conv_b"]
    gamma, beta = params["bn_gamma"], params["bn_beta"]
    mean, var = params["bn_mean"], params["bn_var"]
    w1, b1 = params["w1"], params["b1"]
    w2, b2 = params["w2"], params["b2"]

    # Fold BatchNorm (running stats): scale into the conv weights, shift stays additive.
    scale = gamma / jnp.sqrt(var + EPS)                                  # (50,)
    shift = (bc - mean) * scale + beta                                   # (50,)
    w_fold = (wc * scale[:, None, None]).reshape(NFILT, CK).T            # (76, 50), row = c*19+k
    w_conv = (jnp.zeros((CK_PAD, NFILT_PAD), jnp.float32)
              .at[:CK, :NFILT].set(w_fold)).astype(jnp.bfloat16)
    conv_shift = jnp.zeros((1, NFILT_PAD), jnp.float32).at[0, :NFILT].set(shift)

    # W1 reordered to the conv kernel's flat layout: row = pos*50 + filt (pos padded 327->328,
    # padded rows stay zero -> the padded pooled row cannot contaminate), col = hidden (100->128).
    # PyTorch's flatten is col = f*327 + p, hence the reshape/transpose below.
    w1r = w1.reshape(HIDDEN, NFILT, POOL_LEN).transpose(2, 1, 0)         # (327, 50, 100)
    w1_pad = (jnp.zeros((POOL_LEN_PAD, NFILT, HIDDEN_PAD), jnp.float32)
              .at[:POOL_LEN, :, :HIDDEN].set(w1r)
              ).reshape(FLAT2, HIDDEN_PAD).astype(jnp.bfloat16)
    b1_pad = jnp.zeros((1, HIDDEN_PAD), jnp.float32).at[0, :HIDDEN].set(b1)
    w2_pad = jnp.zeros((HIDDEN_PAD, LABEL), jnp.float32).at[:HIDDEN, :].set(w2.T)
    b2_row = b2.reshape(1, LABEL).astype(jnp.float32)

    return {"w_conv": w_conv, "conv_shift": conv_shift,
            "w1": w1_pad, "b1": b1_pad, "w2": w2_pad, "b2": b2_row}


# ---------------------------------------------------------------------------
# Host-side im2col: static strided slices, written directly into the final padded
# bf16 patch layout.  patches[b, r*328 + pos, c*19 + k] = x[b, c, 3*pos + r + k]
# (zeros / don't-care in all padded entries; pool row 327 is masked in-kernel).
# ---------------------------------------------------------------------------
def _im2col_patches(x):
    B = x.shape[0]
    xp = jnp.pad(x, ((0, 0), (0, 0), (0, SEQ_PAD - SEQ_LEN))).astype(jnp.bfloat16)
    zpad = jnp.zeros((B, POOL_LEN_PAD, CK_PAD - CK), jnp.bfloat16)
    phases = []
    for r in range(POOL):
        cols = [xp[:, c, r + k: r + k + POOL_STRIDE * POOL_LEN_PAD: POOL_STRIDE][..., None]
                for c in range(ALPHABET) for k in range(KSIZE)]          # each (B, 328, 1)
        phases.append(jnp.concatenate(cols + [zpad], axis=-1))           # (B, 328, 128)
    return jnp.concatenate([ph[:, None] for ph in phases], axis=1).reshape(B, M_PAD, CK_PAD)


# ---------------------------------------------------------------------------
# Forward pass (jitted).
# ---------------------------------------------------------------------------
@jax.jit
def dummy_model_forward(x, p):
    B = x.shape[0]
    patches = _im2col_patches(x)                                         # (B, 984, 128) bf16

    pooled = pl.pallas_call(
        conv_bn_relu_pool_kernel,
        out_shape=jax.ShapeDtypeStruct((B, POOL_LEN_PAD, NFILT), jnp.bfloat16),
        grid=(B,),
        in_specs=[
            pl.BlockSpec((1, M_PAD, CK_PAD), lambda b: (b, 0, 0)),
            pl.BlockSpec((CK_PAD, NFILT_PAD), lambda b: (0, 0)),
            pl.BlockSpec((1, NFILT_PAD), lambda b: (0, 0)),
        ],
        out_specs=pl.BlockSpec((1, POOL_LEN_PAD, NFILT), lambda b: (b, 0, 0)),
        compiler_params=pltpu.CompilerParams(dimension_semantics=("parallel",)),
    )(patches, p["w_conv"], p["conv_shift"])

    # The MLP's flat layout IS pooled's row-major layout -> bitcast reshape, no copy.
    flat = pooled.reshape(B, FLAT2)

    out = pl.pallas_call(
        mlp_kernel,
        out_shape=jax.ShapeDtypeStruct((B, LABEL), jnp.float32),
        grid=(1,),
        in_specs=[
            pl.BlockSpec((B, FLAT2), lambda i: (0, 0)),
            pl.BlockSpec((FLAT2, HIDDEN_PAD), lambda i: (0, 0)),
            pl.BlockSpec((1, HIDDEN_PAD), lambda i: (0, 0)),
            pl.BlockSpec((HIDDEN_PAD, LABEL), lambda i: (0, 0)),
            pl.BlockSpec((1, LABEL), lambda i: (0, 0)),
        ],
        out_specs=pl.BlockSpec((B, LABEL), lambda i: (0, 0)),
        compiler_params=pltpu.CompilerParams(
            dimension_semantics=("arbitrary",),
            vmem_limit_bytes=32 * 1024 * 1024,
        ),
    )(flat, p["w1"], p["b1"], p["w2"], p["b2"])
    return out


# ---------------------------------------------------------------------------
# Pure-JAX f32 reference (faithful to the PyTorch module) for the correctness check.
# ---------------------------------------------------------------------------
def reference_forward(x, params):
    B = x.shape[0]
    wc, bc = params["conv_w"], params["conv_b"]
    gamma, beta = params["bn_gamma"], params["bn_beta"]
    mean, var = params["bn_mean"], params["bn_var"]
    w1, b1 = params["w1"], params["b1"]
    w2, b2 = params["w2"], params["b2"]

    li = jnp.arange(CONV_LEN)[:, None] + jnp.arange(KSIZE)[None, :]      # (982, 19)
    cols = x[:, :, li]                                                   # (B, 4, 982, 19)
    conv = jnp.einsum("bclk,fck->bfl", cols, wc) + bc[None, :, None]     # (B, 50, 982)
    bn = (conv - mean[None, :, None]) * (gamma / jnp.sqrt(var + EPS))[None, :, None] \
         + beta[None, :, None]
    act = jnp.maximum(bn, 0.0)
    pooled = act[:, :, : POOL_LEN * POOL_STRIDE].reshape(B, NFILT, POOL_LEN, POOL).max(-1)
    flat = pooled.reshape(B, FLAT)                                       # f*327+p ordering
    h = jnp.maximum(flat @ w1.T + b1, 0.0)
    y = h @ w2.T + b2
    return jnp.where(y > 20.0, y, jnp.log1p(jnp.exp(jnp.minimum(y, 20.0))))


def init_params(key):
    ks = jax.random.split(key, 6)
    return {
        "conv_w": jax.random.normal(ks[0], (NFILT, ALPHABET, KSIZE), jnp.float32)
                  * (1.0 / math.sqrt(CK)),
        "conv_b": jax.random.normal(ks[1], (NFILT,), jnp.float32) * 0.1,
        # BatchNorm1d defaults (inference mode)
        "bn_gamma": jnp.ones((NFILT,), jnp.float32),
        "bn_beta": jnp.zeros((NFILT,), jnp.float32),
        "bn_mean": jnp.zeros((NFILT,), jnp.float32),
        "bn_var": jnp.ones((NFILT,), jnp.float32),
        "w1": jax.random.normal(ks[2], (HIDDEN, FLAT), jnp.float32) * (1.0 / math.sqrt(FLAT)),
        "b1": jax.random.normal(ks[3], (HIDDEN,), jnp.float32) * 0.1,
        "w2": jax.random.normal(ks[4], (LABEL, HIDDEN), jnp.float32) * (1.0 / math.sqrt(HIDDEN)),
        "b2": jax.random.normal(ks[5], (LABEL,), jnp.float32) * 0.1,
    }


if __name__ == "__main__":
    key = jax.random.PRNGKey(0)
    pkey, xkey = jax.random.split(key)
    params = init_params(pkey)
    prepped = prepare_params(params)          # one-time weight prep (not per forward call)

    B = 2
    # The linear layer fixes the sequence length to 1000 (alphabet=4), so the input must be
    # (B, 4, 1000); batch is kept small.
    x = jax.random.normal(xkey, (B, ALPHABET, SEQ_LEN), jnp.float32)

    out = jax.block_until_ready(dummy_model_forward(x, prepped))
    ref = jax.block_until_ready(reference_forward(x, params))

    if not np.allclose(np.asarray(out), np.asarray(ref), rtol=5e-2, atol=5e-2):
        diff = float(np.max(np.abs(np.asarray(out) - np.asarray(ref))))
        raise AssertionError(f"Pallas output mismatch vs reference, max abs diff = {diff}")

    print("KERNEL_OK")
</pallas_src>

<mosaic_0001>
module attributes {stable_mosaic.version = 11 : i64} {
  func.func @conv_bn_relu_pool_kernel(%arg0: i32, %arg1: memref<1x984x128xbf16, #tpu.memory_space<vmem>>, %arg2: memref<128x128xbf16, #tpu.memory_space<vmem>>, %arg3: memref<1x128xf32, #tpu.memory_space<vmem>>, %arg4: memref<1x328x50xbf16, #tpu.memory_space<vmem>>) attributes {dimension_semantics = [#tpu.dimension_semantics<parallel>], iteration_bounds = array<i64: 2>, scalar_prefetch = 0 : i64, scratch_operands = 0 : i64, tpu.core_type = #tpu.core_type<tc>, window_params = [{transform_indices = @transform_0, window_bounds = array<i64: 1, 984, 128>}, {pipeline_mode = #tpu.pipeline_mode<synchronous>, transform_indices = @transform_1, window_bounds = array<i64: 128, 128>}, {pipeline_mode = #tpu.pipeline_mode<synchronous>, transform_indices = @transform_2, window_bounds = array<i64: 1, 128>}, {transform_indices = @transform_3, window_bounds = array<i64: 1, 328, 50>}]} {
    %c0 = arith.constant 0 : index
    %c0_0 = arith.constant 0 : index
    %0 = vector.load %arg2[%c0, %c0_0] : memref<128x128xbf16, #tpu.memory_space<vmem>>, vector<128x128xbf16>
    %c0_1 = arith.constant 0 : index
    %c0_2 = arith.constant 0 : index
    %1 = vector.load %arg3[%c0_1, %c0_2] : memref<1x128xf32, #tpu.memory_space<vmem>>, vector<1x128xf32>
    %c0_3 = arith.constant 0 : index
    %c0_4 = arith.constant 0 : index
    %c0_5 = arith.constant 0 : index
    %2 = vector.load %arg1[%c0_3, %c0_4, %c0_5] : memref<1x984x128xbf16, #tpu.memory_space<vmem>>, vector<1x328x128xbf16>
    %3 = vector.shape_cast %2 : vector<1x328x128xbf16> to vector<328x128xbf16>
    %cst = arith.constant dense<0.000000e+00> : vector<328x128xf32>
    %4 = tpu.matmul %3, %0, %cst {dimension_numbers = #tpu.dot_dimension_numbers<[1], [0], [0], [1], [0, 0, 1, 1], [], []>} : vector<328x128xbf16>, vector<128x128xbf16>, vector<328x128xf32> -> vector<328x128xf32>
    %5 = vector.broadcast %1 : vector<1x128xf32> to vector<328x128xf32>
    %6 = arith.addf %4, %5 : vector<328x128xf32>
    %cst_6 = arith.constant 0.000000e+00 : f32
    %7 = vector.broadcast %cst_6 : f32 to vector<328x128xf32>
    %8 = arith.maximumf %6, %7 : vector<328x128xf32>
    %c0_7 = arith.constant 0 : index
    %c328 = arith.constant 328 : index
    %c0_8 = arith.constant 0 : index
    %9 = vector.load %arg1[%c0_7, %c328, %c0_8] : memref<1x984x128xbf16, #tpu.memory_space<vmem>>, vector<1x328x128xbf16>
    %10 = vector.shape_cast %9 : vector<1x328x128xbf16> to vector<328x128xbf16>
    %cst_9 = arith.constant dense<0.000000e+00> : vector<328x128xf32>
    %11 = tpu.matmul %10, %0, %cst_9 {dimension_numbers = #tpu.dot_dimension_numbers<[1], [0], [0], [1], [0, 0, 1, 1], [], []>} : vector<328x128xbf16>, vector<128x128xbf16>, vector<328x128xf32> -> vector<328x128xf32>
    %12 = vector.broadcast %1 : vector<1x128xf32> to vector<328x128xf32>
    %13 = arith.addf %11, %12 : vector<328x128xf32>
    %cst_10 = arith.constant 0.000000e+00 : f32
    %14 = vector.broadcast %cst_10 : f32 to vector<328x128xf32>
    %15 = arith.maximumf %13, %14 : vector<328x128xf32>
    %16 = arith.maximumf %8, %15 : vector<328x128xf32>
    %c0_11 = arith.constant 0 : index
    %c656 = arith.constant 656 : index
    %c0_12 = arith.constant 0 : index
    %17 = vector.load %arg1[%c0_11, %c656, %c0_12] : memref<1x984x128xbf16, #tpu.memory_space<vmem>>, vector<1x328x128xbf16>
    %18 = vector.shape_cast %17 : vector<1x328x128xbf16> to vector<328x128xbf16>
    %cst_13 = arith.constant dense<0.000000e+00> : vector<328x128xf32>
    %19 = tpu.matmul %18, %0, %cst_13 {dimension_numbers = #tpu.dot_dimension_numbers<[1], [0], [0], [1], [0, 0, 1, 1], [], []>} : vector<328x128xbf16>, vector<128x128xbf16>, vector<328x128xf32> -> vector<328x128xf32>
    %20 = vector.broadcast %1 : vector<1x128xf32> to vector<328x128xf32>
    %21 = arith.addf %19, %20 : vector<328x128xf32>
    %cst_14 = arith.constant 0.000000e+00 : f32
    %22 = vector.broadcast %cst_14 : f32 to vector<328x128xf32>
    %23 = arith.maximumf %21, %22 : vector<328x128xf32>
    %24 = arith.maximumf %16, %23 : vector<328x128xf32>
    %25 = tpu.iota {dimensions = array<i32: 0>} : vector<328x128xi32>
    %c327_i32 = arith.constant 327 : i32
    %26 = vector.broadcast %c327_i32 : i32 to vector<328x128xi32>
    %27 = arith.cmpi slt, %25, %26 : vector<328x128xi32>
    %cst_15 = arith.constant 0.000000e+00 : f32
    %28 = vector.broadcast %cst_15 : f32 to vector<328x128xf32>
    %29 = arith.select %27, %24, %28 : vector<328x128xi1>, vector<328x128xf32>
    %30 = vector.extract_strided_slice %29 {offsets = [0, 0], sizes = [328, 50], strides = [1, 1]} : vector<328x128xf32> to vector<328x50xf32>
    %31 = arith.truncf %30 : vector<328x50xf32> to vector<328x50xbf16>
    %c0_16 = arith.constant 0 : index
    %c0_17 = arith.constant 0 : index
    %c0_18 = arith.constant 0 : index
    %32 = vector.load %arg4[%c0_16, %c0_17, %c0_18] : memref<1x328x50xbf16, #tpu.memory_space<vmem>>, vector<1x328x50xbf16>
    %33 = vector.shape_cast %32 : vector<1x328x50xbf16> to vector<328x50xbf16>
    %34 = vector.shape_cast %31 : vector<328x50xbf16> to vector<1x328x50xbf16>
    tpu.vector_store %arg4[%c0_16, %c0_17, %c0_18], %34 {strides = array<i32>} : memref<1x328x50xbf16, #tpu.memory_space<vmem>>, vector<1x328x50xbf16>,
    return
  }
  func.func @transform_0(%arg0: i32) -> (i32, i32, i32) {
    %c0_i32 = arith.constant 0 : i32
    %c0_i32_0 = arith.constant 0 : i32
    %c0_i32_1 = arith.constant 0 : i32
    return %arg0, %c0_i32, %c0_i32_0 : i32, i32, i32
  }
  func.func @transform_1(%arg0: i32) -> (i32, i32) {
    %c0_i32 = arith.constant 0 : i32
    %c0_i32_0 = arith.constant 0 : i32
    %c0_i32_1 = arith.constant 0 : i32
    return %c0_i32, %c0_i32_0 : i32, i32
  }
  func.func @transform_2(%arg0: i32) -> (i32, i32) {
    %c0_i32 = arith.constant 0 : i32
    %c0_i32_0 = arith.constant 0 : i32
    %c0_i32_1 = arith.constant 0 : i32
    return %c0_i32, %c0_i32_0 : i32, i32
  }
  func.func @transform_3(%arg0: i32) -> (i32, i32, i32) {
    %c0_i32 = arith.constant 0 : i32
    %c0_i32_0 = arith.constant 0 : i32
    %c0_i32_1 = arith.constant 0 : i32
    return %arg0, %c0_i32, %c0_i32_0 : i32, i32, i32
  }
}

module attributes {stable_mosaic.version = 11 : i64} {
  func.func @mlp_kernel(%arg0: i32, %arg1: memref<2x16400xbf16, #tpu.memory_space<vmem>>, %arg2: memref<16400x128xbf16, #tpu.memory_space<vmem>>, %arg3: memref<1x128xf32, #tpu.memory_space<vmem>>, %arg4: memref<128x8xf32, #tpu.memory_space<vmem>>, %arg5: memref<1x8xf32, #tpu.memory_space<vmem>>, %arg6: memref<2x8xf32, #tpu.memory_space<vmem>>) attributes {dimension_semantics = [#tpu.dimension_semantics<arbitrary>], iteration_bounds = array<i64: 1>, scalar_prefetch = 0 : i64, scratch_operands = 0 : i64, tpu.core_type = #tpu.core_type<tc>, window_params = [{pipeline_mode = #tpu.pipeline_mode<synchronous>, transform_indices = @transform_0, window_bounds = array<i64: 2, 16400>}, {pipeline_mode = #tpu.pipeline_mode<synchronous>, transform_indices = @transform_1, window_bounds = array<i64: 16400, 128>}, {pipeline_mode = #tpu.pipeline_mode<synchronous>, transform_indices = @transform_2, window_bounds = array<i64: 1, 128>}, {pipeline_mode = #tpu.pipeline_mode<synchronous>, transform_indices = @transform_3, window_bounds = array<i64: 128, 8>}, {pipeline_mode = #tpu.pipeline_mode<synchronous>, transform_indices = @transform_4, window_bounds = array<i64: 1, 8>}, {pipeline_mode = #tpu.pipeline_mode<synchronous>, transform_indices = @transform_5, window_bounds = array<i64: 2, 8>}]} {
    %c0 = arith.constant 0 : index
    %c0_0 = arith.constant 0 : index
    %0 = vector.load %arg1[%c0, %c0_0] : memref<2x16400xbf16, #tpu.memory_space<vmem>>, vector<2x16400xbf16>
    %c0_1 = arith.constant 0 : index
    %c0_2 = arith.constant 0 : index
    %1 = vector.load %arg2[%c0_1, %c0_2] : memref<16400x128xbf16, #tpu.memory_space<vmem>>, vector<16400x128xbf16>
    %cst = arith.constant dense<0.000000e+00> : vector<2x128xf32>
    %2 = tpu.matmul %0, %1, %cst {dimension_numbers = #tpu.dot_dimension_numbers<[1], [0], [0], [1], [0, 0, 1, 1], [], []>} : vector<2x16400xbf16>, vector<16400x128xbf16>, vector<2x128xf32> -> vector<2x128xf32>
    %c0_3 = arith.constant 0 : index
    %c0_4 = arith.constant 0 : index
    %3 = vector.load %arg3[%c0_3, %c0_4] : memref<1x128xf32, #tpu.memory_space<vmem>>, vector<1x128xf32>
    %4 = vector.broadcast %3 : vector<1x128xf32> to vector<2x128xf32>
    %5 = arith.addf %2, %4 : vector<2x128xf32>
    %cst_5 = arith.constant 0.000000e+00 : f32
    %6 = vector.broadcast %cst_5 : f32 to vector<2x128xf32>
    %7 = arith.maximumf %5, %6 : vector<2x128xf32>
    %c0_6 = arith.constant 0 : index
    %c0_7 = arith.constant 0 : index
    %8 = vector.load %arg4[%c0_6, %c0_7] : memref<128x8xf32, #tpu.memory_space<vmem>>, vector<128x8xf32>
    %cst_8 = arith.constant dense<0.000000e+00> : vector<2x8xf32>
    %9 = tpu.matmul %7, %8, %cst_8 {dimension_numbers = #tpu.dot_dimension_numbers<[1], [0], [0], [1], [0, 0, 1, 1], [], []>} : vector<2x128xf32>, vector<128x8xf32>, vector<2x8xf32> -> vector<2x8xf32>
    %c0_9 = arith.constant 0 : index
    %c0_10 = arith.constant 0 : index
    %10 = vector.load %arg5[%c0_9, %c0_10] : memref<1x8xf32, #tpu.memory_space<vmem>>, vector<1x8xf32>
    %11 = vector.broadcast %10 : vector<1x8xf32> to vector<2x8xf32>
    %12 = arith.addf %9, %11 : vector<2x8xf32>
    %cst_11 = arith.constant 2.000000e+01 : f32
    %13 = vector.broadcast %cst_11 : f32 to vector<2x8xf32>
    %14 = arith.cmpf ogt, %12, %13 : vector<2x8xf32>
    %cst_12 = arith.constant 2.000000e+01 : f32
    %15 = vector.broadcast %cst_12 : f32 to vector<2x8xf32>
    %16 = arith.minimumf %12, %15 : vector<2x8xf32>
    %17 = math.exp %16 : vector<2x8xf32>
    %18 = math.log1p %17 : vector<2x8xf32>
    %19 = arith.select %14, %12, %18 : vector<2x8xi1>, vector<2x8xf32>
    %c0_13 = arith.constant 0 : index
    %c0_14 = arith.constant 0 : index
    %20 = vector.load %arg6[%c0_13, %c0_14] : memref<2x8xf32, #tpu.memory_space<vmem>>, vector<2x8xf32>
    tpu.vector_store %arg6[%c0_13, %c0_14], %19 {strides = array<i32>} : memref<2x8xf32, #tpu.memory_space<vmem>>, vector<2x8xf32>,
    return
  }
  func.func @transform_0(%arg0: i32) -> (i32, i32) {
    %c0_i32 = arith.constant 0 : i32
    %c0_i32_0 = arith.constant 0 : i32
    %c0_i32_1 = arith.constant 0 : i32
    return %c0_i32, %c0_i32_0 : i32, i32
  }
  func.func @transform_1(%arg0: i32) -> (i32, i32) {
    %c0_i32 = arith.constant 0 : i32
    %c0_i32_0 = arith.constant 0 : i32
    %c0_i32_1 = arith.constant 0 : i32
    return %c0_i32, %c0_i32_0 : i32, i32
  }
  func.func @transform_2(%arg0: i32) -> (i32, i32) {
    %c0_i32 = arith.constant 0 : i32
    %c0_i32_0 = arith.constant 0 : i32
    %c0_i32_1 = arith.constant 0 : i32
    return %c0_i32, %c0_i32_0 : i32, i32
  }
  func.func @transform_3(%arg0: i32) -> (i32, i32) {
    %c0_i32 = arith.constant 0 : i32
    %c0_i32_0 = arith.constant 0 : i32
    %c0_i32_1 = arith.constant 0 : i32
    return %c0_i32, %c0_i32_0 : i32, i32
  }
  func.func @transform_4(%arg0: i32) -> (i32, i32) {
    %c0_i32 = arith.constant 0 : i32
    %c0_i32_0 = arith.constant 0 : i32
    %c0_i32_1 = arith.constant 0 : i32
    return %c0_i32, %c0_i32_0 : i32, i32
  }
  func.func @transform_5(%arg0: i32) -> (i32, i32) {
    %c0_i32 = arith.constant 0 : i32
    %c0_i32_0 = arith.constant 0 : i32
    %c0_i32_1 = arith.constant 0 : i32
    return %c0_i32, %c0_i32_0 : i32, i32
  }
}

</mosaic_0001>

<llo_original>
// kernel: squeeze.10
$region0: #{squeeze.10}
  #allocation0 [shape = 's32[1]{0}', space=sflag, size = 0x4, scoped, tag = 'scoped memory for squeeze.10']
  %s0 = inlined_call_operand.vmem [shape: bf16[2,328], index: 0, kind: input, shape index: {}]
  %s1 = inlined_call_operand.vmem [shape: bf16[2,328,1], index: 1, kind: output, shape index: {}]
  // Predicated region
  $region2: #{squeeze.10} parent=0 // pred_check
    _
  $region3: #{squeeze.10} parent=0 // pred_check_branch
    %3 = sbr.rel (0) target = $region5
  $region4: #{squeeze.10} parent=0 // pred_region
    _
  $region5: #{squeeze.10} parent=0 // pred_fallthru
    _
  %v4 = vld [vmem:[%s0] ss:$0 sm:$0xff]
  %v5 = vunpack.i.l.bf16 %v4
  %v7 = vunpack.i.h.bf16 %v4
  %10 = vbcast.lane.b32.xlu0 %v5, 256
  %v11 = vpop.permute.xlu0 %10
  %v12 = vpack.c.bf16 0.0, %v11
  %13 = vst [vmem:[%s1] sm:$0xf] %v12
  %v14 = vld [vmem:[%s0] ss:$0 sm:$0xff]
  %v15 = vunpack.i.l.bf16 %v14
  %v17 = vunpack.i.h.bf16 %v14
  %20 = vbcast.lane.b32.xlu0 %v17, 256
  %v21 = vpop.permute.xlu0 %20
  %s22 = scalar_lea.vmem %s1, 164
  %v23 = vpack.c.bf16 0.0, %v21
  %24 = vst [vmem:[%s22] sm:$0xf] %v23
  %v25 = vld [vmem:[%s0] ss:$0 sm:$0xff]
  %v26 = vunpack.i.l.bf16 %v25
  %v28 = vunpack.i.h.bf16 %v25
  %s31 = sor.u32 256, 8
  %32 = vbcast.lane.b32.xlu0 %v26, %s31
  %v33 = vpop.permute.xlu0 %32
  %s34 = scalar_lea.vmem %s1, 4
  %v35 = vpack.c.bf16 0.0, %v33
  %36 = vst [vmem:[%s34] sm:$0xf] %v35
  %v37 = vld [vmem:[%s0] ss:$0 sm:$0xff]
  %v38 = vunpack.i.l.bf16 %v37
  %v40 = vunpack.i.h.bf16 %v37
  %s43 = sor.u32 256, 8
  %44 = vbcast.lane.b32.xlu0 %v40, %s43
  %v45 = vpop.permute.xlu0 %44
  %s46 = scalar_lea.vmem %s1, 168
  %v47 = vpack.c.bf16 0.0, %v45
  %48 = vst [vmem:[%s46] sm:$0xf] %v47
  %v49 = vld [vmem:[%s0] ss:$0 sm:$0xff]
  %v50 = vunpack.i.l.bf16 %v49
  %v52 = vunpack.i.h.bf16 %v49
  %s55 = sor.u32 256, 16
  %56 = vbcast.lane.b32.xlu0 %v50, %s55
  %v57 = vpop.permute.xlu0 %56
  %s58 = scalar_lea.vmem %s1, 8
  %v59 = vpack.c.bf16 0.0, %v57
  %60 = vst [vmem:[%s58] sm:$0xf] %v59
  %v61 = vld [vmem:[%s0] ss:$0 sm:$0xff]
  %v62 = vunpack.i.l.bf16 %v61
  %v64 = vunpack.i.h.bf16 %v61
  %s67 = sor.u32 256, 16
  %68 = vbcast.lane.b32.xlu0 %v64, %s67
  %v69 = vpop.permute.xlu0 %68
  %s70 = scalar_lea.vmem %s1, 172
  %v71 = vpack.c.bf16 0.0, %v69
  %72 = vst [vmem:[%s70] sm:$0xf] %v71
  %v73 = vld [vmem:[%s0] ss:$0 sm:$0xff]
  %v74 = vunpack.i.l.bf16 %v73
  %v76 = vunpack.i.h.bf16 %v73
  %s79 = sor.u32 256, 24
  %80 = vbcast.lane.b32.xlu0 %v74, %s79
  %v81 = vpop.permute.xlu0 %80
  %s82 = scalar_lea.vmem %s1, 12
  %v83 = vpack.c.bf16 0.0, %v81
  %84 = vst [vmem:[%s82] sm:$0xf] %v83
  %v85 = vld [vmem:[%s0] ss:$0 sm:$0xff]
  %v86 = vunpack.i.l.bf16 %v85
  %v88 = vunpack.i.h.bf16 %v85
  %s91 = sor.u32 256, 24
  %92 = vbcast.lane.b32.xlu0 %v88, %s91
  %v93 = vpop.permute.xlu0 %92
  %s94 = scalar_lea.vmem %s1, 176
  %v95 = vpack.c.bf16 0.0, %v93
  %96 = vst [vmem:[%s94] sm:$0xf] %v95
  %v97 = vld [vmem:[%s0] ss:$0 sm:$0xff]
  %v98 = vunpack.i.l.bf16 %v97
  %v100 = vunpack.i.h.bf16 %v97
  %s103 = sor.u32 256, 32
  %104 = vbcast.lane.b32.xlu0 %v98, %s103
  %v105 = vpop.permute.xlu0 %104
  %s106 = scalar_lea.vmem %s1, 16
  %v107 = vpack.c.bf16 0.0, %v105
  %108 = vst [vmem:[%s106] sm:$0xf] %v107
  %v109 = vld [vmem:[%s0] ss:$0 sm:$0xff]
  %v110 = vunpack.i.l.bf16 %v109
  %v112 = vunpack.i.h.bf16 %v109
  %s115 = sor.u32 256, 32
  %116 = vbcast.lane.b32.xlu0 %v112, %s115
  %v117 = vpop.permute.xlu0 %116
  %s118 = scalar_lea.vmem %s1, 180
  %v119 = vpack.c.bf16 0.0, %v117
  %120 = vst [vmem:[%s118] sm:$0xf] %v119
  %v121 = vld [vmem:[%s0] ss:$0 sm:$0xff]
  %v122 = vunpack.i.l.bf16 %v121
  %v124 = vunpack.i.h.bf16 %v121
  %s127 = sor.u32 256, 40
  %128 = vbcast.lane.b32.xlu0 %v122, %s127
  %v129 = vpop.permute.xlu0 %128
  %s130 = scalar_lea.vmem %s1, 20
  %v131 = vpack.c.bf16 0.0, %v129
  %132 = vst [vmem:[%s130] sm:$0xf] %v131
  %v133 = vld [vmem:[%s0] ss:$0 sm:$0xff]
  %v134 = vunpack.i.l.bf16 %v133
  %v136 = vunpack.i.h.bf16 %v133
  %s139 = sor.u32 256, 40
  %140 = vbcast.lane.b32.xlu0 %v136, %s139
  %v141 = vpop.permute.xlu0 %140
  %s142 = scalar_lea.vmem %s1, 184
  %v143 = vpack.c.bf16 0.0, %v141
  %144 = vst [vmem:[%s142] sm:$0xf] %v143
  %v145 = vld [vmem:[%s0] ss:$0 sm:$0xff]
  %v146 = vunpack.i.l.bf16 %v145
  %v148 = vunpack.i.h.bf16 %v145
  %s151 = sor.u32 256, 48
  %152 = vbcast.lane.b32.xlu0 %v146, %s151
  %v153 = vpop.permute.xlu0 %152
  %s154 = scalar_lea.vmem %s1, 24
  %v155 = vpack.c.bf16 0.0, %v153
  %156 = vst [vmem:[%s154] sm:$0xf] %v155
  %v157 = vld [vmem:[%s0] ss:$0 sm:$0xff]
  %v158 = vunpack.i.l.bf16 %v157
  %v160 = vunpack.i.h.bf16 %v157
  %s163 = sor.u32 256, 48
  %164 = vbcast.lane.b32.xlu0 %v160, %s163
  %v165 = vpop.permute.xlu0 %164
  %s166 = scalar_lea.vmem %s1, 188
  %v167 = vpack.c.bf16 0.0, %v165
  %168 = vst [vmem:[%s166] sm:$0xf] %v167
  %v169 = vld [vmem:[%s0] ss:$0 sm:$0xff]
  %v170 = vunpack.i.l.bf16 %v169
  %v172 = vunpack.i.h.bf16 %v169
  %s175 = sor.u32 256, 56
  %176 = vbcast.lane.b32.xlu0 %v170, %s175
  %v177 = vpop.permute.xlu0 %176
  %s178 = scalar_lea.vmem %s1, 28
  %v179 = vpack.c.bf16 0.0, %v177
  %180 = vst [vmem:[%s178] sm:$0xf] %v179
  %v181 = vld [vmem:[%s0] ss:$0 sm:$0xff]
  %v182 = vunpack.i.l.bf16 %v181
  %v184 = vunpack.i.h.bf16 %v181
  %s187 = sor.u32 256, 56
  %188 = vbcast.lane.b32.xlu0 %v184, %s187
  %v189 = vpop.permute.xlu0 %188
  %s190 = scalar_lea.vmem %s1, 192
  %v191 = vpack.c.bf16 0.0, %v189
  %192 = vst [vmem:[%s190] sm:$0xf] %v191
  %v193 = vld [vmem:[%s0] ss:$0 sm:$0xff]
  %v194 = vunpack.i.l.bf16 %v193
  %v196 = vunpack.i.h.bf16 %v193
  %s199 = sor.u32 256, 64
  %200 = vbcast.lane.b32.xlu0 %v194, %s199
  %v201 = vpop.permute.xlu0 %200
  %s202 = scalar_lea.vmem %s1, 32
  %v203 = vpack.c.bf16 0.0, %v201
  %204 = vst [vmem:[%s202] sm:$0xf] %v203
  %v205 = vld [vmem:[%s0] ss:$0 sm:$0xff]
  %v206 = vunpack.i.l.bf16 %v205
  %v208 = vunpack.i.h.bf16 %v205
  %s211 = sor.u32 256, 64
  %212 = vbcast.lane.b32.xlu0 %v208, %s211
  %v213 = vpop.permute.xlu0 %212
  %s214 = scalar_lea.vmem %s1, 196
  %v215 = vpack.c.bf16 0.0, %v213
  %216 = vst [vmem:[%s214] sm:$0xf] %v215
  %v217 = vld [vmem:[%s0] ss:$0 sm:$0xff]
  %v218 = vunpack.i.l.bf16 %v217
  %v220 = vunpack.i.h.bf16 %v217
  %s223 = sor.u32 256, 72
  %224 = vbcast.lane.b32.xlu0 %v218, %s223
  %v225 = vpop.permute.xlu0 %224
  %s226 = scalar_lea.vmem %s1, 36
  %v227 = vpack.c.bf16 0.0, %v225
  %228 = vst [vmem:[%s226] sm:$0xf] %v227
  %v229 = vld [vmem:[%s0] ss:$0 sm:$0xff]
  %v230 = vunpack.i.l.bf16 %v229
  %v232 = vunpack.i.h.bf16 %v229
  %s235 = sor.u32 256, 72
  %236 = vbcast.lane.b32.xlu0 %v232, %s235
  %v237 = vpop.permute.xlu0 %236
  %s238 = scalar_lea.vmem %s1, 200
  %v239 = vpack.c.bf16 0.0, %v237
  %240 = vst [vmem:[%s238] sm:$0xf] %v239
  %v241 = vld [vmem:[%s0] ss:$0 sm:$0xff]
  %v242 = vunpack.i.l.bf16 %v241
  %v244 = vunpack.i.h.bf16 %v241
  %s247 = sor.u32 256, 80
  %248 = vbcast.lane.b32.xlu0 %v242, %s247
  %v249 = vpop.permute.xlu0 %248
  %s250 = scalar_lea.vmem %s1, 40
  %v251 = vpack.c.bf16 0.0, %v249
  %252 = vst [vmem:[%s250] sm:$0xf] %v251
  %v253 = vld [vmem:[%s0] ss:$0 sm:$0xff]
  %v254 = vunpack.i.l.bf16 %v253
  %v256 = vunpack.i.h.bf16 %v253
  %s259 = sor.u32 256, 80
  %260 = vbcast.lane.b32.xlu0 %v256, %s259
  %v261 = vpop.permute.xlu0 %260
  %s262 = scalar_lea.vmem %s1, 204
  %v263 = vpack.c.bf16 0.0, %v261
  %264 = vst [vmem:[%s262] sm:$0xf] %v263
  %v265 = vld [vmem:[%s0] ss:$0 sm:$0xff]
  %v266 = vunpack.i.l.bf16 %v265
  %v268 = vunpack.i.h.bf16 %v265
  %s271 = sor.u32 256, 88
  %272 = vbcast.lane.b32.xlu0 %v266, %s271
  %v273 = vpop.permute.xlu0 %272
  %s274 = scalar_lea.vmem %s1, 44
  %v275 = vpack.c.bf16 0.0, %v273
  %276 = vst [vmem:[%s274] sm:$0xf] %v275
  %v277 = vld [vmem:[%s0] ss:$0 sm:$0xff]
  %v278 = vunpack.i.l.bf16 %v277
  %v280 = vunpack.i.h.bf16 %v277
  %s283 = sor.u32 256, 88
  %284 = vbcast.lane.b32.xlu0 %v280, %s283
  %v285 = vpop.permute.xlu0 %284
  %s286 = scalar_lea.vmem %s1, 208
  %v287 = vpack.c.bf16 0.0, %v285
  %288 = vst [vmem:[%s286] sm:$0xf] %v287
  %v289 = vld [vmem:[%s0] ss:$0 sm:$0xff]
  %v290 = vunpack.i.l.bf16 %v289
  %v292 = vunpack.i.h.bf16 %v289
  %s295 = sor.u32 256, 96
  %296 = vbcast.lane.b32.xlu0 %v290, %s295
  %v297 = vpop.permute.xlu0 %296
  %s298 = scalar_lea.vmem %s1, 48
  %v299 = vpack.c.bf16 0.0, %v297
  %300 = vst [vmem:[%s298] sm:$0xf] %v299
  %v301 = vld [vmem:[%s0] ss:$0 sm:$0xff]
  %v302 = vunpack.i.l.bf16 %v301
  %v304 = vunpack.i.h.bf16 %v301
  %s307 = sor.u32 256, 96
  %308 = vbcast.lane.b32.xlu0 %v304, %s307
  %v309 = vpop.permute.xlu0 %308
  %s310 = scalar_lea.vmem %s1, 212
  %v311 = vpack.c.bf16 0.0, %v309
  %312 = vst [vmem:[%s310] sm:$0xf] %v311
  %v313 = vld [vmem:[%s0] ss:$0 sm:$0xff]
  %v314 = vunpack.i.l.bf16 %v313
  %v316 = vunpack.i.h.bf16 %v313
  %s319 = sor.u32 256, 104
  %320 = vbcast.lane.b32.xlu0 %v314, %s319
  %v321 = vpop.permute.xlu0 %320
  %s322 = scalar_lea.vmem %s1, 52
  %v323 = vpack.c.bf16 0.0, %v321
  %324 = vst [vmem:[%s322] sm:$0xf] %v323
  %v325 = vld [vmem:[%s0] ss:$0 sm:$0xff]
  %v326 = vunpack.i.l.bf16 %v325
  %v328 = vunpack.i.h.bf16 %v325
  %s331 = sor.u32 256, 104
  %332 = vbcast.lane.b32.xlu0 %v328, %s331
  %v333 = vpop.permute.xlu0 %332
  %s334 = scalar_lea.vmem %s1, 216
  %v335 = vpack.c.bf16 0.0, %v333
  %336 = vst [vmem:[%s334] sm:$0xf] %v335
  %v337 = vld [vmem:[%s0] ss:$0 sm:$0xff]
  %v338 = vunpack.i.l.bf16 %v337
  %v340 = vunpack.i.h.bf16 %v337
  %s343 = sor.u32 256, 112
  %344 = vbcast.lane.b32.xlu0 %v338, %s343
  %v345 = vpop.permute.xlu0 %344
  %s346 = scalar_lea.vmem %s1, 56
  %v347 = vpack.c.bf16 0.0, %v345
  %348 = vst [vmem:[%s346] sm:$0xf] %v347
  %v349 = vld [vmem:[%s0] ss:$0 sm:$0xff]
  %v350 = vunpack.i.l.bf16 %v349
  %v352 = vunpack.i.h.bf16 %v349
  %s355 = sor.u32 256, 112
  %356 = vbcast.lane.b32.xlu0 %v352, %s355
  %v357 = vpop.permute.xlu0 %356
  %s358 = scalar_lea.vmem %s1, 220
  %v359 = vpack.c.bf16 0.0, %v357
  %360 = vst [vmem:[%s358] sm:$0xf] %v359
  %v361 = vld [vmem:[%s0] ss:$0 sm:$0xff]
  %v362 = vunpack.i.l.bf16 %v361
  %v364 = vunpack.i.h.bf16 %v361
  %s367 = sor.u32 256, 120
  %368 = vbcast.lane.b32.xlu0 %v362, %s367
  %v369 = vpop.permute.xlu0 %368
  %s370 = scalar_lea.vmem %s1, 60
  %v371 = vpack.c.bf16 0.0, %v369
  %372 = vst [vmem:[%s370] sm:$0xf] %v371
  %v373 = vld [vmem:[%s0] ss:$0 sm:$0xff]
  %v374 = vunpack.i.l.bf16 %v373
  %v376 = vunpack.i.h.bf16 %v373
  %s379 = sor.u32 256, 120
  %380 = vbcast.lane.b32.xlu0 %v376, %s379
  %v381 = vpop.permute.xlu0 %380
  %s382 = scalar_lea.vmem %s1, 224
  %v383 = vpack.c.bf16 0.0, %v381
  %384 = vst [vmem:[%s382] sm:$0xf] %v383
  %s385 = scalar_lea.vmem %s0, 1
  %v386 = vld [vmem:[%s385] ss:$0 sm:$0xff]
  %v387 = vunpack.i.l.bf16 %v386
  %v389 = vunpack.i.h.bf16 %v386
  %392 = vbcast.lane.b32.xlu0 %v387, 256
  %v393 = vpop.permute.xlu0 %392
  %s394 = scalar_lea.vmem %s1, 64
  %v395 = vpack.c.bf16 0.0, %v393
  %396 = vst [vmem:[%s394] sm:$0xf] %v395
  %s397 = scalar_lea.vmem %s0, 1
  %v398 = vld [vmem:[%s397] ss:$0 sm:$0xff]
  %v399 = vunpack.i.l.bf16 %v398
  %v401 = vunpack.i.h.bf16 %v398
  %404 = vbcast.lane.b32.xlu0 %v401, 256
  %v405 = vpop.permute.xlu0 %404
  %s406 = scalar_lea.vmem %s1, 228
  %v407 = vpack.c.bf16 0.0, %v405
  %408 = vst [vmem:[%s406] sm:$0xf] %v407
  %s409 = scalar_lea.vmem %s0, 1
  %v410 = vld [vmem:[%s409] ss:$0 sm:$0xff]
  %v411 = vunpack.i.l.bf16 %v410
  %v413 = vunpack.i.h.bf16 %v410
  %s416 = sor.u32 256, 8
  %417 = vbcast.lane.b32.xlu0 %v411, %s416
  %v418 = vpop.permute.xlu0 %417
  %s419 = scalar_lea.vmem %s1, 68
  %v420 = vpack.c.bf16 0.0, %v418
  %421 = vst [vmem:[%s419] sm:$0xf] %v420
  %s422 = scalar_lea.vmem %s0, 1
  %v423 = vld [vmem:[%s422] ss:$0 sm:$0xff]
  %v424 = vunpack.i.l.bf16 %v423
  %v426 = vunpack.i.h.bf16 %v423
  %s429 = sor.u32 256, 8
  %430 = vbcast.lane.b32.xlu0 %v426, %s429
  %v431 = vpop.permute.xlu0 %430
  %s432 = scalar_lea.vmem %s1, 232
  %v433 = vpack.c.bf16 0.0, %v431
  %434 = vst [vmem:[%s432] sm:$0xf] %v433
  %s435 = scalar_lea.vmem %s0, 1
  %v436 = vld [vmem:[%s435] ss:$0 sm:$0xff]
  %v437 = vunpack.i.l.bf16 %v436
  %v439 = vunpack.i.h.bf16 %v436
  %s442 = sor.u32 256, 16
  %443 = vbcast.lane.b32.xlu0 %v437, %s442
  %v444 = vpop.permute.xlu0 %443
  %s445 = scalar_lea.vmem %s1, 72
  %v446 = vpack.c.bf16 0.0, %v444
  %447 = vst [vmem:[%s445] sm:$0xf] %v446
  %s448 = scalar_lea.vmem %s0, 1
  %v449 = vld [vmem:[%s448] ss:$0 sm:$0xff]
  %v450 = vunpack.i.l.bf16 %v449
  %v452 = vunpack.i.h.bf16 %v449
  %s455 = sor.u32 256, 16
  %456 = vbcast.lane.b32.xlu0 %v452, %s455
  %v457 = vpop.permute.xlu0 %456
  %s458 = scalar_lea.vmem %s1, 236
  %v459 = vpack.c.bf16 0.0, %v457
  %460 = vst [vmem:[%s458] sm:$0xf] %v459
  %s461 = scalar_lea.vmem %s0, 1
  %v462 = vld [vmem:[%s461] ss:$0 sm:$0xff]
  %v463 = vunpack.i.l.bf16 %v462
  %v465 = vunpack.i.h.bf16 %v462
  %s468 = sor.u32 256, 24
  %469 = vbcast.lane.b32.xlu0 %v463, %s468
  %v470 = vpop.permute.xlu0 %469
  %s471 = scalar_lea.vmem %s1, 76
  %v472 = vpack.c.bf16 0.0, %v470
  %473 = vst [vmem:[%s471] sm:$0xf] %v472
  %s474 = scalar_lea.vmem %s0, 1
  %v475 = vld [vmem:[%s474] ss:$0 sm:$0xff]
  %v476 = vunpack.i.l.bf16 %v475
  %v478 = vunpack.i.h.bf16 %v475
  %s481 = sor.u32 256, 24
  %482 = vbcast.lane.b32.xlu0 %v478, %s481
  %v483 = vpop.permute.xlu0 %482
  %s484 = scalar_lea.vmem %s1, 240
  %v485 = vpack.c.bf16 0.0, %v483
  %486 = vst [vmem:[%s484] sm:$0xf] %v485
  %s487 = scalar_lea.vmem %s0, 1
  %v488 = vld [vmem:[%s487] ss:$0 sm:$0xff]
  %v489 = vunpack.i.l.bf16 %v488
  %v491 = vunpack.i.h.bf16 %v488
  %s494 = sor.u32 256, 32
  %495 = vbcast.lane.b32.xlu0 %v489, %s494
  %v496 = vpop.permute.xlu0 %495
  %s497 = scalar_lea.vmem %s1, 80
  %v498 = vpack.c.bf16 0.0, %v496
  %499 = vst [vmem:[%s497] sm:$0xf] %v498
  %s500 = scalar_lea.vmem %s0, 1
  %v501 = vld [vmem:[%s500] ss:$0 sm:$0xff]
  %v502 = vunpack.i.l.bf16 %v501
  %v504 = vunpack.i.h.bf16 %v501
  %s507 = sor.u32 256, 32
  %508 = vbcast.lane.b32.xlu0 %v504, %s507
  %v509 = vpop.permute.xlu0 %508
  %s510 = scalar_lea.vmem %s1, 244
  %v511 = vpack.c.bf16 0.0, %v509
  %512 = vst [vmem:[%s510] sm:$0xf] %v511
  %s513 = scalar_lea.vmem %s0, 1
  %v514 = vld [vmem:[%s513] ss:$0 sm:$0xff]
  %v515 = vunpack.i.l.bf16 %v514
  %v517 = vunpack.i.h.bf16 %v514
  %s520 = sor.u32 256, 40
  %521 = vbcast.lane.b32.xlu0 %v515, %s520
  %v522 = vpop.permute.xlu0 %521
  %s523 = scalar_lea.vmem %s1, 84
  %v524 = vpack.c.bf16 0.0, %v522
  %525 = vst [vmem:[%s523] sm:$0xf] %v524
  %s526 = scalar_lea.vmem %s0, 1
  %v527 = vld [vmem:[%s526] ss:$0 sm:$0xff]
  %v528 = vunpack.i.l.bf16 %v527
  %v530 = vunpack.i.h.bf16 %v527
  %s533 = sor.u32 256, 40
  %534 = vbcast.lane.b32.xlu0 %v530, %s533
  %v535 = vpop.permute.xlu0 %534
  %s536 = scalar_lea.vmem %s1, 248
  %v537 = vpack.c.bf16 0.0, %v535
  %538 = vst [vmem:[%s536] sm:$0xf] %v537
  %s539 = scalar_lea.vmem %s0, 1
  %v540 = vld [vmem:[%s539] ss:$0 sm:$0xff]
  %v541 = vunpack.i.l.bf16 %v540
  %v543 = vunpack.i.h.bf16 %v540
  %s546 = sor.u32 256, 48
  %547 = vbcast.lane.b32.xlu0 %v541, %s546
  %v548 = vpop.permute.xlu0 %547
  %s549 = scalar_lea.vmem %s1, 88
  %v550 = vpack.c.bf16 0.0, %v548
  %551 = vst [vmem:[%s549] sm:$0xf] %v550
  %s552 = scalar_lea.vmem %s0, 1
  %v553 = vld [vmem:[%s552] ss:$0 sm:$0xff]
  %v554 = vunpack.i.l.bf16 %v553
  %v556 = vunpack.i.h.bf16 %v553
  %s559 = sor.u32 256, 48
  %560 = vbcast.lane.b32.xlu0 %v556, %s559
  %v561 = vpop.permute.xlu0 %560
  %s562 = scalar_lea.vmem %s1, 252
  %v563 = vpack.c.bf16 0.0, %v561
  %564 = vst [vmem:[%s562] sm:$0xf] %v563
  %s565 = scalar_lea.vmem %s0, 1
  %v566 = vld [vmem:[%s565] ss:$0 sm:$0xff]
  %v567 = vunpack.i.l.bf16 %v566
  %v569 = vunpack.i.h.bf16 %v566
  %s572 = sor.u32 256, 56
  %573 = vbcast.lane.b32.xlu0 %v567, %s572
  %v574 = vpop.permute.xlu0 %573
  %s575 = scalar_lea.vmem %s1, 92
  %v576 = vpack.c.bf16 0.0, %v574
  %577 = vst [vmem:[%s575] sm:$0xf] %v576
  %s578 = scalar_lea.vmem %s0, 1
  %v579 = vld [vmem:[%s578] ss:$0 sm:$0xff]
  %v580 = vunpack.i.l.bf16 %v579
  %v582 = vunpack.i.h.bf16 %v579
  %s585 = sor.u32 256, 56
  %586 = vbcast.lane.b32.xlu0 %v582, %s585
  %v587 = vpop.permute.xlu0 %586
  %s588 = scalar_lea.vmem %s1, 256
  %v589 = vpack.c.bf16 0.0, %v587
  %590 = vst [vmem:[%s588] sm:$0xf] %v589
  %s591 = scalar_lea.vmem %s0, 1
  %v592 = vld [vmem:[%s591] ss:$0 sm:$0xff]
  %v593 = vunpack.i.l.bf16 %v592
  %v595 = vunpack.i.h.bf16 %v592
  %s598 = sor.u32 256, 64
  %599 = vbcast.lane.b32.xlu0 %v593, %s598
  %v600 = vpop.permute.xlu0 %599
  %s601 = scalar_lea.vmem %s1, 96
  %v602 = vpack.c.bf16 0.0, %v600
  %603 = vst [vmem:[%s601] sm:$0xf] %v602
  %s604 = scalar_lea.vmem %s0, 1
  %v605 = vld [vmem:[%s604] ss:$0 sm:$0xff]
  %v606 = vunpack.i.l.bf16 %v605
  %v608 = vunpack.i.h.bf16 %v605
  %s611 = sor.u32 256, 64
  %612 = vbcast.lane.b32.xlu0 %v608, %s611
  %v613 = vpop.permute.xlu0 %612
  %s614 = scalar_lea.vmem %s1, 260
  %v615 = vpack.c.bf16 0.0, %v613
  %616 = vst [vmem:[%s614] sm:$0xf] %v615
  %s617 = scalar_lea.vmem %s0, 1
  %v618 = vld [vmem:[%s617] ss:$0 sm:$0xff]
  %v619 = vunpack.i.l.bf16 %v618
  %v621 = vunpack.i.h.bf16 %v618
  %s624 = sor.u32 256, 72
  %625 = vbcast.lane.b32.xlu0 %v619, %s624
  %v626 = vpop.permute.xlu0 %625
  %s627 = scalar_lea.vmem %s1, 100
  %v628 = vpack.c.bf16 0.0, %v626
  %629 = vst [vmem:[%s627] sm:$0xf] %v628
  %s630 = scalar_lea.vmem %s0, 1
  %v631 = vld [vmem:[%s630] ss:$0 sm:$0xff]
  %v632 = vunpack.i.l.bf16 %v631
  %v634 = vunpack.i.h.bf16 %v631
  %s637 = sor.u32 256, 72
  %638 = vbcast.lane.b32.xlu0 %v634, %s637
  %v639 = vpop.permute.xlu0 %638
  %s640 = scalar_lea.vmem %s1, 264
  %v641 = vpack.c.bf16 0.0, %v639
  %642 = vst [vmem:[%s640] sm:$0xf] %v641
  %s643 = scalar_lea.vmem %s0, 1
  %v644 = vld [vmem:[%s643] ss:$0 sm:$0xff]
  %v645 = vunpack.i.l.bf16 %v644
  %v647 = vunpack.i.h.bf16 %v644
  %s650 = sor.u32 256, 80
  %651 = vbcast.lane.b32.xlu0 %v645, %s650
  %v652 = vpop.permute.xlu0 %651
  %s653 = scalar_lea.vmem %s1, 104
  %v654 = vpack.c.bf16 0.0, %v652
  %655 = vst [vmem:[%s653] sm:$0xf] %v654
  %s656 = scalar_lea.vmem %s0, 1
  %v657 = vld [vmem:[%s656] ss:$0 sm:$0xff]
  %v658 = vunpack.i.l.bf16 %v657
  %v660 = vunpack.i.h.bf16 %v657
  %s663 = sor.u32 256, 80
  %664 = vbcast.lane.b32.xlu0 %v660, %s663
  %v665 = vpop.permute.xlu0 %664
  %s666 = scalar_lea.vmem %s1, 268
  %v667 = vpack.c.bf16 0.0, %v665
  %668 = vst [vmem:[%s666] sm:$0xf] %v667
  %s669 = scalar_lea.vmem %s0, 1
  %v670 = vld [vmem:[%s669] ss:$0 sm:$0xff]
  %v671 = vunpack.i.l.bf16 %v670
  %v673 = vunpack.i.h.bf16 %v670
  %s676 = sor.u32 256, 88
  %677 = vbcast.lane.b32.xlu0 %v671, %s676
  %v678 = vpop.permute.xlu0 %677
  %s679 = scalar_lea.vmem %s1, 108
  %v680 = vpack.c.bf16 0.0, %v678
  %681 = vst [vmem:[%s679] sm:$0xf] %v680
  %s682 = scalar_lea.vmem %s0, 1
  %v683 = vld [vmem:[%s682] ss:$0 sm:$0xff]
  %v684 = vunpack.i.l.bf16 %v683
  %v686 = vunpack.i.h.bf16 %v683
  %s689 = sor.u32 256, 88
  %690 = vbcast.lane.b32.xlu0 %v686, %s689
  %v691 = vpop.permute.xlu0 %690
  %s692 = scalar_lea.vmem %s1, 272
  %v693 = vpack.c.bf16 0.0, %v691
  %694 = vst [vmem:[%s692] sm:$0xf] %v693
  %s695 = scalar_lea.vmem %s0, 1
  %v696 = vld [vmem:[%s695] ss:$0 sm:$0xff]
  %v697 = vunpack.i.l.bf16 %v696
  %v699 = vunpack.i.h.bf16 %v696
  %s702 = sor.u32 256, 96
  %703 = vbcast.lane.b32.xlu0 %v697, %s702
  %v704 = vpop.permute.xlu0 %703
  %s705 = scalar_lea.vmem %s1, 112
  %v706 = vpack.c.bf16 0.0, %v704
  %707 = vst [vmem:[%s705] sm:$0xf] %v706
  %s708 = scalar_lea.vmem %s0, 1
  %v709 = vld [vmem:[%s708] ss:$0 sm:$0xff]
  %v710 = vunpack.i.l.bf16 %v709
  %v712 = vunpack.i.h.bf16 %v709
  %s715 = sor.u32 256, 96
  %716 = vbcast.lane.b32.xlu0 %v712, %s715
  %v717 = vpop.permute.xlu0 %716
  %s718 = scalar_lea.vmem %s1, 276
  %v719 = vpack.c.bf16 0.0, %v717
  %720 = vst [vmem:[%s718] sm:$0xf] %v719
  %s721 = scalar_lea.vmem %s0, 1
  %v722 = vld [vmem:[%s721] ss:$0 sm:$0xff]
  %v723 = vunpack.i.l.bf16 %v722
  %v725 = vunpack.i.h.bf16 %v722
  %s728 = sor.u32 256, 104
  %729 = vbcast.lane.b32.xlu0 %v723, %s728
  %v730 = vpop.permute.xlu0 %729
  %s731 = scalar_lea.vmem %s1, 116
  %v732 = vpack.c.bf16 0.0, %v730
  %733 = vst [vmem:[%s731] sm:$0xf] %v732
  %s734 = scalar_lea.vmem %s0, 1
  %v735 = vld [vmem:[%s734] ss:$0 sm:$0xff]
  %v736 = vunpack.i.l.bf16 %v735
  %v738 = vunpack.i.h.bf16 %v735
  %s741 = sor.u32 256, 104
  %742 = vbcast.lane.b32.xlu0 %v738, %s741
  %v743 = vpop.permute.xlu0 %742
  %s744 = scalar_lea.vmem %s1, 280
  %v745 = vpack.c.bf16 0.0, %v743
  %746 = vst [vmem:[%s744] sm:$0xf] %v745
  %s747 = scalar_lea.vmem %s0, 1
  %v748 = vld [vmem:[%s747] ss:$0 sm:$0xff]
  %v749 = vunpack.i.l.bf16 %v748
  %v751 = vunpack.i.h.bf16 %v748
  %s754 = sor.u32 256, 112
  %755 = vbcast.lane.b32.xlu0 %v749, %s754
  %v756 = vpop.permute.xlu0 %755
  %s757 = scalar_lea.vmem %s1, 120
  %v758 = vpack.c.bf16 0.0, %v756
  %759 = vst [vmem:[%s757] sm:$0xf] %v758
  %s760 = scalar_lea.vmem %s0, 1
  %v761 = vld [vmem:[%s760] ss:$0 sm:$0xff]
  %v762 = vunpack.i.l.bf16 %v761
  %v764 = vunpack.i.h.bf16 %v761
  %s767 = sor.u32 256, 112
  %768 = vbcast.lane.b32.xlu0 %v764, %s767
  %v769 = vpop.permute.xlu0 %768
  %s770 = scalar_lea.vmem %s1, 284
  %v771 = vpack.c.bf16 0.0, %v769
  %772 = vst [vmem:[%s770] sm:$0xf] %v771
  %s773 = scalar_lea.vmem %s0, 1
  %v774 = vld [vmem:[%s773] ss:$0 sm:$0xff]
  %v775 = vunpack.i.l.bf16 %v774
  %v777 = vunpack.i.h.bf16 %v774
  %s780 = sor.u32 256, 120
  %781 = vbcast.lane.b32.xlu0 %v775, %s780
  %v782 = vpop.permute.xlu0 %781
  %s783 = scalar_lea.vmem %s1, 124
  %v784 = vpack.c.bf16 0.0, %v782
  %785 = vst [vmem:[%s783] sm:$0xf] %v784
  %s786 = scalar_lea.vmem %s0, 1
  %v787 = vld [vmem:[%s786] ss:$0 sm:$0xff]
  %v788 = vunpack.i.l.bf16 %v787
  %v790 = vunpack.i.h.bf16 %v787
  %s793 = sor.u32 256, 120
  %794 = vbcast.lane.b32.xlu0 %v790, %s793
  %v795 = vpop.permute.xlu0 %794
  %s796 = scalar_lea.vmem %s1, 288
  %v797 = vpack.c.bf16 0.0, %v795
  %798 = vst [vmem:[%s796] sm:$0xf] %v797
  %s799 = scalar_lea.vmem %s0, 2
  %v800 = vld [vmem:[%s799] ss:$0 sm:$0xff]
  %v801 = vunpack.i.l.bf16 %v800
  %v803 = vunpack.i.h.bf16 %v800
  %806 = vbcast.lane.b32.xlu0 %v801, 256
  %v807 = vpop.permute.xlu0 %806
  %s808 = scalar_lea.vmem %s1, 128
  %v809 = vpack.c.bf16 0.0, %v807
  %810 = vst [vmem:[%s808] sm:$0xf] %v809
  %s811 = scalar_lea.vmem %s0, 2
  %v812 = vld [vmem:[%s811] ss:$0 sm:$0xff]
  %v813 = vunpack.i.l.bf16 %v812
  %v815 = vunpack.i.h.bf16 %v812
  %818 = vbcast.lane.b32.xlu0 %v815, 256
  %v819 = vpop.permute.xlu0 %818
  %s820 = scalar_lea.vmem %s1, 292
  %v821 = vpack.c.bf16 0.0, %v819
  %822 = vst [vmem:[%s820] sm:$0xf] %v821
  %s823 = scalar_lea.vmem %s0, 2
  %v824 = vld [vmem:[%s823] ss:$0 sm:$0xff]
  %v825 = vunpack.i.l.bf16 %v824
  %v827 = vunpack.i.h.bf16 %v824
  %s830 = sor.u32 256, 8
  %831 = vbcast.lane.b32.xlu0 %v825, %s830
  %v832 = vpop.permute.xlu0 %831
  %s833 = scalar_lea.vmem %s1, 132
  %v834 = vpack.c.bf16 0.0, %v832
  %835 = vst [vmem:[%s833] sm:$0xf] %v834
  %s836 = scalar_lea.vmem %s0, 2
  %v837 = vld [vmem:[%s836] ss:$0 sm:$0xff]
  %v838 = vunpack.i.l.bf16 %v837
  %v840 = vunpack.i.h.bf16 %v837
  %s843 = sor.u32 256, 8
  %844 = vbcast.lane.b32.xlu0 %v840, %s843
  %v845 = vpop.permute.xlu0 %844
  %s846 = scalar_lea.vmem %s1, 296
  %v847 = vpack.c.bf16 0.0, %v845
  %848 = vst [vmem:[%s846] sm:$0xf] %v847
  %s849 = scalar_lea.vmem %s0, 2
  %v850 = vld [vmem:[%s849] ss:$0 sm:$0xff]
  %v851 = vunpack.i.l.bf16 %v850
  %v853 = vunpack.i.h.bf16 %v850
  %s856 = sor.u32 256, 16
  %857 = vbcast.lane.b32.xlu0 %v851, %s856
  %v858 = vpop.permute.xlu0 %857
  %s859 = scalar_lea.vmem %s1, 136
  %v860 = vpack.c.bf16 0.0, %v858
  %861 = vst [vmem:[%s859] sm:$0xf] %v860
  %s862 = scalar_lea.vmem %s0, 2
  %v863 = vld [vmem:[%s862] ss:$0 sm:$0xff]
  %v864 = vunpack.i.l.bf16 %v863
  %v866 = vunpack.i.h.bf16 %v863
  %s869 = sor.u32 256, 16
  %870 = vbcast.lane.b32.xlu0 %v866, %s869
  %v871 = vpop.permute.xlu0 %870
  %s872 = scalar_lea.vmem %s1, 300
  %v873 = vpack.c.bf16 0.0, %v871
  %874 = vst [vmem:[%s872] sm:$0xf] %v873
  %s875 = scalar_lea.vmem %s0, 2
  %v876 = vld [vmem:[%s875] ss:$0 sm:$0xff]
  %v877 = vunpack.i.l.bf16 %v876
  %v879 = vunpack.i.h.bf16 %v876
  %s882 = sor.u32 256, 24
  %883 = vbcast.lane.b32.xlu0 %v877, %s882
  %v884 = vpop.permute.xlu0 %883
  %s885 = scalar_lea.vmem %s1, 140
  %v886 = vpack.c.bf16 0.0, %v884
  %887 = vst [vmem:[%s885] sm:$0xf] %v886
  %s888 = scalar_lea.vmem %s0, 2
  %v889 = vld [vmem:[%s888] ss:$0 sm:$0xff]
  %v890 = vunpack.i.l.bf16 %v889
  %v892 = vunpack.i.h.bf16 %v889
  %s895 = sor.u32 256, 24
  %896 = vbcast.lane.b32.xlu0 %v892, %s895
  %v897 = vpop.permute.xlu0 %896
  %s898 = scalar_lea.vmem %s1, 304
  %v899 = vpack.c.bf16 0.0, %v897
  %900 = vst [vmem:[%s898] sm:$0xf] %v899
  %s901 = scalar_lea.vmem %s0, 2
  %v902 = vld [vmem:[%s901] ss:$0 sm:$0xff]
  %v903 = vunpack.i.l.bf16 %v902
  %v905 = vunpack.i.h.bf16 %v902
  %s908 = sor.u32 256, 32
  %909 = vbcast.lane.b32.xlu0 %v903, %s908
  %v910 = vpop.permute.xlu0 %909
  %s911 = scalar_lea.vmem %s1, 144
  %v912 = vpack.c.bf16 0.0, %v910
  %913 = vst [vmem:[%s911] sm:$0xf] %v912
  %s914 = scalar_lea.vmem %s0, 2
  %v915 = vld [vmem:[%s914] ss:$0 sm:$0xff]
  %v916 = vunpack.i.l.bf16 %v915
  %v918 = vunpack.i.h.bf16 %v915
  %s921 = sor.u32 256, 32
  %922 = vbcast.lane.b32.xlu0 %v918, %s921
  %v923 = vpop.permute.xlu0 %922
  %s924 = scalar_lea.vmem %s1, 308
  %v925 = vpack.c.bf16 0.0, %v923
  %926 = vst [vmem:[%s924] sm:$0xf] %v925
  %s927 = scalar_lea.vmem %s0, 2
  %v928 = vld [vmem:[%s927] ss:$0 sm:$0xff]
  %v929 = vunpack.i.l.bf16 %v928
  %v931 = vunpack.i.h.bf16 %v928
  %s934 = sor.u32 256, 40
  %935 = vbcast.lane.b32.xlu0 %v929, %s934
  %v936 = vpop.permute.xlu0 %935
  %s937 = scalar_lea.vmem %s1, 148
  %v938 = vpack.c.bf16 0.0, %v936
  %939 = vst [vmem:[%s937] sm:$0xf] %v938
  %s940 = scalar_lea.vmem %s0, 2
  %v941 = vld [vmem:[%s940] ss:$0 sm:$0xff]
  %v942 = vunpack.i.l.bf16 %v941
  %v944 = vunpack.i.h.bf16 %v941
  %s947 = sor.u32 256, 40
  %948 = vbcast.lane.b32.xlu0 %v944, %s947
  %v949 = vpop.permute.xlu0 %948
  %s950 = scalar_lea.vmem %s1, 312
  %v951 = vpack.c.bf16 0.0, %v949
  %952 = vst [vmem:[%s950] sm:$0xf] %v951
  %s953 = scalar_lea.vmem %s0, 2
  %v954 = vld [vmem:[%s953] ss:$0 sm:$0xff]
  %v955 = vunpack.i.l.bf16 %v954
  %v957 = vunpack.i.h.bf16 %v954
  %s960 = sor.u32 256, 48
  %961 = vbcast.lane.b32.xlu0 %v955, %s960
  %v962 = vpop.permute.xlu0 %961
  %s963 = scalar_lea.vmem %s1, 152
  %v964 = vpack.c.bf16 0.0, %v962
  %965 = vst [vmem:[%s963] sm:$0xf] %v964
  %s966 = scalar_lea.vmem %s0, 2
  %v967 = vld [vmem:[%s966] ss:$0 sm:$0xff]
  %v968 = vunpack.i.l.bf16 %v967
  %v970 = vunpack.i.h.bf16 %v967
  %s973 = sor.u32 256, 48
  %974 = vbcast.lane.b32.xlu0 %v970, %s973
  %v975 = vpop.permute.xlu0 %974
  %s976 = scalar_lea.vmem %s1, 316
  %v977 = vpack.c.bf16 0.0, %v975
  %978 = vst [vmem:[%s976] sm:$0xf] %v977
  %s979 = scalar_lea.vmem %s0, 2
  %v980 = vld [vmem:[%s979] ss:$0 sm:$0xff]
  %v981 = vunpack.i.l.bf16 %v980
  %v983 = vunpack.i.h.bf16 %v980
  %s986 = sor.u32 256, 56
  %987 = vbcast.lane.b32.xlu0 %v981, %s986
  %v988 = vpop.permute.xlu0 %987
  %s989 = scalar_lea.vmem %s1, 156
  %v990 = vpack.c.bf16 0.0, %v988
  %991 = vst [vmem:[%s989] sm:$0xf] %v990
  %s992 = scalar_lea.vmem %s0, 2
  %v993 = vld [vmem:[%s992] ss:$0 sm:$0xff]
  %v994 = vunpack.i.l.bf16 %v993
  %v996 = vunpack.i.h.bf16 %v993
  %s999 = sor.u32 256, 56
  %1000 = vbcast.lane.b32.xlu0 %v996, %s999
  %v1001 = vpop.permute.xlu0 %1000
  %s1002 = scalar_lea.vmem %s1, 320
  %v1003 = vpack.c.bf16 0.0, %v1001
  %1004 = vst [vmem:[%s1002] sm:$0xf] %v1003
  %s1005 = scalar_lea.vmem %s0, 2
  %v1006 = vld [vmem:[%s1005] ss:$0 sm:$0xff]
  %v1007 = vunpack.i.l.bf16 %v1006
  %v1009 = vunpack.i.h.bf16 %v1006
  %s1012 = sor.u32 256, 64
  %1013 = vbcast.lane.b32.xlu0 %v1007, %s1012
  %v1014 = vpop.permute.xlu0 %1013
  %s1015 = scalar_lea.vmem %s1, 160
  %v1016 = vpack.c.bf16 0.0, %v1014
  %1017 = vst [vmem:[%s1015] sm:$0xf] %v1016
  %s1018 = scalar_lea.vmem %s0, 2
  %v1019 = vld [vmem:[%s1018] ss:$0 sm:$0xff]
  %v1020 = vunpack.i.l.bf16 %v1019
  %v1022 = vunpack.i.h.bf16 %v1019
  %s1025 = sor.u32 256, 64
  %1026 = vbcast.lane.b32.xlu0 %v1022, %s1025
  %v1027 = vpop.permute.xlu0 %1026
  %s1028 = scalar_lea.vmem %s1, 324
  %v1029 = vpack.c.bf16 0.0, %v1027
  %1030 = vst [vmem:[%s1028] sm:$0xf] %v1029

// kernel: dummy_model_forward.2
$region0: #{dummy_model_forward.2}
  #allocation0 [shape = 'u32[]', space=smem, size = 0x4, offset = 0x4, fixed_abs, tag = 'smem constant byte address 0x4 - core index']
  #allocation1 [shape = 'u32[144,128]{1,0:T(1,128)}', space=vmem, size = 0x12000, scoped, tag = 'internal scratch']
  %s0 = inlined_call_operand.vmem [shape: bf16[2,984,128], index: 0, kind: input, shape index: {}]
  %s1 = inlined_call_operand.vmem [shape: bf16[128,128], index: 1, kind: input, shape index: {}]
  %s2 = inlined_call_operand.vmem [shape: f32[1,128], index: 2, kind: input, shape index: {}]
  %s3 = inlined_call_operand.vmem [shape: bf16[2,328,50], index: 3, kind: output, shape index: {}]
  %s4 = sld [smem:[#allocation0]]
  $region45: #{dummy_model_forward.2} parent=0
    _
  %s6 = ssub.s32 1, %s4
  %s7 = scalar_select 0, %s6, %s4
  loop: start=0, step=1, limit=4
  $region2: #{dummy_model_forward.2} parent=0 // loop_pre_header
    _
  $region3: #{dummy_model_forward.2} parent=0 // loop_header
    %s9 = sphi 0, %s13
    %p10 = scmp.ge.s32.totalorder %s9, 4
    %s19 = sphi 0, %s21
    %s22 = sphi 0, %s19
    %s23 = sphi 0, %s22
    %s39 = sphi 0, %s23
    %s43 = sphi 0, %s43
    %s45 = sphi 0, %s43
    %s46 = sphi 0, %s45
    %s60 = sphi 0, %s46
    %s64 = sphi 0, %s64
    %s66 = sphi 0, %s64
    %s67 = sphi 0, %s66
    %s81 = sphi 0, %s67
    %s87 = sphi 0, %s89
    %s90 = sphi 0, %s87
    %s91 = sphi 0, %s90
    %s107 = sphi 0, %s91
  $region4: #{dummy_model_forward.2} parent=0 // loop_header_branch
    %12 = sbr.rel (%p10) target = $region8
  $region5: #{dummy_model_forward.2} parent=0 // loop_body
    %s14 = ssub.s32 %s9, 1
    %s15 = ssub.s32 %s9, 2
    %s16 = sadd.s32 %s9, 1
    %s17 = ssub.s32 %s9, %s16
    %p18 = scmp.eq.s32.totalorder %s17, 0
    %s20 = sadd.s32 %s19, 1
    %s21 = scalar_select %p18, %s19, %s20
    %p24 = pneg %p18
    %p25 = scmp.eq.s32.totalorder %s9, 1
    %p26 = por %p24, %p25
    %p27 = scmp.ne.s32.totalorder %s19, %s22
    %p28 = scmp.eq.s32.totalorder %s9, 0
    %p29 = por %p27, %p28
    %p30 = scmp.ne.s32.totalorder %s19, %s22
    %p31 = scmp.eq.s32.totalorder %s14, 1
    %p32 = por %p30, %p31
    %p33 = scmp.ne.s32.totalorder %s22, %s23
    %p34 = scmp.eq.s32.totalorder %s14, 0
    %p35 = por %p33, %p34
    %p36 = scmp.ne.s32.totalorder %s22, %s23
    %p37 = scmp.eq.s32.totalorder %s15, 1
    %p38 = por %p36, %p37
    %p40 = scmp.ne.s32.totalorder %s23, %s39
    %p41 = scmp.eq.s32.totalorder %s15, 0
    %p42 = por %p40, %p41
    %s44 = sadd.s32 %s43, 1
    %p47 = scmp.eq.s32.totalorder %s9, 1
    %p48 = scmp.ne.s32.totalorder %s43, %s45
    %p49 = scmp.eq.s32.totalorder %s9, 0
    %p50 = por %p48, %p49
    %p51 = scmp.ne.s32.totalorder %s43, %s45
    %p52 = scmp.eq.s32.totalorder %s14, 1
    %p53 = por %p51, %p52
    %p54 = scmp.ne.s32.totalorder %s45, %s46
    %p55 = scmp.eq.s32.totalorder %s14, 0
    %p56 = por %p54, %p55
    %p57 = scmp.ne.s32.totalorder %s45, %s46
    %p58 = scmp.eq.s32.totalorder %s15, 1
    %p59 = por %p57, %p58
    %p61 = scmp.ne.s32.totalorder %s46, %s60
    %p62 = scmp.eq.s32.totalorder %s15, 0
    %p63 = por %p61, %p62
    %s65 = sadd.s32 %s64, 1
    %p68 = scmp.eq.s32.totalorder %s9, 1
    %p69 = scmp.ne.s32.totalorder %s64, %s66
    %p70 = scmp.eq.s32.totalorder %s9, 0
    %p71 = por %p69, %p70
    %p72 = scmp.ne.s32.totalorder %s64, %s66
    %p73 = scmp.eq.s32.totalorder %s14, 1
    %p74 = por %p72, %p73
    %p75 = scmp.ne.s32.totalorder %s66, %s67
    %p76 = scmp.eq.s32.totalorder %s14, 0
    %p77 = por %p75, %p76
    %p78 = scmp.ne.s32.totalorder %s66, %s67
    %p79 = scmp.eq.s32.totalorder %s15, 1
    %p80 = por %p78, %p79
    %p82 = scmp.ne.s32.totalorder %s67, %s81
    %p83 = scmp.eq.s32.totalorder %s15, 0
    %p84 = por %p82, %p83
    %s85 = ssub.s32 %s9, %s16
    %p86 = scmp.eq.s32.totalorder %s85, 0
    %s88 = sadd.s32 %s87, 1
    %s89 = scalar_select %p86, %s87, %s88
    %p92 = pneg %p86
    %p93 = scmp.eq.s32.totalorder %s9, 1
    %p94 = por %p92, %p93
    %p95 = scmp.ne.s32.totalorder %s87, %s90
    %p96 = scmp.eq.s32.totalorder %s9, 0
    %p97 = por %p95, %p96
    %p98 = scmp.ne.s32.totalorder %s87, %s90
    %p99 = scmp.eq.s32.totalorder %s14, 1
    %p100 = por %p98, %p99
    %p101 = scmp.ne.s32.totalorder %s90, %s91
    %p102 = scmp.eq.s32.totalorder %s14, 0
    %p103 = por %p101, %p102
    %p104 = scmp.ne.s32.totalorder %s90, %s91
    %p105 = scmp.eq.s32.totalorder %s15, 1
    %p106 = por %p104, %p105
    %p108 = scmp.ne.s32.totalorder %s91, %s107
    %p109 = scmp.eq.s32.totalorder %s15, 0
    %p110 = por %p108, %p109
    %p111 = scmp.le.s32.totalorder 1, %s9
    %p112 = scmp.lt.s32.totalorder %s9, 3
    %p113 = pnand %p111, %p112
    %p114 = pneg %p113
    // Predicated region
    $region9: #{dummy_model_forward.2} parent=5 // pred_check
      _
    $region10: #{dummy_model_forward.2} parent=5 // pred_check_branch
      %116 = sbr.rel (%p113) target = $region12
    $region11: #{dummy_model_forward.2} parent=5 // pred_region
      %s117 = ssub.s32 %s9, 1
      // Predicated region
      $region13: #{dummy_model_forward.2} parent=11 // pred_check
        %p118 = pneg %p56
      $region14: #{dummy_model_forward.2} parent=11 // pred_check_branch
        %120 = sbr.rel (%p118) target = $region16
      $region15: #{dummy_model_forward.2} parent=11 // pred_region
        _
      $region16: #{dummy_model_forward.2} parent=11 // pred_fallthru
        _
      // Predicated region
      $region17: #{dummy_model_forward.2} parent=11 // pred_check
        %p121 = pneg %p77
      $region18: #{dummy_model_forward.2} parent=11 // pred_check_branch
        %123 = sbr.rel (%p121) target = $region20
      $region19: #{dummy_model_forward.2} parent=11 // pred_region
        _
      $region20: #{dummy_model_forward.2} parent=11 // pred_fallthru
        _
    $region12: #{dummy_model_forward.2} parent=5 // pred_fallthru
      _
    %p124 = scmp.lt.s32.totalorder %s9, 2
    // Predicated region
    $region21: #{dummy_model_forward.2} parent=5 // pred_check
      %p125 = pneg %p124
    $region22: #{dummy_model_forward.2} parent=5 // pred_check_branch
      %127 = sbr.rel (%p125) target = $region24
    $region23: #{dummy_model_forward.2} parent=5 // pred_region
      // Predicated region
      $region25: #{dummy_model_forward.2} parent=23 // pred_check
        %p128 = pneg %p29
      $region26: #{dummy_model_forward.2} parent=23 // pred_check_branch
        %130 = sbr.rel (%p128) target = $region28
      $region27: #{dummy_model_forward.2} parent=23 // pred_region
        %p131 = scmp.lt.s32.totalorder %s9, 1
        %s132 = scalar_select %p131, %s9, 1
        %s133 = smul.addr %s132, 123
        %s134 = smul.addr %s133, 4
        %s135 = scalar_lea.vmem %s0, %s134
      $region28: #{dummy_model_forward.2} parent=23 // pred_fallthru
        _
    $region24: #{dummy_model_forward.2} parent=5 // pred_fallthru
      _
    %p136 = scmp.le.s32.totalorder 1, %s9
    %p137 = scmp.lt.s32.totalorder %s9, 3
    %p138 = pnand %p136, %p137
    %p139 = pneg %p138
    // Predicated region
    $region29: #{dummy_model_forward.2} parent=5 // pred_check
      _
    $region30: #{dummy_model_forward.2} parent=5 // pred_check_branch
      %141 = sbr.rel (%p138) target = $region32
    $region31: #{dummy_model_forward.2} parent=5 // pred_region
      %s142 = ssub.s32 %s9, 1
      %p143 = scmp.lt.s32.totalorder %s14, 1
      %s144 = scalar_select %p143, %s14, 1
      %s145 = smul.addr %s144, 123
      %s146 = smul.addr %s145, 4
      %s147 = scalar_lea.vmem %s0, %s146
      %p148 = pneg %p35
      %p149 = pneg %p32
      %p150 = pneg %p56
      %p151 = pneg %p53
      %p152 = pneg %p77
      %p153 = pneg %p74
      %p154 = pneg %p103
      %p155 = pneg %p100
      %p156 = scmp.lt.s32.totalorder %s14, 1
      %s157 = scalar_select %p156, %s14, 1
      %s158 = smul.addr %s157, 41
      %s159 = smul.addr %s158, 4
      %s160 = scalar_lea.vmem %s3, %s159
      %p161 = scmp.lt.s32.totalorder %s14, 1
      %s162 = scalar_select %p161, %s14, 1
      %s163 = smul.addr %s162, 123
      %s164 = smul.addr %s163, 4
      %s165 = scalar_lea.vmem %s0, %s164
      %p166 = scmp.lt.s32.totalorder %s14, 1
      %s167 = scalar_select %p166, %s14, 1
      %s168 = smul.addr %s167, 41
      %s169 = smul.addr %s168, 4
      %s170 = scalar_lea.vmem %s3, %s169
      %v172 = vld [vmem:[%s1] sm:$0xf]
      %v173 = vld [vmem:[%s1 + $0x4] sm:$0xf]
      %v174 = vld [vmem:[%s1 + $0x8] sm:$0xf]
      %v175 = vld [vmem:[%s1 + $0xc] sm:$0xf]
      %v176 = vld [vmem:[%s1 + $0x10] sm:$0xf]
      %v177 = vld [vmem:[%s1 + $0x14] sm:$0xf]
      %v178 = vld [vmem:[%s1 + $0x18] sm:$0xf]
      %v179 = vld [vmem:[%s1 + $0x1c] sm:$0xf]
      %v180 = vld [vmem:[%s1 + $0x20] sm:$0xf]
      %v181 = vld [vmem:[%s1 + $0x24] sm:$0xf]
      %v182 = vld [vmem:[%s1 + $0x28] sm:$0xf]
      %v183 = vld [vmem:[%s1 + $0x2c] sm:$0xf]
      %v184 = vld [vmem:[%s1 + $0x30] sm:$0xf]
      %v185 = vld [vmem:[%s1 + $0x34] sm:$0xf]
      %v186 = vld [vmem:[%s1 + $0x38] sm:$0xf]
      %v187 = vld [vmem:[%s1 + $0x3c] sm:$0xf]
      %v188 = vld [vmem:[%s2] sm:$0x1]
      %v189 = vld [vmem:[%s165] sm:$0xf]
      %v190 = vld [vmem:[%s165 + $0x4] sm:$0xf]
      %v191 = vld [vmem:[%s165 + $0x8] sm:$0xf]
      %v192 = vld [vmem:[%s165 + $0xc] sm:$0xf]
      %v193 = vld [vmem:[%s165 + $0x10] sm:$0xf]
      %v194 = vld [vmem:[%s165 + $0x14] sm:$0xf]
      %v195 = vld [vmem:[%s165 + $0x18] sm:$0xf]
      %v196 = vld [vmem:[%s165 + $0x1c] sm:$0xf]
      %v197 = vld [vmem:[%s165 + $0x20] sm:$0xf]
      %v198 = vld [vmem:[%s165 + $0x24] sm:$0xf]
      %v199 = vld [vmem:[%s165 + $0x28] sm:$0xf]
      %v200 = vld [vmem:[%s165 + $0x2c] sm:$0xf]
      %v201 = vld [vmem:[%s165 + $0x30] sm:$0xf]
      %v202 = vld [vmem:[%s165 + $0x34] sm:$0xf]
      %v203 = vld [vmem:[%s165 + $0x38] sm:$0xf]
      %v204 = vld [vmem:[%s165 + $0x3c] sm:$0xf]
      %v205 = vld [vmem:[%s165 + $0x40] sm:$0xf]
      %v206 = vld [vmem:[%s165 + $0x44] sm:$0xf]
      %v207 = vld [vmem:[%s165 + $0x48] sm:$0xf]
      %v208 = vld [vmem:[%s165 + $0x4c] sm:$0xf]
      %v209 = vld [vmem:[%s165 + $0x50] sm:$0xf]
      %v210 = vld [vmem:[%s165 + $0x54] sm:$0xf]
      %v211 = vld [vmem:[%s165 + $0x58] sm:$0xf]
      %v212 = vld [vmem:[%s165 + $0x5c] sm:$0xf]
      %v213 = vld [vmem:[%s165 + $0x60] sm:$0xf]
      %v214 = vld [vmem:[%s165 + $0x64] sm:$0xf]
      %v215 = vld [vmem:[%s165 + $0x68] sm:$0xf]
      %v216 = vld [vmem:[%s165 + $0x6c] sm:$0xf]
      %v217 = vld [vmem:[%s165 + $0x70] sm:$0xf]
      %v218 = vld [vmem:[%s165 + $0x74] sm:$0xf]
      %v219 = vld [vmem:[%s165 + $0x78] sm:$0xf]
      %v220 = vld [vmem:[%s165 + $0x7c] sm:$0xf]
      %v221 = vld [vmem:[%s165 + $0x80] sm:$0xf]
      %v222 = vld [vmem:[%s165 + $0x84] sm:$0xf]
      %v223 = vld [vmem:[%s165 + $0x88] sm:$0xf]
      %v224 = vld [vmem:[%s165 + $0x8c] sm:$0xf]
      %v225 = vld [vmem:[%s165 + $0x90] sm:$0xf]
      %v226 = vld [vmem:[%s165 + $0x94] sm:$0xf]
      %v227 = vld [vmem:[%s165 + $0x98] sm:$0xf]
      %v228 = vld [vmem:[%s165 + $0x9c] sm:$0xf]
      %v229 = vld [vmem:[%s165 + $0xa0] sm:$0xf]
      %v231 = vlaneseq
      %v232 = vshrl.u32 %v231, 7
      %v233 = vsub.s32 0, %v232
      %v234 = vrot.slane %v188, %v233
      %v277 = vunpack.c.l.b16 %v189
      %v278 = vunpack.c.l.b16 %v190
      %v279 = vunpack.c.l.b16 %v191
      %v280 = vunpack.c.l.b16 %v192
      %v281 = vunpack.c.l.b16 %v193
      %v282 = vunpack.c.l.b16 %v194
      %v283 = vunpack.c.l.b16 %v195
      %v284 = vunpack.c.l.b16 %v196
      %v285 = vunpack.c.l.b16 %v197
      %v286 = vunpack.c.l.b16 %v198
      %v287 = vunpack.c.l.b16 %v199
      %v288 = vunpack.c.l.b16 %v200
      %v289 = vunpack.c.l.b16 %v201
      %v290 = vunpack.c.l.b16 %v202
      %v291 = vunpack.c.l.b16 %v203
      %v292 = vunpack.c.l.b16 %v204
      %v293 = vunpack.c.l.b16 %v205
      %v294 = vunpack.c.l.b16 %v206
      %v295 = vunpack.c.l.b16 %v207
      %v296 = vunpack.c.l.b16 %v208
      %v297 = vunpack.c.l.b16 %v209
      %v298 = vunpack.c.l.b16 %v210
      %v299 = vunpack.c.l.b16 %v211
      %v300 = vunpack.c.l.b16 %v212
      %v301 = vunpack.c.l.b16 %v213
      %v302 = vunpack.c.l.b16 %v214
      %v303 = vunpack.c.l.b16 %v215
      %v304 = vunpack.c.l.b16 %v216
      %v305 = vunpack.c.l.b16 %v217
      %v306 = vunpack.c.l.b16 %v218
      %v307 = vunpack.c.l.b16 %v219
      %v308 = vunpack.c.l.b16 %v220
      %v309 = vunpack.c.l.b16 %v221
      %v310 = vunpack.c.l.b16 %v222
      %v311 = vunpack.c.l.b16 %v223
      %v312 = vunpack.c.l.b16 %v224
      %v313 = vunpack.c.l.b16 %v225
      %v314 = vunpack.c.l.b16 %v226
      %v315 = vunpack.c.l.b16 %v227
      %v316 = vunpack.c.l.b16 %v228
      %v317 = vunpack.c.l.b16 %v229
      %v318 = vpack.c.b16 %v278, %v277
      %v319 = vpack.c.b16 %v280, %v279
      %v320 = vpack.c.b16 %v282, %v281
      %v321 = vpack.c.b16 %v284, %v283
      %v322 = vpack.c.b16 %v286, %v285
      %v323 = vpack.c.b16 %v288, %v287
      %v324 = vpack.c.b16 %v290, %v289
      %v325 = vpack.c.b16 %v292, %v291
      %v326 = vpack.c.b16 %v294, %v293
      %v327 = vpack.c.b16 %v296, %v295
      %v328 = vpack.c.b16 %v298, %v297
      %v329 = vpack.c.b16 %v300, %v299
      %v330 = vpack.c.b16 %v302, %v301
      %v331 = vpack.c.b16 %v304, %v303
      %v332 = vpack.c.b16 %v306, %v305
      %v333 = vpack.c.b16 %v308, %v307
      %v334 = vpack.c.b16 %v310, %v309
      %v335 = vpack.c.b16 %v312, %v311
      %v336 = vpack.c.b16 %v314, %v313
      %v337 = vpack.c.b16 %v316, %v315
      %v338 = vpack.c.b16 %v317, %v317
      %v376 = vunpack.c.l.b16 %v172
      %v377 = vunpack.c.l.b16 %v173
      %v378 = vunpack.c.l.b16 %v174
      %v379 = vunpack.c.l.b16 %v175
      %v380 = vunpack.c.l.b16 %v176
      %v381 = vunpack.c.l.b16 %v177
      %v382 = vunpack.c.l.b16 %v178
      %v383 = vunpack.c.l.b16 %v179
      %v384 = vunpack.c.l.b16 %v180
      %v385 = vunpack.c.l.b16 %v181
      %v386 = vunpack.c.l.b16 %v182
      %v387 = vunpack.c.l.b16 %v183
      %v388 = vunpack.c.l.b16 %v184
      %v389 = vunpack.c.l.b16 %v185
      %v390 = vunpack.c.l.b16 %v186
      %v391 = vunpack.c.l.b16 %v187
      %v392 = vpack.c.b16 %v377, %v376
      %v393 = vpack.c.b16 %v379, %v378
      %v394 = vpack.c.b16 %v381, %v380
      %v395 = vpack.c.b16 %v383, %v382
      %v396 = vpack.c.b16 %v385, %v384
      %v397 = vpack.c.b16 %v387, %v386
      %v398 = vpack.c.b16 %v389, %v388
      %v399 = vpack.c.b16 %v391, %v390
      %408 = vmatprep.subr.bf16.mxu0 0
      %409 = vmatpush1.bf16.msra.mxu0 %v392
      %410 = vmatprep.subr.bf16.mxu0 0
      %411 = vmatpush1.bf16.msra.mxu0 %v393
      %412 = vmatprep.subr.bf16.mxu0 0
      %413 = vmatpush1.bf16.msra.mxu0 %v394
      %414 = vmatprep.subr.bf16.mxu0 0
      %415 = vmatpush1.bf16.msra.mxu0 %v395
      %416 = vmatprep.subr.bf16.mxu0 0
      %417 = vmatpush1.bf16.msra.mxu0 %v396
      %418 = vmatprep.subr.bf16.mxu0 0
      %419 = vmatpush1.bf16.msra.mxu0 %v397
      %420 = vmatprep.subr.bf16.mxu0 0
      %421 = vmatpush1.bf16.msra.mxu0 %v398
      %422 = vmatprep.subr.bf16.mxu0 0
      %423 = vmatpush1.bf16.msra.mxu0 %v399
      %424 = vmatprep.subr.bf16.mxu0 0
      %425 = vmatpush1.bf16.msra.mxu0 0
      %426 = vmatprep.subr.bf16.mxu0 0
      %427 = vmatpush1.bf16.msra.mxu0 0
      %428 = vmatprep.subr.bf16.mxu0 0
      %429 = vmatpush1.bf16.msra.mxu0 0
      %430 = vmatprep.subr.bf16.mxu0 0
      %431 = vmatpush1.bf16.msra.mxu0 0
      %432 = vmatprep.subr.bf16.mxu0 0
      %433 = vmatpush1.bf16.msra.mxu0 0
      %434 = vmatprep.subr.bf16.mxu0 0
      %435 = vmatpush1.bf16.msra.mxu0 0
      %436 = vmatprep.subr.bf16.mxu0 0
      %437 = vmatpush1.bf16.msra.mxu0 0
      %438 = vmatprep.subr.bf16.mxu0 0
      %439 = vmatpush1.bf16.msra.mxu0 0
      %440 = vmatprep.mubr.bf16.mxu0 0
      %441 = vmatmul.mubr.bf16.gmra.mrb[0].mxu0 %v318
      %v442 = vpop.f32.mrb[0].mxu0
      %v443 = vadd.f32 %v234, %v442
      %v444 = vpop.f32.mrb[0].mxu0
      %v445 = vpop.f32.mrb[0].mxu0
      %v446 = vadd.f32 %v234, %v445
      %v447 = vpop.f32.mrb[0].mxu0
      %448 = vmatprep.mubr.bf16.mxu0 0
      %449 = vmatmul.mubr.bf16.gmra.mrb[0].mxu0 %v319
      %v450 = vpop.f32.mrb[0].mxu0
      %v451 = vadd.f32 %v234, %v450
      %v452 = vpop.f32.mrb[0].mxu0
      %v453 = vpop.f32.mrb[0].mxu0
      %v454 = vadd.f32 %v234, %v453
      %v455 = vpop.f32.mrb[0].mxu0
      %456 = vmatprep.mubr.bf16.mxu0 0
      %457 = vmatmul.mubr.bf16.gmra.mrb[0].mxu0 %v320
      %v458 = vpop.f32.mrb[0].mxu0
      %v459 = vadd.f32 %v234, %v458
      %v460 = vpop.f32.mrb[0].mxu0
      %v461 = vpop.f32.mrb[0].mxu0
      %v462 = vadd.f32 %v234, %v461
      %v463 = vpop.f32.mrb[0].mxu0
      %464 = vmatprep.mubr.bf16.mxu0 0
      %465 = vmatmul.mubr.bf16.gmra.mrb[0].mxu0 %v321
      %v466 = vpop.f32.mrb[0].mxu0
      %v467 = vadd.f32 %v234, %v466
      %v468 = vpop.f32.mrb[0].mxu0
      %v469 = vpop.f32.mrb[0].mxu0
      %v470 = vadd.f32 %v234, %v469
      %v471 = vpop.f32.mrb[0].mxu0
      %472 = vmatprep.mubr.bf16.mxu0 0
      %473 = vmatmul.mubr.bf16.gmra.mrb[0].mxu0 %v322
      %v474 = vpop.f32.mrb[0].mxu0
      %v475 = vadd.f32 %v234, %v474
      %v476 = vpop.f32.mrb[0].mxu0
      %v477 = vpop.f32.mrb[0].mxu0
      %v478 = vadd.f32 %v234, %v477
      %v479 = vpop.f32.mrb[0].mxu0
      %480 = vmatprep.mubr.bf16.mxu0 0
      %481 = vmatmul.mubr.bf16.gmra.mrb[0].mxu0 %v323
      %v482 = vpop.f32.mrb[0].mxu0
      %v483 = vadd.f32 %v234, %v482
      %v484 = vpop.f32.mrb[0].mxu0
      %v485 = vpop.f32.mrb[0].mxu0
      %v486 = vadd.f32 %v234, %v485
      %v487 = vpop.f32.mrb[0].mxu0
      %488 = vmatprep.mubr.bf16.mxu0 0
      %489 = vmatmul.mubr.bf16.gmra.mrb[0].mxu0 %v324
      %v490 = vpop.f32.mrb[0].mxu0
      %v491 = vadd.f32 %v234, %v490
      %v492 = vpop.f32.mrb[0].mxu0
      %v493 = vpop.f32.mrb[0].mxu0
      %v494 = vadd.f32 %v234, %v493
      %v495 = vpop.f32.mrb[0].mxu0
      %496 = vmatprep.mubr.bf16.mxu0 0
      %497 = vmatmul.mubr.bf16.gmra.mrb[0].mxu0 %v325
      %v498 = vpop.f32.mrb[0].mxu0
      %v499 = vadd.f32 %v234, %v498
      %v500 = vpop.f32.mrb[0].mxu0
      %v501 = vpop.f32.mrb[0].mxu0
      %v502 = vadd.f32 %v234, %v501
      %v503 = vpop.f32.mrb[0].mxu0
      %504 = vmatprep.mubr.bf16.mxu0 0
      %505 = vmatmul.mubr.bf16.gmra.mrb[0].mxu0 %v326
      %v506 = vpop.f32.mrb[0].mxu0
      %v507 = vadd.f32 %v234, %v506
      %v508 = vpop.f32.mrb[0].mxu0
      %v509 = vpop.f32.mrb[0].mxu0
      %v510 = vadd.f32 %v234, %v509
      %v511 = vpop.f32.mrb[0].mxu0
      %512 = vmatprep.mubr.bf16.mxu0 0
      %513 = vmatmul.mubr.bf16.gmra.mrb[0].mxu0 %v327
      %v514 = vpop.f32.mrb[0].mxu0
      %v515 = vadd.f32 %v234, %v514
      %v516 = vpop.f32.mrb[0].mxu0
      %v517 = vpop.f32.mrb[0].mxu0
      %v518 = vadd.f32 %v234, %v517
      %v519 = vpop.f32.mrb[0].mxu0
      %520 = vmatprep.mubr.bf16.mxu0 0
      %521 = vmatmul.mubr.bf16.gmra.mrb[0].mxu0 %v328
      %v522 = vpop.f32.mrb[0].mxu0
      %v523 = vadd.f32 %v234, %v522
      %v524 = vpop.f32.mrb[0].mxu0
      %v525 = vpop.f32.mrb[0].mxu0
      %v526 = vadd.f32 %v234, %v525
      %v527 = vpop.f32.mrb[0].mxu0
      %528 = vmatprep.mubr.bf16.mxu0 0
      %529 = vmatmul.mubr.bf16.gmra.mrb[0].mxu0 %v329
      %v530 = vpop.f32.mrb[0].mxu0
      %v531 = vadd.f32 %v234, %v530
      %v532 = vpop.f32.mrb[0].mxu0
      %v533 = vpop.f32.mrb[0].mxu0
      %v534 = vadd.f32 %v234, %v533
      %v535 = vpop.f32.mrb[0].mxu0
      %536 = vmatprep.mubr.bf16.mxu0 0
      %537 = vmatmul.mubr.bf16.gmra.mrb[0].mxu0 %v330
      %v538 = vpop.f32.mrb[0].mxu0
      %v539 = vadd.f32 %v234, %v538
      %v540 = vpop.f32.mrb[0].mxu0
      %v541 = vpop.f32.mrb[0].mxu0
      %v542 = vadd.f32 %v234, %v541
      %v543 = vpop.f32.mrb[0].mxu0
      %544 = vmatprep.mubr.bf16.mxu0 0
      %545 = vmatmul.mubr.bf16.gmra.mrb[0].mxu0 %v331
      %v546 = vpop.f32.mrb[0].mxu0
      %v547 = vadd.f32 %v234, %v546
      %v548 = vpop.f32.mrb[0].mxu0
      %v549 = vpop.f32.mrb[0].mxu0
      %v550 = vadd.f32 %v234, %v549
      %v551 = vpop.f32.mrb[0].mxu0
      %552 = vmatprep.mubr.bf16.mxu0 0
      %553 = vmatmul.mubr.bf16.gmra.mrb[0].mxu0 %v332
      %v554 = vpop.f32.mrb[0].mxu0
      %v555 = vadd.f32 %v234, %v554
      %v556 = vpop.f32.mrb[0].mxu0
      %v557 = vpop.f32.mrb[0].mxu0
      %v558 = vadd.f32 %v234, %v557
      %v559 = vpop.f32.mrb[0].mxu0
      %560 = vmatprep.mubr.bf16.mxu0 0
      %561 = vmatmul.mubr.bf16.gmra.mrb[0].mxu0 %v333
      %v562 = vpop.f32.mrb[0].mxu0
      %v563 = vadd.f32 %v234, %v562
      %v564 = vpop.f32.mrb[0].mxu0
      %v565 = vpop.f32.mrb[0].mxu0
      %v566 = vadd.f32 %v234, %v565
      %v567 = vpop.f32.mrb[0].mxu0
      %568 = vmatprep.mubr.bf16.mxu0 0
      %569 = vmatmul.mubr.bf16.gmra.mrb[0].mxu0 %v334
      %v570 = vpop.f32.mrb[0].mxu0
      %v571 = vadd.f32 %v234, %v570
      %v572 = vpop.f32.mrb[0].mxu0
      %v573 = vpop.f32.mrb[0].mxu0
      %v574 = vadd.f32 %v234, %v573
      %v575 = vpop.f32.mrb[0].mxu0
      %576 = vmatprep.mubr.bf16.mxu0 0
      %577 = vmatmul.mubr.bf16.gmra.mrb[0].mxu0 %v335
      %v578 = vpop.f32.mrb[0].mxu0
      %v579 = vadd.f32 %v234, %v578
      %v580 = vpop.f32.mrb[0].mxu0
      %v581 = vpop.f32.mrb[0].mxu0
      %v582 = vadd.f32 %v234, %v581
      %v583 = vpop.f32.mrb[0].mxu0
      %584 = vmatprep.mubr.bf16.mxu0 0
      %585 = vmatmul.mubr.bf16.gmra.mrb[0].mxu0 %v336
      %v586 = vpop.f32.mrb[0].mxu0
      %v587 = vadd.f32 %v234, %v586
      %v588 = vpop.f32.mrb[0].mxu0
      %v589 = vpop.f32.mrb[0].mxu0
      %v590 = vadd.f32 %v234, %v589
      %v591 = vpop.f32.mrb[0].mxu0
      %592 = vmatprep.mubr.bf16.mxu0 0
      %593 = vmatmul.mubr.bf16.gmra.mrb[0].mxu0 %v337
      %v594 = vpop.f32.mrb[0].mxu0
      %v595 = vadd.f32 %v234, %v594
      %v596 = vpop.f32.mrb[0].mxu0
      %v597 = vpop.f32.mrb[0].mxu0
      %v598 = vadd.f32 %v234, %v597
      %v599 = vpop.f32.mrb[0].mxu0
      %600 = vmatprep.mubr.bf16.mxu0 0
      %601 = vmatmul.mubr.bf16.gmra.mrb[0].mxu0 %v338
      %v602 = vpop.f32.mrb[0].mxu0
      %v603 = vadd.f32 %v234, %v602
      %v604 = vpop.f32.mrb[0].mxu0
      %v605 = vpop.f32.mrb[0].mxu0
      %v606 = vpop.f32.mrb[0].mxu0
      %607 = vdwg.mxu0
      %v608 = vmax.f32 %v443, 0.0
      %v609 = vmax.f32 %v446, 0.0
      %v610 = vmax.f32 %v451, 0.0
      %v611 = vmax.f32 %v454, 0.0
      %v612 = vmax.f32 %v459, 0.0
      %v613 = vmax.f32 %v462, 0.0
      %v614 = vmax.f32 %v467, 0.0
      %v615 = vmax.f32 %v470, 0.0
      %v616 = vmax.f32 %v475, 0.0
      %v617 = vmax.f32 %v478, 0.0
      %v618 = vmax.f32 %v483, 0.0
      %v619 = vmax.f32 %v486, 0.0
      %v620 = vmax.f32 %v491, 0.0
      %v621 = vmax.f32 %v494, 0.0
      %v622 = vmax.f32 %v499, 0.0
      %v623 = vmax.f32 %v502, 0.0
      %v624 = vmax.f32 %v507, 0.0
      %v625 = vmax.f32 %v510, 0.0
      %v626 = vmax.f32 %v515, 0.0
      %v627 = vmax.f32 %v518, 0.0
      %v628 = vmax.f32 %v523, 0.0
      %v629 = vmax.f32 %v526, 0.0
      %v630 = vmax.f32 %v531, 0.0
      %v631 = vmax.f32 %v534, 0.0
      %v632 = vmax.f32 %v539, 0.0
      %v633 = vmax.f32 %v542, 0.0
      %v634 = vmax.f32 %v547, 0.0
      %v635 = vmax.f32 %v550, 0.0
      %v636 = vmax.f32 %v555, 0.0
      %v637 = vmax.f32 %v558, 0.0
      %v638 = vmax.f32 %v563, 0.0
      %v639 = vmax.f32 %v566, 0.0
      %v640 = vmax.f32 %v571, 0.0
      %v641 = vmax.f32 %v574, 0.0
      %v642 = vmax.f32 %v579, 0.0
      %v643 = vmax.f32 %v582, 0.0
      %v644 = vmax.f32 %v587, 0.0
      %v645 = vmax.f32 %v590, 0.0
      %v646 = vmax.f32 %v595, 0.0
      %v647 = vmax.f32 %v598, 0.0
      %v648 = vmax.f32 %v603, 0.0
      %v649 = vld [vmem:[%s165 + $0xa4] sm:$0xf]
      %v650 = vld [vmem:[%s165 + $0xa8] sm:$0xf]
      %v651 = vld [vmem:[%s165 + $0xac] sm:$0xf]
      %v652 = vld [vmem:[%s165 + $0xb0] sm:$0xf]
      %v653 = vld [vmem:[%s165 + $0xb4] sm:$0xf]
      %v654 = vld [vmem:[%s165 + $0xb8] sm:$0xf]
      %v655 = vld [vmem:[%s165 + $0xbc] sm:$0xf]
      %v656 = vld [vmem:[%s165 + $0xc0] sm:$0xf]
      %v657 = vld [vmem:[%s165 + $0xc4] sm:$0xf]
      %v658 = vld [vmem:[%s165 + $0xc8] sm:$0xf]
      %v659 = vld [vmem:[%s165 + $0xcc] sm:$0xf]
      %v660 = vld [vmem:[%s165 + $0xd0] sm:$0xf]
      %v661 = vld [vmem:[%s165 + $0xd4] sm:$0xf]
      %v662 = vld [vmem:[%s165 + $0xd8] sm:$0xf]
      %v663 = vld [vmem:[%s165 + $0xdc] sm:$0xf]
      %v664 = vld [vmem:[%s165 + $0xe0] sm:$0xf]
      %v665 = vld [vmem:[%s165 + $0xe4] sm:$0xf]
      %v666 = vld [vmem:[%s165 + $0xe8] sm:$0xf]
      %v667 = vld [vmem:[%s165 + $0xec] sm:$0xf]
      %v668 = vld [vmem:[%s165 + $0xf0] sm:$0xf]
      %v669 = vld [vmem:[%s165 + $0xf4] sm:$0xf]
      %v670 = vld [vmem:[%s165 + $0xf8] sm:$0xf]
      %v671 = vld [vmem:[%s165 + $0xfc] sm:$0xf]
      %v672 = vld [vmem:[%s165 + $0x100] sm:$0xf]
      %v673 = vld [vmem:[%s165 + $0x104] sm:$0xf]
      %v674 = vld [vmem:[%s165 + $0x108] sm:$0xf]
      %v675 = vld [vmem:[%s165 + $0x10c] sm:$0xf]
      %v676 = vld [vmem:[%s165 + $0x110] sm:$0xf]
      %v677 = vld [vmem:[%s165 + $0x114] sm:$0xf]
      %v678 = vld [vmem:[%s165 + $0x118] sm:$0xf]
      %v679 = vld [vmem:[%s165 + $0x11c] sm:$0xf]
      %v680 = vld [vmem:[%s165 + $0x120] sm:$0xf]
      %v681 = vld [vmem:[%s165 + $0x124] sm:$0xf]
      %v682 = vld [vmem:[%s165 + $0x128] sm:$0xf]
      %v683 = vld [vmem:[%s165 + $0x12c] sm:$0xf]
      %v684 = vld [vmem:[%s165 + $0x130] sm:$0xf]
      %v685 = vld [vmem:[%s165 + $0x134] sm:$0xf]
      %v686 = vld [vmem:[%s165 + $0x138] sm:$0xf]
      %v687 = vld [vmem:[%s165 + $0x13c] sm:$0xf]
      %v688 = vld [vmem:[%s165 + $0x140] sm:$0xf]
      %v689 = vld [vmem:[%s165 + $0x144] sm:$0xf]
      %v731 = vunpack.c.l.b16 %v649
      %v732 = vunpack.c.l.b16 %v650
      %v733 = vunpack.c.l.b16 %v651
      %v734 = vunpack.c.l.b16 %v652
      %v735 = vunpack.c.l.b16 %v653
      %v736 = vunpack.c.l.b16 %v654
      %v737 = vunpack.c.l.b16 %v655
      %v738 = vunpack.c.l.b16 %v656
      %v739 = vunpack.c.l.b16 %v657
      %v740 = vunpack.c.l.b16 %v658
      %v741 = vunpack.c.l.b16 %v659
      %v742 = vunpack.c.l.b16 %v660
      %v743 = vunpack.c.l.b16 %v661
      %v744 = vunpack.c.l.b16 %v662
      %v745 = vunpack.c.l.b16 %v663
      %v746 = vunpack.c.l.b16 %v664
      %v747 = vunpack.c.l.b16 %v665
      %v748 = vunpack.c.l.b16 %v666
      %v749 = vunpack.c.l.b16 %v667
      %v750 = vunpack.c.l.b16 %v668
      %v751 = vunpack.c.l.b16 %v669
      %v752 = vunpack.c.l.b16 %v670
      %v753 = vunpack.c.l.b16 %v671
      %v754 = vunpack.c.l.b16 %v672
      %v755 = vunpack.c.l.b16 %v673
      %v756 = vunpack.c.l.b16 %v674
      %v757 = vunpack.c.l.b16 %v675
      %v758 = vunpack.c.l.b16 %v676
      %v759 = vunpack.c.l.b16 %v677
      %v760 = vunpack.c.l.b16 %v678
      %v761 = vunpack.c.l.b16 %v679
      %v762 = vunpack.c.l.b16 %v680
      %v763 = vunpack.c.l.b16 %v681
      %v764 = vunpack.c.l.b16 %v682
      %v765 = vunpack.c.l.b16 %v683
      %v766 = vunpack.c.l.b16 %v684
      %v767 = vunpack.c.l.b16 %v685
      %v768 = vunpack.c.l.b16 %v686
      %v769 = vunpack.c.l.b16 %v687
      %v770 = vunpack.c.l.b16 %v688
      %v771 = vunpack.c.l.b16 %v689
      %v772 = vpack.c.b16 %v732, %v731
      %v773 = vpack.c.b16 %v734, %v733
      %v774 = vpack.c.b16 %v736, %v735
      %v775 = vpack.c.b16 %v738, %v737
      %v776 = vpack.c.b16 %v740, %v739
      %v777 = vpack.c.b16 %v742, %v741
      %v778 = vpack.c.b16 %v744, %v743
      %v779 = vpack.c.b16 %v746, %v745
      %v780 = vpack.c.b16 %v748, %v747
      %v781 = vpack.c.b16 %v750, %v749
      %v782 = vpack.c.b16 %v752, %v751
      %v783 = vpack.c.b16 %v754, %v753
      %v784 = vpack.c.b16 %v756, %v755
      %v785 = vpack.c.b16 %v758, %v757
      %v786 = vpack.c.b16 %v760, %v759
      %v787 = vpack.c.b16 %v762, %v761
      %v788 = vpack.c.b16 %v764, %v763
      %v789 = vpack.c.b16 %v766, %v765
      %v790 = vpack.c.b16 %v768, %v767
      %v791 = vpack.c.b16 %v770, %v769
      %v792 = vpack.c.b16 %v771, %v771
      %814 = vmatprep.subr.bf16.mxu0 0
      %815 = vmatpush1.bf16.msra.mxu0 %v392
      %816 = vmatprep.subr.bf16.mxu0 0
      %817 = vmatpush1.bf16.msra.mxu0 %v393
      %818 = vmatprep.subr.bf16.mxu0 0
      %819 = vmatpush1.bf16.msra.mxu0 %v394
      %820 = vmatprep.subr.bf16.mxu0 0
      %821 = vmatpush1.bf16.msra.mxu0 %v395
      %822 = vmatprep.subr.bf16.mxu0 0
      %823 = vmatpush1.bf16.msra.mxu0 %v396
      %824 = vmatprep.subr.bf16.mxu0 0
      %825 = vmatpush1.bf16.msra.mxu0 %v397
      %826 = vmatprep.subr.bf16.mxu0 0
      %827 = vmatpush1.bf16.msra.mxu0 %v398
      %828 = vmatprep.subr.bf16.mxu0 0
      %829 = vmatpush1.bf16.msra.mxu0 %v399
      %830 = vmatprep.subr.bf16.mxu0 0
      %831 = vmatpush1.bf16.msra.mxu0 0
      %832 = vmatprep.subr.bf16.mxu0 0
      %833 = vmatpush1.bf16.msra.mxu0 0
      %834 = vmatprep.subr.bf16.mxu0 0
      %835 = vmatpush1.bf16.msra.mxu0 0
      %836 = vmatprep.subr.bf16.mxu0 0
      %837 = vmatpush1.bf16.msra.mxu0 0
      %838 = vmatprep.subr.bf16.mxu0 0
      %839 = vmatpush1.bf16.msra.mxu0 0
      %840 = vmatprep.subr.bf16.mxu0 0
      %841 = vmatpush1.bf16.msra.mxu0 0
      %842 = vmatprep.subr.bf16.mxu0 0
      %843 = vmatpush1.bf16.msra.mxu0 0
      %844 = vmatprep.subr.bf16.mxu0 0
      %845 = vmatpush1.bf16.msra.mxu0 0
      %846 = vmatprep.mubr.bf16.mxu0 0
      %847 = vmatmul.mubr.bf16.gmra.mrb[0].mxu0 %v772
      %v848 = vpop.f32.mrb[0].mxu0
      %v849 = vadd.f32 %v234, %v848
      %v850 = vpop.f32.mrb[0].mxu0
      %v851 = vpop.f32.mrb[0].mxu0
      %v852 = vadd.f32 %v234, %v851
      %v853 = vpop.f32.mrb[0].mxu0
      %854 = vmatprep.mubr.bf16.mxu0 0
      %855 = vmatmul.mubr.bf16.gmra.mrb[0].mxu0 %v773
      %v856 = vpop.f32.mrb[0].mxu0
      %v857 = vadd.f32 %v234, %v856
      %v858 = vpop.f32.mrb[0].mxu0
      %v859 = vpop.f32.mrb[0].mxu0
      %v860 = vadd.f32 %v234, %v859
      %v861 = vpop.f32.mrb[0].mxu0
      %862 = vmatprep.mubr.bf16.mxu0 0
      %863 = vmatmul.mubr.bf16.gmra.mrb[0].mxu0 %v774
      %v864 = vpop.f32.mrb[0].mxu0
      %v865 = vadd.f32 %v234, %v864
      %v866 = vpop.f32.mrb[0].mxu0
      %v867 = vpop.f32.mrb[0].mxu0
      %v868 = vadd.f32 %v234, %v867
      %v869 = vpop.f32.mrb[0].mxu0
      %870 = vmatprep.mubr.bf16.mxu0 0
      %871 = vmatmul.mubr.bf16.gmra.mrb[0].mxu0 %v775
      %v872 = vpop.f32.mrb[0].mxu0
      %v873 = vadd.f32 %v234, %v872
      %v874 = vpop.f32.mrb[0].mxu0
      %v875 = vpop.f32.mrb[0].mxu0
      %v876 = vadd.f32 %v234, %v875
      %v877 = vpop.f32.mrb[0].mxu0
      %878 = vmatprep.mubr.bf16.mxu0 0
      %879 = vmatmul.mubr.bf16.gmra.mrb[0].mxu0 %v776
      %v880 = vpop.f32.mrb[0].mxu0
      %v881 = vadd.f32 %v234, %v880
      %v882 = vpop.f32.mrb[0].mxu0
      %v883 = vpop.f32.mrb[0].mxu0
      %v884 = vadd.f32 %v234, %v883
      %v885 = vpop.f32.mrb[0].mxu0
      %886 = vmatprep.mubr.bf16.mxu0 0
      %887 = vmatmul.mubr.bf16.gmra.mrb[0].mxu0 %v777
      %v888 = vpop.f32.mrb[0].mxu0
      %v889 = vadd.f32 %v234, %v888
      %v890 = vpop.f32.mrb[0].mxu0
      %v891 = vpop.f32.mrb[0].mxu0
      %v892 = vadd.f32 %v234, %v891
      %v893 = vpop.f32.mrb[0].mxu0
      %894 = vmatprep.mubr.bf16.mxu0 0
      %895 = vmatmul.mubr.bf16.gmra.mrb[0].mxu0 %v778
      %v896 = vpop.f32.mrb[0].mxu0
      %v897 = vadd.f32 %v234, %v896
      %v898 = vpop.f32.mrb[0].mxu0
      %v899 = vpop.f32.mrb[0].mxu0
      %v900 = vadd.f32 %v234, %v899
      %v901 = vpop.f32.mrb[0].mxu0
      %902 = vmatprep.mubr.bf16.mxu0 0
      %903 = vmatmul.mubr.bf16.gmra.mrb[0].mxu0 %v779
      %v904 = vpop.f32.mrb[0].mxu0
      %v905 = vadd.f32 %v234, %v904
      %v906 = vpop.f32.mrb[0].mxu0
      %v907 = vpop.f32.mrb[0].mxu0
      %v908 = vadd.f32 %v234, %v907
      %v909 = vpop.f32.mrb[0].mxu0
      %910 = vmatprep.mubr.bf16.mxu0 0
      %911 = vmatmul.mubr.bf16.gmra.mrb[0].mxu0 %v780
      %v912 = vpop.f32.mrb[0].mxu0
      %v913 = vadd.f32 %v234, %v912
      %v914 = vpop.f32.mrb[0].mxu0
      %v915 = vpop.f32.mrb[0].mxu0
      %v916 = vadd.f32 %v234, %v915
      %v917 = vpop.f32.mrb[0].mxu0
      %918 = vmatprep.mubr.bf16.mxu0 0
      %919 = vmatmul.mubr.bf16.gmra.mrb[0].mxu0 %v781
      %v920 = vpop.f32.mrb[0].mxu0
      %v921 = vadd.f32 %v234, %v920
      %v922 = vpop.f32.mrb[0].mxu0
      %v923 = vpop.f32.mrb[0].mxu0
      %v924 = vadd.f32 %v234, %v923
      %v925 = vpop.f32.mrb[0].mxu0
      %926 = vmatprep.mubr.bf16.mxu0 0
      %927 = vmatmul.mubr.bf16.gmra.mrb[0].mxu0 %v782
      %v928 = vpop.f32.mrb[0].mxu0
      %v929 = vadd.f32 %v234, %v928
      %v930 = vpop.f32.mrb[0].mxu0
      %v931 = vpop.f32.mrb[0].mxu0
      %v932 = vadd.f32 %v234, %v931
      %v933 = vpop.f32.mrb[0].mxu0
      %934 = vmatprep.mubr.bf16.mxu0 0
      %935 = vmatmul.mubr.bf16.gmra.mrb[0].mxu0 %v783
      %v936 = vpop.f32.mrb[0].mxu0
      %v937 = vadd.f32 %v234, %v936
      %v938 = vpop.f32.mrb[0].mxu0
      %v939 = vpop.f32.mrb[0].mxu0
      %v940 = vadd.f32 %v234, %v939
      %v941 = vpop.f32.mrb[0].mxu0
      %942 = vmatprep.mubr.bf16.mxu0 0
      %943 = vmatmul.mubr.bf16.gmra.mrb[0].mxu0 %v784
      %v944 = vpop.f32.mrb[0].mxu0
      %v945 = vadd.f32 %v234, %v944
      %v946 = vpop.f32.mrb[0].mxu0
      %v947 = vpop.f32.mrb[0].mxu0
      %v948 = vadd.f32 %v234, %v947
      %v949 = vpop.f32.mrb[0].mxu0
      %950 = vmatprep.mubr.bf16.mxu0 0
      %951 = vmatmul.mubr.bf16.gmra.mrb[0].mxu0 %v785
      %v952 = vpop.f32.mrb[0].mxu0
      %v953 = vadd.f32 %v234, %v952
      %v954 = vpop.f32.mrb[0].mxu0
      %v955 = vpop.f32.mrb[0].mxu0
      %v956 = vadd.f32 %v234, %v955
      %v957 = vpop.f32.mrb[0].mxu0
      %958 = vmatprep.mubr.bf16.mxu0 0
      %959 = vmatmul.mubr.bf16.gmra.mrb[0].mxu0 %v786
      %v960 = vpop.f32.mrb[0].mxu0
      %v961 = vadd.f32 %v234, %v960
      %v962 = vpop.f32.mrb[0].mxu0
      %v963 = vpop.f32.mrb[0].mxu0
      %v964 = vadd.f32 %v234, %v963
      %v965 = vpop.f32.mrb[0].mxu0
      %966 = vmatprep.mubr.bf16.mxu0 0
      %967 = vmatmul.mubr.bf16.gmra.mrb[0].mxu0 %v787
      %v968 = vpop.f32.mrb[0].mxu0
      %v969 = vadd.f32 %v234, %v968
      %v970 = vpop.f32.mrb[0].mxu0
      %v971 = vpop.f32.mrb[0].mxu0
      %v972 = vadd.f32 %v234, %v971
      %v973 = vpop.f32.mrb[0].mxu0
      %974 = vmatprep.mubr.bf16.mxu0 0
      %975 = vmatmul.mubr.bf16.gmra.mrb[0].mxu0 %v788
      %v976 = vpop.f32.mrb[0].mxu0
      %v977 = vadd.f32 %v234, %v976
      %v978 = vpop.f32.mrb[0].mxu0
      %v979 = vpop.f32.mrb[0].mxu0
      %v980 = vadd.f32 %v234, %v979
      %v981 = vpop.f32.mrb[0].mxu0
      %982 = vmatprep.mubr.bf16.mxu0 0
      %983 = vmatmul.mubr.bf16.gmra.mrb[0].mxu0 %v789
      %v984 = vpop.f32.mrb[0].mxu0
      %v985 = vadd.f32 %v234, %v984
      %v986 = vpop.f32.mrb[0].mxu0
      %v987 = vpop.f32.mrb[0].mxu0
      %v988 = vadd.f32 %v234, %v987
      %v989 = vpop.f32.mrb[0].mxu0
      %990 = vmatprep.mubr.bf16.mxu0 0
      %991 = vmatmul.mubr.bf16.gmra.mrb[0].mxu0 %v790
      %v992 = vpop.f32.mrb[0].mxu0
      %v993 = vadd.f32 %v234, %v992
      %v994 = vpop.f32.mrb[0].mxu0
      %v995 = vpop.f32.mrb[0].mxu0
      %v996 = vadd.f32 %v234, %v995
      %v997 = vpop.f32.mrb[0].mxu0
      %998 = vmatprep.mubr.bf16.mxu0 0
      %999 = vmatmul.mubr.bf16.gmra.mrb[0].mxu0 %v791
      %v1000 = vpop.f32.mrb[0].mxu0
      %v1001 = vadd.f32 %v234, %v1000
      %v1002 = vpop.f32.mrb[0].mxu0
      %v1003 = vpop.f32.mrb[0].mxu0
      %v1004 = vadd.f32 %v234, %v1003
      %v1005 = vpop.f32.mrb[0].mxu0
      %1006 = vmatprep.mubr.bf16.mxu0 0
      %1007 = vmatmul.mubr.bf16.gmra.mrb[0].mxu0 %v792
      %v1008 = vpop.f32.mrb[0].mxu0
      %v1009 = vadd.f32 %v234, %v1008
      %v1010 = vpop.f32.mrb[0].mxu0
      %v1011 = vpop.f32.mrb[0].mxu0
      %v1012 = vpop.f32.mrb[0].mxu0
      %1013 = vdwg.mxu0
      %v1014 = vmax.f32 %v849, 0.0
      %v1015 = vmax.f32 %v852, 0.0
      %v1016 = vmax.f32 %v857, 0.0
      %v1017 = vmax.f32 %v860, 0.0
      %v1018 = vmax.f32 %v865, 0.0
      %v1019 = vmax.f32 %v868, 0.0
      %v1020 = vmax.f32 %v873, 0.0
      %v1021 = vmax.f32 %v876, 0.0
      %v1022 = vmax.f32 %v881, 0.0
      %v1023 = vmax.f32 %v884, 0.0
      %v1024 = vmax.f32 %v889, 0.0
      %v1025 = vmax.f32 %v892, 0.0
      %v1026 = vmax.f32 %v897, 0.0
      %v1027 = vmax.f32 %v900, 0.0
      %v1028 = vmax.f32 %v905, 0.0
      %v1029 = vmax.f32 %v908, 0.0
      %v1030 = vmax.f32 %v913, 0.0
      %v1031 = vmax.f32 %v916, 0.0
      %v1032 = vmax.f32 %v921, 0.0
      %v1033 = vmax.f32 %v924, 0.0
      %v1034 = vmax.f32 %v929, 0.0
      %v1035 = vmax.f32 %v932, 0.0
      %v1036 = vmax.f32 %v937, 0.0
      %v1037 = vmax.f32 %v940, 0.0
      %v1038 = vmax.f32 %v945, 0.0
      %v1039 = vmax.f32 %v948, 0.0
      %v1040 = vmax.f32 %v953, 0.0
      %v1041 = vmax.f32 %v956, 0.0
      %v1042 = vmax.f32 %v961, 0.0
      %v1043 = vmax.f32 %v964, 0.0
      %v1044 = vmax.f32 %v969, 0.0
      %v1045 = vmax.f32 %v972, 0.0
      %v1046 = vmax.f32 %v977, 0.0
      %v1047 = vmax.f32 %v980, 0.0
      %v1048 = vmax.f32 %v985, 0.0
      %v1049 = vmax.f32 %v988, 0.0
      %v1050 = vmax.f32 %v993, 0.0
      %v1051 = vmax.f32 %v996, 0.0
      %v1052 = vmax.f32 %v1001, 0.0
      %v1053 = vmax.f32 %v1004, 0.0
      %v1054 = vmax.f32 %v1009, 0.0
      %v1055 = vmax.f32 %v608, %v1014
      %v1056 = vmax.f32 %v609, %v1015
      %v1057 = vmax.f32 %v610, %v1016
      %v1058 = vmax.f32 %v611, %v1017
      %v1059 = vmax.f32 %v612, %v1018
      %v1060 = vmax.f32 %v613, %v1019
      %v1061 = vmax.f32 %v614, %v1020
      %v1062 = vmax.f32 %v615, %v1021
      %v1063 = vmax.f32 %v616, %v1022
      %v1064 = vmax.f32 %v617, %v1023
      %v1065 = vmax.f32 %v618, %v1024
      %v1066 = vmax.f32 %v619, %v1025
      %v1067 = vmax.f32 %v620, %v1026
      %v1068 = vmax.f32 %v621, %v1027
      %v1069 = vmax.f32 %v622, %v1028
      %v1070 = vmax.f32 %v623, %v1029
      %v1071 = vmax.f32 %v624, %v1030
      %v1072 = vmax.f32 %v625, %v1031
      %v1073 = vmax.f32 %v626, %v1032
      %v1074 = vmax.f32 %v627, %v1033
      %v1075 = vmax.f32 %v628, %v1034
      %v1076 = vmax.f32 %v629, %v1035
      %v1077 = vmax.f32 %v630, %v1036
      %v1078 = vmax.f32 %v631, %v1037
      %v1079 = vmax.f32 %v632, %v1038
      %v1080 = vmax.f32 %v633, %v1039
      %v1081 = vmax.f32 %v634, %v1040
      %v1082 = vmax.f32 %v635, %v1041
      %v1083 = vmax.f32 %v636, %v1042
      %v1084 = vmax.f32 %v637, %v1043
      %v1085 = vmax.f32 %v638, %v1044
      %v1086 = vmax.f32 %v639, %v1045
      %v1087 = vmax.f32 %v640, %v1046
      %v1088 = vmax.f32 %v641, %v1047
      %v1089 = vmax.f32 %v642, %v1048
      %v1090 = vmax.f32 %v643, %v1049
      %v1091 = vmax.f32 %v644, %v1050
      %v1092 = vmax.f32 %v645, %v1051
      %v1093 = vmax.f32 %v646, %v1052
      %v1094 = vmax.f32 %v647, %v1053
      %v1095 = vmax.f32 %v648, %v1054
      %v1096 = vld [vmem:[%s165 + $0x148] sm:$0xf]
      %v1097 = vld [vmem:[%s165 + $0x14c] sm:$0xf]
      %v1098 = vld [vmem:[%s165 + $0x150] sm:$0xf]
      %v1099 = vld [vmem:[%s165 + $0x154] sm:$0xf]
      %v1100 = vld [vmem:[%s165 + $0x158] sm:$0xf]
      %v1101 = vld [vmem:[%s165 + $0x15c] sm:$0xf]
      %v1102 = vld [vmem:[%s165 + $0x160] sm:$0xf]
      %v1103 = vld [vmem:[%s165 + $0x164] sm:$0xf]
      %v1104 = vld [vmem:[%s165 + $0x168] sm:$0xf]
      %v1105 = vld [vmem:[%s165 + $0x16c] sm:$0xf]
      %v1106 = vld [vmem:[%s165 + $0x170] sm:$0xf]
      %v1107 = vld [vmem:[%s165 + $0x174] sm:$0xf]
      %v1108 = vld [vmem:[%s165 + $0x178] sm:$0xf]
      %v1109 = vld [vmem:[%s165 + $0x17c] sm:$0xf]
      %v1110 = vld [vmem:[%s165 + $0x180] sm:$0xf]
      %v1111 = vld [vmem:[%s165 + $0x184] sm:$0xf]
      %v1112 = vld [vmem:[%s165 + $0x188] sm:$0xf]
      %v1113 = vld [vmem:[%s165 + $0x18c] sm:$0xf]
      %v1114 = vld [vmem:[%s165 + $0x190] sm:$0xf]
      %v1115 = vld [vmem:[%s165 + $0x194] sm:$0xf]
      %v1116 = vld [vmem:[%s165 + $0x198] sm:$0xf]
      %v1117 = vld [vmem:[%s165 + $0x19c] sm:$0xf]
      %v1118 = vld [vmem:[%s165 + $0x1a0] sm:$0xf]
      %v1119 = vld [vmem:[%s165 + $0x1a4] sm:$0xf]
      %v1120 = vld [vmem:[%s165 + $0x1a8] sm:$0xf]
      %v1121 = vld [vmem:[%s165 + $0x1ac] sm:$0xf]
      %v1122 = vld [vmem:[%s165 + $0x1b0] sm:$0xf]
      %v1123 = vld [vmem:[%s165 + $0x1b4] sm:$0xf]
      %v1124 = vld [vmem:[%s165 + $0x1b8] sm:$0xf]
      %v1125 = vld [vmem:[%s165 + $0x1bc] sm:$0xf]
      %v1126 = vld [vmem:[%s165 + $0x1c0] sm:$0xf]
      %v1127 = vld [vmem:[%s165 + $0x1c4] sm:$0xf]
      %v1128 = vld [vmem:[%s165 + $0x1c8] sm:$0xf]
      %v1129 = vld [vmem:[%s165 + $0x1cc] sm:$0xf]
      %v1130 = vld [vmem:[%s165 + $0x1d0] sm:$0xf]
      %v1131 = vld [vmem:[%s165 + $0x1d4] sm:$0xf]
      %v1132 = vld [vmem:[%s165 + $0x1d8] sm:$0xf]
      %v1133 = vld [vmem:[%s165 + $0x1dc] sm:$0xf]
      %v1134 = vld [vmem:[%s165 + $0x1e0] sm:$0xf]
      %v1135 = vld [vmem:[%s165 + $0x1e4] sm:$0xf]
      %v1136 = vld [vmem:[%s165 + $0x1e8] sm:$0xf]
      %v1178 = vunpack.c.l.b16 %v1096
      %v1179 = vunpack.c.l.b16 %v1097
      %v1180 = vunpack.c.l.b16 %v1098
      %v1181 = vunpack.c.l.b16 %v1099
      %v1182 = vunpack.c.l.b16 %v1100
      %v1183 = vunpack.c.l.b16 %v1101
      %v1184 = vunpack.c.l.b16 %v1102
      %v1185 = vunpack.c.l.b16 %v1103
      %v1186 = vunpack.c.l.b16 %v1104
      %v1187 = vunpack.c.l.b16 %v1105
      %v1188 = vunpack.c.l.b16 %v1106
      %v1189 = vunpack.c.l.b16 %v1107
      %v1190 = vunpack.c.l.b16 %v1108
      %v1191 = vunpack.c.l.b16 %v1109
      %v1192 = vunpack.c.l.b16 %v1110
      %v1193 = vunpack.c.l.b16 %v1111
      %v1194 = vunpack.c.l.b16 %v1112
      %v1195 = vunpack.c.l.b16 %v1113
      %v1196 = vunpack.c.l.b16 %v1114
      %v1197 = vunpack.c.l.b16 %v1115
      %v1198 = vunpack.c.l.b16 %v1116
      %v1199 = vunpack.c.l.b16 %v1117
      %v1200 = vunpack.c.l.b16 %v1118
      %v1201 = vunpack.c.l.b16 %v1119
      %v1202 = vunpack.c.l.b16 %v1120
      %v1203 = vunpack.c.l.b16 %v1121
      %v1204 = vunpack.c.l.b16 %v1122
      %v1205 = vunpack.c.l.b16 %v1123
      %v1206 = vunpack.c.l.b16 %v1124
      %v1207 = vunpack.c.l.b16 %v1125
      %v1208 = vunpack.c.l.b16 %v1126
      %v1209 = vunpack.c.l.b16 %v1127
      %v1210 = vunpack.c.l.b16 %v1128
      %v1211 = vunpack.c.l.b16 %v1129
      %v1212 = vunpack.c.l.b16 %v1130
      %v1213 = vunpack.c.l.b16 %v1131
      %v1214 = vunpack.c.l.b16 %v1132
      %v1215 = vunpack.c.l.b16 %v1133
      %v1216 = vunpack.c.l.b16 %v1134
      %v1217 = vunpack.c.l.b16 %v1135
      %v1218 = vunpack.c.l.b16 %v1136
      %v1219 = vpack.c.b16 %v1179, %v1178
      %v1220 = vpack.c.b16 %v1181, %v1180
      %v1221 = vpack.c.b16 %v1183, %v1182
      %v1222 = vpack.c.b16 %v1185, %v1184
      %v1223 = vpack.c.b16 %v1187, %v1186
      %v1224 = vpack.c.b16 %v1189, %v1188
      %v1225 = vpack.c.b16 %v1191, %v1190
      %v1226 = vpack.c.b16 %v1193, %v1192
      %v1227 = vpack.c.b16 %v1195, %v1194
      %v1228 = vpack.c.b16 %v1197, %v1196
      %v1229 = vpack.c.b16 %v1199, %v1198
      %v1230 = vpack.c.b16 %v1201, %v1200
      %v1231 = vpack.c.b16 %v1203, %v1202
      %v1232 = vpack.c.b16 %v1205, %v1204
      %v1233 = vpack.c.b16 %v1207, %v1206
      %v1234 = vpack.c.b16 %v1209, %v1208
      %v1235 = vpack.c.b16 %v1211, %v1210
      %v1236 = vpack.c.b16 %v1213, %v1212
      %v1237 = vpack.c.b16 %v1215, %v1214
      %v1238 = vpack.c.b16 %v1217, %v1216
      %v1239 = vpack.c.b16 %v1218, %v1218
      %1261 = vmatprep.subr.bf16.mxu0 0
      %1262 = vmatpush1.bf16.msra.mxu0 %v392
      %1263 = vmatprep.subr.bf16.mxu0 0
      %1264 = vmatpush1.bf16.msra.mxu0 %v393
      %1265 = vmatprep.subr.bf16.mxu0 0
      %1266 = vmatpush1.bf16.msra.mxu0 %v394
      %1267 = vmatprep.subr.bf16.mxu0 0
      %1268 = vmatpush1.bf16.msra.mxu0 %v395
      %1269 = vmatprep.subr.bf16.mxu0 0
      %1270 = vmatpush1.bf16.msra.mxu0 %v396
      %1271 = vmatprep.subr.bf16.mxu0 0
      %1272 = vmatpush1.bf16.msra.mxu0 %v397
      %1273 = vmatprep.subr.bf16.mxu0 0
      %1274 = vmatpush1.bf16.msra.mxu0 %v398
      %1275 = vmatprep.subr.bf16.mxu0 0
      %1276 = vmatpush1.bf16.msra.mxu0 %v399
      %1277 = vmatprep.subr.bf16.mxu0 0
      %1278 = vmatpush1.bf16.msra.mxu0 0
      %1279 = vmatprep.subr.bf16.mxu0 0
      %1280 = vmatpush1.bf16.msra.mxu0 0
      %1281 = vmatprep.subr.bf16.mxu0 0
      %1282 = vmatpush1.bf16.msra.mxu0 0
      %1283 = vmatprep.subr.bf16.mxu0 0
      %1284 = vmatpush1.bf16.msra.mxu0 0
      %1285 = vmatprep.subr.bf16.mxu0 0
      %1286 = vmatpush1.bf16.msra.mxu0 0
      %1287 = vmatprep.subr.bf16.mxu0 0
      %1288 = vmatpush1.bf16.msra.mxu0 0
      %1289 = vmatprep.subr.bf16.mxu0 0
      %1290 = vmatpush1.bf16.msra.mxu0 0
      %1291 = vmatprep.subr.bf16.mxu0 0
      %1292 = vmatpush1.bf16.msra.mxu0 0
      %1293 = vmatprep.mubr.bf16.mxu0 0
      %1294 = vmatmul.mubr.bf16.gmra.mrb[0].mxu0 %v1219
      %v1295 = vpop.f32.mrb[0].mxu0
      %v1296 = vadd.f32 %v234, %v1295
      %v1297 = vpop.f32.mrb[0].mxu0
      %v1298 = vpop.f32.mrb[0].mxu0
      %v1299 = vadd.f32 %v234, %v1298
      %v1300 = vpop.f32.mrb[0].mxu0
      %1301 = vmatprep.mubr.bf16.mxu0 0
      %1302 = vmatmul.mubr.bf16.gmra.mrb[0].mxu0 %v1220
      %v1303 = vpop.f32.mrb[0].mxu0
      %v1304 = vadd.f32 %v234, %v1303
      %v1305 = vpop.f32.mrb[0].mxu0
      %v1306 = vpop.f32.mrb[0].mxu0
      %v1307 = vadd.f32 %v234, %v1306
      %v1308 = vpop.f32.mrb[0].mxu0
      %1309 = vmatprep.mubr.bf16.mxu0 0
      %1310 = vmatmul.mubr.bf16.gmra.mrb[0].mxu0 %v1221
      %v1311 = vpop.f32.mrb[0].mxu0
      %v1312 = vadd.f32 %v234, %v1311
      %v1313 = vpop.f32.mrb[0].mxu0
      %v1314 = vpop.f32.mrb[0].mxu0
      %v1315 = vadd.f32 %v234, %v1314
      %v1316 = vpop.f32.mrb[0].mxu0
      %1317 = vmatprep.mubr.bf16.mxu0 0
      %1318 = vmatmul.mubr.bf16.gmra.mrb[0].mxu0 %v1222
      %v1319 = vpop.f32.mrb[0].mxu0
      %v1320 = vadd.f32 %v234, %v1319
      %v1321 = vpop.f32.mrb[0].mxu0
      %v1322 = vpop.f32.mrb[0].mxu0
      %v1323 = vadd.f32 %v234, %v1322
      %v1324 = vpop.f32.mrb[0].mxu0
      %1325 = vmatprep.mubr.bf16.mxu0 0
      %1326 = vmatmul.mubr.bf16.gmra.mrb[0].mxu0 %v1223
      %v1327 = vpop.f32.mrb[0].mxu0
      %v1328 = vadd.f32 %v234, %v1327
      %v1329 = vpop.f32.mrb[0].mxu0
      %v1330 = vpop.f32.mrb[0].mxu0
      %v1331 = vadd.f32 %v234, %v1330
      %v1332 = vpop.f32.mrb[0].mxu0
      %1333 = vmatprep.mubr.bf16.mxu0 0
      %1334 = vmatmul.mubr.bf16.gmra.mrb[0].mxu0 %v1224
      %v1335 = vpop.f32.mrb[0].mxu0
      %v1336 = vadd.f32 %v234, %v1335
      %v1337 = vpop.f32.mrb[0].mxu0
      %v1338 = vpop.f32.mrb[0].mxu0
      %v1339 = vadd.f32 %v234, %v1338
      %v1340 = vpop.f32.mrb[0].mxu0
      %1341 = vmatprep.mubr.bf16.mxu0 0
      %1342 = vmatmul.mubr.bf16.gmra.mrb[0].mxu0 %v1225
      %v1343 = vpop.f32.mrb[0].mxu0
      %v1344 = vadd.f32 %v234, %v1343
      %v1345 = vpop.f32.mrb[0].mxu0
      %v1346 = vpop.f32.mrb[0].mxu0
      %v1347 = vadd.f32 %v234, %v1346
      %v1348 = vpop.f32.mrb[0].mxu0
      %1349 = vmatprep.mubr.bf16.mxu0 0
      %1350 = vmatmul.mubr.bf16.gmra.mrb[0].mxu0 %v1226
      %v1351 = vpop.f32.mrb[0].mxu0
      %v1352 = vadd.f32 %v234, %v1351
      %v1353 = vpop.f32.mrb[0].mxu0
      %v1354 = vpop.f32.mrb[0].mxu0
      %v1355 = vadd.f32 %v234, %v1354
      %v1356 = vpop.f32.mrb[0].mxu0
      %1357 = vmatprep.mubr.bf16.mxu0 0
      %1358 = vmatmul.mubr.bf16.gmra.mrb[0].mxu0 %v1227
      %v1359 = vpop.f32.mrb[0].mxu0
      %v1360 = vadd.f32 %v234, %v1359
      %v1361 = vpop.f32.mrb[0].mxu0
      %v1362 = vpop.f32.mrb[0].mxu0
      %v1363 = vadd.f32 %v234, %v1362
      %v1364 = vpop.f32.mrb[0].mxu0
      %1365 = vmatprep.mubr.bf16.mxu0 0
      %1366 = vmatmul.mubr.bf16.gmra.mrb[0].mxu0 %v1228
      %v1367 = vpop.f32.mrb[0].mxu0
      %v1368 = vadd.f32 %v234, %v1367
      %v1369 = vpop.f32.mrb[0].mxu0
      %v1370 = vpop.f32.mrb[0].mxu0
      %v1371 = vadd.f32 %v234, %v1370
      %v1372 = vpop.f32.mrb[0].mxu0
      %1373 = vmatprep.mubr.bf16.mxu0 0
      %1374 = vmatmul.mubr.bf16.gmra.mrb[0].mxu0 %v1229
      %v1375 = vpop.f32.mrb[0].mxu0
      %v1376 = vadd.f32 %v234, %v1375
      %v1377 = vpop.f32.mrb[0].mxu0
      %v1378 = vpop.f32.mrb[0].mxu0
      %v1379 = vadd.f32 %v234, %v1378
      %v1380 = vpop.f32.mrb[0].mxu0
      %1381 = vmatprep.mubr.bf16.mxu0 0
      %1382 = vmatmul.mubr.bf16.gmra.mrb[0].mxu0 %v1230
      %v1383 = vpop.f32.mrb[0].mxu0
      %v1384 = vadd.f32 %v234, %v1383
      %v1385 = vpop.f32.mrb[0].mxu0
      %v1386 = vpop.f32.mrb[0].mxu0
      %v1387 = vadd.f32 %v234, %v1386
      %v1388 = vpop.f32.mrb[0].mxu0
      %1389 = vmatprep.mubr.bf16.mxu0 0
      %1390 = vmatmul.mubr.bf16.gmra.mrb[0].mxu0 %v1231
      %v1391 = vpop.f32.mrb[0].mxu0
      %v1392 = vadd.f32 %v234, %v1391
      %v1393 = vpop.f32.mrb[0].mxu0
      %v1394 = vpop.f32.mrb[0].mxu0
      %v1395 = vadd.f32 %v234, %v1394
      %v1396 = vpop.f32.mrb[0].mxu0
      %1397 = vmatprep.mubr.bf16.mxu0 0
      %1398 = vmatmul.mubr.bf16.gmra.mrb[0].mxu0 %v1232
      %v1399 = vpop.f32.mrb[0].mxu0
      %v1400 = vadd.f32 %v234, %v1399
      %v1401 = vpop.f32.mrb[0].mxu0
      %v1402 = vpop.f32.mrb[0].mxu0
      %v1403 = vadd.f32 %v234, %v1402
      %v1404 = vpop.f32.mrb[0].mxu0
      %1405 = vmatprep.mubr.bf16.mxu0 0
      %1406 = vmatmul.mubr.bf16.gmra.mrb[0].mxu0 %v1233
      %v1407 = vpop.f32.mrb[0].mxu0
      %v1408 = vadd.f32 %v234, %v1407
      %v1409 = vpop.f32.mrb[0].mxu0
      %v1410 = vpop.f32.mrb[0].mxu0
      %v1411 = vadd.f32 %v234, %v1410
      %v1412 = vpop.f32.mrb[0].mxu0
      %1413 = vmatprep.mubr.bf16.mxu0 0
      %1414 = vmatmul.mubr.bf16.gmra.mrb[0].mxu0 %v1234
      %v1415 = vpop.f32.mrb[0].mxu0
      %v1416 = vadd.f32 %v234, %v1415
      %v1417 = vpop.f32.mrb[0].mxu0
      %v1418 = vpop.f32.mrb[0].mxu0
      %v1419 = vadd.f32 %v234, %v1418
      %v1420 = vpop.f32.mrb[0].mxu0
      %1421 = vmatprep.mubr.bf16.mxu0 0
      %1422 = vmatmul.mubr.bf16.gmra.mrb[0].mxu0 %v1235
      %v1423 = vpop.f32.mrb[0].mxu0
      %v1424 = vadd.f32 %v234, %v1423
      %v1425 = vpop.f32.mrb[0].mxu0
      %v1426 = vpop.f32.mrb[0].mxu0
      %v1427 = vadd.f32 %v234, %v1426
      %v1428 = vpop.f32.mrb[0].mxu0
      %1429 = vmatprep.mubr.bf16.mxu0 0
      %1430 = vmatmul.mubr.bf16.gmra.mrb[0].mxu0 %v1236
      %v1431 = vpop.f32.mrb[0].mxu0
      %v1432 = vadd.f32 %v234, %v1431
      %v1433 = vpop.f32.mrb[0].mxu0
      %v1434 = vpop.f32.mrb[0].mxu0
      %v1435 = vadd.f32 %v234, %v1434
      %v1436 = vpop.f32.mrb[0].mxu0
      %1437 = vmatprep.mubr.bf16.mxu0 0
      %1438 = vmatmul.mubr.bf16.gmra.mrb[0].mxu0 %v1237
      %v1439 = vpop.f32.mrb[0].mxu0
      %v1440 = vadd.f32 %v234, %v1439
      %v1441 = vpop.f32.mrb[0].mxu0
      %v1442 = vpop.f32.mrb[0].mxu0
      %v1443 = vadd.f32 %v234, %v1442
      %v1444 = vpop.f32.mrb[0].mxu0
      %1445 = vmatprep.mubr.bf16.mxu0 0
      %1446 = vmatmul.mubr.bf16.gmra.mrb[0].mxu0 %v1238
      %v1447 = vpop.f32.mrb[0].mxu0
      %v1448 = vadd.f32 %v234, %v1447
      %v1449 = vpop.f32.mrb[0].mxu0
      %v1450 = vpop.f32.mrb[0].mxu0
      %v1451 = vadd.f32 %v234, %v1450
      %v1452 = vpop.f32.mrb[0].mxu0
      %1453 = vmatprep.mubr.bf16.mxu0 0
      %1454 = vmatmul.mubr.bf16.gmra.mrb[0].mxu0 %v1239
      %v1455 = vpop.f32.mrb[0].mxu0
      %v1456 = vadd.f32 %v234, %v1455
      %v1457 = vpop.f32.mrb[0].mxu0
      %v1458 = vpop.f32.mrb[0].mxu0
      %v1459 = vpop.f32.mrb[0].mxu0
      %1460 = vdwg.mxu0
      %v1461 = vmax.f32 %v1296, 0.0
      %v1462 = vmax.f32 %v1299, 0.0
      %v1463 = vmax.f32 %v1304, 0.0
      %v1464 = vmax.f32 %v1307, 0.0
      %v1465 = vmax.f32 %v1312, 0.0
      %v1466 = vmax.f32 %v1315, 0.0
      %v1467 = vmax.f32 %v1320, 0.0
      %v1468 = vmax.f32 %v1323, 0.0
      %v1469 = vmax.f32 %v1328, 0.0
      %v1470 = vmax.f32 %v1331, 0.0
      %v1471 = vmax.f32 %v1336, 0.0
      %v1472 = vmax.f32 %v1339, 0.0
      %v1473 = vmax.f32 %v1344, 0.0
      %v1474 = vmax.f32 %v1347, 0.0
      %v1475 = vmax.f32 %v1352, 0.0
      %v1476 = vmax.f32 %v1355, 0.0
      %v1477 = vmax.f32 %v1360, 0.0
      %v1478 = vmax.f32 %v1363, 0.0
      %v1479 = vmax.f32 %v1368, 0.0
      %v1480 = vmax.f32 %v1371, 0.0
      %v1481 = vmax.f32 %v1376, 0.0
      %v1482 = vmax.f32 %v1379, 0.0
      %v1483 = vmax.f32 %v1384, 0.0
      %v1484 = vmax.f32 %v1387, 0.0
      %v1485 = vmax.f32 %v1392, 0.0
      %v1486 = vmax.f32 %v1395, 0.0
      %v1487 = vmax.f32 %v1400, 0.0
      %v1488 = vmax.f32 %v1403, 0.0
      %v1489 = vmax.f32 %v1408, 0.0
      %v1490 = vmax.f32 %v1411, 0.0
      %v1491 = vmax.f32 %v1416, 0.0
      %v1492 = vmax.f32 %v1419, 0.0
      %v1493 = vmax.f32 %v1424, 0.0
      %v1494 = vmax.f32 %v1427, 0.0
      %v1495 = vmax.f32 %v1432, 0.0
      %v1496 = vmax.f32 %v1435, 0.0
      %v1497 = vmax.f32 %v1440, 0.0
      %v1498 = vmax.f32 %v1443, 0.0
      %v1499 = vmax.f32 %v1448, 0.0
      %v1500 = vmax.f32 %v1451, 0.0
      %v1501 = vmax.f32 %v1456, 0.0
      %v1502 = vmax.f32 %v1055, %v1461
      %v1503 = vmax.f32 %v1056, %v1462
      %v1504 = vmax.f32 %v1057, %v1463
      %v1505 = vmax.f32 %v1058, %v1464
      %v1506 = vmax.f32 %v1059, %v1465
      %v1507 = vmax.f32 %v1060, %v1466
      %v1508 = vmax.f32 %v1061, %v1467
      %v1509 = vmax.f32 %v1062, %v1468
      %v1510 = vmax.f32 %v1063, %v1469
      %v1511 = vmax.f32 %v1064, %v1470
      %v1512 = vmax.f32 %v1065, %v1471
      %v1513 = vmax.f32 %v1066, %v1472
      %v1514 = vmax.f32 %v1067, %v1473
      %v1515 = vmax.f32 %v1068, %v1474
      %v1516 = vmax.f32 %v1069, %v1475
      %v1517 = vmax.f32 %v1070, %v1476
      %v1518 = vmax.f32 %v1071, %v1477
      %v1519 = vmax.f32 %v1072, %v1478
      %v1520 = vmax.f32 %v1073, %v1479
      %v1521 = vmax.f32 %v1074, %v1480
      %v1522 = vmax.f32 %v1075, %v1481
      %v1523 = vmax.f32 %v1076, %v1482
      %v1524 = vmax.f32 %v1077, %v1483
      %v1525 = vmax.f32 %v1078, %v1484
      %v1526 = vmax.f32 %v1079, %v1485
      %v1527 = vmax.f32 %v1080, %v1486
      %v1528 = vmax.f32 %v1081, %v1487
      %v1529 = vmax.f32 %v1082, %v1488
      %v1530 = vmax.f32 %v1083, %v1489
      %v1531 = vmax.f32 %v1084, %v1490
      %v1532 = vmax.f32 %v1085, %v1491
      %v1533 = vmax.f32 %v1086, %v1492
      %v1534 = vmax.f32 %v1087, %v1493
      %v1535 = vmax.f32 %v1088, %v1494
      %v1536 = vmax.f32 %v1089, %v1495
      %v1537 = vmax.f32 %v1090, %v1496
      %v1538 = vmax.f32 %v1091, %v1497
      %v1539 = vmax.f32 %v1092, %v1498
      %v1540 = vmax.f32 %v1093, %v1499
      %v1541 = vmax.f32 %v1094, %v1500
      %v1542 = vmax.f32 %v1095, %v1501
      %v1543 = vlaneseq
      %v1544 = vshrl.u32 %v1543, 7
      %v1545 = vadd.s32 %v1544, 8
      %v1546 = vadd.s32 %v1544, 16
      %v1547 = vadd.s32 %v1544, 24
      %v1548 = vadd.s32 %v1544, 32
      %v1549 = vadd.s32 %v1544, 40
      %v1550 = vadd.s32 %v1544, 48
      %v1551 = vadd.s32 %v1544, 56
      %v1552 = vadd.s32 %v1544, 64
      %v1553 = vadd.s32 %v1544, 72
      %v1554 = vadd.s32 %v1544, 80
      %v1555 = vadd.s32 %v1544, 88
      %v1556 = vadd.s32 %v1544, 96
      %v1557 = vadd.s32 %v1544, 104
      %v1558 = vadd.s32 %v1544, 112
      %v1559 = vadd.s32 %v1544, 120
      %v1560 = vadd.s32 %v1544, 128
      %v1561 = vadd.s32 %v1544, 136
      %v1562 = vadd.s32 %v1544, 144
      %v1563 = vadd.s32 %v1544, 152
      %v1564 = vadd.s32 %v1544, 160
      %v1565 = vadd.s32 %v1544, 168
      %v1566 = vadd.s32 %v1544, 176
      %v1567 = vadd.s32 %v1544, 184
      %v1568 = vadd.s32 %v1544, 192
      %v1569 = vadd.s32 %v1544, 200
      %v1570 = vadd.s32 %v1544, 208
      %v1571 = vadd.s32 %v1544, 216
      %v1572 = vadd.s32 %v1544, 224
      %v1573 = vadd.s32 %v1544, 232
      %v1574 = vadd.s32 %v1544, 240
      %v1575 = vadd.s32 %v1544, 248
      %v1576 = vadd.s32 %v1544, 256
      %v1577 = vadd.s32 %v1544, 264
      %v1578 = vadd.s32 %v1544, 272
      %v1579 = vadd.s32 %v1544, 280
      %v1580 = vadd.s32 %v1544, 288
      %v1581 = vadd.s32 %v1544, 296
      %v1582 = vadd.s32 %v1544, 304
      %v1583 = vadd.s32 %v1544, 312
      %v1584 = vadd.s32 %v1544, 320
      %vm1585 = vcmp.lt.s32.totalorder %v1544, 327
      %vm1586 = vcmp.lt.s32.totalorder %v1545, 327
      %vm1587 = vcmp.lt.s32.totalorder %v1546, 327
      %vm1588 = vcmp.lt.s32.totalorder %v1547, 327
      %vm1589 = vcmp.lt.s32.totalorder %v1548, 327
      %vm1590 = vcmp.lt.s32.totalorder %v1549, 327
      %vm1591 = vcmp.lt.s32.totalorder %v1550, 327
      %vm1592 = vcmp.lt.s32.totalorder %v1551, 327
      %vm1593 = vcmp.lt.s32.totalorder %v1552, 327
      %vm1594 = vcmp.lt.s32.totalorder %v1553, 327
      %vm1595 = vcmp.lt.s32.totalorder %v1554, 327
      %vm1596 = vcmp.lt.s32.totalorder %v1555, 327
      %vm1597 = vcmp.lt.s32.totalorder %v1556, 327
      %vm1598 = vcmp.lt.s32.totalorder %v1557, 327
      %vm1599 = vcmp.lt.s32.totalorder %v1558, 327
      %vm1600 = vcmp.lt.s32.totalorder %v1559, 327
      %vm1601 = vcmp.lt.s32.totalorder %v1560, 327
      %vm1602 = vcmp.lt.s32.totalorder %v1561, 327
      %vm1603 = vcmp.lt.s32.totalorder %v1562, 327
      %vm1604 = vcmp.lt.s32.totalorder %v1563, 327
      %vm1605 = vcmp.lt.s32.totalorder %v1564, 327
      %vm1606 = vcmp.lt.s32.totalorder %v1565, 327
      %vm1607 = vcmp.lt.s32.totalorder %v1566, 327
      %vm1608 = vcmp.lt.s32.totalorder %v1567, 327
      %vm1609 = vcmp.lt.s32.totalorder %v1568, 327
      %vm1610 = vcmp.lt.s32.totalorder %v1569, 327
      %vm1611 = vcmp.lt.s32.totalorder %v1570, 327
      %vm1612 = vcmp.lt.s32.totalorder %v1571, 327
      %vm1613 = vcmp.lt.s32.totalorder %v1572, 327
      %vm1614 = vcmp.lt.s32.totalorder %v1573, 327
      %vm1615 = vcmp.lt.s32.totalorder %v1574, 327
      %vm1616 = vcmp.lt.s32.totalorder %v1575, 327
      %vm1617 = vcmp.lt.s32.totalorder %v1576, 327
      %vm1618 = vcmp.lt.s32.totalorder %v1577, 327
      %vm1619 = vcmp.lt.s32.totalorder %v1578, 327
      %vm1620 = vcmp.lt.s32.totalorder %v1579, 327
      %vm1621 = vcmp.lt.s32.totalorder %v1580, 327
      %vm1622 = vcmp.lt.s32.totalorder %v1581, 327
      %vm1623 = vcmp.lt.s32.totalorder %v1582, 327
      %vm1624 = vcmp.lt.s32.totalorder %v1583, 327
      %vm1625 = vcmp.lt.s32.totalorder %v1584, 327
      %v1626 = vsel %vm1585, %v1502, 0.0
      %v1627 = vsel %vm1586, %v1503, 0.0
      %v1628 = vsel %vm1587, %v1504, 0.0
      %v1629 = vsel %vm1588, %v1505, 0.0
      %v1630 = vsel %vm1589, %v1506, 0.0
      %v1631 = vsel %vm1590, %v1507, 0.0
      %v1632 = vsel %vm1591, %v1508, 0.0
      %v1633 = vsel %vm1592, %v1509, 0.0
      %v1634 = vsel %vm1593, %v1510, 0.0
      %v1635 = vsel %vm1594, %v1511, 0.0
      %v1636 = vsel %vm1595, %v1512, 0.0
      %v1637 = vsel %vm1596, %v1513, 0.0
      %v1638 = vsel %vm1597, %v1514, 0.0
      %v1639 = vsel %vm1598, %v1515, 0.0
      %v1640 = vsel %vm1599, %v1516, 0.0
      %v1641 = vsel %vm1600, %v1517, 0.0
      %v1642 = vsel %vm1601, %v1518, 0.0
      %v1643 = vsel %vm1602, %v1519, 0.0
      %v1644 = vsel %vm1603, %v1520, 0.0
      %v1645 = vsel %vm1604, %v1521, 0.0
      %v1646 = vsel %vm1605, %v1522, 0.0
      %v1647 = vsel %vm1606, %v1523, 0.0
      %v1648 = vsel %vm1607, %v1524, 0.0
      %v1649 = vsel %vm1608, %v1525, 0.0
      %v1650 = vsel %vm1609, %v1526, 0.0
      %v1651 = vsel %vm1610, %v1527, 0.0
      %v1652 = vsel %vm1611, %v1528, 0.0
      %v1653 = vsel %vm1612, %v1529, 0.0
      %v1654 = vsel %vm1613, %v1530, 0.0
      %v1655 = vsel %vm1614, %v1531, 0.0
      %v1656 = vsel %vm1615, %v1532, 0.0
      %v1657 = vsel %vm1616, %v1533, 0.0
      %v1658 = vsel %vm1617, %v1534, 0.0
      %v1659 = vsel %vm1618, %v1535, 0.0
      %v1660 = vsel %vm1619, %v1536, 0.0
      %v1661 = vsel %vm1620, %v1537, 0.0
      %v1662 = vsel %vm1621, %v1538, 0.0
      %v1663 = vsel %vm1622, %v1539, 0.0
      %v1664 = vsel %vm1623, %v1540, 0.0
      %v1665 = vsel %vm1624, %v1541, 0.0
      %v1666 = vsel %vm1625, %v1542, 0.0
      %v1667 = vpack.c.bf16 %v1627, %v1626
      %v1668 = vpack.c.bf16 %v1629, %v1628
      %v1669 = vpack.c.bf16 %v1631, %v1630
      %v1670 = vpack.c.bf16 %v1633, %v1632
      %v1671 = vpack.c.bf16 %v1635, %v1634
      %v1672 = vpack.c.bf16 %v1637, %v1636
      %v1673 = vpack.c.bf16 %v1639, %v1638
      %v1674 = vpack.c.bf16 %v1641, %v1640
      %v1675 = vpack.c.bf16 %v1643, %v1642
      %v1676 = vpack.c.bf16 %v1645, %v1644
      %v1677 = vpack.c.bf16 %v1647, %v1646
      %v1678 = vpack.c.bf16 %v1649, %v1648
      %v1679 = vpack.c.bf16 %v1651, %v1650
      %v1680 = vpack.c.bf16 %v1653, %v1652
      %v1681 = vpack.c.bf16 %v1655, %v1654
      %v1682 = vpack.c.bf16 %v1657, %v1656
      %v1683 = vpack.c.bf16 %v1659, %v1658
      %v1684 = vpack.c.bf16 %v1661, %v1660
      %v1685 = vpack.c.bf16 %v1663, %v1662
      %v1686 = vpack.c.bf16 %v1665, %v1664
      %v1687 = vpack.c.bf16 %v1666, %v1666
      %v1709 = vunpack.c.l.b16 %v1667
      %v1710 = vunpack.c.h.b16 %v1667
      %v1711 = vunpack.c.l.b16 %v1668
      %v1712 = vunpack.c.h.b16 %v1668
      %v1713 = vunpack.c.l.b16 %v1669
      %v1714 = vunpack.c.h.b16 %v1669
      %v1715 = vunpack.c.l.b16 %v1670
      %v1716 = vunpack.c.h.b16 %v1670
      %v1717 = vunpack.c.l.b16 %v1671
      %v1718 = vunpack.c.h.b16 %v1671
      %v1719 = vunpack.c.l.b16 %v1672
      %v1720 = vunpack.c.h.b16 %v1672
      %v1721 = vunpack.c.l.b16 %v1673
      %v1722 = vunpack.c.h.b16 %v1673
      %v1723 = vunpack.c.l.b16 %v1674
      %v1724 = vunpack.c.h.b16 %v1674
      %v1725 = vunpack.c.l.b16 %v1675
      %v1726 = vunpack.c.h.b16 %v1675
      %v1727 = vunpack.c.l.b16 %v1676
      %v1728 = vunpack.c.h.b16 %v1676
      %v1729 = vunpack.c.l.b16 %v1677
      %v1730 = vunpack.c.h.b16 %v1677
      %v1731 = vunpack.c.l.b16 %v1678
      %v1732 = vunpack.c.h.b16 %v1678
      %v1733 = vunpack.c.l.b16 %v1679
      %v1734 = vunpack.c.h.b16 %v1679
      %v1735 = vunpack.c.l.b16 %v1680
      %v1736 = vunpack.c.h.b16 %v1680
      %v1737 = vunpack.c.l.b16 %v1681
      %v1738 = vunpack.c.h.b16 %v1681
      %v1739 = vunpack.c.l.b16 %v1682
      %v1740 = vunpack.c.h.b16 %v1682
      %v1741 = vunpack.c.l.b16 %v1683
      %v1742 = vunpack.c.h.b16 %v1683
      %v1743 = vunpack.c.l.b16 %v1684
      %v1744 = vunpack.c.h.b16 %v1684
      %v1745 = vunpack.c.l.b16 %v1685
      %v1746 = vunpack.c.h.b16 %v1685
      %v1747 = vunpack.c.l.b16 %v1686
      %v1748 = vunpack.c.h.b16 %v1686
      %v1749 = vunpack.c.l.b16 %v1687
      %v1750 = vpack.c.b16 %v1709, %v1709
      %v1751 = vpack.c.b16 %v1710, %v1710
      %v1752 = vpack.c.b16 %v1711, %v1711
      %v1753 = vpack.c.b16 %v1712, %v1712
      %v1754 = vpack.c.b16 %v1713, %v1713
      %v1755 = vpack.c.b16 %v1714, %v1714
      %v1756 = vpack.c.b16 %v1715, %v1715
      %v1757 = vpack.c.b16 %v1716, %v1716
      %v1758 = vpack.c.b16 %v1717, %v1717
      %v1759 = vpack.c.b16 %v1718, %v1718
      %v1760 = vpack.c.b16 %v1719, %v1719
      %v1761 = vpack.c.b16 %v1720, %v1720
      %v1762 = vpack.c.b16 %v1721, %v1721
      %v1763 = vpack.c.b16 %v1722, %v1722
      %v1764 = vpack.c.b16 %v1723, %v1723
      %v1765 = vpack.c.b16 %v1724, %v1724
      %v1766 = vpack.c.b16 %v1725, %v1725
      %v1767 = vpack.c.b16 %v1726, %v1726
      %v1768 = vpack.c.b16 %v1727, %v1727
      %v1769 = vpack.c.b16 %v1728, %v1728
      %v1770 = vpack.c.b16 %v1729, %v1729
      %v1771 = vpack.c.b16 %v1730, %v1730
      %v1772 = vpack.c.b16 %v1731, %v1731
      %v1773 = vpack.c.b16 %v1732, %v1732
      %v1774 = vpack.c.b16 %v1733, %v1733
      %v1775 = vpack.c.b16 %v1734, %v1734
      %v1776 = vpack.c.b16 %v1735, %v1735
      %v1777 = vpack.c.b16 %v1736, %v1736
      %v1778 = vpack.c.b16 %v1737, %v1737
      %v1779 = vpack.c.b16 %v1738, %v1738
      %v1780 = vpack.c.b16 %v1739, %v1739
      %v1781 = vpack.c.b16 %v1740, %v1740
      %v1782 = vpack.c.b16 %v1741, %v1741
      %v1783 = vpack.c.b16 %v1742, %v1742
      %v1784 = vpack.c.b16 %v1743, %v1743
      %v1785 = vpack.c.b16 %v1744, %v1744
      %v1786 = vpack.c.b16 %v1745, %v1745
      %v1787 = vpack.c.b16 %v1746, %v1746
      %v1788 = vpack.c.b16 %v1747, %v1747
      %v1789 = vpack.c.b16 %v1748, %v1748
      %v1790 = vpack.c.b16 %v1749, %v1749
      %vm1832 = vcmask 404480
      %1833 = vst.msk [vmem:[%s170] sm:$0xf] %vm1832, %v1750
      %1834 = vst.msk [vmem:[%s170 + $0x4] sm:$0xf] %vm1832, %v1751
      %1835 = vst.msk [vmem:[%s170 + $0x8] sm:$0xf] %vm1832, %v1752
      %1836 = vst.msk [vmem:[%s170 + $0xc] sm:$0xf] %vm1832, %v1753
      %1837 = vst.msk [vmem:[%s170 + $0x10] sm:$0xf] %vm1832, %v1754
      %1838 = vst.msk [vmem:[%s170 + $0x14] sm:$0xf] %vm1832, %v1755
      %1839 = vst.msk [vmem:[%s170 + $0x18] sm:$0xf] %vm1832, %v1756
      %1840 = vst.msk [vmem:[%s170 + $0x1c] sm:$0xf] %vm1832, %v1757
      %1841 = vst.msk [vmem:[%s170 + $0x20] sm:$0xf] %vm1832, %v1758
      %1842 = vst.msk [vmem:[%s170 + $0x24] sm:$0xf] %vm1832, %v1759
      %1843 = vst.msk [vmem:[%s170 + $0x28] sm:$0xf] %vm1832, %v1760
      %1844 = vst.msk [vmem:[%s170 + $0x2c] sm:$0xf] %vm1832, %v1761
      %1845 = vst.msk [vmem:[%s170 + $0x30] sm:$0xf] %vm1832, %v1762
      %1846 = vst.msk [vmem:[%s170 + $0x34] sm:$0xf] %vm1832, %v1763
      %1847 = vst.msk [vmem:[%s170 + $0x38] sm:$0xf] %vm1832, %v1764
      %1848 = vst.msk [vmem:[%s170 + $0x3c] sm:$0xf] %vm1832, %v1765
      %1849 = vst.msk [vmem:[%s170 + $0x40] sm:$0xf] %vm1832, %v1766
      %1850 = vst.msk [vmem:[%s170 + $0x44] sm:$0xf] %vm1832, %v1767
      %1851 = vst.msk [vmem:[%s170 + $0x48] sm:$0xf] %vm1832, %v1768
      %1852 = vst.msk [vmem:[%s170 + $0x4c] sm:$0xf] %vm1832, %v1769
      %1853 = vst.msk [vmem:[%s170 + $0x50] sm:$0xf] %vm1832, %v1770
      %1854 = vst.msk [vmem:[%s170 + $0x54] sm:$0xf] %vm1832, %v1771
      %1855 = vst.msk [vmem:[%s170 + $0x58] sm:$0xf] %vm1832, %v1772
      %1856 = vst.msk [vmem:[%s170 + $0x5c] sm:$0xf] %vm1832, %v1773
      %1857 = vst.msk [vmem:[%s170 + $0x60] sm:$0xf] %vm1832, %v1774
      %1858 = vst.msk [vmem:[%s170 + $0x64] sm:$0xf] %vm1832, %v1775
      %1859 = vst.msk [vmem:[%s170 + $0x68] sm:$0xf] %vm1832, %v1776
      %1860 = vst.msk [vmem:[%s170 + $0x6c] sm:$0xf] %vm1832, %v1777
      %1861 = vst.msk [vmem:[%s170 + $0x70] sm:$0xf] %vm1832, %v1778
      %1862 = vst.msk [vmem:[%s170 + $0x74] sm:$0xf] %vm1832, %v1779
      %1863 = vst.msk [vmem:[%s170 + $0x78] sm:$0xf] %vm1832, %v1780
      %1864 = vst.msk [vmem:[%s170 + $0x7c] sm:$0xf] %vm1832, %v1781
      %1865 = vst.msk [vmem:[%s170 + $0x80] sm:$0xf] %vm1832, %v1782
      %1866 = vst.msk [vmem:[%s170 + $0x84] sm:$0xf] %vm1832, %v1783
      %1867 = vst.msk [vmem:[%s170 + $0x88] sm:$0xf] %vm1832, %v1784
      %1868 = vst.msk [vmem:[%s170 + $0x8c] sm:$0xf] %vm1832, %v1785
      %1869 = vst.msk [vmem:[%s170 + $0x90] sm:$0xf] %vm1832, %v1786
      %1870 = vst.msk [vmem:[%s170 + $0x94] sm:$0xf] %vm1832, %v1787
      %1871 = vst.msk [vmem:[%s170 + $0x98] sm:$0xf] %vm1832, %v1788
      %1872 = vst.msk [vmem:[%s170 + $0x9c] sm:$0xf] %vm1832, %v1789
      %1873 = vst.msk [vmem:[%s170 + $0xa0] sm:$0xf] %vm1832, %v1790
      %p1874 = scmp.lt.s32.totalorder %s14, 1
      %s1875 = scalar_select %p1874, %s14, 1
      %s1876 = smul.addr %s1875, 41
      %s1877 = smul.addr %s1876, 4
      %s1878 = scalar_lea.vmem %s3, %s1877
      // Predicated region
      $region33: #{dummy_model_forward.2} parent=31 // pred_check
        %p1879 = pneg %p100
      $region34: #{dummy_model_forward.2} parent=31 // pred_check_branch
        %1881 = sbr.rel (%p1879) target = $region36
      $region35: #{dummy_model_forward.2} parent=31 // pred_region
        _
      $region36: #{dummy_model_forward.2} parent=31 // pred_fallthru
        _
    $region32: #{dummy_model_forward.2} parent=5 // pred_fallthru
      _
    %p1882 = scmp.le.s32.totalorder 2, %s9
    // Predicated region
    $region37: #{dummy_model_forward.2} parent=5 // pred_check
      %p1883 = pneg %p1882
    $region38: #{dummy_model_forward.2} parent=5 // pred_check_branch
      %1885 = sbr.rel (%p1883) target = $region40
    $region39: #{dummy_model_forward.2} parent=5 // pred_region
      %s1886 = ssub.s32 %s9, 2
      // Predicated region
      $region41: #{dummy_model_forward.2} parent=39 // pred_check
        %p1887 = pneg %p106
      $region42: #{dummy_model_forward.2} parent=39 // pred_check_branch
        %1889 = sbr.rel (%p1887) target = $region44
      $region43: #{dummy_model_forward.2} parent=39 // pred_region
        %p1890 = scmp.lt.s32.totalorder %s15, 1
        %s1891 = scalar_select %p1890, %s15, 1
        %s1892 = smul.addr %s1891, 41
        %s1893 = smul.addr %s1892, 4
        %s1894 = scalar_lea.vmem %s3, %s1893
      $region44: #{dummy_model_forward.2} parent=39 // pred_fallthru
        _
    $region40: #{dummy_model_forward.2} parent=5 // pred_fallthru
      _
  $region6: #{dummy_model_forward.2} parent=0 // loop_footer
    %s13 = sadd.s32 1, %s9
  $region7: #{dummy_model_forward.2} parent=0 // loop_footer_branch
    %8 = sbr.rel target = $region3
  $region8: #{dummy_model_forward.2} parent=0 // loop_exit
    _

// kernel: dummy_model_forward.3
$region0: #{dummy_model_forward.3}
  #allocation0 [shape = 'u32[]', space=smem, size = 0x4, offset = 0x4, fixed_abs, tag = 'smem constant byte address 0x4 - core index']
  #allocation1 [shape = 'u32[144,128]{1,0:T(1,128)}', space=vmem, size = 0x12000, scoped, tag = 'internal scratch']
  %s0 = inlined_call_operand.vmem [shape: bf16[2,16400], index: 0, kind: input, shape index: {}]
  %s1 = inlined_call_operand.vmem [shape: bf16[16400,128], index: 1, kind: input, shape index: {}]
  %s2 = inlined_call_operand.vmem [shape: f32[1,128], index: 2, kind: input, shape index: {}]
  %s3 = inlined_call_operand.vmem [shape: f32[128,8], index: 3, kind: input, shape index: {}]
  %s4 = inlined_call_operand.vmem [shape: f32[1,8], index: 4, kind: input, shape index: {}]
  %s5 = inlined_call_operand.hbm [shape: f32[2,8], index: 5, kind: output, shape index: {}]
  %s6 = sld [smem:[#allocation0]]
  $region30: #{dummy_model_forward.3} parent=0
    _
  %s8 = ssub.s32 1, %s6
  %s9 = scalar_select 0, %s8, %s6
  $region1: #{dummy_model_forward.3} parent=0
    #allocation2 [shape = 'u8[1024]{0}', space=vmem, size = 0x400, scoped, tag = 'output window, operand 0, single buffered']
    #allocation3 [shape = 's32[1]{0}', space=sflag, size = 0x4, scoped, tag = 'scoped memory for dummy_model_forward.3']
    %10 = vsyncpa [#allocation3], 0
    // Predicated region
    $region2: #{dummy_model_forward.3} parent=1 // pred_check
      _
    $region3: #{dummy_model_forward.3} parent=1 // pred_check_branch
      %12 = sbr.rel (0) target = $region5
    $region4: #{dummy_model_forward.3} parent=1 // pred_region
      _
    $region5: #{dummy_model_forward.3} parent=1 // pred_fallthru
      _
    // Predicated region
    $region6: #{dummy_model_forward.3} parent=1 // pred_check
      _
    $region7: #{dummy_model_forward.3} parent=1 // pred_check_branch
      %14 = sbr.rel (0) target = $region9
    $region8: #{dummy_model_forward.3} parent=1 // pred_region
      _
    $region9: #{dummy_model_forward.3} parent=1 // pred_fallthru
      _
    // Predicated region
    $region10: #{dummy_model_forward.3} parent=1 // pred_check
      _
    $region11: #{dummy_model_forward.3} parent=1 // pred_check_branch
      %16 = sbr.rel (0) target = $region13
    $region12: #{dummy_model_forward.3} parent=1 // pred_region
      _
    $region13: #{dummy_model_forward.3} parent=1 // pred_fallthru
      _
    // Predicated region
    $region14: #{dummy_model_forward.3} parent=1 // pred_check
      _
    $region15: #{dummy_model_forward.3} parent=1 // pred_check_branch
      %18 = sbr.rel (0) target = $region17
    $region16: #{dummy_model_forward.3} parent=1 // pred_region
      _
    $region17: #{dummy_model_forward.3} parent=1 // pred_fallthru
      _
    // Predicated region
    $region18: #{dummy_model_forward.3} parent=1 // pred_check
      _
    $region19: #{dummy_model_forward.3} parent=1 // pred_check_branch
      %20 = sbr.rel (0) target = $region21
    $region20: #{dummy_model_forward.3} parent=1 // pred_region
      _
    $region21: #{dummy_model_forward.3} parent=1 // pred_fallthru
      _
    %v22 = vld [vmem:[%s0] sm:$0xff]
    %v23 = vld [vmem:[%s0 + $0x8] sm:$0xff]
    %v24 = vld [vmem:[%s0 + $0x10] sm:$0xff]
    %v25 = vld [vmem:[%s0 + $0x18] sm:$0xff]
    %v26 = vld [vmem:[%s0 + $0x20] sm:$0xff]
    %v27 = vld [vmem:[%s0 + $0x28] sm:$0xff]
    %v28 = vld [vmem:[%s0 + $0x30] sm:$0xff]
    %v29 = vld [vmem:[%s0 + $0x38] sm:$0xff]
    %v30 = vld [vmem:[%s0 + $0x40] sm:$0xff]
    %v31 = vld [vmem:[%s0 + $0x48] sm:$0xff]
    %v32 = vld [vmem:[%s0 + $0x50] sm:$0xff]
    %v33 = vld [vmem:[%s0 + $0x58] sm:$0xff]
    %v34 = vld [vmem:[%s0 + $0x60] sm:$0xff]
    %v35 = vld [vmem:[%s0 + $0x68] sm:$0xff]
    %v36 = vld [vmem:[%s0 + $0x70] sm:$0xff]
    %v37 = vld [vmem:[%s0 + $0x78] sm:$0xff]
    %v38 = vld [vmem:[%s0 + $0x80] sm:$0x1]
    %v39 = vld [vmem:[%s1] sm:$0xf]
    %v40 = vld [vmem:[%s1 + $0x4] sm:$0xf]
    %v41 = vld [vmem:[%s1 + $0x8] sm:$0xf]
    %v42 = vld [vmem:[%s1 + $0xc] sm:$0xf]
    %v43 = vld [vmem:[%s1 + $0x10] sm:$0xf]
    %v44 = vld [vmem:[%s1 + $0x14] sm:$0xf]
    %v45 = vld [vmem:[%s1 + $0x18] sm:$0xf]
    %v46 = vld [vmem:[%s1 + $0x1c] sm:$0xf]
    %v47 = vld [vmem:[%s1 + $0x20] sm:$0xf]
    %v48 = vld [vmem:[%s1 + $0x24] sm:$0xf]
    %v49 = vld [vmem:[%s1 + $0x28] sm:$0xf]
    %v50 = vld [vmem:[%s1 + $0x2c] sm:$0xf]
    %v51 = vld [vmem:[%s1 + $0x30] sm:$0xf]
    %v52 = vld [vmem:[%s1 + $0x34] sm:$0xf]
    %v53 = vld [vmem:[%s1 + $0x38] sm:$0xf]
    %v54 = vld [vmem:[%s1 + $0x3c] sm:$0xf]
    %v55 = vld [vmem:[%s1 + $0x40] sm:$0xf]
    %v56 = vld [vmem:[%s1 + $0x44] sm:$0xf]
    %v57 = vld [vmem:[%s1 + $0x48] sm:$0xf]
    %v58 = vld [vmem:[%s1 + $0x4c] sm:$0xf]
    %v59 = vld [vmem:[%s1 + $0x50] sm:$0xf]
    %v60 = vld [vmem:[%s1 + $0x54] sm:$0xf]
    %v61 = vld [vmem:[%s1 + $0x58] sm:$0xf]
    %v62 = vld [vmem:[%s1 + $0x5c] sm:$0xf]
    %v63 = vld [vmem:[%s1 + $0x60] sm:$0xf]
    %v64 = vld [vmem:[%s1 + $0x64] sm:$0xf]
    %v65 = vld [vmem:[%s1 + $0x68] sm:$0xf]
    %v66 = vld [vmem:[%s1 + $0x6c] sm:$0xf]
    %v67 = vld [vmem:[%s1 + $0x70] sm:$0xf]
    %v68 = vld [vmem:[%s1 + $0x74] sm:$0xf]
    %v69 = vld [vmem:[%s1 + $0x78] sm:$0xf]
    %v70 = vld [vmem:[%s1 + $0x7c] sm:$0xf]
    %v71 = vld [vmem:[%s1 + $0x80] sm:$0xf]
    %v72 = vld [vmem:[%s1 + $0x84] sm:$0xf]
    %v73 = vld [vmem:[%s1 + $0x88] sm:$0xf]
    %v74 = vld [vmem:[%s1 + $0x8c] sm:$0xf]
    %v75 = vld [vmem:[%s1 + $0x90] sm:$0xf]
    %v76 = vld [vmem:[%s1 + $0x94] sm:$0xf]
    %v77 = vld [vmem:[%s1 + $0x98] sm:$0xf]
    %v78 = vld [vmem:[%s1 + $0x9c] sm:$0xf]
    %v79 = vld [vmem:[%s1 + $0xa0] sm:$0xf]
    %v80 = vld [vmem:[%s1 + $0xa4] sm:$0xf]
    %v81 = vld [vmem:[%s1 + $0xa8] sm:$0xf]
    %v82 = vld [vmem:[%s1 + $0xac] sm:$0xf]
    %v83 = vld [vmem:[%s1 + $0xb0] sm:$0xf]
    %v84 = vld [vmem:[%s1 + $0xb4] sm:$0xf]
    %v85 = vld [vmem:[%s1 + $0xb8] sm:$0xf]
    %v86 = vld [vmem:[%s1 + $0xbc] sm:$0xf]
    %v87 = vld [vmem:[%s1 + $0xc0] sm:$0xf]
    %v88 = vld [vmem:[%s1 + $0xc4] sm:$0xf]
    %v89 = vld [vmem:[%s1 + $0xc8] sm:$0xf]
    %v90 = vld [vmem:[%s1 + $0xcc] sm:$0xf]
    %v91 = vld [vmem:[%s1 + $0xd0] sm:$0xf]
    %v92 = vld [vmem:[%s1 + $0xd4] sm:$0xf]
    %v93 = vld [vmem:[%s1 + $0xd8] sm:$0xf]
    %v94 = vld [vmem:[%s1 + $0xdc] sm:$0xf]
    %v95 = vld [vmem:[%s1 + $0xe0] sm:$0xf]
    %v96 = vld [vmem:[%s1 + $0xe4] sm:$0xf]
    %v97 = vld [vmem:[%s1 + $0xe8] sm:$0xf]
    %v98 = vld [vmem:[%s1 + $0xec] sm:$0xf]
    %v99 = vld [vmem:[%s1 + $0xf0] sm:$0xf]
    %v100 = vld [vmem:[%s1 + $0xf4] sm:$0xf]
    %v101 = vld [vmem:[%s1 + $0xf8] sm:$0xf]
    %v102 = vld [vmem:[%s1 + $0xfc] sm:$0xf]
    %v103 = vld [vmem:[%s1 + $0x100] sm:$0xf]
    %v104 = vld [vmem:[%s1 + $0x104] sm:$0xf]
    %v105 = vld [vmem:[%s1 + $0x108] sm:$0xf]
    %v106 = vld [vmem:[%s1 + $0x10c] sm:$0xf]
    %v107 = vld [vmem:[%s1 + $0x110] sm:$0xf]
    %v108 = vld [vmem:[%s1 + $0x114] sm:$0xf]
    %v109 = vld [vmem:[%s1 + $0x118] sm:$0xf]
    %v110 = vld [vmem:[%s1 + $0x11c] sm:$0xf]
    %v111 = vld [vmem:[%s1 + $0x120] sm:$0xf]
    %v112 = vld [vmem:[%s1 + $0x124] sm:$0xf]
    %v113 = vld [vmem:[%s1 + $0x128] sm:$0xf]
    %v114 = vld [vmem:[%s1 + $0x12c] sm:$0xf]
    %v115 = vld [vmem:[%s1 + $0x130] sm:$0xf]
    %v116 = vld [vmem:[%s1 + $0x134] sm:$0xf]
    %v117 = vld [vmem:[%s1 + $0x138] sm:$0xf]
    %v118 = vld [vmem:[%s1 + $0x13c] sm:$0xf]
    %v119 = vld [vmem:[%s1 + $0x140] sm:$0xf]
    %v120 = vld [vmem:[%s1 + $0x144] sm:$0xf]
    %v121 = vld [vmem:[%s1 + $0x148] sm:$0xf]
    %v122 = vld [vmem:[%s1 + $0x14c] sm:$0xf]
    %v123 = vld [vmem:[%s1 + $0x150] sm:$0xf]
    %v124 = vld [vmem:[%s1 + $0x154] sm:$0xf]
    %v125 = vld [vmem:[%s1 + $0x158] sm:$0xf]
    %v126 = vld [vmem:[%s1 + $0x15c] sm:$0xf]
    %v127 = vld [vmem:[%s1 + $0x160] sm:$0xf]
    %v128 = vld [vmem:[%s1 + $0x164] sm:$0xf]
    %v129 = vld [vmem:[%s1 + $0x168] sm:$0xf]
    %v130 = vld [vmem:[%s1 + $0x16c] sm:$0xf]
    %v131 = vld [vmem:[%s1 + $0x170] sm:$0xf]
    %v132 = vld [vmem:[%s1 + $0x174] sm:$0xf]
    %v133 = vld [vmem:[%s1 + $0x178] sm:$0xf]
    %v134 = vld [vmem:[%s1 + $0x17c] sm:$0xf]
    %v135 = vld [vmem:[%s1 + $0x180] sm:$0xf]
    %v136 = vld [vmem:[%s1 + $0x184] sm:$0xf]
    %v137 = vld [vmem:[%s1 + $0x188] sm:$0xf]
    %v138 = vld [vmem:[%s1 + $0x18c] sm:$0xf]
    %v139 = vld [vmem:[%s1 + $0x190] sm:$0xf]
    %v140 = vld [vmem:[%s1 + $0x194] sm:$0xf]
    %v141 = vld [vmem:[%s1 + $0x198] sm:$0xf]
    %v142 = vld [vmem:[%s1 + $0x19c] sm:$0xf]
    %v143 = vld [vmem:[%s1 + $0x1a0] sm:$0xf]
    %v144 = vld [vmem:[%s1 + $0x1a4] sm:$0xf]
    %v145 = vld [vmem:[%s1 + $0x1a8] sm:$0xf]
    %v146 = vld [vmem:[%s1 + $0x1ac] sm:$0xf]
    %v147 = vld [vmem:[%s1 + $0x1b0] sm:$0xf]
    %v148 = vld [vmem:[%s1 + $0x1b4] sm:$0xf]
    %v149 = vld [vmem:[%s1 + $0x1b8] sm:$0xf]
    %v150 = vld [vmem:[%s1 + $0x1bc] sm:$0xf]
    %v151 = vld [vmem:[%s1 + $0x1c0] sm:$0xf]
    %v152 = vld [vmem:[%s1 + $0x1c4] sm:$0xf]
    %v153 = vld [vmem:[%s1 + $0x1c8] sm:$0xf]
    %v154 = vld [vmem:[%s1 + $0x1cc] sm:$0xf]
    %v155 = vld [vmem:[%s1 + $0x1d0] sm:$0xf]
    %v156 = vld [vmem:[%s1 + $0x1d4] sm:$0xf]
    %v157 = vld [vmem:[%s1 + $0x1d8] sm:$0xf]
    %v158 = vld [vmem:[%s1 + $0x1dc] sm:$0xf]
    %v159 = vld [vmem:[%s1 + $0x1e0] sm:$0xf]
    %v160 = vld [vmem:[%s1 + $0x1e4] sm:$0xf]
    %v161 = vld [vmem:[%s1 + $0x1e8] sm:$0xf]
    %v162 = vld [vmem:[%s1 + $0x1ec] sm:$0xf]
    %v163 = vld [vmem:[%s1 + $0x1f0] sm:$0xf]
    %v164 = vld [vmem:[%s1 + $0x1f4] sm:$0xf]
    %v165 = vld [vmem:[%s1 + $0x1f8] sm:$0xf]
    %v166 = vld [vmem:[%s1 + $0x1fc] sm:$0xf]
    %v167 = vld [vmem:[%s1 + $0x200] sm:$0xf]
    %v168 = vld [vmem:[%s1 + $0x204] sm:$0xf]
    %v169 = vld [vmem:[%s1 + $0x208] sm:$0xf]
    %v170 = vld [vmem:[%s1 + $0x20c] sm:$0xf]
    %v171 = vld [vmem:[%s1 + $0x210] sm:$0xf]
    %v172 = vld [vmem:[%s1 + $0x214] sm:$0xf]
    %v173 = vld [vmem:[%s1 + $0x218] sm:$0xf]
    %v174 = vld [vmem:[%s1 + $0x21c] sm:$0xf]
    %v175 = vld [vmem:[%s1 + $0x220] sm:$0xf]
    %v176 = vld [vmem:[%s1 + $0x224] sm:$0xf]
    %v177 = vld [vmem:[%s1 + $0x228] sm:$0xf]
    %v178 = vld [vmem:[%s1 + $0x22c] sm:$0xf]
    %v179 = vld [vmem:[%s1 + $0x230] sm:$0xf]
    %v180 = vld [vmem:[%s1 + $0x234] sm:$0xf]
    %v181 = vld [vmem:[%s1 + $0x238] sm:$0xf]
    %v182 = vld [vmem:[%s1 + $0x23c] sm:$0xf]
    %v183 = vld [vmem:[%s1 + $0x240] sm:$0xf]
    %v184 = vld [vmem:[%s1 + $0x244] sm:$0xf]
    %v185 = vld [vmem:[%s1 + $0x248] sm:$0xf]
    %v186 = vld [vmem:[%s1 + $0x24c] sm:$0xf]
    %v187 = vld [vmem:[%s1 + $0x250] sm:$0xf]
    %v188 = vld [vmem:[%s1 + $0x254] sm:$0xf]
    %v189 = vld [vmem:[%s1 + $0x258] sm:$0xf]
    %v190 = vld [vmem:[%s1 + $0x25c] sm:$0xf]
    %v191 = vld [vmem:[%s1 + $0x260] sm:$0xf]
    %v192 = vld [vmem:[%s1 + $0x264] sm:$0xf]
    %v193 = vld [vmem:[%s1 + $0x268] sm:$0xf]
    %v194 = vld [vmem:[%s1 + $0x26c] sm:$0xf]
    %v195 = vld [vmem:[%s1 + $0x270] sm:$0xf]
    %v196 = vld [vmem:[%s1 + $0x274] sm:$0xf]
    %v197 = vld [vmem:[%s1 + $0x278] sm:$0xf]
    %v198 = vld [vmem:[%s1 + $0x27c] sm:$0xf]
    %v199 = vld [vmem:[%s1 + $0x280] sm:$0xf]
    %v200 = vld [vmem:[%s1 + $0x284] sm:$0xf]
    %v201 = vld [vmem:[%s1 + $0x288] sm:$0xf]
    %v202 = vld [vmem:[%s1 + $0x28c] sm:$0xf]
    %v203 = vld [vmem:[%s1 + $0x290] sm:$0xf]
    %v204 = vld [vmem:[%s1 + $0x294] sm:$0xf]
    %v205 = vld [vmem:[%s1 + $0x298] sm:$0xf]
    %v206 = vld [vmem:[%s1 + $0x29c] sm:$0xf]
    %v207 = vld [vmem:[%s1 + $0x2a0] sm:$0xf]
    %v208 = vld [vmem:[%s1 + $0x2a4] sm:$0xf]
    %v209 = vld [vmem:[%s1 + $0x2a8] sm:$0xf]
    %v210 = vld [vmem:[%s1 + $0x2ac] sm:$0xf]
    %v211 = vld [vmem:[%s1 + $0x2b0] sm:$0xf]
    %v212 = vld [vmem:[%s1 + $0x2b4] sm:$0xf]
    %v213 = vld [vmem:[%s1 + $0x2b8] sm:$0xf]
    %v214 = vld [vmem:[%s1 + $0x2bc] sm:$0xf]
    %v215 = vld [vmem:[%s1 + $0x2c0] sm:$0xf]
    %v216 = vld [vmem:[%s1 + $0x2c4] sm:$0xf]
    %v217 = vld [vmem:[%s1 + $0x2c8] sm:$0xf]
    %v218 = vld [vmem:[%s1 + $0x2cc] sm:$0xf]
    %v219 = vld [vmem:[%s1 + $0x2d0] sm:$0xf]
    %v220 = vld [vmem:[%s1 + $0x2d4] sm:$0xf]
    %v221 = vld [vmem:[%s1 + $0x2d8] sm:$0xf]
    %v222 = vld [vmem:[%s1 + $0x2dc] sm:$0xf]
    %v223 = vld [vmem:[%s1 + $0x2e0] sm:$0xf]
    %v224 = vld [vmem:[%s1 + $0x2e4] sm:$0xf]
    %v225 = vld [vmem:[%s1 + $0x2e8] sm:$0xf]
    %v226 = vld [vmem:[%s1 + $0x2ec] sm:$0xf]
    %v227 = vld [vmem:[%s1 + $0x2f0] sm:$0xf]
    %v228 = vld [vmem:[%s1 + $0x2f4] sm:$0xf]
    %v229 = vld [vmem:[%s1 + $0x2f8] sm:$0xf]
    %v230 = vld [vmem:[%s1 + $0x2fc] sm:$0xf]
    %v231 = vld [vmem:[%s1 + $0x300] sm:$0xf]
    %v232 = vld [vmem:[%s1 + $0x304] sm:$0xf]
    %v233 = vld [vmem:[%s1 + $0x308] sm:$0xf]
    %v234 = vld [vmem:[%s1 + $0x30c] sm:$0xf]
    %v235 = vld [vmem:[%s1 + $0x310] sm:$0xf]
    %v236 = vld [vmem:[%s1 + $0x314] sm:$0xf]
    %v237 = vld [vmem:[%s1 + $0x318] sm:$0xf]
    %v238 = vld [vmem:[%s1 + $0x31c] sm:$0xf]
    %v239 = vld [vmem:[%s1 + $0x320] sm:$0xf]
    %v240 = vld [vmem:[%s1 + $0x324] sm:$0xf]
    %v241 = vld [vmem:[%s1 + $0x328] sm:$0xf]
    %v242 = vld [vmem:[%s1 + $0x32c] sm:$0xf]
    %v243 = vld [vmem:[%s1 + $0x330] sm:$0xf]
    %v244 = vld [vmem:[%s1 + $0x334] sm:$0xf]
    %v245 = vld [vmem:[%s1 + $0x338] sm:$0xf]
    %v246 = vld [vmem:[%s1 + $0x33c] sm:$0xf]
    %v247 = vld [vmem:[%s1 + $0x340] sm:$0xf]
    %v248 = vld [vmem:[%s1 + $0x344] sm:$0xf]
    %v249 = vld [vmem:[%s1 + $0x348] sm:$0xf]
    %v250 = vld [vmem:[%s1 + $0x34c] sm:$0xf]
    %v251 = vld [vmem:[%s1 + $0x350] sm:$0xf]
    %v252 = vld [vmem:[%s1 + $0x354] sm:$0xf]
    %v253 = vld [vmem:[%s1 + $0x358] sm:$0xf]
    %v254 = vld [vmem:[%s1 + $0x35c] sm:$0xf]
    %v255 = vld [vmem:[%s1 + $0x360] sm:$0xf]
    %v256 = vld [vmem:[%s1 + $0x364] sm:$0xf]
    %v257 = vld [vmem:[%s1 + $0x368] sm:$0xf]
    %v258 = vld [vmem:[%s1 + $0x36c] sm:$0xf]
    %v259 = vld [vmem:[%s1 + $0x370] sm:$0xf]
    %v260 = vld [vmem:[%s1 + $0x374] sm:$0xf]
    %v261 = vld [vmem:[%s1 + $0x378] sm:$0xf]
    %v262 = vld [vmem:[%s1 + $0x37c] sm:$0xf]
    %v263 = vld [vmem:[%s1 + $0x380] sm:$0xf]
    %v264 = vld [vmem:[%s1 + $0x384] sm:$0xf]
    %v265 = vld [vmem:[%s1 + $0x388] sm:$0xf]
    %v266 = vld [vmem:[%s1 + $0x38c] sm:$0xf]
    %v267 = vld [vmem:[%s1 + $0x390] sm:$0xf]
    %v268 = vld [vmem:[%s1 + $0x394] sm:$0xf]
    %v269 = vld [vmem:[%s1 + $0x398] sm:$0xf]
    %v270 = vld [vmem:[%s1 + $0x39c] sm:$0xf]
    %v271 = vld [vmem:[%s1 + $0x3a0] sm:$0xf]
    %v272 = vld [vmem:[%s1 + $0x3a4] sm:$0xf]
    %v273 = vld [vmem:[%s1 + $0x3a8] sm:$0xf]
    %v274 = vld [vmem:[%s1 + $0x3ac] sm:$0xf]
    %v275 = vld [vmem:[%s1 + $0x3b0] sm:$0xf]
    %v276 = vld [vmem:[%s1 + $0x3b4] sm:$0xf]
    %v277 = vld [vmem:[%s1 + $0x3b8] sm:$0xf]
    %v278 = vld [vmem:[%s1 + $0x3bc] sm:$0xf]
    %v279 = vld [vmem:[%s1 + $0x3c0] sm:$0xf]
    %v280 = vld [vmem:[%s1 + $0x3c4] sm:$0xf]
    %v281 = vld [vmem:[%s1 + $0x3c8] sm:$0xf]
    %v282 = vld [vmem:[%s1 + $0x3cc] sm:$0xf]
    %v283 = vld [vmem:[%s1 + $0x3d0] sm:$0xf]
    %v284 = vld [vmem:[%s1 + $0x3d4] sm:$0xf]
    %v285 = vld [vmem:[%s1 + $0x3d8] sm:$0xf]
    %v286 = vld [vmem:[%s1 + $0x3dc] sm:$0xf]
    %v287 = vld [vmem:[%s1 + $0x3e0] sm:$0xf]
    %v288 = vld [vmem:[%s1 + $0x3e4] sm:$0xf]
    %v289 = vld [vmem:[%s1 + $0x3e8] sm:$0xf]
    %v290 = vld [vmem:[%s1 + $0x3ec] sm:$0xf]
    %v291 = vld [vmem:[%s1 + $0x3f0] sm:$0xf]
    %v292 = vld [vmem:[%s1 + $0x3f4] sm:$0xf]
    %v293 = vld [vmem:[%s1 + $0x3f8] sm:$0xf]
    %v294 = vld [vmem:[%s1 + $0x3fc] sm:$0xf]
    %v295 = vld [vmem:[%s1 + $0x400] sm:$0xf]
    %v296 = vld [vmem:[%s1 + $0x404] sm:$0xf]
    %v297 = vld [vmem:[%s1 + $0x408] sm:$0xf]
    %v298 = vld [vmem:[%s1 + $0x40c] sm:$0xf]
    %v299 = vld [vmem:[%s1 + $0x410] sm:$0xf]
    %v300 = vld [vmem:[%s1 + $0x414] sm:$0xf]
    %v301 = vld [vmem:[%s1 + $0x418] sm:$0xf]
    %v302 = vld [vmem:[%s1 + $0x41c] sm:$0xf]
    %v303 = vld [vmem:[%s1 + $0x420] sm:$0xf]
    %v304 = vld [vmem:[%s1 + $0x424] sm:$0xf]
    %v305 = vld [vmem:[%s1 + $0x428] sm:$0xf]
    %v306 = vld [vmem:[%s1 + $0x42c] sm:$0xf]
    %v307 = vld [vmem:[%s1 + $0x430] sm:$0xf]
    %v308 = vld [vmem:[%s1 + $0x434] sm:$0xf]
    %v309 = vld [vmem:[%s1 + $0x438] sm:$0xf]
    %v310 = vld [vmem:[%s1 + $0x43c] sm:$0xf]
    %v311 = vld [vmem:[%s1 + $0x440] sm:$0xf]
    %v312 = vld [vmem:[%s1 + $0x444] sm:$0xf]
    %v313 = vld [vmem:[%s1 + $0x448] sm:$0xf]
    %v314 = vld [vmem:[%s1 + $0x44c] sm:$0xf]
    %v315 = vld [vmem:[%s1 + $0x450] sm:$0xf]
    %v316 = vld [vmem:[%s1 + $0x454] sm:$0xf]
    %v317 = vld [vmem:[%s1 + $0x458] sm:$0xf]
    %v318 = vld [vmem:[%s1 + $0x45c] sm:$0xf]
    %v319 = vld [vmem:[%s1 + $0x460] sm:$0xf]
    %v320 = vld [vmem:[%s1 + $0x464] sm:$0xf]
    %v321 = vld [vmem:[%s1 + $0x468] sm:$0xf]
    %v322 = vld [vmem:[%s1 + $0x46c] sm:$0xf]
    %v323 = vld [vmem:[%s1 + $0x470] sm:$0xf]
    %v324 = vld [vmem:[%s1 + $0x474] sm:$0xf]
    %v325 = vld [vmem:[%s1 + $0x478] sm:$0xf]
    %v326 = vld [vmem:[%s1 + $0x47c] sm:$0xf]
    %v327 = vld [vmem:[%s1 + $0x480] sm:$0xf]
    %v328 = vld [vmem:[%s1 + $0x484] sm:$0xf]
    %v329 = vld [vmem:[%s1 + $0x488] sm:$0xf]
    %v330 = vld [vmem:[%s1 + $0x48c] sm:$0xf]
    %v331 = vld [vmem:[%s1 + $0x490] sm:$0xf]
    %v332 = vld [vmem:[%s1 + $0x494] sm:$0xf]
    %v333 = vld [vmem:[%s1 + $0x498] sm:$0xf]
    %v334 = vld [vmem:[%s1 + $0x49c] sm:$0xf]
    %v335 = vld [vmem:[%s1 + $0x4a0] sm:$0xf]
    %v336 = vld [vmem:[%s1 + $0x4a4] sm:$0xf]
    %v337 = vld [vmem:[%s1 + $0x4a8] sm:$0xf]
    %v338 = vld [vmem:[%s1 + $0x4ac] sm:$0xf]
    %v339 = vld [vmem:[%s1 + $0x4b0] sm:$0xf]
    %v340 = vld [vmem:[%s1 + $0x4b4] sm:$0xf]
    %v341 = vld [vmem:[%s1 + $0x4b8] sm:$0xf]
    %v342 = vld [vmem:[%s1 + $0x4bc] sm:$0xf]
    %v343 = vld [vmem:[%s1 + $0x4c0] sm:$0xf]
    %v344 = vld [vmem:[%s1 + $0x4c4] sm:$0xf]
    %v345 = vld [vmem:[%s1 + $0x4c8] sm:$0xf]
    %v346 = vld [vmem:[%s1 + $0x4cc] sm:$0xf]
    %v347 = vld [vmem:[%s1 + $0x4d0] sm:$0xf]
    %v348 = vld [vmem:[%s1 + $0x4d4] sm:$0xf]
    %v349 = vld [vmem:[%s1 + $0x4d8] sm:$0xf]
    %v350 = vld [vmem:[%s1 + $0x4dc] sm:$0xf]
    %v351 = vld [vmem:[%s1 + $0x4e0] sm:$0xf]
    %v352 = vld [vmem:[%s1 + $0x4e4] sm:$0xf]
    %v353 = vld [vmem:[%s1 + $0x4e8] sm:$0xf]
    %v354 = vld [vmem:[%s1 + $0x4ec] sm:$0xf]
    %v355 = vld [vmem:[%s1 + $0x4f0] sm:$0xf]
    %v356 = vld [vmem:[%s1 + $0x4f4] sm:$0xf]
    %v357 = vld [vmem:[%s1 + $0x4f8] sm:$0xf]
    %v358 = vld [vmem:[%s1 + $0x4fc] sm:$0xf]
    %v359 = vld [vmem:[%s1 + $0x500] sm:$0xf]
    %v360 = vld [vmem:[%s1 + $0x504] sm:$0xf]
    %v361 = vld [vmem:[%s1 + $0x508] sm:$0xf]
    %v362 = vld [vmem:[%s1 + $0x50c] sm:$0xf]
    %v363 = vld [vmem:[%s1 + $0x510] sm:$0xf]
    %v364 = vld [vmem:[%s1 + $0x514] sm:$0xf]
    %v365 = vld [vmem:[%s1 + $0x518] sm:$0xf]
    %v366 = vld [vmem:[%s1 + $0x51c] sm:$0xf]
    %v367 = vld [vmem:[%s1 + $0x520] sm:$0xf]
    %v368 = vld [vmem:[%s1 + $0x524] sm:$0xf]
    %v369 = vld [vmem:[%s1 + $0x528] sm:$0xf]
    %v370 = vld [vmem:[%s1 + $0x52c] sm:$0xf]
    %v371 = vld [vmem:[%s1 + $0x530] sm:$0xf]
    %v372 = vld [vmem:[%s1 + $0x534] sm:$0xf]
    %v373 = vld [vmem:[%s1 + $0x538] sm:$0xf]
    %v374 = vld [vmem:[%s1 + $0x53c] sm:$0xf]
    %v375 = vld [vmem:[%s1 + $0x540] sm:$0xf]
    %v376 = vld [vmem:[%s1 + $0x544] sm:$0xf]
    %v377 = vld [vmem:[%s1 + $0x548] sm:$0xf]
    %v378 = vld [vmem:[%s1 + $0x54c] sm:$0xf]
    %v379 = vld [vmem:[%s1 + $0x550] sm:$0xf]
    %v380 = vld [vmem:[%s1 + $0x554] sm:$0xf]
    %v381 = vld [vmem:[%s1 + $0x558] sm:$0xf]
    %v382 = vld [vmem:[%s1 + $0x55c] sm:$0xf]
    %v383 = vld [vmem:[%s1 + $0x560] sm:$0xf]
    %v384 = vld [vmem:[%s1 + $0x564] sm:$0xf]
    %v385 = vld [vmem:[%s1 + $0x568] sm:$0xf]
    %v386 = vld [vmem:[%s1 + $0x56c] sm:$0xf]
    %v387 = vld [vmem:[%s1 + $0x570] sm:$0xf]
    %v388 = vld [vmem:[%s1 + $0x574] sm:$0xf]
    %v389 = vld [vmem:[%s1 + $0x578] sm:$0xf]
    %v390 = vld [vmem:[%s1 + $0x57c] sm:$0xf]
    %v391 = vld [vmem:[%s1 + $0x580] sm:$0xf]
    %v392 = vld [vmem:[%s1 + $0x584] sm:$0xf]
    %v393 = vld [vmem:[%s1 + $0x588] sm:$0xf]
    %v394 = vld [vmem:[%s1 + $0x58c] sm:$0xf]
    %v395 = vld [vmem:[%s1 + $0x590] sm:$0xf]
    %v396 = vld [vmem:[%s1 + $0x594] sm:$0xf]
    %v397 = vld [vmem:[%s1 + $0x598] sm:$0xf]
    %v398 = vld [vmem:[%s1 + $0x59c] sm:$0xf]
    %v399 = vld [vmem:[%s1 + $0x5a0] sm:$0xf]
    %v400 = vld [vmem:[%s1 + $0x5a4] sm:$0xf]
    %v401 = vld [vmem:[%s1 + $0x5a8] sm:$0xf]
    %v402 = vld [vmem:[%s1 + $0x5ac] sm:$0xf]
    %v403 = vld [vmem:[%s1 + $0x5b0] sm:$0xf]
    %v404 = vld [vmem:[%s1 + $0x5b4] sm:$0xf]
    %v405 = vld [vmem:[%s1 + $0x5b8] sm:$0xf]
    %v406 = vld [vmem:[%s1 + $0x5bc] sm:$0xf]
    %v407 = vld [vmem:[%s1 + $0x5c0] sm:$0xf]
    %v408 = vld [vmem:[%s1 + $0x5c4] sm:$0xf]
    %v409 = vld [vmem:[%s1 + $0x5c8] sm:$0xf]
    %v410 = vld [vmem:[%s1 + $0x5cc] sm:$0xf]
    %v411 = vld [vmem:[%s1 + $0x5d0] sm:$0xf]
    %v412 = vld [vmem:[%s1 + $0x5d4] sm:$0xf]
    %v413 = vld [vmem:[%s1 + $0x5d8] sm:$0xf]
    %v414 = vld [vmem:[%s1 + $0x5dc] sm:$0xf]
    %v415 = vld [vmem:[%s1 + $0x5e0] sm:$0xf]
    %v416 = vld [vmem:[%s1 + $0x5e4] sm:$0xf]
    %v417 = vld [vmem:[%s1 + $0x5e8] sm:$0xf]
    %v418 = vld [vmem:[%s1 + $0x5ec] sm:$0xf]
    %v419 = vld [vmem:[%s1 + $0x5f0] sm:$0xf]
    %v420 = vld [vmem:[%s1 + $0x5f4] sm:$0xf]
    %v421 = vld [vmem:[%s1 + $0x5f8] sm:$0xf]
    %v422 = vld [vmem:[%s1 + $0x5fc] sm:$0xf]
    %v423 = vld [vmem:[%s1 + $0x600] sm:$0xf]
    %v424 = vld [vmem:[%s1 + $0x604] sm:$0xf]
    %v425 = vld [vmem:[%s1 + $0x608] sm:$0xf]
    %v426 = vld [vmem:[%s1 + $0x60c] sm:$0xf]
    %v427 = vld [vmem:[%s1 + $0x610] sm:$0xf]
    %v428 = vld [vmem:[%s1 + $0x614] sm:$0xf]
    %v429 = vld [vmem:[%s1 + $0x618] sm:$0xf]
    %v430 = vld [vmem:[%s1 + $0x61c] sm:$0xf]
    %v431 = vld [vmem:[%s1 + $0x620] sm:$0xf]
    %v432 = vld [vmem:[%s1 + $0x624] sm:$0xf]
    %v433 = vld [vmem:[%s1 + $0x628] sm:$0xf]
    %v434 = vld [vmem:[%s1 + $0x62c] sm:$0xf]
    %v435 = vld [vmem:[%s1 + $0x630] sm:$0xf]
    %v436 = vld [vmem:[%s1 + $0x634] sm:$0xf]
    %v437 = vld [vmem:[%s1 + $0x638] sm:$0xf]
    %v438 = vld [vmem:[%s1 + $0x63c] sm:$0xf]
    %v439 = vld [vmem:[%s1 + $0x640] sm:$0xf]
    %v440 = vld [vmem:[%s1 + $0x644] sm:$0xf]
    %v441 = vld [vmem:[%s1 + $0x648] sm:$0xf]
    %v442 = vld [vmem:[%s1 + $0x64c] sm:$0xf]
    %v443 = vld [vmem:[%s1 + $0x650] sm:$0xf]
    %v444 = vld [vmem:[%s1 + $0x654] sm:$0xf]
    %v445 = vld [vmem:[%s1 + $0x658] sm:$0xf]
    %v446 = vld [vmem:[%s1 + $0x65c] sm:$0xf]
    %v447 = vld [vmem:[%s1 + $0x660] sm:$0xf]
    %v448 = vld [vmem:[%s1 + $0x664] sm:$0xf]
    %v449 = vld [vmem:[%s1 + $0x668] sm:$0xf]
    %v450 = vld [vmem:[%s1 + $0x66c] sm:$0xf]
    %v451 = vld [vmem:[%s1 + $0x670] sm:$0xf]
    %v452 = vld [vmem:[%s1 + $0x674] sm:$0xf]
    %v453 = vld [vmem:[%s1 + $0x678] sm:$0xf]
    %v454 = vld [vmem:[%s1 + $0x67c] sm:$0xf]
    %v455 = vld [vmem:[%s1 + $0x680] sm:$0xf]
    %v456 = vld [vmem:[%s1 + $0x684] sm:$0xf]
    %v457 = vld [vmem:[%s1 + $0x688] sm:$0xf]
    %v458 = vld [vmem:[%s1 + $0x68c] sm:$0xf]
    %v459 = vld [vmem:[%s1 + $0x690] sm:$0xf]
    %v460 = vld [vmem:[%s1 + $0x694] sm:$0xf]
    %v461 = vld [vmem:[%s1 + $0x698] sm:$0xf]
    %v462 = vld [vmem:[%s1 + $0x69c] sm:$0xf]
    %v463 = vld [vmem:[%s1 + $0x6a0] sm:$0xf]
    %v464 = vld [vmem:[%s1 + $0x6a4] sm:$0xf]
    %v465 = vld [vmem:[%s1 + $0x6a8] sm:$0xf]
    %v466 = vld [vmem:[%s1 + $0x6ac] sm:$0xf]
    %v467 = vld [vmem:[%s1 + $0x6b0] sm:$0xf]
    %v468 = vld [vmem:[%s1 + $0x6b4] sm:$0xf]
    %v469 = vld [vmem:[%s1 + $0x6b8] sm:$0xf]
    %v470 = vld [vmem:[%s1 + $0x6bc] sm:$0xf]
    %v471 = vld [vmem:[%s1 + $0x6c0] sm:$0xf]
    %v472 = vld [vmem:[%s1 + $0x6c4] sm:$0xf]
    %v473 = vld [vmem:[%s1 + $0x6c8] sm:$0xf]
    %v474 = vld [vmem:[%s1 + $0x6cc] sm:$0xf]
    %v475 = vld [vmem:[%s1 + $0x6d0] sm:$0xf]
    %v476 = vld [vmem:[%s1 + $0x6d4] sm:$0xf]
    %v477 = vld [vmem:[%s1 + $0x6d8] sm:$0xf]
    %v478 = vld [vmem:[%s1 + $0x6dc] sm:$0xf]
    %v479 = vld [vmem:[%s1 + $0x6e0] sm:$0xf]
    %v480 = vld [vmem:[%s1 + $0x6e4] sm:$0xf]
    %v481 = vld [vmem:[%s1 + $0x6e8] sm:$0xf]
    %v482 = vld [vmem:[%s1 + $0x6ec] sm:$0xf]
    %v483 = vld [vmem:[%s1 + $0x6f0] sm:$0xf]
    %v484 = vld [vmem:[%s1 + $0x6f4] sm:$0xf]
    %v485 = vld [vmem:[%s1 + $0x6f8] sm:$0xf]
    %v486 = vld [vmem:[%s1 + $0x6fc] sm:$0xf]
    %v487 = vld [vmem:[%s1 + $0x700] sm:$0xf]
    %v488 = vld [vmem:[%s1 + $0x704] sm:$0xf]
    %v489 = vld [vmem:[%s1 + $0x708] sm:$0xf]
    %v490 = vld [vmem:[%s1 + $0x70c] sm:$0xf]
    %v491 = vld [vmem:[%s1 + $0x710] sm:$0xf]
    %v492 = vld [vmem:[%s1 + $0x714] sm:$0xf]
    %v493 = vld [vmem:[%s1 + $0x718] sm:$0xf]
    %v494 = vld [vmem:[%s1 + $0x71c] sm:$0xf]
    %v495 = vld [vmem:[%s1 + $0x720] sm:$0xf]
    %v496 = vld [vmem:[%s1 + $0x724] sm:$0xf]
    %v497 = vld [vmem:[%s1 + $0x728] sm:$0xf]
    %v498 = vld [vmem:[%s1 + $0x72c] sm:$0xf]
    %v499 = vld [vmem:[%s1 + $0x730] sm:$0xf]
    %v500 = vld [vmem:[%s1 + $0x734] sm:$0xf]
    %v501 = vld [vmem:[%s1 + $0x738] sm:$0xf]
    %v502 = vld [vmem:[%s1 + $0x73c] sm:$0xf]
    %v503 = vld [vmem:[%s1 + $0x740] sm:$0xf]
    %v504 = vld [vmem:[%s1 + $0x744] sm:$0xf]
    %v505 = vld [vmem:[%s1 + $0x748] sm:$0xf]
    %v506 = vld [vmem:[%s1 + $0x74c] sm:$0xf]
    %v507 = vld [vmem:[%s1 + $0x750] sm:$0xf]
    %v508 = vld [vmem:[%s1 + $0x754] sm:$0xf]
    %v509 = vld [vmem:[%s1 + $0x758] sm:$0xf]
    %v510 = vld [vmem:[%s1 + $0x75c] sm:$0xf]
    %v511 = vld [vmem:[%s1 + $0x760] sm:$0xf]
    %v512 = vld [vmem:[%s1 + $0x764] sm:$0xf]
    %v513 = vld [vmem:[%s1 + $0x768] sm:$0xf]
    %v514 = vld [vmem:[%s1 + $0x76c] sm:$0xf]
    %v515 = vld [vmem:[%s1 + $0x770] sm:$0xf]
    %v516 = vld [vmem:[%s1 + $0x774] sm:$0xf]
    %v517 = vld [vmem:[%s1 + $0x778] sm:$0xf]
    %v518 = vld [vmem:[%s1 + $0x77c] sm:$0xf]
    %v519 = vld [vmem:[%s1 + $0x780] sm:$0xf]
    %v520 = vld [vmem:[%s1 + $0x784] sm:$0xf]
    %v521 = vld [vmem:[%s1 + $0x788] sm:$0xf]
    %v522 = vld [vmem:[%s1 + $0x78c] sm:$0xf]
    %v523 = vld [vmem:[%s1 + $0x790] sm:$0xf]
    %v524 = vld [vmem:[%s1 + $0x794] sm:$0xf]
    %v525 = vld [vmem:[%s1 + $0x798] sm:$0xf]
    %v526 = vld [vmem:[%s1 + $0x79c] sm:$0xf]
    %v527 = vld [vmem:[%s1 + $0x7a0] sm:$0xf]
    %v528 = vld [vmem:[%s1 + $0x7a4] sm:$0xf]
    %v529 = vld [vmem:[%s1 + $0x7a8] sm:$0xf]
    %v530 = vld [vmem:[%s1 + $0x7ac] sm:$0xf]
    %v531 = vld [vmem:[%s1 + $0x7b0] sm:$0xf]
    %v532 = vld [vmem:[%s1 + $0x7b4] sm:$0xf]
    %v533 = vld [vmem:[%s1 + $0x7b8] sm:$0xf]
    %v534 = vld [vmem:[%s1 + $0x7bc] sm:$0xf]
    %v535 = vld [vmem:[%s1 + $0x7c0] sm:$0xf]
    %v536 = vld [vmem:[%s1 + $0x7c4] sm:$0xf]
    %v537 = vld [vmem:[%s1 + $0x7c8] sm:$0xf]
    %v538 = vld [vmem:[%s1 + $0x7cc] sm:$0xf]
    %v539 = vld [vmem:[%s1 + $0x7d0] sm:$0xf]
    %v540 = vld [vmem:[%s1 + $0x7d4] sm:$0xf]
    %v541 = vld [vmem:[%s1 + $0x7d8] sm:$0xf]
    %v542 = vld [vmem:[%s1 + $0x7dc] sm:$0xf]
    %v543 = vld [vmem:[%s1 + $0x7e0] sm:$0xf]
    %v544 = vld [vmem:[%s1 + $0x7e4] sm:$0xf]
    %v545 = vld [vmem:[%s1 + $0x7e8] sm:$0xf]
    %v546 = vld [vmem:[%s1 + $0x7ec] sm:$0xf]
    %v547 = vld [vmem:[%s1 + $0x7f0] sm:$0xf]
    %v548 = vld [vmem:[%s1 + $0x7f4] sm:$0xf]
    %v549 = vld [vmem:[%s1 + $0x7f8] sm:$0xf]
    %v550 = vld [vmem:[%s1 + $0x7fc] sm:$0xf]
    %v551 = vld [vmem:[%s1 + $0x800] sm:$0xf]
    %v552 = vld [vmem:[%s1 + $0x804] sm:$0xf]
    %v553 = vld [vmem:[%s1 + $0x808] sm:$0xf]
    %v554 = vld [vmem:[%s1 + $0x80c] sm:$0xf]
    %v555 = vld [vmem:[%s1 + $0x810] sm:$0xf]
    %v556 = vld [vmem:[%s1 + $0x814] sm:$0xf]
    %v557 = vld [vmem:[%s1 + $0x818] sm:$0xf]
    %v558 = vld [vmem:[%s1 + $0x81c] sm:$0xf]
    %v559 = vld [vmem:[%s1 + $0x820] sm:$0xf]
    %v560 = vld [vmem:[%s1 + $0x824] sm:$0xf]
    %v561 = vld [vmem:[%s1 + $0x828] sm:$0xf]
    %v562 = vld [vmem:[%s1 + $0x82c] sm:$0xf]
    %v563 = vld [vmem:[%s1 + $0x830] sm:$0xf]
    %v564 = vld [vmem:[%s1 + $0x834] sm:$0xf]
    %v565 = vld [vmem:[%s1 + $0x838] sm:$0xf]
    %v566 = vld [vmem:[%s1 + $0x83c] sm:$0xf]
    %v567 = vld [vmem:[%s1 + $0x840] sm:$0xf]
    %v568 = vld [vmem:[%s1 + $0x844] sm:$0xf]
    %v569 = vld [vmem:[%s1 + $0x848] sm:$0xf]
    %v570 = vld [vmem:[%s1 + $0x84c] sm:$0xf]
    %v571 = vld [vmem:[%s1 + $0x850] sm:$0xf]
    %v572 = vld [vmem:[%s1 + $0x854] sm:$0xf]
    %v573 = vld [vmem:[%s1 + $0x858] sm:$0xf]
    %v574 = vld [vmem:[%s1 + $0x85c] sm:$0xf]
    %v575 = vld [vmem:[%s1 + $0x860] sm:$0xf]
    %v576 = vld [vmem:[%s1 + $0x864] sm:$0xf]
    %v577 = vld [vmem:[%s1 + $0x868] sm:$0xf]
    %v578 = vld [vmem:[%s1 + $0x86c] sm:$0xf]
    %v579 = vld [vmem:[%s1 + $0x870] sm:$0xf]
    %v580 = vld [vmem:[%s1 + $0x874] sm:$0xf]
    %v581 = vld [vmem:[%s1 + $0x878] sm:$0xf]
    %v582 = vld [vmem:[%s1 + $0x87c] sm:$0xf]
    %v583 = vld [vmem:[%s1 + $0x880] sm:$0xf]
    %v584 = vld [vmem:[%s1 + $0x884] sm:$0xf]
    %v585 = vld [vmem:[%s1 + $0x888] sm:$0xf]
    %v586 = vld [vmem:[%s1 + $0x88c] sm:$0xf]
    %v587 = vld [vmem:[%s1 + $0x890] sm:$0xf]
    %v588 = vld [vmem:[%s1 + $0x894] sm:$0xf]
    %v589 = vld [vmem:[%s1 + $0x898] sm:$0xf]
    %v590 = vld [vmem:[%s1 + $0x89c] sm:$0xf]
    %v591 = vld [vmem:[%s1 + $0x8a0] sm:$0xf]
    %v592 = vld [vmem:[%s1 + $0x8a4] sm:$0xf]
    %v593 = vld [vmem:[%s1 + $0x8a8] sm:$0xf]
    %v594 = vld [vmem:[%s1 + $0x8ac] sm:$0xf]
    %v595 = vld [vmem:[%s1 + $0x8b0] sm:$0xf]
    %v596 = vld [vmem:[%s1 + $0x8b4] sm:$0xf]
    %v597 = vld [vmem:[%s1 + $0x8b8] sm:$0xf]
    %v598 = vld [vmem:[%s1 + $0x8bc] sm:$0xf]
    %v599 = vld [vmem:[%s1 + $0x8c0] sm:$0xf]
    %v600 = vld [vmem:[%s1 + $0x8c4] sm:$0xf]
    %v601 = vld [vmem:[%s1 + $0x8c8] sm:$0xf]
    %v602 = vld [vmem:[%s1 + $0x8cc] sm:$0xf]
    %v603 = vld [vmem:[%s1 + $0x8d0] sm:$0xf]
    %v604 = vld [vmem:[%s1 + $0x8d4] sm:$0xf]
    %v605 = vld [vmem:[%s1 + $0x8d8] sm:$0xf]
    %v606 = vld [vmem:[%s1 + $0x8dc] sm:$0xf]
    %v607 = vld [vmem:[%s1 + $0x8e0] sm:$0xf]
    %v608 = vld [vmem:[%s1 + $0x8e4] sm:$0xf]
    %v609 = vld [vmem:[%s1 + $0x8e8] sm:$0xf]
    %v610 = vld [vmem:[%s1 + $0x8ec] sm:$0xf]
    %v611 = vld [vmem:[%s1 + $0x8f0] sm:$0xf]
    %v612 = vld [vmem:[%s1 + $0x8f4] sm:$0xf]
    %v613 = vld [vmem:[%s1 + $0x8f8] sm:$0xf]
    %v614 = vld [vmem:[%s1 + $0x8fc] sm:$0xf]
    %v615 = vld [vmem:[%s1 + $0x900] sm:$0xf]
    %v616 = vld [vmem:[%s1 + $0x904] sm:$0xf]
    %v617 = vld [vmem:[%s1 + $0x908] sm:$0xf]
    %v618 = vld [vmem:[%s1 + $0x90c] sm:$0xf]
    %v619 = vld [vmem:[%s1 + $0x910] sm:$0xf]
    %v620 = vld [vmem:[%s1 + $0x914] sm:$0xf]
    %v621 = vld [vmem:[%s1 + $0x918] sm:$0xf]
    %v622 = vld [vmem:[%s1 + $0x91c] sm:$0xf]
    %v623 = vld [vmem:[%s1 + $0x920] sm:$0xf]
    %v624 = vld [vmem:[%s1 + $0x924] sm:$0xf]
    %v625 = vld [vmem:[%s1 + $0x928] sm:$0xf]
    %v626 = vld [vmem:[%s1 + $0x92c] sm:$0xf]
    %v627 = vld [vmem:[%s1 + $0x930] sm:$0xf]
    %v628 = vld [vmem:[%s1 + $0x934] sm:$0xf]
    %v629 = vld [vmem:[%s1 + $0x938] sm:$0xf]
    %v630 = vld [vmem:[%s1 + $0x93c] sm:$0xf]
    %v631 = vld [vmem:[%s1 + $0x940] sm:$0xf]
    %v632 = vld [vmem:[%s1 + $0x944] sm:$0xf]
    %v633 = vld [vmem:[%s1 + $0x948] sm:$0xf]
    %v634 = vld [vmem:[%s1 + $0x94c] sm:$0xf]
    %v635 = vld [vmem:[%s1 + $0x950] sm:$0xf]
    %v636 = vld [vmem:[%s1 + $0x954] sm:$0xf]
    %v637 = vld [vmem:[%s1 + $0x958] sm:$0xf]
    %v638 = vld [vmem:[%s1 + $0x95c] sm:$0xf]
    %v639 = vld [vmem:[%s1 + $0x960] sm:$0xf]
    %v640 = vld [vmem:[%s1 + $0x964] sm:$0xf]
    %v641 = vld [vmem:[%s1 + $0x968] sm:$0xf]
    %v642 = vld [vmem:[%s1 + $0x96c] sm:$0xf]
    %v643 = vld [vmem:[%s1 + $0x970] sm:$0xf]
    %v644 = vld [vmem:[%s1 + $0x974] sm:$0xf]
    %v645 = vld [vmem:[%s1 + $0x978] sm:$0xf]
    %v646 = vld [vmem:[%s1 + $0x97c] sm:$0xf]
    %v647 = vld [vmem:[%s1 + $0x980] sm:$0xf]
    %v648 = vld [vmem:[%s1 + $0x984] sm:$0xf]
    %v649 = vld [vmem:[%s1 + $0x988] sm:$0xf]
    %v650 = vld [vmem:[%s1 + $0x98c] sm:$0xf]
    %v651 = vld [vmem:[%s1 + $0x990] sm:$0xf]
    %v652 = vld [vmem:[%s1 + $0x994] sm:$0xf]
    %v653 = vld [vmem:[%s1 + $0x998] sm:$0xf]
    %v654 = vld [vmem:[%s1 + $0x99c] sm:$0xf]
    %v655 = vld [vmem:[%s1 + $0x9a0] sm:$0xf]
    %v656 = vld [vmem:[%s1 + $0x9a4] sm:$0xf]
    %v657 = vld [vmem:[%s1 + $0x9a8] sm:$0xf]
    %v658 = vld [vmem:[%s1 + $0x9ac] sm:$0xf]
    %v659 = vld [vmem:[%s1 + $0x9b0] sm:$0xf]
    %v660 = vld [vmem:[%s1 + $0x9b4] sm:$0xf]
    %v661 = vld [vmem:[%s1 + $0x9b8] sm:$0xf]
    %v662 = vld [vmem:[%s1 + $0x9bc] sm:$0xf]
    %v663 = vld [vmem:[%s1 + $0x9c0] sm:$0xf]
    %v664 = vld [vmem:[%s1 + $0x9c4] sm:$0xf]
    %v665 = vld [vmem:[%s1 + $0x9c8] sm:$0xf]
    %v666 = vld [vmem:[%s1 + $0x9cc] sm:$0xf]
    %v667 = vld [vmem:[%s1 + $0x9d0] sm:$0xf]
    %v668 = vld [vmem:[%s1 + $0x9d4] sm:$0xf]
    %v669 = vld [vmem:[%s1 + $0x9d8] sm:$0xf]
    %v670 = vld [vmem:[%s1 + $0x9dc] sm:$0xf]
    %v671 = vld [vmem:[%s1 + $0x9e0] sm:$0xf]
    %v672 = vld [vmem:[%s1 + $0x9e4] sm:$0xf]
    %v673 = vld [vmem:[%s1 + $0x9e8] sm:$0xf]
    %v674 = vld [vmem:[%s1 + $0x9ec] sm:$0xf]
    %v675 = vld [vmem:[%s1 + $0x9f0] sm:$0xf]
    %v676 = vld [vmem:[%s1 + $0x9f4] sm:$0xf]
    %v677 = vld [vmem:[%s1 + $0x9f8] sm:$0xf]
    %v678 = vld [vmem:[%s1 + $0x9fc] sm:$0xf]
    %v679 = vld [vmem:[%s1 + $0xa00] sm:$0xf]
    %v680 = vld [vmem:[%s1 + $0xa04] sm:$0xf]
    %v681 = vld [vmem:[%s1 + $0xa08] sm:$0xf]
    %v682 = vld [vmem:[%s1 + $0xa0c] sm:$0xf]
    %v683 = vld [vmem:[%s1 + $0xa10] sm:$0xf]
    %v684 = vld [vmem:[%s1 + $0xa14] sm:$0xf]
    %v685 = vld [vmem:[%s1 + $0xa18] sm:$0xf]
    %v686 = vld [vmem:[%s1 + $0xa1c] sm:$0xf]
    %v687 = vld [vmem:[%s1 + $0xa20] sm:$0xf]
    %v688 = vld [vmem:[%s1 + $0xa24] sm:$0xf]
    %v689 = vld [vmem:[%s1 + $0xa28] sm:$0xf]
    %v690 = vld [vmem:[%s1 + $0xa2c] sm:$0xf]
    %v691 = vld [vmem:[%s1 + $0xa30] sm:$0xf]
    %v692 = vld [vmem:[%s1 + $0xa34] sm:$0xf]
    %v693 = vld [vmem:[%s1 + $0xa38] sm:$0xf]
    %v694 = vld [vmem:[%s1 + $0xa3c] sm:$0xf]
    %v695 = vld [vmem:[%s1 + $0xa40] sm:$0xf]
    %v696 = vld [vmem:[%s1 + $0xa44] sm:$0xf]
    %v697 = vld [vmem:[%s1 + $0xa48] sm:$0xf]
    %v698 = vld [vmem:[%s1 + $0xa4c] sm:$0xf]
    %v699 = vld [vmem:[%s1 + $0xa50] sm:$0xf]
    %v700 = vld [vmem:[%s1 + $0xa54] sm:$0xf]
    %v701 = vld [vmem:[%s1 + $0xa58] sm:$0xf]
    %v702 = vld [vmem:[%s1 + $0xa5c] sm:$0xf]
    %v703 = vld [vmem:[%s1 + $0xa60] sm:$0xf]
    %v704 = vld [vmem:[%s1 + $0xa64] sm:$0xf]
    %v705 = vld [vmem:[%s1 + $0xa68] sm:$0xf]
    %v706 = vld [vmem:[%s1 + $0xa6c] sm:$0xf]
    %v707 = vld [vmem:[%s1 + $0xa70] sm:$0xf]
    %v708 = vld [vmem:[%s1 + $0xa74] sm:$0xf]
    %v709 = vld [vmem:[%s1 + $0xa78] sm:$0xf]
    %v710 = vld [vmem:[%s1 + $0xa7c] sm:$0xf]
    %v711 = vld [vmem:[%s1 + $0xa80] sm:$0xf]
    %v712 = vld [vmem:[%s1 + $0xa84] sm:$0xf]
    %v713 = vld [vmem:[%s1 + $0xa88] sm:$0xf]
    %v714 = vld [vmem:[%s1 + $0xa8c] sm:$0xf]
    %v715 = vld [vmem:[%s1 + $0xa90] sm:$0xf]
    %v716 = vld [vmem:[%s1 + $0xa94] sm:$0xf]
    %v717 = vld [vmem:[%s1 + $0xa98] sm:$0xf]
    %v718 = vld [vmem:[%s1 + $0xa9c] sm:$0xf]
    %v719 = vld [vmem:[%s1 + $0xaa0] sm:$0xf]
    %v720 = vld [vmem:[%s1 + $0xaa4] sm:$0xf]
    %v721 = vld [vmem:[%s1 + $0xaa8] sm:$0xf]
    %v722 = vld [vmem:[%s1 + $0xaac] sm:$0xf]
    %v723 = vld [vmem:[%s1 + $0xab0] sm:$0xf]
    %v724 = vld [vmem:[%s1 + $0xab4] sm:$0xf]
    %v725 = vld [vmem:[%s1 + $0xab8] sm:$0xf]
    %v726 = vld [vmem:[%s1 + $0xabc] sm:$0xf]
    %v727 = vld [vmem:[%s1 + $0xac0] sm:$0xf]
    %v728 = vld [vmem:[%s1 + $0xac4] sm:$0xf]
    %v729 = vld [vmem:[%s1 + $0xac8] sm:$0xf]
    %v730 = vld [vmem:[%s1 + $0xacc] sm:$0xf]
    %v731 = vld [vmem:[%s1 + $0xad0] sm:$0xf]
    %v732 = vld [vmem:[%s1 + $0xad4] sm:$0xf]
    %v733 = vld [vmem:[%s1 + $0xad8] sm:$0xf]
    %v734 = vld [vmem:[%s1 + $0xadc] sm:$0xf]
    %v735 = vld [vmem:[%s1 + $0xae0] sm:$0xf]
    %v736 = vld [vmem:[%s1 + $0xae4] sm:$0xf]
    %v737 = vld [vmem:[%s1 + $0xae8] sm:$0xf]
    %v738 = vld [vmem:[%s1 + $0xaec] sm:$0xf]
    %v739 = vld [vmem:[%s1 + $0xaf0] sm:$0xf]
    %v740 = vld [vmem:[%s1 + $0xaf4] sm:$0xf]
    %v741 = vld [vmem:[%s1 + $0xaf8] sm:$0xf]
    %v742 = vld [vmem:[%s1 + $0xafc] sm:$0xf]
    %v743 = vld [vmem:[%s1 + $0xb00] sm:$0xf]
    %v744 = vld [vmem:[%s1 + $0xb04] sm:$0xf]
    %v745 = vld [vmem:[%s1 + $0xb08] sm:$0xf]
    %v746 = vld [vmem:[%s1 + $0xb0c] sm:$0xf]
    %v747 = vld [vmem:[%s1 + $0xb10] sm:$0xf]
    %v748 = vld [vmem:[%s1 + $0xb14] sm:$0xf]
    %v749 = vld [vmem:[%s1 + $0xb18] sm:$0xf]
    %v750 = vld [vmem:[%s1 + $0xb1c] sm:$0xf]
    %v751 = vld [vmem:[%s1 + $0xb20] sm:$0xf]
    %v752 = vld [vmem:[%s1 + $0xb24] sm:$0xf]
    %v753 = vld [vmem:[%s1 + $0xb28] sm:$0xf]
    %v754 = vld [vmem:[%s1 + $0xb2c] sm:$0xf]
    %v755 = vld [vmem:[%s1 + $0xb30] sm:$0xf]
    %v756 = vld [vmem:[%s1 + $0xb34] sm:$0xf]
    %v757 = vld [vmem:[%s1 + $0xb38] sm:$0xf]
    %v758 = vld [vmem:[%s1 + $0xb3c] sm:$0xf]
    %v759 = vld [vmem:[%s1 + $0xb40] sm:$0xf]
    %v760 = vld [vmem:[%s1 + $0xb44] sm:$0xf]
    %v761 = vld [vmem:[%s1 + $0xb48] sm:$0xf]
    %v762 = vld [vmem:[%s1 + $0xb4c] sm:$0xf]
    %v763 = vld [vmem:[%s1 + $0xb50] sm:$0xf]
    %v764 = vld [vmem:[%s1 + $0xb54] sm:$0xf]
    %v765 = vld [vmem:[%s1 + $0xb58] sm:$0xf]
    %v766 = vld [vmem:[%s1 + $0xb5c] sm:$0xf]
    %v767 = vld [vmem:[%s1 + $0xb60] sm:$0xf]
    %v768 = vld [vmem:[%s1 + $0xb64] sm:$0xf]
    %v769 = vld [vmem:[%s1 + $0xb68] sm:$0xf]
    %v770 = vld [vmem:[%s1 + $0xb6c] sm:$0xf]
    %v771 = vld [vmem:[%s1 + $0xb70] sm:$0xf]
    %v772 = vld [vmem:[%s1 + $0xb74] sm:$0xf]
    %v773 = vld [vmem:[%s1 + $0xb78] sm:$0xf]
    %v774 = vld [vmem:[%s1 + $0xb7c] sm:$0xf]
    %v775 = vld [vmem:[%s1 + $0xb80] sm:$0xf]
    %v776 = vld [vmem:[%s1 + $0xb84] sm:$0xf]
    %v777 = vld [vmem:[%s1 + $0xb88] sm:$0xf]
    %v778 = vld [vmem:[%s1 + $0xb8c] sm:$0xf]
    %v779 = vld [vmem:[%s1 + $0xb90] sm:$0xf]
    %v780 = vld [vmem:[%s1 + $0xb94] sm:$0xf]
    %v781 = vld [vmem:[%s1 + $0xb98] sm:$0xf]
    %v782 = vld [vmem:[%s1 + $0xb9c] sm:$0xf]
    %v783 = vld [vmem:[%s1 + $0xba0] sm:$0xf]
    %v784 = vld [vmem:[%s1 + $0xba4] sm:$0xf]
    %v785 = vld [vmem:[%s1 + $0xba8] sm:$0xf]
    %v786 = vld [vmem:[%s1 + $0xbac] sm:$0xf]
    %v787 = vld [vmem:[%s1 + $0xbb0] sm:$0xf]
    %v788 = vld [vmem:[%s1 + $0xbb4] sm:$0xf]
    %v789 = vld [vmem:[%s1 + $0xbb8] sm:$0xf]
    %v790 = vld [vmem:[%s1 + $0xbbc] sm:$0xf]
    %v791 = vld [vmem:[%s1 + $0xbc0] sm:$0xf]
    %v792 = vld [vmem:[%s1 + $0xbc4] sm:$0xf]
    %v793 = vld [vmem:[%s1 + $0xbc8] sm:$0xf]
    %v794 = vld [vmem:[%s1 + $0xbcc] sm:$0xf]
    %v795 = vld [vmem:[%s1 + $0xbd0] sm:$0xf]
    %v796 = vld [vmem:[%s1 + $0xbd4] sm:$0xf]
    %v797 = vld [vmem:[%s1 + $0xbd8] sm:$0xf]
    %v798 = vld [vmem:[%s1 + $0xbdc] sm:$0xf]
    %v799 = vld [vmem:[%s1 + $0xbe0] sm:$0xf]
    %v800 = vld [vmem:[%s1 + $0xbe4] sm:$0xf]
    %v801 = vld [vmem:[%s1 + $0xbe8] sm:$0xf]
    %v802 = vld [vmem:[%s1 + $0xbec] sm:$0xf]
    %v803 = vld [vmem:[%s1 + $0xbf0] sm:$0xf]
    %v804 = vld [vmem:[%s1 + $0xbf4] sm:$0xf]
    %v805 = vld [vmem:[%s1 + $0xbf8] sm:$0xf]
    %v806 = vld [vmem:[%s1 + $0xbfc] sm:$0xf]
    %v807 = vld [vmem:[%s1 + $0xc00] sm:$0xf]
    %v808 = vld [vmem:[%s1 + $0xc04] sm:$0xf]
    %v809 = vld [vmem:[%s1 + $0xc08] sm:$0xf]
    %v810 = vld [vmem:[%s1 + $0xc0c] sm:$0xf]
    %v811 = vld [vmem:[%s1 + $0xc10] sm:$0xf]
    %v812 = vld [vmem:[%s1 + $0xc14] sm:$0xf]
    %v813 = vld [vmem:[%s1 + $0xc18] sm:$0xf]
    %v814 = vld [vmem:[%s1 + $0xc1c] sm:$0xf]
    %v815 = vld [vmem:[%s1 + $0xc20] sm:$0xf]
    %v816 = vld [vmem:[%s1 + $0xc24] sm:$0xf]
    %v817 = vld [vmem:[%s1 + $0xc28] sm:$0xf]
    %v818 = vld [vmem:[%s1 + $0xc2c] sm:$0xf]
    %v819 = vld [vmem:[%s1 + $0xc30] sm:$0xf]
    %v820 = vld [vmem:[%s1 + $0xc34] sm:$0xf]
    %v821 = vld [vmem:[%s1 + $0xc38] sm:$0xf]
    %v822 = vld [vmem:[%s1 + $0xc3c] sm:$0xf]
    %v823 = vld [vmem:[%s1 + $0xc40] sm:$0xf]
    %v824 = vld [vmem:[%s1 + $0xc44] sm:$0xf]
    %v825 = vld [vmem:[%s1 + $0xc48] sm:$0xf]
    %v826 = vld [vmem:[%s1 + $0xc4c] sm:$0xf]
    %v827 = vld [vmem:[%s1 + $0xc50] sm:$0xf]
    %v828 = vld [vmem:[%s1 + $0xc54] sm:$0xf]
    %v829 = vld [vmem:[%s1 + $0xc58] sm:$0xf]
    %v830 = vld [vmem:[%s1 + $0xc5c] sm:$0xf]
    %v831 = vld [vmem:[%s1 + $0xc60] sm:$0xf]
    %v832 = vld [vmem:[%s1 + $0xc64] sm:$0xf]
    %v833 = vld [vmem:[%s1 + $0xc68] sm:$0xf]
    %v834 = vld [vmem:[%s1 + $0xc6c] sm:$0xf]
    %v835 = vld [vmem:[%s1 + $0xc70] sm:$0xf]
    %v836 = vld [vmem:[%s1 + $0xc74] sm:$0xf]
    %v837 = vld [vmem:[%s1 + $0xc78] sm:$0xf]
    %v838 = vld [vmem:[%s1 + $0xc7c] sm:$0xf]
    %v839 = vld [vmem:[%s1 + $0xc80] sm:$0xf]
    %v840 = vld [vmem:[%s1 + $0xc84] sm:$0xf]
    %v841 = vld [vmem:[%s1 + $0xc88] sm:$0xf]
    %v842 = vld [vmem:[%s1 + $0xc8c] sm:$0xf]
    %v843 = vld [vmem:[%s1 + $0xc90] sm:$0xf]
    %v844 = vld [vmem:[%s1 + $0xc94] sm:$0xf]
    %v845 = vld [vmem:[%s1 + $0xc98] sm:$0xf]
    %v846 = vld [vmem:[%s1 + $0xc9c] sm:$0xf]
    %v847 = vld [vmem:[%s1 + $0xca0] sm:$0xf]
    %v848 = vld [vmem:[%s1 + $0xca4] sm:$0xf]
    %v849 = vld [vmem:[%s1 + $0xca8] sm:$0xf]
    %v850 = vld [vmem:[%s1 + $0xcac] sm:$0xf]
    %v851 = vld [vmem:[%s1 + $0xcb0] sm:$0xf]
    %v852 = vld [vmem:[%s1 + $0xcb4] sm:$0xf]
    %v853 = vld [vmem:[%s1 + $0xcb8] sm:$0xf]
    %v854 = vld [vmem:[%s1 + $0xcbc] sm:$0xf]
    %v855 = vld [vmem:[%s1 + $0xcc0] sm:$0xf]
    %v856 = vld [vmem:[%s1 + $0xcc4] sm:$0xf]
    %v857 = vld [vmem:[%s1 + $0xcc8] sm:$0xf]
    %v858 = vld [vmem:[%s1 + $0xccc] sm:$0xf]
    %v859 = vld [vmem:[%s1 + $0xcd0] sm:$0xf]
    %v860 = vld [vmem:[%s1 + $0xcd4] sm:$0xf]
    %v861 = vld [vmem:[%s1 + $0xcd8] sm:$0xf]
    %v862 = vld [vmem:[%s1 + $0xcdc] sm:$0xf]
    %v863 = vld [vmem:[%s1 + $0xce0] sm:$0xf]
    %v864 = vld [vmem:[%s1 + $0xce4] sm:$0xf]
    %v865 = vld [vmem:[%s1 + $0xce8] sm:$0xf]
    %v866 = vld [vmem:[%s1 + $0xcec] sm:$0xf]
    %v867 = vld [vmem:[%s1 + $0xcf0] sm:$0xf]
    %v868 = vld [vmem:[%s1 + $0xcf4] sm:$0xf]
    %v869 = vld [vmem:[%s1 + $0xcf8] sm:$0xf]
    %v870 = vld [vmem:[%s1 + $0xcfc] sm:$0xf]
    %v871 = vld [vmem:[%s1 + $0xd00] sm:$0xf]
    %v872 = vld [vmem:[%s1 + $0xd04] sm:$0xf]
    %v873 = vld [vmem:[%s1 + $0xd08] sm:$0xf]
    %v874 = vld [vmem:[%s1 + $0xd0c] sm:$0xf]
    %v875 = vld [vmem:[%s1 + $0xd10] sm:$0xf]
    %v876 = vld [vmem:[%s1 + $0xd14] sm:$0xf]
    %v877 = vld [vmem:[%s1 + $0xd18] sm:$0xf]
    %v878 = vld [vmem:[%s1 + $0xd1c] sm:$0xf]
    %v879 = vld [vmem:[%s1 + $0xd20] sm:$0xf]
    %v880 = vld [vmem:[%s1 + $0xd24] sm:$0xf]
    %v881 = vld [vmem:[%s1 + $0xd28] sm:$0xf]
    %v882 = vld [vmem:[%s1 + $0xd2c] sm:$0xf]
    %v883 = vld [vmem:[%s1 + $0xd30] sm:$0xf]
    %v884 = vld [vmem:[%s1 + $0xd34] sm:$0xf]
    %v885 = vld [vmem:[%s1 + $0xd38] sm:$0xf]
    %v886 = vld [vmem:[%s1 + $0xd3c] sm:$0xf]
    %v887 = vld [vmem:[%s1 + $0xd40] sm:$0xf]
    %v888 = vld [vmem:[%s1 + $0xd44] sm:$0xf]
    %v889 = vld [vmem:[%s1 + $0xd48] sm:$0xf]
    %v890 = vld [vmem:[%s1 + $0xd4c] sm:$0xf]
    %v891 = vld [vmem:[%s1 + $0xd50] sm:$0xf]
    %v892 = vld [vmem:[%s1 + $0xd54] sm:$0xf]
    %v893 = vld [vmem:[%s1 + $0xd58] sm:$0xf]
    %v894 = vld [vmem:[%s1 + $0xd5c] sm:$0xf]
    %v895 = vld [vmem:[%s1 + $0xd60] sm:$0xf]
    %v896 = vld [vmem:[%s1 + $0xd64] sm:$0xf]
    %v897 = vld [vmem:[%s1 + $0xd68] sm:$0xf]
    %v898 = vld [vmem:[%s1 + $0xd6c] sm:$0xf]
    %v899 = vld [vmem:[%s1 + $0xd70] sm:$0xf]
    %v900 = vld [vmem:[%s1 + $0xd74] sm:$0xf]
    %v901 = vld [vmem:[%s1 + $0xd78] sm:$0xf]
    %v902 = vld [vmem:[%s1 + $0xd7c] sm:$0xf]
    %v903 = vld [vmem:[%s1 + $0xd80] sm:$0xf]
    %v904 = vld [vmem:[%s1 + $0xd84] sm:$0xf]
    %v905 = vld [vmem:[%s1 + $0xd88] sm:$0xf]
    %v906 = vld [vmem:[%s1 + $0xd8c] sm:$0xf]
    %v907 = vld [vmem:[%s1 + $0xd90] sm:$0xf]
    %v908 = vld [vmem:[%s1 + $0xd94] sm:$0xf]
    %v909 = vld [vmem:[%s1 + $0xd98] sm:$0xf]
    %v910 = vld [vmem:[%s1 + $0xd9c] sm:$0xf]
    %v911 = vld [vmem:[%s1 + $0xda0] sm:$0xf]
    %v912 = vld [vmem:[%s1 + $0xda4] sm:$0xf]
    %v913 = vld [vmem:[%s1 + $0xda8] sm:$0xf]
    %v914 = vld [vmem:[%s1 + $0xdac] sm:$0xf]
    %v915 = vld [vmem:[%s1 + $0xdb0] sm:$0xf]
    %v916 = vld [vmem:[%s1 + $0xdb4] sm:$0xf]
    %v917 = vld [vmem:[%s1 + $0xdb8] sm:$0xf]
    %v918 = vld [vmem:[%s1 + $0xdbc] sm:$0xf]
    %v919 = vld [vmem:[%s1 + $0xdc0] sm:$0xf]
    %v920 = vld [vmem:[%s1 + $0xdc4] sm:$0xf]
    %v921 = vld [vmem:[%s1 + $0xdc8] sm:$0xf]
    %v922 = vld [vmem:[%s1 + $0xdcc] sm:$0xf]
    %v923 = vld [vmem:[%s1 + $0xdd0] sm:$0xf]
    %v924 = vld [vmem:[%s1 + $0xdd4] sm:$0xf]
    %v925 = vld [vmem:[%s1 + $0xdd8] sm:$0xf]
    %v926 = vld [vmem:[%s1 + $0xddc] sm:$0xf]
    %v927 = vld [vmem:[%s1 + $0xde0] sm:$0xf]
    %v928 = vld [vmem:[%s1 + $0xde4] sm:$0xf]
    %v929 = vld [vmem:[%s1 + $0xde8] sm:$0xf]
    %v930 = vld [vmem:[%s1 + $0xdec] sm:$0xf]
    %v931 = vld [vmem:[%s1 + $0xdf0] sm:$0xf]
    %v932 = vld [vmem:[%s1 + $0xdf4] sm:$0xf]
    %v933 = vld [vmem:[%s1 + $0xdf8] sm:$0xf]
    %v934 = vld [vmem:[%s1 + $0xdfc] sm:$0xf]
    %v935 = vld [vmem:[%s1 + $0xe00] sm:$0xf]
    %v936 = vld [vmem:[%s1 + $0xe04] sm:$0xf]
    %v937 = vld [vmem:[%s1 + $0xe08] sm:$0xf]
    %v938 = vld [vmem:[%s1 + $0xe0c] sm:$0xf]
    %v939 = vld [vmem:[%s1 + $0xe10] sm:$0xf]
    %v940 = vld [vmem:[%s1 + $0xe14] sm:$0xf]
    %v941 = vld [vmem:[%s1 + $0xe18] sm:$0xf]
    %v942 = vld [vmem:[%s1 + $0xe1c] sm:$0xf]
    %v943 = vld [vmem:[%s1 + $0xe20] sm:$0xf]
    %v944 = vld [vmem:[%s1 + $0xe24] sm:$0xf]
    %v945 = vld [vmem:[%s1 + $0xe28] sm:$0xf]
    %v946 = vld [vmem:[%s1 + $0xe2c] sm:$0xf]
    %v947 = vld [vmem:[%s1 + $0xe30] sm:$0xf]
    %v948 = vld [vmem:[%s1 + $0xe34] sm:$0xf]
    %v949 = vld [vmem:[%s1 + $0xe38] sm:$0xf]
    %v950 = vld [vmem:[%s1 + $0xe3c] sm:$0xf]
    %v951 = vld [vmem:[%s1 + $0xe40] sm:$0xf]
    %v952 = vld [vmem:[%s1 + $0xe44] sm:$0xf]
    %v953 = vld [vmem:[%s1 + $0xe48] sm:$0xf]
    %v954 = vld [vmem:[%s1 + $0xe4c] sm:$0xf]
    %v955 = vld [vmem:[%s1 + $0xe50] sm:$0xf]
    %v956 = vld [vmem:[%s1 + $0xe54] sm:$0xf]
    %v957 = vld [vmem:[%s1 + $0xe58] sm:$0xf]
    %v958 = vld [vmem:[%s1 + $0xe5c] sm:$0xf]
    %v959 = vld [vmem:[%s1 + $0xe60] sm:$0xf]
    %v960 = vld [vmem:[%s1 + $0xe64] sm:$0xf]
    %v961 = vld [vmem:[%s1 + $0xe68] sm:$0xf]
    %v962 = vld [vmem:[%s1 + $0xe6c] sm:$0xf]
    %v963 = vld [vmem:[%s1 + $0xe70] sm:$0xf]
    %v964 = vld [vmem:[%s1 + $0xe74] sm:$0xf]
    %v965 = vld [vmem:[%s1 + $0xe78] sm:$0xf]
    %v966 = vld [vmem:[%s1 + $0xe7c] sm:$0xf]
    %v967 = vld [vmem:[%s1 + $0xe80] sm:$0xf]
    %v968 = vld [vmem:[%s1 + $0xe84] sm:$0xf]
    %v969 = vld [vmem:[%s1 + $0xe88] sm:$0xf]
    %v970 = vld [vmem:[%s1 + $0xe8c] sm:$0xf]
    %v971 = vld [vmem:[%s1 + $0xe90] sm:$0xf]
    %v972 = vld [vmem:[%s1 + $0xe94] sm:$0xf]
    %v973 = vld [vmem:[%s1 + $0xe98] sm:$0xf]
    %v974 = vld [vmem:[%s1 + $0xe9c] sm:$0xf]
    %v975 = vld [vmem:[%s1 + $0xea0] sm:$0xf]
    %v976 = vld [vmem:[%s1 + $0xea4] sm:$0xf]
    %v977 = vld [vmem:[%s1 + $0xea8] sm:$0xf]
    %v978 = vld [vmem:[%s1 + $0xeac] sm:$0xf]
    %v979 = vld [vmem:[%s1 + $0xeb0] sm:$0xf]
    %v980 = vld [vmem:[%s1 + $0xeb4] sm:$0xf]
    %v981 = vld [vmem:[%s1 + $0xeb8] sm:$0xf]
    %v982 = vld [vmem:[%s1 + $0xebc] sm:$0xf]
    %v983 = vld [vmem:[%s1 + $0xec0] sm:$0xf]
    %v984 = vld [vmem:[%s1 + $0xec4] sm:$0xf]
    %v985 = vld [vmem:[%s1 + $0xec8] sm:$0xf]
    %v986 = vld [vmem:[%s1 + $0xecc] sm:$0xf]
    %v987 = vld [vmem:[%s1 + $0xed0] sm:$0xf]
    %v988 = vld [vmem:[%s1 + $0xed4] sm:$0xf]
    %v989 = vld [vmem:[%s1 + $0xed8] sm:$0xf]
    %v990 = vld [vmem:[%s1 + $0xedc] sm:$0xf]
    %v991 = vld [vmem:[%s1 + $0xee0] sm:$0xf]
    %v992 = vld [vmem:[%s1 + $0xee4] sm:$0xf]
    %v993 = vld [vmem:[%s1 + $0xee8] sm:$0xf]
    %v994 = vld [vmem:[%s1 + $0xeec] sm:$0xf]
    %v995 = vld [vmem:[%s1 + $0xef0] sm:$0xf]
    %v996 = vld [vmem:[%s1 + $0xef4] sm:$0xf]
    %v997 = vld [vmem:[%s1 + $0xef8] sm:$0xf]
    %v998 = vld [vmem:[%s1 + $0xefc] sm:$0xf]
    %v999 = vld [vmem:[%s1 + $0xf00] sm:$0xf]
    %v1000 = vld [vmem:[%s1 + $0xf04] sm:$0xf]
    %v1001 = vld [vmem:[%s1 + $0xf08] sm:$0xf]
    %v1002 = vld [vmem:[%s1 + $0xf0c] sm:$0xf]
    %v1003 = vld [vmem:[%s1 + $0xf10] sm:$0xf]
    %v1004 = vld [vmem:[%s1 + $0xf14] sm:$0xf]
    %v1005 = vld [vmem:[%s1 + $0xf18] sm:$0xf]
    %v1006 = vld [vmem:[%s1 + $0xf1c] sm:$0xf]
    %v1007 = vld [vmem:[%s1 + $0xf20] sm:$0xf]
    %v1008 = vld [vmem:[%s1 + $0xf24] sm:$0xf]
    %v1009 = vld [vmem:[%s1 + $0xf28] sm:$0xf]
    %v1010 = vld [vmem:[%s1 + $0xf2c] sm:$0xf]
    %v1011 = vld [vmem:[%s1 + $0xf30] sm:$0xf]
    %v1012 = vld [vmem:[%s1 + $0xf34] sm:$0xf]
    %v1013 = vld [vmem:[%s1 + $0xf38] sm:$0xf]
    %v1014 = vld [vmem:[%s1 + $0xf3c] sm:$0xf]
    %v1015 = vld [vmem:[%s1 + $0xf40] sm:$0xf]
    %v1016 = vld [vmem:[%s1 + $0xf44] sm:$0xf]
    %v1017 = vld [vmem:[%s1 + $0xf48] sm:$0xf]
    %v1018 = vld [vmem:[%s1 + $0xf4c] sm:$0xf]
    %v1019 = vld [vmem:[%s1 + $0xf50] sm:$0xf]
    %v1020 = vld [vmem:[%s1 + $0xf54] sm:$0xf]
    %v1021 = vld [vmem:[%s1 + $0xf58] sm:$0xf]
    %v1022 = vld [vmem:[%s1 + $0xf5c] sm:$0xf]
    %v1023 = vld [vmem:[%s1 + $0xf60] sm:$0xf]
    %v1024 = vld [vmem:[%s1 + $0xf64] sm:$0xf]
    %v1025 = vld [vmem:[%s1 + $0xf68] sm:$0xf]
    %v1026 = vld [vmem:[%s1 + $0xf6c] sm:$0xf]
    %v1027 = vld [vmem:[%s1 + $0xf70] sm:$0xf]
    %v1028 = vld [vmem:[%s1 + $0xf74] sm:$0xf]
    %v1029 = vld [vmem:[%s1 + $0xf78] sm:$0xf]
    %v1030 = vld [vmem:[%s1 + $0xf7c] sm:$0xf]
    %v1031 = vld [vmem:[%s1 + $0xf80] sm:$0xf]
    %v1032 = vld [vmem:[%s1 + $0xf84] sm:$0xf]
    %v1033 = vld [vmem:[%s1 + $0xf88] sm:$0xf]
    %v1034 = vld [vmem:[%s1 + $0xf8c] sm:$0xf]
    %v1035 = vld [vmem:[%s1 + $0xf90] sm:$0xf]
    %v1036 = vld [vmem:[%s1 + $0xf94] sm:$0xf]
    %v1037 = vld [vmem:[%s1 + $0xf98] sm:$0xf]
    %v1038 = vld [vmem:[%s1 + $0xf9c] sm:$0xf]
    %v1039 = vld [vmem:[%s1 + $0xfa0] sm:$0xf]
    %v1040 = vld [vmem:[%s1 + $0xfa4] sm:$0xf]
    %v1041 = vld [vmem:[%s1 + $0xfa8] sm:$0xf]
    %v1042 = vld [vmem:[%s1 + $0xfac] sm:$0xf]
    %v1043 = vld [vmem:[%s1 + $0xfb0] sm:$0xf]
    %v1044 = vld [vmem:[%s1 + $0xfb4] sm:$0xf]
    %v1045 = vld [vmem:[%s1 + $0xfb8] sm:$0xf]
    %v1046 = vld [vmem:[%s1 + $0xfbc] sm:$0xf]
    %v1047 = vld [vmem:[%s1 + $0xfc0] sm:$0xf]
    %v1048 = vld [vmem:[%s1 + $0xfc4] sm:$0xf]
    %v1049 = vld [vmem:[%s1 + $0xfc8] sm:$0xf]
    %v1050 = vld [vmem:[%s1 + $0xfcc] sm:$0xf]
    %v1051 = vld [vmem:[%s1 + $0xfd0] sm:$0xf]
    %v1052 = vld [vmem:[%s1 + $0xfd4] sm:$0xf]
    %v1053 = vld [vmem:[%s1 + $0xfd8] sm:$0xf]
    %v1054 = vld [vmem:[%s1 + $0xfdc] sm:$0xf]
    %v1055 = vld [vmem:[%s1 + $0xfe0] sm:$0xf]
    %v1056 = vld [vmem:[%s1 + $0xfe4] sm:$0xf]
    %v1057 = vld [vmem:[%s1 + $0xfe8] sm:$0xf]
    %v1058 = vld [vmem:[%s1 + $0xfec] sm:$0xf]
    %v1059 = vld [vmem:[%s1 + $0xff0] sm:$0xf]
    %v1060 = vld [vmem:[%s1 + $0xff4] sm:$0xf]
    %v1061 = vld [vmem:[%s1 + $0xff8] sm:$0xf]
    %v1062 = vld [vmem:[%s1 + $0xffc] sm:$0xf]
    %v1063 = vld [vmem:[%s1 + $0x1000] sm:$0xf]
    %v1064 = vld [vmem:[%s1 + $0x1004] sm:$0xf]
    %v1065 = vld [vmem:[%s1 + $0x1008] sm:$0xf]
    %v1066 = vld [vmem:[%s1 + $0x100c] sm:$0xf]
    %v1067 = vld [vmem:[%s1 + $0x1010] sm:$0xf]
    %v1068 = vld [vmem:[%s1 + $0x1014] sm:$0xf]
    %v1069 = vld [vmem:[%s1 + $0x1018] sm:$0xf]
    %v1070 = vld [vmem:[%s1 + $0x101c] sm:$0xf]
    %v1071 = vld [vmem:[%s1 + $0x1020] sm:$0xf]
    %v1072 = vld [vmem:[%s1 + $0x1024] sm:$0xf]
    %v1073 = vld [vmem:[%s1 + $0x1028] sm:$0xf]
    %v1074 = vld [vmem:[%s1 + $0x102c] sm:$0xf]
    %v1075 = vld [vmem:[%s1 + $0x1030] sm:$0xf]
    %v1076 = vld [vmem:[%s1 + $0x1034] sm:$0xf]
    %v1077 = vld [vmem:[%s1 + $0x1038] sm:$0xf]
    %v1078 = vld [vmem:[%s1 + $0x103c] sm:$0xf]
    %v1079 = vld [vmem:[%s1 + $0x1040] sm:$0xf]
    %v1080 = vld [vmem:[%s1 + $0x1044] sm:$0xf]
    %v1081 = vld [vmem:[%s1 + $0x1048] sm:$0xf]
    %v1082 = vld [vmem:[%s1 + $0x104c] sm:$0xf]
    %v1083 = vld [vmem:[%s1 + $0x1050] sm:$0xf]
    %v1084 = vld [vmem:[%s1 + $0x1054] sm:$0xf]
    %v1085 = vld [vmem:[%s1 + $0x1058] sm:$0xf]
    %v1086 = vld [vmem:[%s1 + $0x105c] sm:$0xf]
    %v1087 = vld [vmem:[%s1 + $0x1060] sm:$0xf]
    %v1088 = vld [vmem:[%s1 + $0x1064] sm:$0xf]
    %v1089 = vld [vmem:[%s1 + $0x1068] sm:$0xf]
    %v1090 = vld [vmem:[%s1 + $0x106c] sm:$0xf]
    %v1091 = vld [vmem:[%s1 + $0x1070] sm:$0xf]
    %v1092 = vld [vmem:[%s1 + $0x1074] sm:$0xf]
    %v1093 = vld [vmem:[%s1 + $0x1078] sm:$0xf]
    %v1094 = vld [vmem:[%s1 + $0x107c] sm:$0xf]
    %v1095 = vld [vmem:[%s1 + $0x1080] sm:$0xf]
    %v1096 = vld [vmem:[%s1 + $0x1084] sm:$0xf]
    %v1097 = vld [vmem:[%s1 + $0x1088] sm:$0xf]
    %v1098 = vld [vmem:[%s1 + $0x108c] sm:$0xf]
    %v1099 = vld [vmem:[%s1 + $0x1090] sm:$0xf]
    %v1100 = vld [vmem:[%s1 + $0x1094] sm:$0xf]
    %v1101 = vld [vmem:[%s1 + $0x1098] sm:$0xf]
    %v1102 = vld [vmem:[%s1 + $0x109c] sm:$0xf]
    %v1103 = vld [vmem:[%s1 + $0x10a0] sm:$0xf]
    %v1104 = vld [vmem:[%s1 + $0x10a4] sm:$0xf]
    %v1105 = vld [vmem:[%s1 + $0x10a8] sm:$0xf]
    %v1106 = vld [vmem:[%s1 + $0x10ac] sm:$0xf]
    %v1107 = vld [vmem:[%s1 + $0x10b0] sm:$0xf]
    %v1108 = vld [vmem:[%s1 + $0x10b4] sm:$0xf]
    %v1109 = vld [vmem:[%s1 + $0x10b8] sm:$0xf]
    %v1110 = vld [vmem:[%s1 + $0x10bc] sm:$0xf]
    %v1111 = vld [vmem:[%s1 + $0x10c0] sm:$0xf]
    %v1112 = vld [vmem:[%s1 + $0x10c4] sm:$0xf]
    %v1113 = vld [vmem:[%s1 + $0x10c8] sm:$0xf]
    %v1114 = vld [vmem:[%s1 + $0x10cc] sm:$0xf]
    %v1115 = vld [vmem:[%s1 + $0x10d0] sm:$0xf]
    %v1116 = vld [vmem:[%s1 + $0x10d4] sm:$0xf]
    %v1117 = vld [vmem:[%s1 + $0x10d8] sm:$0xf]
    %v1118 = vld [vmem:[%s1 + $0x10dc] sm:$0xf]
    %v1119 = vld [vmem:[%s1 + $0x10e0] sm:$0xf]
    %v1120 = vld [vmem:[%s1 + $0x10e4] sm:$0xf]
    %v1121 = vld [vmem:[%s1 + $0x10e8] sm:$0xf]
    %v1122 = vld [vmem:[%s1 + $0x10ec] sm:$0xf]
    %v1123 = vld [vmem:[%s1 + $0x10f0] sm:$0xf]
    %v1124 = vld [vmem:[%s1 + $0x10f4] sm:$0xf]
    %v1125 = vld [vmem:[%s1 + $0x10f8] sm:$0xf]
    %v1126 = vld [vmem:[%s1 + $0x10fc] sm:$0xf]
    %v1127 = vld [vmem:[%s1 + $0x1100] sm:$0xf]
    %v1128 = vld [vmem:[%s1 + $0x1104] sm:$0xf]
    %v1129 = vld [vmem:[%s1 + $0x1108] sm:$0xf]
    %v1130 = vld [vmem:[%s1 + $0x110c] sm:$0xf]
    %v1131 = vld [vmem:[%s1 + $0x1110] sm:$0xf]
    %v1132 = vld [vmem:[%s1 + $0x1114] sm:$0xf]
    %v1133 = vld [vmem:[%s1 + $0x1118] sm:$0xf]
    %v1134 = vld [vmem:[%s1 + $0x111c] sm:$0xf]
    %v1135 = vld [vmem:[%s1 + $0x1120] sm:$0xf]
    %v1136 = vld [vmem:[%s1 + $0x1124] sm:$0xf]
    %v1137 = vld [vmem:[%s1 + $0x1128] sm:$0xf]
    %v1138 = vld [vmem:[%s1 + $0x112c] sm:$0xf]
    %v1139 = vld [vmem:[%s1 + $0x1130] sm:$0xf]
    %v1140 = vld [vmem:[%s1 + $0x1134] sm:$0xf]
    %v1141 = vld [vmem:[%s1 + $0x1138] sm:$0xf]
    %v1142 = vld [vmem:[%s1 + $0x113c] sm:$0xf]
    %v1143 = vld [vmem:[%s1 + $0x1140] sm:$0xf]
    %v1144 = vld [vmem:[%s1 + $0x1144] sm:$0xf]
    %v1145 = vld [vmem:[%s1 + $0x1148] sm:$0xf]
    %v1146 = vld [vmem:[%s1 + $0x114c] sm:$0xf]
    %v1147 = vld [vmem:[%s1 + $0x1150] sm:$0xf]
    %v1148 = vld [vmem:[%s1 + $0x1154] sm:$0xf]
    %v1149 = vld [vmem:[%s1 + $0x1158] sm:$0xf]
    %v1150 = vld [vmem:[%s1 + $0x115c] sm:$0xf]
    %v1151 = vld [vmem:[%s1 + $0x1160] sm:$0xf]
    %v1152 = vld [vmem:[%s1 + $0x1164] sm:$0xf]
    %v1153 = vld [vmem:[%s1 + $0x1168] sm:$0xf]
    %v1154 = vld [vmem:[%s1 + $0x116c] sm:$0xf]
    %v1155 = vld [vmem:[%s1 + $0x1170] sm:$0xf]
    %v1156 = vld [vmem:[%s1 + $0x1174] sm:$0xf]
    %v1157 = vld [vmem:[%s1 + $0x1178] sm:$0xf]
    %v1158 = vld [vmem:[%s1 + $0x117c] sm:$0xf]
    %v1159 = vld [vmem:[%s1 + $0x1180] sm:$0xf]
    %v1160 = vld [vmem:[%s1 + $0x1184] sm:$0xf]
    %v1161 = vld [vmem:[%s1 + $0x1188] sm:$0xf]
    %v1162 = vld [vmem:[%s1 + $0x118c] sm:$0xf]
    %v1163 = vld [vmem:[%s1 + $0x1190] sm:$0xf]
    %v1164 = vld [vmem:[%s1 + $0x1194] sm:$0xf]
    %v1165 = vld [vmem:[%s1 + $0x1198] sm:$0xf]
    %v1166 = vld [vmem:[%s1 + $0x119c] sm:$0xf]
    %v1167 = vld [vmem:[%s1 + $0x11a0] sm:$0xf]
    %v1168 = vld [vmem:[%s1 + $0x11a4] sm:$0xf]
    %v1169 = vld [vmem:[%s1 + $0x11a8] sm:$0xf]
    %v1170 = vld [vmem:[%s1 + $0x11ac] sm:$0xf]
    %v1171 = vld [vmem:[%s1 + $0x11b0] sm:$0xf]
    %v1172 = vld [vmem:[%s1 + $0x11b4] sm:$0xf]
    %v1173 = vld [vmem:[%s1 + $0x11b8] sm:$0xf]
    %v1174 = vld [vmem:[%s1 + $0x11bc] sm:$0xf]
    %v1175 = vld [vmem:[%s1 + $0x11c0] sm:$0xf]
    %v1176 = vld [vmem:[%s1 + $0x11c4] sm:$0xf]
    %v1177 = vld [vmem:[%s1 + $0x11c8] sm:$0xf]
    %v1178 = vld [vmem:[%s1 + $0x11cc] sm:$0xf]
    %v1179 = vld [vmem:[%s1 + $0x11d0] sm:$0xf]
    %v1180 = vld [vmem:[%s1 + $0x11d4] sm:$0xf]
    %v1181 = vld [vmem:[%s1 + $0x11d8] sm:$0xf]
    %v1182 = vld [vmem:[%s1 + $0x11dc] sm:$0xf]
    %v1183 = vld [vmem:[%s1 + $0x11e0] sm:$0xf]
    %v1184 = vld [vmem:[%s1 + $0x11e4] sm:$0xf]
    %v1185 = vld [vmem:[%s1 + $0x11e8] sm:$0xf]
    %v1186 = vld [vmem:[%s1 + $0x11ec] sm:$0xf]
    %v1187 = vld [vmem:[%s1 + $0x11f0] sm:$0xf]
    %v1188 = vld [vmem:[%s1 + $0x11f4] sm:$0xf]
    %v1189 = vld [vmem:[%s1 + $0x11f8] sm:$0xf]
    %v1190 = vld [vmem:[%s1 + $0x11fc] sm:$0xf]
    %v1191 = vld [vmem:[%s1 + $0x1200] sm:$0xf]
    %v1192 = vld [vmem:[%s1 + $0x1204] sm:$0xf]
    %v1193 = vld [vmem:[%s1 + $0x1208] sm:$0xf]
    %v1194 = vld [vmem:[%s1 + $0x120c] sm:$0xf]
    %v1195 = vld [vmem:[%s1 + $0x1210] sm:$0xf]
    %v1196 = vld [vmem:[%s1 + $0x1214] sm:$0xf]
    %v1197 = vld [vmem:[%s1 + $0x1218] sm:$0xf]
    %v1198 = vld [vmem:[%s1 + $0x121c] sm:$0xf]
    %v1199 = vld [vmem:[%s1 + $0x1220] sm:$0xf]
    %v1200 = vld [vmem:[%s1 + $0x1224] sm:$0xf]
    %v1201 = vld [vmem:[%s1 + $0x1228] sm:$0xf]
    %v1202 = vld [vmem:[%s1 + $0x122c] sm:$0xf]
    %v1203 = vld [vmem:[%s1 + $0x1230] sm:$0xf]
    %v1204 = vld [vmem:[%s1 + $0x1234] sm:$0xf]
    %v1205 = vld [vmem:[%s1 + $0x1238] sm:$0xf]
    %v1206 = vld [vmem:[%s1 + $0x123c] sm:$0xf]
    %v1207 = vld [vmem:[%s1 + $0x1240] sm:$0xf]
    %v1208 = vld [vmem:[%s1 + $0x1244] sm:$0xf]
    %v1209 = vld [vmem:[%s1 + $0x1248] sm:$0xf]
    %v1210 = vld [vmem:[%s1 + $0x124c] sm:$0xf]
    %v1211 = vld [vmem:[%s1 + $0x1250] sm:$0xf]
    %v1212 = vld [vmem:[%s1 + $0x1254] sm:$0xf]
    %v1213 = vld [vmem:[%s1 + $0x1258] sm:$0xf]
    %v1214 = vld [vmem:[%s1 + $0x125c] sm:$0xf]
    %v1215 = vld [vmem:[%s1 + $0x1260] sm:$0xf]
    %v1216 = vld [vmem:[%s1 + $0x1264] sm:$0xf]
    %v1217 = vld [vmem:[%s1 + $0x1268] sm:$0xf]
    %v1218 = vld [vmem:[%s1 + $0x126c] sm:$0xf]
    %v1219 = vld [vmem:[%s1 + $0x1270] sm:$0xf]
    %v1220 = vld [vmem:[%s1 + $0x1274] sm:$0xf]
    %v1221 = vld [vmem:[%s1 + $0x1278] sm:$0xf]
    %v1222 = vld [vmem:[%s1 + $0x127c] sm:$0xf]
    %v1223 = vld [vmem:[%s1 + $0x1280] sm:$0xf]
    %v1224 = vld [vmem:[%s1 + $0x1284] sm:$0xf]
    %v1225 = vld [vmem:[%s1 + $0x1288] sm:$0xf]
    %v1226 = vld [vmem:[%s1 + $0x128c] sm:$0xf]
    %v1227 = vld [vmem:[%s1 + $0x1290] sm:$0xf]
    %v1228 = vld [vmem:[%s1 + $0x1294] sm:$0xf]
    %v1229 = vld [vmem:[%s1 + $0x1298] sm:$0xf]
    %v1230 = vld [vmem:[%s1 + $0x129c] sm:$0xf]
    %v1231 = vld [vmem:[%s1 + $0x12a0] sm:$0xf]
    %v1232 = vld [vmem:[%s1 + $0x12a4] sm:$0xf]
    %v1233 = vld [vmem:[%s1 + $0x12a8] sm:$0xf]
    %v1234 = vld [vmem:[%s1 + $0x12ac] sm:$0xf]
    %v1235 = vld [vmem:[%s1 + $0x12b0] sm:$0xf]
    %v1236 = vld [vmem:[%s1 + $0x12b4] sm:$0xf]
    %v1237 = vld [vmem:[%s1 + $0x12b8] sm:$0xf]
    %v1238 = vld [vmem:[%s1 + $0x12bc] sm:$0xf]
    %v1239 = vld [vmem:[%s1 + $0x12c0] sm:$0xf]
    %v1240 = vld [vmem:[%s1 + $0x12c4] sm:$0xf]
    %v1241 = vld [vmem:[%s1 + $0x12c8] sm:$0xf]
    %v1242 = vld [vmem:[%s1 + $0x12cc] sm:$0xf]
    %v1243 = vld [vmem:[%s1 + $0x12d0] sm:$0xf]
    %v1244 = vld [vmem:[%s1 + $0x12d4] sm:$0xf]
    %v1245 = vld [vmem:[%s1 + $0x12d8] sm:$0xf]
    %v1246 = vld [vmem:[%s1 + $0x12dc] sm:$0xf]
    %v1247 = vld [vmem:[%s1 + $0x12e0] sm:$0xf]
    %v1248 = vld [vmem:[%s1 + $0x12e4] sm:$0xf]
    %v1249 = vld [vmem:[%s1 + $0x12e8] sm:$0xf]
    %v1250 = vld [vmem:[%s1 + $0x12ec] sm:$0xf]
    %v1251 = vld [vmem:[%s1 + $0x12f0] sm:$0xf]
    %v1252 = vld [vmem:[%s1 + $0x12f4] sm:$0xf]
    %v1253 = vld [vmem:[%s1 + $0x12f8] sm:$0xf]
    %v1254 = vld [vmem:[%s1 + $0x12fc] sm:$0xf]
    %v1255 = vld [vmem:[%s1 + $0x1300] sm:$0xf]
    %v1256 = vld [vmem:[%s1 + $0x1304] sm:$0xf]
    %v1257 = vld [vmem:[%s1 + $0x1308] sm:$0xf]
    %v1258 = vld [vmem:[%s1 + $0x130c] sm:$0xf]
    %v1259 = vld [vmem:[%s1 + $0x1310] sm:$0xf]
    %v1260 = vld [vmem:[%s1 + $0x1314] sm:$0xf]
    %v1261 = vld [vmem:[%s1 + $0x1318] sm:$0xf]
    %v1262 = vld [vmem:[%s1 + $0x131c] sm:$0xf]
    %v1263 = vld [vmem:[%s1 + $0x1320] sm:$0xf]
    %v1264 = vld [vmem:[%s1 + $0x1324] sm:$0xf]
    %v1265 = vld [vmem:[%s1 + $0x1328] sm:$0xf]
    %v1266 = vld [vmem:[%s1 + $0x132c] sm:$0xf]
    %v1267 = vld [vmem:[%s1 + $0x1330] sm:$0xf]
    %v1268 = vld [vmem:[%s1 + $0x1334] sm:$0xf]
    %v1269 = vld [vmem:[%s1 + $0x1338] sm:$0xf]
    %v1270 = vld [vmem:[%s1 + $0x133c] sm:$0xf]
    %v1271 = vld [vmem:[%s1 + $0x1340] sm:$0xf]
    %v1272 = vld [vmem:[%s1 + $0x1344] sm:$0xf]
    %v1273 = vld [vmem:[%s1 + $0x1348] sm:$0xf]
    %v1274 = vld [vmem:[%s1 + $0x134c] sm:$0xf]
    %v1275 = vld [vmem:[%s1 + $0x1350] sm:$0xf]
    %v1276 = vld [vmem:[%s1 + $0x1354] sm:$0xf]
    %v1277 = vld [vmem:[%s1 + $0x1358] sm:$0xf]
    %v1278 = vld [vmem:[%s1 + $0x135c] sm:$0xf]
    %v1279 = vld [vmem:[%s1 + $0x1360] sm:$0xf]
    %v1280 = vld [vmem:[%s1 + $0x1364] sm:$0xf]
    %v1281 = vld [vmem:[%s1 + $0x1368] sm:$0xf]
    %v1282 = vld [vmem:[%s1 + $0x136c] sm:$0xf]
    %v1283 = vld [vmem:[%s1 + $0x1370] sm:$0xf]
    %v1284 = vld [vmem:[%s1 + $0x1374] sm:$0xf]
    %v1285 = vld [vmem:[%s1 + $0x1378] sm:$0xf]
    %v1286 = vld [vmem:[%s1 + $0x137c] sm:$0xf]
    %v1287 = vld [vmem:[%s1 + $0x1380] sm:$0xf]
    %v1288 = vld [vmem:[%s1 + $0x1384] sm:$0xf]
    %v1289 = vld [vmem:[%s1 + $0x1388] sm:$0xf]
    %v1290 = vld [vmem:[%s1 + $0x138c] sm:$0xf]
    %v1291 = vld [vmem:[%s1 + $0x1390] sm:$0xf]
    %v1292 = vld [vmem:[%s1 + $0x1394] sm:$0xf]
    %v1293 = vld [vmem:[%s1 + $0x1398] sm:$0xf]
    %v1294 = vld [vmem:[%s1 + $0x139c] sm:$0xf]
    %v1295 = vld [vmem:[%s1 + $0x13a0] sm:$0xf]
    %v1296 = vld [vmem:[%s1 + $0x13a4] sm:$0xf]
    %v1297 = vld [vmem:[%s1 + $0x13a8] sm:$0xf]
    %v1298 = vld [vmem:[%s1 + $0x13ac] sm:$0xf]
    %v1299 = vld [vmem:[%s1 + $0x13b0] sm:$0xf]
    %v1300 = vld [vmem:[%s1 + $0x13b4] sm:$0xf]
    %v1301 = vld [vmem:[%s1 + $0x13b8] sm:$0xf]
    %v1302 = vld [vmem:[%s1 + $0x13bc] sm:$0xf]
    %v1303 = vld [vmem:[%s1 + $0x13c0] sm:$0xf]
    %v1304 = vld [vmem:[%s1 + $0x13c4] sm:$0xf]
    %v1305 = vld [vmem:[%s1 + $0x13c8] sm:$0xf]
    %v1306 = vld [vmem:[%s1 + $0x13cc] sm:$0xf]
    %v1307 = vld [vmem:[%s1 + $0x13d0] sm:$0xf]
    %v1308 = vld [vmem:[%s1 + $0x13d4] sm:$0xf]
    %v1309 = vld [vmem:[%s1 + $0x13d8] sm:$0xf]
    %v1310 = vld [vmem:[%s1 + $0x13dc] sm:$0xf]
    %v1311 = vld [vmem:[%s1 + $0x13e0] sm:$0xf]
    %v1312 = vld [vmem:[%s1 + $0x13e4] sm:$0xf]
    %v1313 = vld [vmem:[%s1 + $0x13e8] sm:$0xf]
    %v1314 = vld [vmem:[%s1 + $0x13ec] sm:$0xf]
    %v1315 = vld [vmem:[%s1 + $0x13f0] sm:$0xf]
    %v1316 = vld [vmem:[%s1 + $0x13f4] sm:$0xf]
    %v1317 = vld [vmem:[%s1 + $0x13f8] sm:$0xf]
    %v1318 = vld [vmem:[%s1 + $0x13fc] sm:$0xf]
    %v1319 = vld [vmem:[%s1 + $0x1400] sm:$0xf]
    %v1320 = vld [vmem:[%s1 + $0x1404] sm:$0xf]
    %v1321 = vld [vmem:[%s1 + $0x1408] sm:$0xf]
    %v1322 = vld [vmem:[%s1 + $0x140c] sm:$0xf]
    %v1323 = vld [vmem:[%s1 + $0x1410] sm:$0xf]
    %v1324 = vld [vmem:[%s1 + $0x1414] sm:$0xf]
    %v1325 = vld [vmem:[%s1 + $0x1418] sm:$0xf]
    %v1326 = vld [vmem:[%s1 + $0x141c] sm:$0xf]
    %v1327 = vld [vmem:[%s1 + $0x1420] sm:$0xf]
    %v1328 = vld [vmem:[%s1 + $0x1424] sm:$0xf]
    %v1329 = vld [vmem:[%s1 + $0x1428] sm:$0xf]
    %v1330 = vld [vmem:[%s1 + $0x142c] sm:$0xf]
    %v1331 = vld [vmem:[%s1 + $0x1430] sm:$0xf]
    %v1332 = vld [vmem:[%s1 + $0x1434] sm:$0xf]
    %v1333 = vld [vmem:[%s1 + $0x1438] sm:$0xf]
    %v1334 = vld [vmem:[%s1 + $0x143c] sm:$0xf]
    %v1335 = vld [vmem:[%s1 + $0x1440] sm:$0xf]
    %v1336 = vld [vmem:[%s1 + $0x1444] sm:$0xf]
    %v1337 = vld [vmem:[%s1 + $0x1448] sm:$0xf]
    %v1338 = vld [vmem:[%s1 + $0x144c] sm:$0xf]
    %v1339 = vld [vmem:[%s1 + $0x1450] sm:$0xf]
    %v1340 = vld [vmem:[%s1 + $0x1454] sm:$0xf]
    %v1341 = vld [vmem:[%s1 + $0x1458] sm:$0xf]
    %v1342 = vld [vmem:[%s1 + $0x145c] sm:$0xf]
    %v1343 = vld [vmem:[%s1 + $0x1460] sm:$0xf]
    %v1344 = vld [vmem:[%s1 + $0x1464] sm:$0xf]
    %v1345 = vld [vmem:[%s1 + $0x1468] sm:$0xf]
    %v1346 = vld [vmem:[%s1 + $0x146c] sm:$0xf]
    %v1347 = vld [vmem:[%s1 + $0x1470] sm:$0xf]
    %v1348 = vld [vmem:[%s1 + $0x1474] sm:$0xf]
    %v1349 = vld [vmem:[%s1 + $0x1478] sm:$0xf]
    %v1350 = vld [vmem:[%s1 + $0x147c] sm:$0xf]
    %v1351 = vld [vmem:[%s1 + $0x1480] sm:$0xf]
    %v1352 = vld [vmem:[%s1 + $0x1484] sm:$0xf]
    %v1353 = vld [vmem:[%s1 + $0x1488] sm:$0xf]
    %v1354 = vld [vmem:[%s1 + $0x148c] sm:$0xf]
    %v1355 = vld [vmem:[%s1 + $0x1490] sm:$0xf]
    %v1356 = vld [vmem:[%s1 + $0x1494] sm:$0xf]
    %v1357 = vld [vmem:[%s1 + $0x1498] sm:$0xf]
    %v1358 = vld [vmem:[%s1 + $0x149c] sm:$0xf]
    %v1359 = vld [vmem:[%s1 + $0x14a0] sm:$0xf]
    %v1360 = vld [vmem:[%s1 + $0x14a4] sm:$0xf]
    %v1361 = vld [vmem:[%s1 + $0x14a8] sm:$0xf]
    %v1362 = vld [vmem:[%s1 + $0x14ac] sm:$0xf]
    %v1363 = vld [vmem:[%s1 + $0x14b0] sm:$0xf]
    %v1364 = vld [vmem:[%s1 + $0x14b4] sm:$0xf]
    %v1365 = vld [vmem:[%s1 + $0x14b8] sm:$0xf]
    %v1366 = vld [vmem:[%s1 + $0x14bc] sm:$0xf]
    %v1367 = vld [vmem:[%s1 + $0x14c0] sm:$0xf]
    %v1368 = vld [vmem:[%s1 + $0x14c4] sm:$0xf]
    %v1369 = vld [vmem:[%s1 + $0x14c8] sm:$0xf]
    %v1370 = vld [vmem:[%s1 + $0x14cc] sm:$0xf]
    %v1371 = vld [vmem:[%s1 + $0x14d0] sm:$0xf]
    %v1372 = vld [vmem:[%s1 + $0x14d4] sm:$0xf]
    %v1373 = vld [vmem:[%s1 + $0x14d8] sm:$0xf]
    %v1374 = vld [vmem:[%s1 + $0x14dc] sm:$0xf]
    %v1375 = vld [vmem:[%s1 + $0x14e0] sm:$0xf]
    %v1376 = vld [vmem:[%s1 + $0x14e4] sm:$0xf]
    %v1377 = vld [vmem:[%s1 + $0x14e8] sm:$0xf]
    %v1378 = vld [vmem:[%s1 + $0x14ec] sm:$0xf]
    %v1379 = vld [vmem:[%s1 + $0x14f0] sm:$0xf]
    %v1380 = vld [vmem:[%s1 + $0x14f4] sm:$0xf]
    %v1381 = vld [vmem:[%s1 + $0x14f8] sm:$0xf]
    %v1382 = vld [vmem:[%s1 + $0x14fc] sm:$0xf]
    %v1383 = vld [vmem:[%s1 + $0x1500] sm:$0xf]
    %v1384 = vld [vmem:[%s1 + $0x1504] sm:$0xf]
    %v1385 = vld [vmem:[%s1 + $0x1508] sm:$0xf]
    %v1386 = vld [vmem:[%s1 + $0x150c] sm:$0xf]
    %v1387 = vld [vmem:[%s1 + $0x1510] sm:$0xf]
    %v1388 = vld [vmem:[%s1 + $0x1514] sm:$0xf]
    %v1389 = vld [vmem:[%s1 + $0x1518] sm:$0xf]
    %v1390 = vld [vmem:[%s1 + $0x151c] sm:$0xf]
    %v1391 = vld [vmem:[%s1 + $0x1520] sm:$0xf]
    %v1392 = vld [vmem:[%s1 + $0x1524] sm:$0xf]
    %v1393 = vld [vmem:[%s1 + $0x1528] sm:$0xf]
    %v1394 = vld [vmem:[%s1 + $0x152c] sm:$0xf]
    %v1395 = vld [vmem:[%s1 + $0x1530] sm:$0xf]
    %v1396 = vld [vmem:[%s1 + $0x1534] sm:$0xf]
    %v1397 = vld [vmem:[%s1 + $0x1538] sm:$0xf]
    %v1398 = vld [vmem:[%s1 + $0x153c] sm:$0xf]
    %v1399 = vld [vmem:[%s1 + $0x1540] sm:$0xf]
    %v1400 = vld [vmem:[%s1 + $0x1544] sm:$0xf]
    %v1401 = vld [vmem:[%s1 + $0x1548] sm:$0xf]
    %v1402 = vld [vmem:[%s1 + $0x154c] sm:$0xf]
    %v1403 = vld [vmem:[%s1 + $0x1550] sm:$0xf]
    %v1404 = vld [vmem:[%s1 + $0x1554] sm:$0xf]
    %v1405 = vld [vmem:[%s1 + $0x1558] sm:$0xf]
    %v1406 = vld [vmem:[%s1 + $0x155c] sm:$0xf]
    %v1407 = vld [vmem:[%s1 + $0x1560] sm:$0xf]
    %v1408 = vld [vmem:[%s1 + $0x1564] sm:$0xf]
    %v1409 = vld [vmem:[%s1 + $0x1568] sm:$0xf]
    %v1410 = vld [vmem:[%s1 + $0x156c] sm:$0xf]
    %v1411 = vld [vmem:[%s1 + $0x1570] sm:$0xf]
    %v1412 = vld [vmem:[%s1 + $0x1574] sm:$0xf]
    %v1413 = vld [vmem:[%s1 + $0x1578] sm:$0xf]
    %v1414 = vld [vmem:[%s1 + $0x157c] sm:$0xf]
    %v1415 = vld [vmem:[%s1 + $0x1580] sm:$0xf]
    %v1416 = vld [vmem:[%s1 + $0x1584] sm:$0xf]
    %v1417 = vld [vmem:[%s1 + $0x1588] sm:$0xf]
    %v1418 = vld [vmem:[%s1 + $0x158c] sm:$0xf]
    %v1419 = vld [vmem:[%s1 + $0x1590] sm:$0xf]
    %v1420 = vld [vmem:[%s1 + $0x1594] sm:$0xf]
    %v1421 = vld [vmem:[%s1 + $0x1598] sm:$0xf]
    %v1422 = vld [vmem:[%s1 + $0x159c] sm:$0xf]
    %v1423 = vld [vmem:[%s1 + $0x15a0] sm:$0xf]
    %v1424 = vld [vmem:[%s1 + $0x15a4] sm:$0xf]
    %v1425 = vld [vmem:[%s1 + $0x15a8] sm:$0xf]
    %v1426 = vld [vmem:[%s1 + $0x15ac] sm:$0xf]
    %v1427 = vld [vmem:[%s1 + $0x15b0] sm:$0xf]
    %v1428 = vld [vmem:[%s1 + $0x15b4] sm:$0xf]
    %v1429 = vld [vmem:[%s1 + $0x15b8] sm:$0xf]
    %v1430 = vld [vmem:[%s1 + $0x15bc] sm:$0xf]
    %v1431 = vld [vmem:[%s1 + $0x15c0] sm:$0xf]
    %v1432 = vld [vmem:[%s1 + $0x15c4] sm:$0xf]
    %v1433 = vld [vmem:[%s1 + $0x15c8] sm:$0xf]
    %v1434 = vld [vmem:[%s1 + $0x15cc] sm:$0xf]
    %v1435 = vld [vmem:[%s1 + $0x15d0] sm:$0xf]
    %v1436 = vld [vmem:[%s1 + $0x15d4] sm:$0xf]
    %v1437 = vld [vmem:[%s1 + $0x15d8] sm:$0xf]
    %v1438 = vld [vmem:[%s1 + $0x15dc] sm:$0xf]
    %v1439 = vld [vmem:[%s1 + $0x15e0] sm:$0xf]
    %v1440 = vld [vmem:[%s1 + $0x15e4] sm:$0xf]
    %v1441 = vld [vmem:[%s1 + $0x15e8] sm:$0xf]
    %v1442 = vld [vmem:[%s1 + $0x15ec] sm:$0xf]
    %v1443 = vld [vmem:[%s1 + $0x15f0] sm:$0xf]
    %v1444 = vld [vmem:[%s1 + $0x15f4] sm:$0xf]
    %v1445 = vld [vmem:[%s1 + $0x15f8] sm:$0xf]
    %v1446 = vld [vmem:[%s1 + $0x15fc] sm:$0xf]
    %v1447 = vld [vmem:[%s1 + $0x1600] sm:$0xf]
    %v1448 = vld [vmem:[%s1 + $0x1604] sm:$0xf]
    %v1449 = vld [vmem:[%s1 + $0x1608] sm:$0xf]
    %v1450 = vld [vmem:[%s1 + $0x160c] sm:$0xf]
    %v1451 = vld [vmem:[%s1 + $0x1610] sm:$0xf]
    %v1452 = vld [vmem:[%s1 + $0x1614] sm:$0xf]
    %v1453 = vld [vmem:[%s1 + $0x1618] sm:$0xf]
    %v1454 = vld [vmem:[%s1 + $0x161c] sm:$0xf]
    %v1455 = vld [vmem:[%s1 + $0x1620] sm:$0xf]
    %v1456 = vld [vmem:[%s1 + $0x1624] sm:$0xf]
    %v1457 = vld [vmem:[%s1 + $0x1628] sm:$0xf]
    %v1458 = vld [vmem:[%s1 + $0x162c] sm:$0xf]
    %v1459 = vld [vmem:[%s1 + $0x1630] sm:$0xf]
    %v1460 = vld [vmem:[%s1 + $0x1634] sm:$0xf]
    %v1461 = vld [vmem:[%s1 + $0x1638] sm:$0xf]
    %v1462 = vld [vmem:[%s1 + $0x163c] sm:$0xf]
    %v1463 = vld [vmem:[%s1 + $0x1640] sm:$0xf]
    %v1464 = vld [vmem:[%s1 + $0x1644] sm:$0xf]
    %v1465 = vld [vmem:[%s1 + $0x1648] sm:$0xf]
    %v1466 = vld [vmem:[%s1 + $0x164c] sm:$0xf]
    %v1467 = vld [vmem:[%s1 + $0x1650] sm:$0xf]
    %v1468 = vld [vmem:[%s1 + $0x1654] sm:$0xf]
    %v1469 = vld [vmem:[%s1 + $0x1658] sm:$0xf]
    %v1470 = vld [vmem:[%s1 + $0x165c] sm:$0xf]
    %v1471 = vld [vmem:[%s1 + $0x1660] sm:$0xf]
    %v1472 = vld [vmem:[%s1 + $0x1664] sm:$0xf]
    %v1473 = vld [vmem:[%s1 + $0x1668] sm:$0xf]
    %v1474 = vld [vmem:[%s1 + $0x166c] sm:$0xf]
    %v1475 = vld [vmem:[%s1 + $0x1670] sm:$0xf]
    %v1476 = vld [vmem:[%s1 + $0x1674] sm:$0xf]
    %v1477 = vld [vmem:[%s1 + $0x1678] sm:$0xf]
    %v1478 = vld [vmem:[%s1 + $0x167c] sm:$0xf]
    %v1479 = vld [vmem:[%s1 + $0x1680] sm:$0xf]
    %v1480 = vld [vmem:[%s1 + $0x1684] sm:$0xf]
    %v1481 = vld [vmem:[%s1 + $0x1688] sm:$0xf]
    %v1482 = vld [vmem:[%s1 + $0x168c] sm:$0xf]
    %v1483 = vld [vmem:[%s1 + $0x1690] sm:$0xf]
    %v1484 = vld [vmem:[%s1 + $0x1694] sm:$0xf]
    %v1485 = vld [vmem:[%s1 + $0x1698] sm:$0xf]
    %v1486 = vld [vmem:[%s1 + $0x169c] sm:$0xf]
    %v1487 = vld [vmem:[%s1 + $0x16a0] sm:$0xf]
    %v1488 = vld [vmem:[%s1 + $0x16a4] sm:$0xf]
    %v1489 = vld [vmem:[%s1 + $0x16a8] sm:$0xf]
    %v1490 = vld [vmem:[%s1 + $0x16ac] sm:$0xf]
    %v1491 = vld [vmem:[%s1 + $0x16b0] sm:$0xf]
    %v1492 = vld [vmem:[%s1 + $0x16b4] sm:$0xf]
    %v1493 = vld [vmem:[%s1 + $0x16b8] sm:$0xf]
    %v1494 = vld [vmem:[%s1 + $0x16bc] sm:$0xf]
    %v1495 = vld [vmem:[%s1 + $0x16c0] sm:$0xf]
    %v1496 = vld [vmem:[%s1 + $0x16c4] sm:$0xf]
    %v1497 = vld [vmem:[%s1 + $0x16c8] sm:$0xf]
    %v1498 = vld [vmem:[%s1 + $0x16cc] sm:$0xf]
    %v1499 = vld [vmem:[%s1 + $0x16d0] sm:$0xf]
    %v1500 = vld [vmem:[%s1 + $0x16d4] sm:$0xf]
    %v1501 = vld [vmem:[%s1 + $0x16d8] sm:$0xf]
    %v1502 = vld [vmem:[%s1 + $0x16dc] sm:$0xf]
    %v1503 = vld [vmem:[%s1 + $0x16e0] sm:$0xf]
    %v1504 = vld [vmem:[%s1 + $0x16e4] sm:$0xf]
    %v1505 = vld [vmem:[%s1 + $0x16e8] sm:$0xf]
    %v1506 = vld [vmem:[%s1 + $0x16ec] sm:$0xf]
    %v1507 = vld [vmem:[%s1 + $0x16f0] sm:$0xf]
    %v1508 = vld [vmem:[%s1 + $0x16f4] sm:$0xf]
    %v1509 = vld [vmem:[%s1 + $0x16f8] sm:$0xf]
    %v1510 = vld [vmem:[%s1 + $0x16fc] sm:$0xf]
    %v1511 = vld [vmem:[%s1 + $0x1700] sm:$0xf]
    %v1512 = vld [vmem:[%s1 + $0x1704] sm:$0xf]
    %v1513 = vld [vmem:[%s1 + $0x1708] sm:$0xf]
    %v1514 = vld [vmem:[%s1 + $0x170c] sm:$0xf]
    %v1515 = vld [vmem:[%s1 + $0x1710] sm:$0xf]
    %v1516 = vld [vmem:[%s1 + $0x1714] sm:$0xf]
    %v1517 = vld [vmem:[%s1 + $0x1718] sm:$0xf]
    %v1518 = vld [vmem:[%s1 + $0x171c] sm:$0xf]
    %v1519 = vld [vmem:[%s1 + $0x1720] sm:$0xf]
    %v1520 = vld [vmem:[%s1 + $0x1724] sm:$0xf]
    %v1521 = vld [vmem:[%s1 + $0x1728] sm:$0xf]
    %v1522 = vld [vmem:[%s1 + $0x172c] sm:$0xf]
    %v1523 = vld [vmem:[%s1 + $0x1730] sm:$0xf]
    %v1524 = vld [vmem:[%s1 + $0x1734] sm:$0xf]
    %v1525 = vld [vmem:[%s1 + $0x1738] sm:$0xf]
    %v1526 = vld [vmem:[%s1 + $0x173c] sm:$0xf]
    %v1527 = vld [vmem:[%s1 + $0x1740] sm:$0xf]
    %v1528 = vld [vmem:[%s1 + $0x1744] sm:$0xf]
    %v1529 = vld [vmem:[%s1 + $0x1748] sm:$0xf]
    %v1530 = vld [vmem:[%s1 + $0x174c] sm:$0xf]
    %v1531 = vld [vmem:[%s1 + $0x1750] sm:$0xf]
    %v1532 = vld [vmem:[%s1 + $0x1754] sm:$0xf]
    %v1533 = vld [vmem:[%s1 + $0x1758] sm:$0xf]
    %v1534 = vld [vmem:[%s1 + $0x175c] sm:$0xf]
    %v1535 = vld [vmem:[%s1 + $0x1760] sm:$0xf]
    %v1536 = vld [vmem:[%s1 + $0x1764] sm:$0xf]
    %v1537 = vld [vmem:[%s1 + $0x1768] sm:$0xf]
    %v1538 = vld [vmem:[%s1 + $0x176c] sm:$0xf]
    %v1539 = vld [vmem:[%s1 + $0x1770] sm:$0xf]
    %v1540 = vld [vmem:[%s1 + $0x1774] sm:$0xf]
    %v1541 = vld [vmem:[%s1 + $0x1778] sm:$0xf]
    %v1542 = vld [vmem:[%s1 + $0x177c] sm:$0xf]
    %v1543 = vld [vmem:[%s1 + $0x1780] sm:$0xf]
    %v1544 = vld [vmem:[%s1 + $0x1784] sm:$0xf]
    %v1545 = vld [vmem:[%s1 + $0x1788] sm:$0xf]
    %v1546 = vld [vmem:[%s1 + $0x178c] sm:$0xf]
    %v1547 = vld [vmem:[%s1 + $0x1790] sm:$0xf]
    %v1548 = vld [vmem:[%s1 + $0x1794] sm:$0xf]
    %v1549 = vld [vmem:[%s1 + $0x1798] sm:$0xf]
    %v1550 = vld [vmem:[%s1 + $0x179c] sm:$0xf]
    %v1551 = vld [vmem:[%s1 + $0x17a0] sm:$0xf]
    %v1552 = vld [vmem:[%s1 + $0x17a4] sm:$0xf]
    %v1553 = vld [vmem:[%s1 + $0x17a8] sm:$0xf]
    %v1554 = vld [vmem:[%s1 + $0x17ac] sm:$0xf]
    %v1555 = vld [vmem:[%s1 + $0x17b0] sm:$0xf]
    %v1556 = vld [vmem:[%s1 + $0x17b4] sm:$0xf]
    %v1557 = vld [vmem:[%s1 + $0x17b8] sm:$0xf]
    %v1558 = vld [vmem:[%s1 + $0x17bc] sm:$0xf]
    %v1559 = vld [vmem:[%s1 + $0x17c0] sm:$0xf]
    %v1560 = vld [vmem:[%s1 + $0x17c4] sm:$0xf]
    %v1561 = vld [vmem:[%s1 + $0x17c8] sm:$0xf]
    %v1562 = vld [vmem:[%s1 + $0x17cc] sm:$0xf]
    %v1563 = vld [vmem:[%s1 + $0x17d0] sm:$0xf]
    %v1564 = vld [vmem:[%s1 + $0x17d4] sm:$0xf]
    %v1565 = vld [vmem:[%s1 + $0x17d8] sm:$0xf]
    %v1566 = vld [vmem:[%s1 + $0x17dc] sm:$0xf]
    %v1567 = vld [vmem:[%s1 + $0x17e0] sm:$0xf]
    %v1568 = vld [vmem:[%s1 + $0x17e4] sm:$0xf]
    %v1569 = vld [vmem:[%s1 + $0x17e8] sm:$0xf]
    %v1570 = vld [vmem:[%s1 + $0x17ec] sm:$0xf]
    %v1571 = vld [vmem:[%s1 + $0x17f0] sm:$0xf]
    %v1572 = vld [vmem:[%s1 + $0x17f4] sm:$0xf]
    %v1573 = vld [vmem:[%s1 + $0x17f8] sm:$0xf]
    %v1574 = vld [vmem:[%s1 + $0x17fc] sm:$0xf]
    %v1575 = vld [vmem:[%s1 + $0x1800] sm:$0xf]
    %v1576 = vld [vmem:[%s1 + $0x1804] sm:$0xf]
    %v1577 = vld [vmem:[%s1 + $0x1808] sm:$0xf]
    %v1578 = vld [vmem:[%s1 + $0x180c] sm:$0xf]
    %v1579 = vld [vmem:[%s1 + $0x1810] sm:$0xf]
    %v1580 = vld [vmem:[%s1 + $0x1814] sm:$0xf]
    %v1581 = vld [vmem:[%s1 + $0x1818] sm:$0xf]
    %v1582 = vld [vmem:[%s1 + $0x181c] sm:$0xf]
    %v1583 = vld [vmem:[%s1 + $0x1820] sm:$0xf]
    %v1584 = vld [vmem:[%s1 + $0x1824] sm:$0xf]
    %v1585 = vld [vmem:[%s1 + $0x1828] sm:$0xf]
    %v1586 = vld [vmem:[%s1 + $0x182c] sm:$0xf]
    %v1587 = vld [vmem:[%s1 + $0x1830] sm:$0xf]
    %v1588 = vld [vmem:[%s1 + $0x1834] sm:$0xf]
    %v1589 = vld [vmem:[%s1 + $0x1838] sm:$0xf]
    %v1590 = vld [vmem:[%s1 + $0x183c] sm:$0xf]
    %v1591 = vld [vmem:[%s1 + $0x1840] sm:$0xf]
    %v1592 = vld [vmem:[%s1 + $0x1844] sm:$0xf]
    %v1593 = vld [vmem:[%s1 + $0x1848] sm:$0xf]
    %v1594 = vld [vmem:[%s1 + $0x184c] sm:$0xf]
    %v1595 = vld [vmem:[%s1 + $0x1850] sm:$0xf]
    %v1596 = vld [vmem:[%s1 + $0x1854] sm:$0xf]
    %v1597 = vld [vmem:[%s1 + $0x1858] sm:$0xf]
    %v1598 = vld [vmem:[%s1 + $0x185c] sm:$0xf]
    %v1599 = vld [vmem:[%s1 + $0x1860] sm:$0xf]
    %v1600 = vld [vmem:[%s1 + $0x1864] sm:$0xf]
    %v1601 = vld [vmem:[%s1 + $0x1868] sm:$0xf]
    %v1602 = vld [vmem:[%s1 + $0x186c] sm:$0xf]
    %v1603 = vld [vmem:[%s1 + $0x1870] sm:$0xf]
    %v1604 = vld [vmem:[%s1 + $0x1874] sm:$0xf]
    %v1605 = vld [vmem:[%s1 + $0x1878] sm:$0xf]
    %v1606 = vld [vmem:[%s1 + $0x187c] sm:$0xf]
    %v1607 = vld [vmem:[%s1 + $0x1880] sm:$0xf]
    %v1608 = vld [vmem:[%s1 + $0x1884] sm:$0xf]
    %v1609 = vld [vmem:[%s1 + $0x1888] sm:$0xf]
    %v1610 = vld [vmem:[%s1 + $0x188c] sm:$0xf]
    %v1611 = vld [vmem:[%s1 + $0x1890] sm:$0xf]
    %v1612 = vld [vmem:[%s1 + $0x1894] sm:$0xf]
    %v1613 = vld [vmem:[%s1 + $0x1898] sm:$0xf]
    %v1614 = vld [vmem:[%s1 + $0x189c] sm:$0xf]
    %v1615 = vld [vmem:[%s1 + $0x18a0] sm:$0xf]
    %v1616 = vld [vmem:[%s1 + $0x18a4] sm:$0xf]
    %v1617 = vld [vmem:[%s1 + $0x18a8] sm:$0xf]
    %v1618 = vld [vmem:[%s1 + $0x18ac] sm:$0xf]
    %v1619 = vld [vmem:[%s1 + $0x18b0] sm:$0xf]
    %v1620 = vld [vmem:[%s1 + $0x18b4] sm:$0xf]
    %v1621 = vld [vmem:[%s1 + $0x18b8] sm:$0xf]
    %v1622 = vld [vmem:[%s1 + $0x18bc] sm:$0xf]
    %v1623 = vld [vmem:[%s1 + $0x18c0] sm:$0xf]
    %v1624 = vld [vmem:[%s1 + $0x18c4] sm:$0xf]
    %v1625 = vld [vmem:[%s1 + $0x18c8] sm:$0xf]
    %v1626 = vld [vmem:[%s1 + $0x18cc] sm:$0xf]
    %v1627 = vld [vmem:[%s1 + $0x18d0] sm:$0xf]
    %v1628 = vld [vmem:[%s1 + $0x18d4] sm:$0xf]
    %v1629 = vld [vmem:[%s1 + $0x18d8] sm:$0xf]
    %v1630 = vld [vmem:[%s1 + $0x18dc] sm:$0xf]
    %v1631 = vld [vmem:[%s1 + $0x18e0] sm:$0xf]
    %v1632 = vld [vmem:[%s1 + $0x18e4] sm:$0xf]
    %v1633 = vld [vmem:[%s1 + $0x18e8] sm:$0xf]
    %v1634 = vld [vmem:[%s1 + $0x18ec] sm:$0xf]
    %v1635 = vld [vmem:[%s1 + $0x18f0] sm:$0xf]
    %v1636 = vld [vmem:[%s1 + $0x18f4] sm:$0xf]
    %v1637 = vld [vmem:[%s1 + $0x18f8] sm:$0xf]
    %v1638 = vld [vmem:[%s1 + $0x18fc] sm:$0xf]
    %v1639 = vld [vmem:[%s1 + $0x1900] sm:$0xf]
    %v1640 = vld [vmem:[%s1 + $0x1904] sm:$0xf]
    %v1641 = vld [vmem:[%s1 + $0x1908] sm:$0xf]
    %v1642 = vld [vmem:[%s1 + $0x190c] sm:$0xf]
    %v1643 = vld [vmem:[%s1 + $0x1910] sm:$0xf]
    %v1644 = vld [vmem:[%s1 + $0x1914] sm:$0xf]
    %v1645 = vld [vmem:[%s1 + $0x1918] sm:$0xf]
    %v1646 = vld [vmem:[%s1 + $0x191c] sm:$0xf]
    %v1647 = vld [vmem:[%s1 + $0x1920] sm:$0xf]
    %v1648 = vld [vmem:[%s1 + $0x1924] sm:$0xf]
    %v1649 = vld [vmem:[%s1 + $0x1928] sm:$0xf]
    %v1650 = vld [vmem:[%s1 + $0x192c] sm:$0xf]
    %v1651 = vld [vmem:[%s1 + $0x1930] sm:$0xf]
    %v1652 = vld [vmem:[%s1 + $0x1934] sm:$0xf]
    %v1653 = vld [vmem:[%s1 + $0x1938] sm:$0xf]
    %v1654 = vld [vmem:[%s1 + $0x193c] sm:$0xf]
    %v1655 = vld [vmem:[%s1 + $0x1940] sm:$0xf]
    %v1656 = vld [vmem:[%s1 + $0x1944] sm:$0xf]
    %v1657 = vld [vmem:[%s1 + $0x1948] sm:$0xf]
    %v1658 = vld [vmem:[%s1 + $0x194c] sm:$0xf]
    %v1659 = vld [vmem:[%s1 + $0x1950] sm:$0xf]
    %v1660 = vld [vmem:[%s1 + $0x1954] sm:$0xf]
    %v1661 = vld [vmem:[%s1 + $0x1958] sm:$0xf]
    %v1662 = vld [vmem:[%s1 + $0x195c] sm:$0xf]
    %v1663 = vld [vmem:[%s1 + $0x1960] sm:$0xf]
    %v1664 = vld [vmem:[%s1 + $0x1964] sm:$0xf]
    %v1665 = vld [vmem:[%s1 + $0x1968] sm:$0xf]
    %v1666 = vld [vmem:[%s1 + $0x196c] sm:$0xf]
    %v1667 = vld [vmem:[%s1 + $0x1970] sm:$0xf]
    %v1668 = vld [vmem:[%s1 + $0x1974] sm:$0xf]
    %v1669 = vld [vmem:[%s1 + $0x1978] sm:$0xf]
    %v1670 = vld [vmem:[%s1 + $0x197c] sm:$0xf]
    %v1671 = vld [vmem:[%s1 + $0x1980] sm:$0xf]
    %v1672 = vld [vmem:[%s1 + $0x1984] sm:$0xf]
    %v1673 = vld [vmem:[%s1 + $0x1988] sm:$0xf]
    %v1674 = vld [vmem:[%s1 + $0x198c] sm:$0xf]
    %v1675 = vld [vmem:[%s1 + $0x1990] sm:$0xf]
    %v1676 = vld [vmem:[%s1 + $0x1994] sm:$0xf]
    %v1677 = vld [vmem:[%s1 + $0x1998] sm:$0xf]
    %v1678 = vld [vmem:[%s1 + $0x199c] sm:$0xf]
    %v1679 = vld [vmem:[%s1 + $0x19a0] sm:$0xf]
    %v1680 = vld [vmem:[%s1 + $0x19a4] sm:$0xf]
    %v1681 = vld [vmem:[%s1 + $0x19a8] sm:$0xf]
    %v1682 = vld [vmem:[%s1 + $0x19ac] sm:$0xf]
    %v1683 = vld [vmem:[%s1 + $0x19b0] sm:$0xf]
    %v1684 = vld [vmem:[%s1 + $0x19b4] sm:$0xf]
    %v1685 = vld [vmem:[%s1 + $0x19b8] sm:$0xf]
    %v1686 = vld [vmem:[%s1 + $0x19bc] sm:$0xf]
    %v1687 = vld [vmem:[%s1 + $0x19c0] sm:$0xf]
    %v1688 = vld [vmem:[%s1 + $0x19c4] sm:$0xf]
    %v1689 = vld [vmem:[%s1 + $0x19c8] sm:$0xf]
    %v1690 = vld [vmem:[%s1 + $0x19cc] sm:$0xf]
    %v1691 = vld [vmem:[%s1 + $0x19d0] sm:$0xf]
    %v1692 = vld [vmem:[%s1 + $0x19d4] sm:$0xf]
    %v1693 = vld [vmem:[%s1 + $0x19d8] sm:$0xf]
    %v1694 = vld [vmem:[%s1 + $0x19dc] sm:$0xf]
    %v1695 = vld [vmem:[%s1 + $0x19e0] sm:$0xf]
    %v1696 = vld [vmem:[%s1 + $0x19e4] sm:$0xf]
    %v1697 = vld [vmem:[%s1 + $0x19e8] sm:$0xf]
    %v1698 = vld [vmem:[%s1 + $0x19ec] sm:$0xf]
    %v1699 = vld [vmem:[%s1 + $0x19f0] sm:$0xf]
    %v1700 = vld [vmem:[%s1 + $0x19f4] sm:$0xf]
    %v1701 = vld [vmem:[%s1 + $0x19f8] sm:$0xf]
    %v1702 = vld [vmem:[%s1 + $0x19fc] sm:$0xf]
    %v1703 = vld [vmem:[%s1 + $0x1a00] sm:$0xf]
    %v1704 = vld [vmem:[%s1 + $0x1a04] sm:$0xf]
    %v1705 = vld [vmem:[%s1 + $0x1a08] sm:$0xf]
    %v1706 = vld [vmem:[%s1 + $0x1a0c] sm:$0xf]
    %v1707 = vld [vmem:[%s1 + $0x1a10] sm:$0xf]
    %v1708 = vld [vmem:[%s1 + $0x1a14] sm:$0xf]
    %v1709 = vld [vmem:[%s1 + $0x1a18] sm:$0xf]
    %v1710 = vld [vmem:[%s1 + $0x1a1c] sm:$0xf]
    %v1711 = vld [vmem:[%s1 + $0x1a20] sm:$0xf]
    %v1712 = vld [vmem:[%s1 + $0x1a24] sm:$0xf]
    %v1713 = vld [vmem:[%s1 + $0x1a28] sm:$0xf]
    %v1714 = vld [vmem:[%s1 + $0x1a2c] sm:$0xf]
    %v1715 = vld [vmem:[%s1 + $0x1a30] sm:$0xf]
    %v1716 = vld [vmem:[%s1 + $0x1a34] sm:$0xf]
    %v1717 = vld [vmem:[%s1 + $0x1a38] sm:$0xf]
    %v1718 = vld [vmem:[%s1 + $0x1a3c] sm:$0xf]
    %v1719 = vld [vmem:[%s1 + $0x1a40] sm:$0xf]
    %v1720 = vld [vmem:[%s1 + $0x1a44] sm:$0xf]
    %v1721 = vld [vmem:[%s1 + $0x1a48] sm:$0xf]
    %v1722 = vld [vmem:[%s1 + $0x1a4c] sm:$0xf]
    %v1723 = vld [vmem:[%s1 + $0x1a50] sm:$0xf]
    %v1724 = vld [vmem:[%s1 + $0x1a54] sm:$0xf]
    %v1725 = vld [vmem:[%s1 + $0x1a58] sm:$0xf]
    %v1726 = vld [vmem:[%s1 + $0x1a5c] sm:$0xf]
    %v1727 = vld [vmem:[%s1 + $0x1a60] sm:$0xf]
    %v1728 = vld [vmem:[%s1 + $0x1a64] sm:$0xf]
    %v1729 = vld [vmem:[%s1 + $0x1a68] sm:$0xf]
    %v1730 = vld [vmem:[%s1 + $0x1a6c] sm:$0xf]
    %v1731 = vld [vmem:[%s1 + $0x1a70] sm:$0xf]
    %v1732 = vld [vmem:[%s1 + $0x1a74] sm:$0xf]
    %v1733 = vld [vmem:[%s1 + $0x1a78] sm:$0xf]
    %v1734 = vld [vmem:[%s1 + $0x1a7c] sm:$0xf]
    %v1735 = vld [vmem:[%s1 + $0x1a80] sm:$0xf]
    %v1736 = vld [vmem:[%s1 + $0x1a84] sm:$0xf]
    %v1737 = vld [vmem:[%s1 + $0x1a88] sm:$0xf]
    %v1738 = vld [vmem:[%s1 + $0x1a8c] sm:$0xf]
    %v1739 = vld [vmem:[%s1 + $0x1a90] sm:$0xf]
    %v1740 = vld [vmem:[%s1 + $0x1a94] sm:$0xf]
    %v1741 = vld [vmem:[%s1 + $0x1a98] sm:$0xf]
    %v1742 = vld [vmem:[%s1 + $0x1a9c] sm:$0xf]
    %v1743 = vld [vmem:[%s1 + $0x1aa0] sm:$0xf]
    %v1744 = vld [vmem:[%s1 + $0x1aa4] sm:$0xf]
    %v1745 = vld [vmem:[%s1 + $0x1aa8] sm:$0xf]
    %v1746 = vld [vmem:[%s1 + $0x1aac] sm:$0xf]
    %v1747 = vld [vmem:[%s1 + $0x1ab0] sm:$0xf]
    %v1748 = vld [vmem:[%s1 + $0x1ab4] sm:$0xf]
    %v1749 = vld [vmem:[%s1 + $0x1ab8] sm:$0xf]
    %v1750 = vld [vmem:[%s1 + $0x1abc] sm:$0xf]
    %v1751 = vld [vmem:[%s1 + $0x1ac0] sm:$0xf]
    %v1752 = vld [vmem:[%s1 + $0x1ac4] sm:$0xf]
    %v1753 = vld [vmem:[%s1 + $0x1ac8] sm:$0xf]
    %v1754 = vld [vmem:[%s1 + $0x1acc] sm:$0xf]
    %v1755 = vld [vmem:[%s1 + $0x1ad0] sm:$0xf]
    %v1756 = vld [vmem:[%s1 + $0x1ad4] sm:$0xf]
    %v1757 = vld [vmem:[%s1 + $0x1ad8] sm:$0xf]
    %v1758 = vld [vmem:[%s1 + $0x1adc] sm:$0xf]
    %v1759 = vld [vmem:[%s1 + $0x1ae0] sm:$0xf]
    %v1760 = vld [vmem:[%s1 + $0x1ae4] sm:$0xf]
    %v1761 = vld [vmem:[%s1 + $0x1ae8] sm:$0xf]
    %v1762 = vld [vmem:[%s1 + $0x1aec] sm:$0xf]
    %v1763 = vld [vmem:[%s1 + $0x1af0] sm:$0xf]
    %v1764 = vld [vmem:[%s1 + $0x1af4] sm:$0xf]
    %v1765 = vld [vmem:[%s1 + $0x1af8] sm:$0xf]
    %v1766 = vld [vmem:[%s1 + $0x1afc] sm:$0xf]
    %v1767 = vld [vmem:[%s1 + $0x1b00] sm:$0xf]
    %v1768 = vld [vmem:[%s1 + $0x1b04] sm:$0xf]
    %v1769 = vld [vmem:[%s1 + $0x1b08] sm:$0xf]
    %v1770 = vld [vmem:[%s1 + $0x1b0c] sm:$0xf]
    %v1771 = vld [vmem:[%s1 + $0x1b10] sm:$0xf]
    %v1772 = vld [vmem:[%s1 + $0x1b14] sm:$0xf]
    %v1773 = vld [vmem:[%s1 + $0x1b18] sm:$0xf]
    %v1774 = vld [vmem:[%s1 + $0x1b1c] sm:$0xf]
    %v1775 = vld [vmem:[%s1 + $0x1b20] sm:$0xf]
    %v1776 = vld [vmem:[%s1 + $0x1b24] sm:$0xf]
    %v1777 = vld [vmem:[%s1 + $0x1b28] sm:$0xf]
    %v1778 = vld [vmem:[%s1 + $0x1b2c] sm:$0xf]
    %v1779 = vld [vmem:[%s1 + $0x1b30] sm:$0xf]
    %v1780 = vld [vmem:[%s1 + $0x1b34] sm:$0xf]
    %v1781 = vld [vmem:[%s1 + $0x1b38] sm:$0xf]
    %v1782 = vld [vmem:[%s1 + $0x1b3c] sm:$0xf]
    %v1783 = vld [vmem:[%s1 + $0x1b40] sm:$0xf]
    %v1784 = vld [vmem:[%s1 + $0x1b44] sm:$0xf]
    %v1785 = vld [vmem:[%s1 + $0x1b48] sm:$0xf]
    %v1786 = vld [vmem:[%s1 + $0x1b4c] sm:$0xf]
    %v1787 = vld [vmem:[%s1 + $0x1b50] sm:$0xf]
    %v1788 = vld [vmem:[%s1 + $0x1b54] sm:$0xf]
    %v1789 = vld [vmem:[%s1 + $0x1b58] sm:$0xf]
    %v1790 = vld [vmem:[%s1 + $0x1b5c] sm:$0xf]
    %v1791 = vld [vmem:[%s1 + $0x1b60] sm:$0xf]
    %v1792 = vld [vmem:[%s1 + $0x1b64] sm:$0xf]
    %v1793 = vld [vmem:[%s1 + $0x1b68] sm:$0xf]
    %v1794 = vld [vmem:[%s1 + $0x1b6c] sm:$0xf]
    %v1795 = vld [vmem:[%s1 + $0x1b70] sm:$0xf]
    %v1796 = vld [vmem:[%s1 + $0x1b74] sm:$0xf]
    %v1797 = vld [vmem:[%s1 + $0x1b78] sm:$0xf]
    %v1798 = vld [vmem:[%s1 + $0x1b7c] sm:$0xf]
    %v1799 = vld [vmem:[%s1 + $0x1b80] sm:$0xf]
    %v1800 = vld [vmem:[%s1 + $0x1b84] sm:$0xf]
    %v1801 = vld [vmem:[%s1 + $0x1b88] sm:$0xf]
    %v1802 = vld [vmem:[%s1 + $0x1b8c] sm:$0xf]
    %v1803 = vld [vmem:[%s1 + $0x1b90] sm:$0xf]
    %v1804 = vld [vmem:[%s1 + $0x1b94] sm:$0xf]
    %v1805 = vld [vmem:[%s1 + $0x1b98] sm:$0xf]
    %v1806 = vld [vmem:[%s1 + $0x1b9c] sm:$0xf]
    %v1807 = vld [vmem:[%s1 + $0x1ba0] sm:$0xf]
    %v1808 = vld [vmem:[%s1 + $0x1ba4] sm:$0xf]
    %v1809 = vld [vmem:[%s1 + $0x1ba8] sm:$0xf]
    %v1810 = vld [vmem:[%s1 + $0x1bac] sm:$0xf]
    %v1811 = vld [vmem:[%s1 + $0x1bb0] sm:$0xf]
    %v1812 = vld [vmem:[%s1 + $0x1bb4] sm:$0xf]
    %v1813 = vld [vmem:[%s1 + $0x1bb8] sm:$0xf]
    %v1814 = vld [vmem:[%s1 + $0x1bbc] sm:$0xf]
    %v1815 = vld [vmem:[%s1 + $0x1bc0] sm:$0xf]
    %v1816 = vld [vmem:[%s1 + $0x1bc4] sm:$0xf]
    %v1817 = vld [vmem:[%s1 + $0x1bc8] sm:$0xf]
    %v1818 = vld [vmem:[%s1 + $0x1bcc] sm:$0xf]
    %v1819 = vld [vmem:[%s1 + $0x1bd0] sm:$0xf]
    %v1820 = vld [vmem:[%s1 + $0x1bd4] sm:$0xf]
    %v1821 = vld [vmem:[%s1 + $0x1bd8] sm:$0xf]
    %v1822 = vld [vmem:[%s1 + $0x1bdc] sm:$0xf]
    %v1823 = vld [vmem:[%s1 + $0x1be0] sm:$0xf]
    %v1824 = vld [vmem:[%s1 + $0x1be4] sm:$0xf]
    %v1825 = vld [vmem:[%s1 + $0x1be8] sm:$0xf]
    %v1826 = vld [vmem:[%s1 + $0x1bec] sm:$0xf]
    %v1827 = vld [vmem:[%s1 + $0x1bf0] sm:$0xf]
    %v1828 = vld [vmem:[%s1 + $0x1bf4] sm:$0xf]
    %v1829 = vld [vmem:[%s1 + $0x1bf8] sm:$0xf]
    %v1830 = vld [vmem:[%s1 + $0x1bfc] sm:$0xf]
    %v1831 = vld [vmem:[%s1 + $0x1c00] sm:$0xf]
    %v1832 = vld [vmem:[%s1 + $0x1c04] sm:$0xf]
    %v1833 = vld [vmem:[%s1 + $0x1c08] sm:$0xf]
    %v1834 = vld [vmem:[%s1 + $0x1c0c] sm:$0xf]
    %v1835 = vld [vmem:[%s1 + $0x1c10] sm:$0xf]
    %v1836 = vld [vmem:[%s1 + $0x1c14] sm:$0xf]
    %v1837 = vld [vmem:[%s1 + $0x1c18] sm:$0xf]
    %v1838 = vld [vmem:[%s1 + $0x1c1c] sm:$0xf]
    %v1839 = vld [vmem:[%s1 + $0x1c20] sm:$0xf]
    %v1840 = vld [vmem:[%s1 + $0x1c24] sm:$0xf]
    %v1841 = vld [vmem:[%s1 + $0x1c28] sm:$0xf]
    %v1842 = vld [vmem:[%s1 + $0x1c2c] sm:$0xf]
    %v1843 = vld [vmem:[%s1 + $0x1c30] sm:$0xf]
    %v1844 = vld [vmem:[%s1 + $0x1c34] sm:$0xf]
    %v1845 = vld [vmem:[%s1 + $0x1c38] sm:$0xf]
    %v1846 = vld [vmem:[%s1 + $0x1c3c] sm:$0xf]
    %v1847 = vld [vmem:[%s1 + $0x1c40] sm:$0xf]
    %v1848 = vld [vmem:[%s1 + $0x1c44] sm:$0xf]
    %v1849 = vld [vmem:[%s1 + $0x1c48] sm:$0xf]
    %v1850 = vld [vmem:[%s1 + $0x1c4c] sm:$0xf]
    %v1851 = vld [vmem:[%s1 + $0x1c50] sm:$0xf]
    %v1852 = vld [vmem:[%s1 + $0x1c54] sm:$0xf]
    %v1853 = vld [vmem:[%s1 + $0x1c58] sm:$0xf]
    %v1854 = vld [vmem:[%s1 + $0x1c5c] sm:$0xf]
    %v1855 = vld [vmem:[%s1 + $0x1c60] sm:$0xf]
    %v1856 = vld [vmem:[%s1 + $0x1c64] sm:$0xf]
    %v1857 = vld [vmem:[%s1 + $0x1c68] sm:$0xf]
    %v1858 = vld [vmem:[%s1 + $0x1c6c] sm:$0xf]
    %v1859 = vld [vmem:[%s1 + $0x1c70] sm:$0xf]
    %v1860 = vld [vmem:[%s1 + $0x1c74] sm:$0xf]
    %v1861 = vld [vmem:[%s1 + $0x1c78] sm:$0xf]
    %v1862 = vld [vmem:[%s1 + $0x1c7c] sm:$0xf]
    %v1863 = vld [vmem:[%s1 + $0x1c80] sm:$0xf]
    %v1864 = vld [vmem:[%s1 + $0x1c84] sm:$0xf]
    %v1865 = vld [vmem:[%s1 + $0x1c88] sm:$0xf]
    %v1866 = vld [vmem:[%s1 + $0x1c8c] sm:$0xf]
    %v1867 = vld [vmem:[%s1 + $0x1c90] sm:$0xf]
    %v1868 = vld [vmem:[%s1 + $0x1c94] sm:$0xf]
    %v1869 = vld [vmem:[%s1 + $0x1c98] sm:$0xf]
    %v1870 = vld [vmem:[%s1 + $0x1c9c] sm:$0xf]
    %v1871 = vld [vmem:[%s1 + $0x1ca0] sm:$0xf]
    %v1872 = vld [vmem:[%s1 + $0x1ca4] sm:$0xf]
    %v1873 = vld [vmem:[%s1 + $0x1ca8] sm:$0xf]
    %v1874 = vld [vmem:[%s1 + $0x1cac] sm:$0xf]
    %v1875 = vld [vmem:[%s1 + $0x1cb0] sm:$0xf]
    %v1876 = vld [vmem:[%s1 + $0x1cb4] sm:$0xf]
    %v1877 = vld [vmem:[%s1 + $0x1cb8] sm:$0xf]
    %v1878 = vld [vmem:[%s1 + $0x1cbc] sm:$0xf]
    %v1879 = vld [vmem:[%s1 + $0x1cc0] sm:$0xf]
    %v1880 = vld [vmem:[%s1 + $0x1cc4] sm:$0xf]
    %v1881 = vld [vmem:[%s1 + $0x1cc8] sm:$0xf]
    %v1882 = vld [vmem:[%s1 + $0x1ccc] sm:$0xf]
    %v1883 = vld [vmem:[%s1 + $0x1cd0] sm:$0xf]
    %v1884 = vld [vmem:[%s1 + $0x1cd4] sm:$0xf]
    %v1885 = vld [vmem:[%s1 + $0x1cd8] sm:$0xf]
    %v1886 = vld [vmem:[%s1 + $0x1cdc] sm:$0xf]
    %v1887 = vld [vmem:[%s1 + $0x1ce0] sm:$0xf]
    %v1888 = vld [vmem:[%s1 + $0x1ce4] sm:$0xf]
    %v1889 = vld [vmem:[%s1 + $0x1ce8] sm:$0xf]
    %v1890 = vld [vmem:[%s1 + $0x1cec] sm:$0xf]
    %v1891 = vld [vmem:[%s1 + $0x1cf0] sm:$0xf]
    %v1892 = vld [vmem:[%s1 + $0x1cf4] sm:$0xf]
    %v1893 = vld [vmem:[%s1 + $0x1cf8] sm:$0xf]
    %v1894 = vld [vmem:[%s1 + $0x1cfc] sm:$0xf]
    %v1895 = vld [vmem:[%s1 + $0x1d00] sm:$0xf]
    %v1896 = vld [vmem:[%s1 + $0x1d04] sm:$0xf]
    %v1897 = vld [vmem:[%s1 + $0x1d08] sm:$0xf]
    %v1898 = vld [vmem:[%s1 + $0x1d0c] sm:$0xf]
    %v1899 = vld [vmem:[%s1 + $0x1d10] sm:$0xf]
    %v1900 = vld [vmem:[%s1 + $0x1d14] sm:$0xf]
    %v1901 = vld [vmem:[%s1 + $0x1d18] sm:$0xf]
    %v1902 = vld [vmem:[%s1 + $0x1d1c] sm:$0xf]
    %v1903 = vld [vmem:[%s1 + $0x1d20] sm:$0xf]
    %v1904 = vld [vmem:[%s1 + $0x1d24] sm:$0xf]
    %v1905 = vld [vmem:[%s1 + $0x1d28] sm:$0xf]
    %v1906 = vld [vmem:[%s1 + $0x1d2c] sm:$0xf]
    %v1907 = vld [vmem:[%s1 + $0x1d30] sm:$0xf]
    %v1908 = vld [vmem:[%s1 + $0x1d34] sm:$0xf]
    %v1909 = vld [vmem:[%s1 + $0x1d38] sm:$0xf]
    %v1910 = vld [vmem:[%s1 + $0x1d3c] sm:$0xf]
    %v1911 = vld [vmem:[%s1 + $0x1d40] sm:$0xf]
    %v1912 = vld [vmem:[%s1 + $0x1d44] sm:$0xf]
    %v1913 = vld [vmem:[%s1 + $0x1d48] sm:$0xf]
    %v1914 = vld [vmem:[%s1 + $0x1d4c] sm:$0xf]
    %v1915 = vld [vmem:[%s1 + $0x1d50] sm:$0xf]
    %v1916 = vld [vmem:[%s1 + $0x1d54] sm:$0xf]
    %v1917 = vld [vmem:[%s1 + $0x1d58] sm:$0xf]
    %v1918 = vld [vmem:[%s1 + $0x1d5c] sm:$0xf]
    %v1919 = vld [vmem:[%s1 + $0x1d60] sm:$0xf]
    %v1920 = vld [vmem:[%s1 + $0x1d64] sm:$0xf]
    %v1921 = vld [vmem:[%s1 + $0x1d68] sm:$0xf]
    %v1922 = vld [vmem:[%s1 + $0x1d6c] sm:$0xf]
    %v1923 = vld [vmem:[%s1 + $0x1d70] sm:$0xf]
    %v1924 = vld [vmem:[%s1 + $0x1d74] sm:$0xf]
    %v1925 = vld [vmem:[%s1 + $0x1d78] sm:$0xf]
    %v1926 = vld [vmem:[%s1 + $0x1d7c] sm:$0xf]
    %v1927 = vld [vmem:[%s1 + $0x1d80] sm:$0xf]
    %v1928 = vld [vmem:[%s1 + $0x1d84] sm:$0xf]
    %v1929 = vld [vmem:[%s1 + $0x1d88] sm:$0xf]
    %v1930 = vld [vmem:[%s1 + $0x1d8c] sm:$0xf]
    %v1931 = vld [vmem:[%s1 + $0x1d90] sm:$0xf]
    %v1932 = vld [vmem:[%s1 + $0x1d94] sm:$0xf]
    %v1933 = vld [vmem:[%s1 + $0x1d98] sm:$0xf]
    %v1934 = vld [vmem:[%s1 + $0x1d9c] sm:$0xf]
    %v1935 = vld [vmem:[%s1 + $0x1da0] sm:$0xf]
    %v1936 = vld [vmem:[%s1 + $0x1da4] sm:$0xf]
    %v1937 = vld [vmem:[%s1 + $0x1da8] sm:$0xf]
    %v1938 = vld [vmem:[%s1 + $0x1dac] sm:$0xf]
    %v1939 = vld [vmem:[%s1 + $0x1db0] sm:$0xf]
    %v1940 = vld [vmem:[%s1 + $0x1db4] sm:$0xf]
    %v1941 = vld [vmem:[%s1 + $0x1db8] sm:$0xf]
    %v1942 = vld [vmem:[%s1 + $0x1dbc] sm:$0xf]
    %v1943 = vld [vmem:[%s1 + $0x1dc0] sm:$0xf]
    %v1944 = vld [vmem:[%s1 + $0x1dc4] sm:$0xf]
    %v1945 = vld [vmem:[%s1 + $0x1dc8] sm:$0xf]
    %v1946 = vld [vmem:[%s1 + $0x1dcc] sm:$0xf]
    %v1947 = vld [vmem:[%s1 + $0x1dd0] sm:$0xf]
    %v1948 = vld [vmem:[%s1 + $0x1dd4] sm:$0xf]
    %v1949 = vld [vmem:[%s1 + $0x1dd8] sm:$0xf]
    %v1950 = vld [vmem:[%s1 + $0x1ddc] sm:$0xf]
    %v1951 = vld [vmem:[%s1 + $0x1de0] sm:$0xf]
    %v1952 = vld [vmem:[%s1 + $0x1de4] sm:$0xf]
    %v1953 = vld [vmem:[%s1 + $0x1de8] sm:$0xf]
    %v1954 = vld [vmem:[%s1 + $0x1dec] sm:$0xf]
    %v1955 = vld [vmem:[%s1 + $0x1df0] sm:$0xf]
    %v1956 = vld [vmem:[%s1 + $0x1df4] sm:$0xf]
    %v1957 = vld [vmem:[%s1 + $0x1df8] sm:$0xf]
    %v1958 = vld [vmem:[%s1 + $0x1dfc] sm:$0xf]
    %v1959 = vld [vmem:[%s1 + $0x1e00] sm:$0xf]
    %v1960 = vld [vmem:[%s1 + $0x1e04] sm:$0xf]
    %v1961 = vld [vmem:[%s1 + $0x1e08] sm:$0xf]
    %v1962 = vld [vmem:[%s1 + $0x1e0c] sm:$0xf]
    %v1963 = vld [vmem:[%s1 + $0x1e10] sm:$0xf]
    %v1964 = vld [vmem:[%s1 + $0x1e14] sm:$0xf]
    %v1965 = vld [vmem:[%s1 + $0x1e18] sm:$0xf]
    %v1966 = vld [vmem:[%s1 + $0x1e1c] sm:$0xf]
    %v1967 = vld [vmem:[%s1 + $0x1e20] sm:$0xf]
    %v1968 = vld [vmem:[%s1 + $0x1e24] sm:$0xf]
    %v1969 = vld [vmem:[%s1 + $0x1e28] sm:$0xf]
    %v1970 = vld [vmem:[%s1 + $0x1e2c] sm:$0xf]
    %v1971 = vld [vmem:[%s1 + $0x1e30] sm:$0xf]
    %v1972 = vld [vmem:[%s1 + $0x1e34] sm:$0xf]
    %v1973 = vld [vmem:[%s1 + $0x1e38] sm:$0xf]
    %v1974 = vld [vmem:[%s1 + $0x1e3c] sm:$0xf]
    %v1975 = vld [vmem:[%s1 + $0x1e40] sm:$0xf]
    %v1976 = vld [vmem:[%s1 + $0x1e44] sm:$0xf]
    %v1977 = vld [vmem:[%s1 + $0x1e48] sm:$0xf]
    %v1978 = vld [vmem:[%s1 + $0x1e4c] sm:$0xf]
    %v1979 = vld [vmem:[%s1 + $0x1e50] sm:$0xf]
    %v1980 = vld [vmem:[%s1 + $0x1e54] sm:$0xf]
    %v1981 = vld [vmem:[%s1 + $0x1e58] sm:$0xf]
    %v1982 = vld [vmem:[%s1 + $0x1e5c] sm:$0xf]
    %v1983 = vld [vmem:[%s1 + $0x1e60] sm:$0xf]
    %v1984 = vld [vmem:[%s1 + $0x1e64] sm:$0xf]
    %v1985 = vld [vmem:[%s1 + $0x1e68] sm:$0xf]
    %v1986 = vld [vmem:[%s1 + $0x1e6c] sm:$0xf]
    %v1987 = vld [vmem:[%s1 + $0x1e70] sm:$0xf]
    %v1988 = vld [vmem:[%s1 + $0x1e74] sm:$0xf]
    %v1989 = vld [vmem:[%s1 + $0x1e78] sm:$0xf]
    %v1990 = vld [vmem:[%s1 + $0x1e7c] sm:$0xf]
    %v1991 = vld [vmem:[%s1 + $0x1e80] sm:$0xf]
    %v1992 = vld [vmem:[%s1 + $0x1e84] sm:$0xf]
    %v1993 = vld [vmem:[%s1 + $0x1e88] sm:$0xf]
    %v1994 = vld [vmem:[%s1 + $0x1e8c] sm:$0xf]
    %v1995 = vld [vmem:[%s1 + $0x1e90] sm:$0xf]
    %v1996 = vld [vmem:[%s1 + $0x1e94] sm:$0xf]
    %v1997 = vld [vmem:[%s1 + $0x1e98] sm:$0xf]
    %v1998 = vld [vmem:[%s1 + $0x1e9c] sm:$0xf]
    %v1999 = vld [vmem:[%s1 + $0x1ea0] sm:$0xf]
    %v2000 = vld [vmem:[%s1 + $0x1ea4] sm:$0xf]
    %v2001 = vld [vmem:[%s1 + $0x1ea8] sm:$0xf]
    %v2002 = vld [vmem:[%s1 + $0x1eac] sm:$0xf]
    %v2003 = vld [vmem:[%s1 + $0x1eb0] sm:$0xf]
    %v2004 = vld [vmem:[%s1 + $0x1eb4] sm:$0xf]
    %v2005 = vld [vmem:[%s1 + $0x1eb8] sm:$0xf]
    %v2006 = vld [vmem:[%s1 + $0x1ebc] sm:$0xf]
    %v2007 = vld [vmem:[%s1 + $0x1ec0] sm:$0xf]
    %v2008 = vld [vmem:[%s1 + $0x1ec4] sm:$0xf]
    %v2009 = vld [vmem:[%s1 + $0x1ec8] sm:$0xf]
    %v2010 = vld [vmem:[%s1 + $0x1ecc] sm:$0xf]
    %v2011 = vld [vmem:[%s1 + $0x1ed0] sm:$0xf]
    %v2012 = vld [vmem:[%s1 + $0x1ed4] sm:$0xf]
    %v2013 = vld [vmem:[%s1 + $0x1ed8] sm:$0xf]
    %v2014 = vld [vmem:[%s1 + $0x1edc] sm:$0xf]
    %v2015 = vld [vmem:[%s1 + $0x1ee0] sm:$0xf]
    %v2016 = vld [vmem:[%s1 + $0x1ee4] sm:$0xf]
    %v2017 = vld [vmem:[%s1 + $0x1ee8] sm:$0xf]
    %v2018 = vld [vmem:[%s1 + $0x1eec] sm:$0xf]
    %v2019 = vld [vmem:[%s1 + $0x1ef0] sm:$0xf]
    %v2020 = vld [vmem:[%s1 + $0x1ef4] sm:$0xf]
    %v2021 = vld [vmem:[%s1 + $0x1ef8] sm:$0xf]
    %v2022 = vld [vmem:[%s1 + $0x1efc] sm:$0xf]
    %v2023 = vld [vmem:[%s1 + $0x1f00] sm:$0xf]
    %v2024 = vld [vmem:[%s1 + $0x1f04] sm:$0xf]
    %v2025 = vld [vmem:[%s1 + $0x1f08] sm:$0xf]
    %v2026 = vld [vmem:[%s1 + $0x1f0c] sm:$0xf]
    %v2027 = vld [vmem:[%s1 + $0x1f10] sm:$0xf]
    %v2028 = vld [vmem:[%s1 + $0x1f14] sm:$0xf]
    %v2029 = vld [vmem:[%s1 + $0x1f18] sm:$0xf]
    %v2030 = vld [vmem:[%s1 + $0x1f1c] sm:$0xf]
    %v2031 = vld [vmem:[%s1 + $0x1f20] sm:$0xf]
    %v2032 = vld [vmem:[%s1 + $0x1f24] sm:$0xf]
    %v2033 = vld [vmem:[%s1 + $0x1f28] sm:$0xf]
    %v2034 = vld [vmem:[%s1 + $0x1f2c] sm:$0xf]
    %v2035 = vld [vmem:[%s1 + $0x1f30] sm:$0xf]
    %v2036 = vld [vmem:[%s1 + $0x1f34] sm:$0xf]
    %v2037 = vld [vmem:[%s1 + $0x1f38] sm:$0xf]
    %v2038 = vld [vmem:[%s1 + $0x1f3c] sm:$0xf]
    %v2039 = vld [vmem:[%s1 + $0x1f40] sm:$0xf]
    %v2040 = vld [vmem:[%s1 + $0x1f44] sm:$0xf]
    %v2041 = vld [vmem:[%s1 + $0x1f48] sm:$0xf]
    %v2042 = vld [vmem:[%s1 + $0x1f4c] sm:$0xf]
    %v2043 = vld [vmem:[%s1 + $0x1f50] sm:$0xf]
    %v2044 = vld [vmem:[%s1 + $0x1f54] sm:$0xf]
    %v2045 = vld [vmem:[%s1 + $0x1f58] sm:$0xf]
    %v2046 = vld [vmem:[%s1 + $0x1f5c] sm:$0xf]
    %v2047 = vld [vmem:[%s1 + $0x1f60] sm:$0xf]
    %v2048 = vld [vmem:[%s1 + $0x1f64] sm:$0xf]
    %v2049 = vld [vmem:[%s1 + $0x1f68] sm:$0xf]
    %v2050 = vld [vmem:[%s1 + $0x1f6c] sm:$0xf]
    %v2051 = vld [vmem:[%s1 + $0x1f70] sm:$0xf]
    %v2052 = vld [vmem:[%s1 + $0x1f74] sm:$0xf]
    %v2053 = vld [vmem:[%s1 + $0x1f78] sm:$0xf]
    %v2054 = vld [vmem:[%s1 + $0x1f7c] sm:$0xf]
    %v2055 = vld [vmem:[%s1 + $0x1f80] sm:$0xf]
    %v2056 = vld [vmem:[%s1 + $0x1f84] sm:$0xf]
    %v2057 = vld [vmem:[%s1 + $0x1f88] sm:$0xf]
    %v2058 = vld [vmem:[%s1 + $0x1f8c] sm:$0xf]
    %v2059 = vld [vmem:[%s1 + $0x1f90] sm:$0xf]
    %v2060 = vld [vmem:[%s1 + $0x1f94] sm:$0xf]
    %v2061 = vld [vmem:[%s1 + $0x1f98] sm:$0xf]
    %v2062 = vld [vmem:[%s1 + $0x1f9c] sm:$0xf]
    %v2063 = vld [vmem:[%s1 + $0x1fa0] sm:$0xf]
    %v2064 = vld [vmem:[%s1 + $0x1fa4] sm:$0xf]
    %v2065 = vld [vmem:[%s1 + $0x1fa8] sm:$0xf]
    %v2066 = vld [vmem:[%s1 + $0x1fac] sm:$0xf]
    %v2067 = vld [vmem:[%s1 + $0x1fb0] sm:$0xf]
    %v2068 = vld [vmem:[%s1 + $0x1fb4] sm:$0xf]
    %v2069 = vld [vmem:[%s1 + $0x1fb8] sm:$0xf]
    %v2070 = vld [vmem:[%s1 + $0x1fbc] sm:$0xf]
    %v2071 = vld [vmem:[%s1 + $0x1fc0] sm:$0xf]
    %v2072 = vld [vmem:[%s1 + $0x1fc4] sm:$0xf]
    %v2073 = vld [vmem:[%s1 + $0x1fc8] sm:$0xf]
    %v2074 = vld [vmem:[%s1 + $0x1fcc] sm:$0xf]
    %v2075 = vld [vmem:[%s1 + $0x1fd0] sm:$0xf]
    %v2076 = vld [vmem:[%s1 + $0x1fd4] sm:$0xf]
    %v2077 = vld [vmem:[%s1 + $0x1fd8] sm:$0xf]
    %v2078 = vld [vmem:[%s1 + $0x1fdc] sm:$0xf]
    %v2079 = vld [vmem:[%s1 + $0x1fe0] sm:$0xf]
    %v2080 = vld [vmem:[%s1 + $0x1fe4] sm:$0xf]
    %v2081 = vld [vmem:[%s1 + $0x1fe8] sm:$0xf]
    %v2082 = vld [vmem:[%s1 + $0x1fec] sm:$0xf]
    %v2083 = vld [vmem:[%s1 + $0x1ff0] sm:$0xf]
    %v2084 = vld [vmem:[%s1 + $0x1ff4] sm:$0xf]
    %v2085 = vld [vmem:[%s1 + $0x1ff8] sm:$0xf]
    %v2086 = vld [vmem:[%s1 + $0x1ffc] sm:$0xf]
    %v2087 = vld [vmem:[%s1 + $0x2000] sm:$0xf]
    %v2088 = vld [vmem:[%s1 + $0x2004] sm:$0xf]
    %v2089 = vld [vmem:[%s2] sm:$0x1]
    %v2091 = vlaneseq
    %v2092 = vshrl.u32 %v2091, 7
    %v2093 = vsub.s32 0, %v2092
    %v2094 = vrot.slane %v2089, %v2093
    %v2113 = vcombine.high %v22, %v22
    %v2115 = vunpack.c.l.s4 1966171168
    %v2116 = vunpack.c.0.s8 %v2115
    %v2117 = vlaneseq
    %v2118 = vshrl.u32 %v2117, 7
    %v2119 = vsub.s32 %v2116, %v2118
    %v2120 = vrot.slane %v22, %v2119
    %v2122 = vunpack.c.l.s4 1966171168
    %v2123 = vunpack.c.0.s8 %v2122
    %v2124 = vlaneseq
    %v2125 = vshrl.u32 %v2124, 7
    %v2126 = vsub.s32 %v2123, %v2125
    %v2127 = vrot.slane %v2113, %v2126
    %v2128 = vcombine.high %v2120, %v2120
    %v2129 = vcombine.high %v2127, %v2127
    %v2131 = vunpack.c.l.s4 1966171168
    %v2132 = vunpack.c.0.s8 %v2131
    %v2133 = vlaneseq
    %v2134 = vshrl.u32 %v2133, 7
    %v2135 = vsub.s32 %v2132, %v2134
    %v2136 = vrot.slane %v2120, %v2135
    %v2138 = vunpack.c.l.s4 1966171168
    %v2139 = vunpack.c.0.s8 %v2138
    %v2140 = vlaneseq
    %v2141 = vshrl.u32 %v2140, 7
    %v2142 = vsub.s32 %v2139, %v2141
    %v2143 = vrot.slane %v2127, %v2142
    %v2145 = vunpack.c.l.s4 1966171168
    %v2146 = vunpack.c.0.s8 %v2145
    %v2147 = vlaneseq
    %v2148 = vshrl.u32 %v2147, 7
    %v2149 = vsub.s32 %v2146, %v2148
    %v2150 = vrot.slane %v2128, %v2149
    %v2152 = vunpack.c.l.s4 1966171168
    %v2153 = vunpack.c.0.s8 %v2152
    %v2154 = vlaneseq
    %v2155 = vshrl.u32 %v2154, 7
    %v2156 = vsub.s32 %v2153, %v2155
    %v2157 = vrot.slane %v2129, %v2156
    %v2158 = vcombine.high %v2136, %v2136
    %v2159 = vcombine.high %v2143, %v2143
    %v2160 = vcombine.high %v2150, %v2150
    %v2161 = vcombine.high %v2157, %v2157
    %v2162 = vcombine.high %v23, %v23
    %v2164 = vunpack.c.l.s4 1966171168
    %v2165 = vunpack.c.0.s8 %v2164
    %v2166 = vlaneseq
    %v2167 = vshrl.u32 %v2166, 7
    %v2168 = vsub.s32 %v2165, %v2167
    %v2169 = vrot.slane %v23, %v2168
    %v2171 = vunpack.c.l.s4 1966171168
    %v2172 = vunpack.c.0.s8 %v2171
    %v2173 = vlaneseq
    %v2174 = vshrl.u32 %v2173, 7
    %v2175 = vsub.s32 %v2172, %v2174
    %v2176 = vrot.slane %v2162, %v2175
    %v2177 = vcombine.high %v2169, %v2169
    %v2178 = vcombine.high %v2176, %v2176
    %v2180 = vunpack.c.l.s4 1966171168
    %v2181 = vunpack.c.0.s8 %v2180
    %v2182 = vlaneseq
    %v2183 = vshrl.u32 %v2182, 7
    %v2184 = vsub.s32 %v2181, %v2183
    %v2185 = vrot.slane %v2169, %v2184
    %v2187 = vunpack.c.l.s4 1966171168
    %v2188 = vunpack.c.0.s8 %v2187
    %v2189 = vlaneseq
    %v2190 = vshrl.u32 %v2189, 7
    %v2191 = vsub.s32 %v2188, %v2190
    %v2192 = vrot.slane %v2176, %v2191
    %v2194 = vunpack.c.l.s4 1966171168
    %v2195 = vunpack.c.0.s8 %v2194
    %v2196 = vlaneseq
    %v2197 = vshrl.u32 %v2196, 7
    %v2198 = vsub.s32 %v2195, %v2197
    %v2199 = vrot.slane %v2177, %v2198
    %v2201 = vunpack.c.l.s4 1966171168
    %v2202 = vunpack.c.0.s8 %v2201
    %v2203 = vlaneseq
    %v2204 = vshrl.u32 %v2203, 7
    %v2205 = vsub.s32 %v2202, %v2204
    %v2206 = vrot.slane %v2178, %v2205
    %v2207 = vcombine.high %v2185, %v2185
    %v2208 = vcombine.high %v2192, %v2192
    %v2209 = vcombine.high %v2199, %v2199
    %v2210 = vcombine.high %v2206, %v2206
    %v2211 = vcombine.high %v24, %v24
    %v2213 = vunpack.c.l.s4 1966171168
    %v2214 = vunpack.c.0.s8 %v2213
    %v2215 = vlaneseq
    %v2216 = vshrl.u32 %v2215, 7
    %v2217 = vsub.s32 %v2214, %v2216
    %v2218 = vrot.slane %v24, %v2217
    %v2220 = vunpack.c.l.s4 1966171168
    %v2221 = vunpack.c.0.s8 %v2220
    %v2222 = vlaneseq
    %v2223 = vshrl.u32 %v2222, 7
    %v2224 = vsub.s32 %v2221, %v2223
    %v2225 = vrot.slane %v2211, %v2224
    %v2226 = vcombine.high %v2218, %v2218
    %v2227 = vcombine.high %v2225, %v2225
    %v2229 = vunpack.c.l.s4 1966171168
    %v2230 = vunpack.c.0.s8 %v2229
    %v2231 = vlaneseq
    %v2232 = vshrl.u32 %v2231, 7
    %v2233 = vsub.s32 %v2230, %v2232
    %v2234 = vrot.slane %v2218, %v2233
    %v2236 = vunpack.c.l.s4 1966171168
    %v2237 = vunpack.c.0.s8 %v2236
    %v2238 = vlaneseq
    %v2239 = vshrl.u32 %v2238, 7
    %v2240 = vsub.s32 %v2237, %v2239
    %v2241 = vrot.slane %v2225, %v2240
    %v2243 = vunpack.c.l.s4 1966171168
    %v2244 = vunpack.c.0.s8 %v2243
    %v2245 = vlaneseq
    %v2246 = vshrl.u32 %v2245, 7
    %v2247 = vsub.s32 %v2244, %v2246
    %v2248 = vrot.slane %v2226, %v2247
    %v2250 = vunpack.c.l.s4 1966171168
    %v2251 = vunpack.c.0.s8 %v2250
    %v2252 = vlaneseq
    %v2253 = vshrl.u32 %v2252, 7
    %v2254 = vsub.s32 %v2251, %v2253
    %v2255 = vrot.slane %v2227, %v2254
    %v2256 = vcombine.high %v2234, %v2234
    %v2257 = vcombine.high %v2241, %v2241
    %v2258 = vcombine.high %v2248, %v2248
    %v2259 = vcombine.high %v2255, %v2255
    %v2260 = vcombine.high %v25, %v25
    %v2262 = vunpack.c.l.s4 1966171168
    %v2263 = vunpack.c.0.s8 %v2262
    %v2264 = vlaneseq
    %v2265 = vshrl.u32 %v2264, 7
    %v2266 = vsub.s32 %v2263, %v2265
    %v2267 = vrot.slane %v25, %v2266
    %v2269 = vunpack.c.l.s4 1966171168
    %v2270 = vunpack.c.0.s8 %v2269
    %v2271 = vlaneseq
    %v2272 = vshrl.u32 %v2271, 7
    %v2273 = vsub.s32 %v2270, %v2272
    %v2274 = vrot.slane %v2260, %v2273
    %v2275 = vcombine.high %v2267, %v2267
    %v2276 = vcombine.high %v2274, %v2274
    %v2278 = vunpack.c.l.s4 1966171168
    %v2279 = vunpack.c.0.s8 %v2278
    %v2280 = vlaneseq
    %v2281 = vshrl.u32 %v2280, 7
    %v2282 = vsub.s32 %v2279, %v2281
    %v2283 = vrot.slane %v2267, %v2282
    %v2285 = vunpack.c.l.s4 1966171168
    %v2286 = vunpack.c.0.s8 %v2285
    %v2287 = vlaneseq
    %v2288 = vshrl.u32 %v2287, 7
    %v2289 = vsub.s32 %v2286, %v2288
    %v2290 = vrot.slane %v2274, %v2289
    %v2292 = vunpack.c.l.s4 1966171168
    %v2293 = vunpack.c.0.s8 %v2292
    %v2294 = vlaneseq
    %v2295 = vshrl.u32 %v2294, 7
    %v2296 = vsub.s32 %v2293, %v2295
    %v2297 = vrot.slane %v2275, %v2296
    %v2299 = vunpack.c.l.s4 1966171168
    %v2300 = vunpack.c.0.s8 %v2299
    %v2301 = vlaneseq
    %v2302 = vshrl.u32 %v2301, 7
    %v2303 = vsub.s32 %v2300, %v2302
    %v2304 = vrot.slane %v2276, %v2303
    %v2305 = vcombine.high %v2283, %v2283
    %v2306 = vcombine.high %v2290, %v2290
    %v2307 = vcombine.high %v2297, %v2297
    %v2308 = vcombine.high %v2304, %v2304
    %v2309 = vcombine.high %v26, %v26
    %v2311 = vunpack.c.l.s4 1966171168
    %v2312 = vunpack.c.0.s8 %v2311
    %v2313 = vlaneseq
    %v2314 = vshrl.u32 %v2313, 7
    %v2315 = vsub.s32 %v2312, %v2314
    %v2316 = vrot.slane %v26, %v2315
    %v2318 = vunpack.c.l.s4 1966171168
    %v2319 = vunpack.c.0.s8 %v2318
    %v2320 = vlaneseq
    %v2321 = vshrl.u32 %v2320, 7
    %v2322 = vsub.s32 %v2319, %v2321
    %v2323 = vrot.slane %v2309, %v2322
    %v2324 = vcombine.high %v2316, %v2316
    %v2325 = vcombine.high %v2323, %v2323
    %v2327 = vunpack.c.l.s4 1966171168
    %v2328 = vunpack.c.0.s8 %v2327
    %v2329 = vlaneseq
    %v2330 = vshrl.u32 %v2329, 7
    %v2331 = vsub.s32 %v2328, %v2330
    %v2332 = vrot.slane %v2316, %v2331
    %v2334 = vunpack.c.l.s4 1966171168
    %v2335 = vunpack.c.0.s8 %v2334
    %v2336 = vlaneseq
    %v2337 = vshrl.u32 %v2336, 7
    %v2338 = vsub.s32 %v2335, %v2337
    %v2339 = vrot.slane %v2323, %v2338
    %v2341 = vunpack.c.l.s4 1966171168
    %v2342 = vunpack.c.0.s8 %v2341
    %v2343 = vlaneseq
    %v2344 = vshrl.u32 %v2343, 7
    %v2345 = vsub.s32 %v2342, %v2344
    %v2346 = vrot.slane %v2324, %v2345
    %v2348 = vunpack.c.l.s4 1966171168
    %v2349 = vunpack.c.0.s8 %v2348
    %v2350 = vlaneseq
    %v2351 = vshrl.u32 %v2350, 7
    %v2352 = vsub.s32 %v2349, %v2351
    %v2353 = vrot.slane %v2325, %v2352
    %v2354 = vcombine.high %v2332, %v2332
    %v2355 = vcombine.high %v2339, %v2339
    %v2356 = vcombine.high %v2346, %v2346
    %v2357 = vcombine.high %v2353, %v2353
    %v2358 = vcombine.high %v27, %v27
    %v2360 = vunpack.c.l.s4 1966171168
    %v2361 = vunpack.c.0.s8 %v2360
    %v2362 = vlaneseq
    %v2363 = vshrl.u32 %v2362, 7
    %v2364 = vsub.s32 %v2361, %v2363
    %v2365 = vrot.slane %v27, %v2364
    %v2367 = vunpack.c.l.s4 1966171168
    %v2368 = vunpack.c.0.s8 %v2367
    %v2369 = vlaneseq
    %v2370 = vshrl.u32 %v2369, 7
    %v2371 = vsub.s32 %v2368, %v2370
    %v2372 = vrot.slane %v2358, %v2371
    %v2373 = vcombine.high %v2365, %v2365
    %v2374 = vcombine.high %v2372, %v2372
    %v2376 = vunpack.c.l.s4 1966171168
    %v2377 = vunpack.c.0.s8 %v2376
    %v2378 = vlaneseq
    %v2379 = vshrl.u32 %v2378, 7
    %v2380 = vsub.s32 %v2377, %v2379
    %v2381 = vrot.slane %v2365, %v2380
    %v2383 = vunpack.c.l.s4 1966171168
    %v2384 = vunpack.c.0.s8 %v2383
    %v2385 = vlaneseq
    %v2386 = vshrl.u32 %v2385, 7
    %v2387 = vsub.s32 %v2384, %v2386
    %v2388 = vrot.slane %v2372, %v2387
    %v2390 = vunpack.c.l.s4 1966171168
    %v2391 = vunpack.c.0.s8 %v2390
    %v2392 = vlaneseq
    %v2393 = vshrl.u32 %v2392, 7
    %v2394 = vsub.s32 %v2391, %v2393
    %v2395 = vrot.slane %v2373, %v2394
    %v2397 = vunpack.c.l.s4 1966171168
    %v2398 = vunpack.c.0.s8 %v2397
    %v2399 = vlaneseq
    %v2400 = vshrl.u32 %v2399, 7
    %v2401 = vsub.s32 %v2398, %v2400
    %v2402 = vrot.slane %v2374, %v2401
    %v2403 = vcombine.high %v2381, %v2381
    %v2404 = vcombine.high %v2388, %v2388
    %v2405 = vcombine.high %v2395, %v2395
    %v2406 = vcombine.high %v2402, %v2402
    %v2407 = vcombine.high %v28, %v28
    %v2409 = vunpack.c.l.s4 1966171168
    %v2410 = vunpack.c.0.s8 %v2409
    %v2411 = vlaneseq
    %v2412 = vshrl.u32 %v2411, 7
    %v2413 = vsub.s32 %v2410, %v2412
    %v2414 = vrot.slane %v28, %v2413
    %v2416 = vunpack.c.l.s4 1966171168
    %v2417 = vunpack.c.0.s8 %v2416
    %v2418 = vlaneseq
    %v2419 = vshrl.u32 %v2418, 7
    %v2420 = vsub.s32 %v2417, %v2419
    %v2421 = vrot.slane %v2407, %v2420
    %v2422 = vcombine.high %v2414, %v2414
    %v2423 = vcombine.high %v2421, %v2421
    %v2425 = vunpack.c.l.s4 1966171168
    %v2426 = vunpack.c.0.s8 %v2425
    %v2427 = vlaneseq
    %v2428 = vshrl.u32 %v2427, 7
    %v2429 = vsub.s32 %v2426, %v2428
    %v2430 = vrot.slane %v2414, %v2429
    %v2432 = vunpack.c.l.s4 1966171168
    %v2433 = vunpack.c.0.s8 %v2432
    %v2434 = vlaneseq
    %v2435 = vshrl.u32 %v2434, 7
    %v2436 = vsub.s32 %v2433, %v2435
    %v2437 = vrot.slane %v2421, %v2436
    %v2439 = vunpack.c.l.s4 1966171168
    %v2440 = vunpack.c.0.s8 %v2439
    %v2441 = vlaneseq
    %v2442 = vshrl.u32 %v2441, 7
    %v2443 = vsub.s32 %v2440, %v2442
    %v2444 = vrot.slane %v2422, %v2443
    %v2446 = vunpack.c.l.s4 1966171168
    %v2447 = vunpack.c.0.s8 %v2446
    %v2448 = vlaneseq
    %v2449 = vshrl.u32 %v2448, 7
    %v2450 = vsub.s32 %v2447, %v2449
    %v2451 = vrot.slane %v2423, %v2450
    %v2452 = vcombine.high %v2430, %v2430
    %v2453 = vcombine.high %v2437, %v2437
    %v2454 = vcombine.high %v2444, %v2444
    %v2455 = vcombine.high %v2451, %v2451
    %v2456 = vcombine.high %v29, %v29
    %v2458 = vunpack.c.l.s4 1966171168
    %v2459 = vunpack.c.0.s8 %v2458
    %v2460 = vlaneseq
    %v2461 = vshrl.u32 %v2460, 7
    %v2462 = vsub.s32 %v2459, %v2461
    %v2463 = vrot.slane %v29, %v2462
    %v2465 = vunpack.c.l.s4 1966171168
    %v2466 = vunpack.c.0.s8 %v2465
    %v2467 = vlaneseq
    %v2468 = vshrl.u32 %v2467, 7
    %v2469 = vsub.s32 %v2466, %v2468
    %v2470 = vrot.slane %v2456, %v2469
    %v2471 = vcombine.high %v2463, %v2463
    %v2472 = vcombine.high %v2470, %v2470
    %v2474 = vunpack.c.l.s4 1966171168
    %v2475 = vunpack.c.0.s8 %v2474
    %v2476 = vlaneseq
    %v2477 = vshrl.u32 %v2476, 7
    %v2478 = vsub.s32 %v2475, %v2477
    %v2479 = vrot.slane %v2463, %v2478
    %v2481 = vunpack.c.l.s4 1966171168
    %v2482 = vunpack.c.0.s8 %v2481
    %v2483 = vlaneseq
    %v2484 = vshrl.u32 %v2483, 7
    %v2485 = vsub.s32 %v2482, %v2484
    %v2486 = vrot.slane %v2470, %v2485
    %v2488 = vunpack.c.l.s4 1966171168
    %v2489 = vunpack.c.0.s8 %v2488
    %v2490 = vlaneseq
    %v2491 = vshrl.u32 %v2490, 7
    %v2492 = vsub.s32 %v2489, %v2491
    %v2493 = vrot.slane %v2471, %v2492
    %v2495 = vunpack.c.l.s4 1966171168
    %v2496 = vunpack.c.0.s8 %v2495
    %v2497 = vlaneseq
    %v2498 = vshrl.u32 %v2497, 7
    %v2499 = vsub.s32 %v2496, %v2498
    %v2500 = vrot.slane %v2472, %v2499
    %v2501 = vcombine.high %v2479, %v2479
    %v2502 = vcombine.high %v2486, %v2486
    %v2503 = vcombine.high %v2493, %v2493
    %v2504 = vcombine.high %v2500, %v2500
    %v2505 = vcombine.high %v30, %v30
    %v2507 = vunpack.c.l.s4 1966171168
    %v2508 = vunpack.c.0.s8 %v2507
    %v2509 = vlaneseq
    %v2510 = vshrl.u32 %v2509, 7
    %v2511 = vsub.s32 %v2508, %v2510
    %v2512 = vrot.slane %v30, %v2511
    %v2514 = vunpack.c.l.s4 1966171168
    %v2515 = vunpack.c.0.s8 %v2514
    %v2516 = vlaneseq
    %v2517 = vshrl.u32 %v2516, 7
    %v2518 = vsub.s32 %v2515, %v2517
    %v2519 = vrot.slane %v2505, %v2518
    %v2520 = vcombine.high %v2512, %v2512
    %v2521 = vcombine.high %v2519, %v2519
    %v2523 = vunpack.c.l.s4 1966171168
    %v2524 = vunpack.c.0.s8 %v2523
    %v2525 = vlaneseq
    %v2526 = vshrl.u32 %v2525, 7
    %v2527 = vsub.s32 %v2524, %v2526
    %v2528 = vrot.slane %v2512, %v2527
    %v2530 = vunpack.c.l.s4 1966171168
    %v2531 = vunpack.c.0.s8 %v2530
    %v2532 = vlaneseq
    %v2533 = vshrl.u32 %v2532, 7
    %v2534 = vsub.s32 %v2531, %v2533
    %v2535 = vrot.slane %v2519, %v2534
    %v2537 = vunpack.c.l.s4 1966171168
    %v2538 = vunpack.c.0.s8 %v2537
    %v2539 = vlaneseq
    %v2540 = vshrl.u32 %v2539, 7
    %v2541 = vsub.s32 %v2538, %v2540
    %v2542 = vrot.slane %v2520, %v2541
    %v2544 = vunpack.c.l.s4 1966171168
    %v2545 = vunpack.c.0.s8 %v2544
    %v2546 = vlaneseq
    %v2547 = vshrl.u32 %v2546, 7
    %v2548 = vsub.s32 %v2545, %v2547
    %v2549 = vrot.slane %v2521, %v2548
    %v2550 = vcombine.high %v2528, %v2528
    %v2551 = vcombine.high %v2535, %v2535
    %v2552 = vcombine.high %v2542, %v2542
    %v2553 = vcombine.high %v2549, %v2549
    %v2554 = vcombine.high %v31, %v31
    %v2556 = vunpack.c.l.s4 1966171168
    %v2557 = vunpack.c.0.s8 %v2556
    %v2558 = vlaneseq
    %v2559 = vshrl.u32 %v2558, 7
    %v2560 = vsub.s32 %v2557, %v2559
    %v2561 = vrot.slane %v31, %v2560
    %v2563 = vunpack.c.l.s4 1966171168
    %v2564 = vunpack.c.0.s8 %v2563
    %v2565 = vlaneseq
    %v2566 = vshrl.u32 %v2565, 7
    %v2567 = vsub.s32 %v2564, %v2566
    %v2568 = vrot.slane %v2554, %v2567
    %v2569 = vcombine.high %v2561, %v2561
    %v2570 = vcombine.high %v2568, %v2568
    %v2572 = vunpack.c.l.s4 1966171168
    %v2573 = vunpack.c.0.s8 %v2572
    %v2574 = vlaneseq
    %v2575 = vshrl.u32 %v2574, 7
    %v2576 = vsub.s32 %v2573, %v2575
    %v2577 = vrot.slane %v2561, %v2576
    %v2579 = vunpack.c.l.s4 1966171168
    %v2580 = vunpack.c.0.s8 %v2579
    %v2581 = vlaneseq
    %v2582 = vshrl.u32 %v2581, 7
    %v2583 = vsub.s32 %v2580, %v2582
    %v2584 = vrot.slane %v2568, %v2583
    %v2586 = vunpack.c.l.s4 1966171168
    %v2587 = vunpack.c.0.s8 %v2586
    %v2588 = vlaneseq
    %v2589 = vshrl.u32 %v2588, 7
    %v2590 = vsub.s32 %v2587, %v2589
    %v2591 = vrot.slane %v2569, %v2590
    %v2593 = vunpack.c.l.s4 1966171168
    %v2594 = vunpack.c.0.s8 %v2593
    %v2595 = vlaneseq
    %v2596 = vshrl.u32 %v2595, 7
    %v2597 = vsub.s32 %v2594, %v2596
    %v2598 = vrot.slane %v2570, %v2597
    %v2599 = vcombine.high %v2577, %v2577
    %v2600 = vcombine.high %v2584, %v2584
    %v2601 = vcombine.high %v2591, %v2591
    %v2602 = vcombine.high %v2598, %v2598
    %v2603 = vcombine.high %v32, %v32
    %v2605 = vunpack.c.l.s4 1966171168
    %v2606 = vunpack.c.0.s8 %v2605
    %v2607 = vlaneseq
    %v2608 = vshrl.u32 %v2607, 7
    %v2609 = vsub.s32 %v2606, %v2608
    %v2610 = vrot.slane %v32, %v2609
    %v2612 = vunpack.c.l.s4 1966171168
    %v2613 = vunpack.c.0.s8 %v2612
    %v2614 = vlaneseq
    %v2615 = vshrl.u32 %v2614, 7
    %v2616 = vsub.s32 %v2613, %v2615
    %v2617 = vrot.slane %v2603, %v2616
    %v2618 = vcombine.high %v2610, %v2610
    %v2619 = vcombine.high %v2617, %v2617
    %v2621 = vunpack.c.l.s4 1966171168
    %v2622 = vunpack.c.0.s8 %v2621
    %v2623 = vlaneseq
    %v2624 = vshrl.u32 %v2623, 7
    %v2625 = vsub.s32 %v2622, %v2624
    %v2626 = vrot.slane %v2610, %v2625
    %v2628 = vunpack.c.l.s4 1966171168
    %v2629 = vunpack.c.0.s8 %v2628
    %v2630 = vlaneseq
    %v2631 = vshrl.u32 %v2630, 7
    %v2632 = vsub.s32 %v2629, %v2631
    %v2633 = vrot.slane %v2617, %v2632
    %v2635 = vunpack.c.l.s4 1966171168
    %v2636 = vunpack.c.0.s8 %v2635
    %v2637 = vlaneseq
    %v2638 = vshrl.u32 %v2637, 7
    %v2639 = vsub.s32 %v2636, %v2638
    %v2640 = vrot.slane %v2618, %v2639
    %v2642 = vunpack.c.l.s4 1966171168
    %v2643 = vunpack.c.0.s8 %v2642
    %v2644 = vlaneseq
    %v2645 = vshrl.u32 %v2644, 7
    %v2646 = vsub.s32 %v2643, %v2645
    %v2647 = vrot.slane %v2619, %v2646
    %v2648 = vcombine.high %v2626, %v2626
    %v2649 = vcombine.high %v2633, %v2633
    %v2650 = vcombine.high %v2640, %v2640
    %v2651 = vcombine.high %v2647, %v2647
    %v2652 = vcombine.high %v33, %v33
    %v2654 = vunpack.c.l.s4 1966171168
    %v2655 = vunpack.c.0.s8 %v2654
    %v2656 = vlaneseq
    %v2657 = vshrl.u32 %v2656, 7
    %v2658 = vsub.s32 %v2655, %v2657
    %v2659 = vrot.slane %v33, %v2658
    %v2661 = vunpack.c.l.s4 1966171168
    %v2662 = vunpack.c.0.s8 %v2661
    %v2663 = vlaneseq
    %v2664 = vshrl.u32 %v2663, 7
    %v2665 = vsub.s32 %v2662, %v2664
    %v2666 = vrot.slane %v2652, %v2665
    %v2667 = vcombine.high %v2659, %v2659
    %v2668 = vcombine.high %v2666, %v2666
    %v2670 = vunpack.c.l.s4 1966171168
    %v2671 = vunpack.c.0.s8 %v2670
    %v2672 = vlaneseq
    %v2673 = vshrl.u32 %v2672, 7
    %v2674 = vsub.s32 %v2671, %v2673
    %v2675 = vrot.slane %v2659, %v2674
    %v2677 = vunpack.c.l.s4 1966171168
    %v2678 = vunpack.c.0.s8 %v2677
    %v2679 = vlaneseq
    %v2680 = vshrl.u32 %v2679, 7
    %v2681 = vsub.s32 %v2678, %v2680
    %v2682 = vrot.slane %v2666, %v2681
    %v2684 = vunpack.c.l.s4 1966171168
    %v2685 = vunpack.c.0.s8 %v2684
    %v2686 = vlaneseq
    %v2687 = vshrl.u32 %v2686, 7
    %v2688 = vsub.s32 %v2685, %v2687
    %v2689 = vrot.slane %v2667, %v2688
    %v2691 = vunpack.c.l.s4 1966171168
    %v2692 = vunpack.c.0.s8 %v2691
    %v2693 = vlaneseq
    %v2694 = vshrl.u32 %v2693, 7
    %v2695 = vsub.s32 %v2692, %v2694
    %v2696 = vrot.slane %v2668, %v2695
    %v2697 = vcombine.high %v2675, %v2675
    %v2698 = vcombine.high %v2682, %v2682
    %v2699 = vcombine.high %v2689, %v2689
    %v2700 = vcombine.high %v2696, %v2696
    %v2701 = vcombine.high %v34, %v34
    %v2703 = vunpack.c.l.s4 1966171168
    %v2704 = vunpack.c.0.s8 %v2703
    %v2705 = vlaneseq
    %v2706 = vshrl.u32 %v2705, 7
    %v2707 = vsub.s32 %v2704, %v2706
    %v2708 = vrot.slane %v34, %v2707
    %v2710 = vunpack.c.l.s4 1966171168
    %v2711 = vunpack.c.0.s8 %v2710
    %v2712 = vlaneseq
    %v2713 = vshrl.u32 %v2712, 7
    %v2714 = vsub.s32 %v2711, %v2713
    %v2715 = vrot.slane %v2701, %v2714
    %v2716 = vcombine.high %v2708, %v2708
    %v2717 = vcombine.high %v2715, %v2715
    %v2719 = vunpack.c.l.s4 1966171168
    %v2720 = vunpack.c.0.s8 %v2719
    %v2721 = vlaneseq
    %v2722 = vshrl.u32 %v2721, 7
    %v2723 = vsub.s32 %v2720, %v2722
    %v2724 = vrot.slane %v2708, %v2723
    %v2726 = vunpack.c.l.s4 1966171168
    %v2727 = vunpack.c.0.s8 %v2726
    %v2728 = vlaneseq
    %v2729 = vshrl.u32 %v2728, 7
    %v2730 = vsub.s32 %v2727, %v2729
    %v2731 = vrot.slane %v2715, %v2730
    %v2733 = vunpack.c.l.s4 1966171168
    %v2734 = vunpack.c.0.s8 %v2733
    %v2735 = vlaneseq
    %v2736 = vshrl.u32 %v2735, 7
    %v2737 = vsub.s32 %v2734, %v2736
    %v2738 = vrot.slane %v2716, %v2737
    %v2740 = vunpack.c.l.s4 1966171168
    %v2741 = vunpack.c.0.s8 %v2740
    %v2742 = vlaneseq
    %v2743 = vshrl.u32 %v2742, 7
    %v2744 = vsub.s32 %v2741, %v2743
    %v2745 = vrot.slane %v2717, %v2744
    %v2746 = vcombine.high %v2724, %v2724
    %v2747 = vcombine.high %v2731, %v2731
    %v2748 = vcombine.high %v2738, %v2738
    %v2749 = vcombine.high %v2745, %v2745
    %v2750 = vcombine.high %v35, %v35
    %v2752 = vunpack.c.l.s4 1966171168
    %v2753 = vunpack.c.0.s8 %v2752
    %v2754 = vlaneseq
    %v2755 = vshrl.u32 %v2754, 7
    %v2756 = vsub.s32 %v2753, %v2755
    %v2757 = vrot.slane %v35, %v2756
    %v2759 = vunpack.c.l.s4 1966171168
    %v2760 = vunpack.c.0.s8 %v2759
    %v2761 = vlaneseq
    %v2762 = vshrl.u32 %v2761, 7
    %v2763 = vsub.s32 %v2760, %v2762
    %v2764 = vrot.slane %v2750, %v2763
    %v2765 = vcombine.high %v2757, %v2757
    %v2766 = vcombine.high %v2764, %v2764
    %v2768 = vunpack.c.l.s4 1966171168
    %v2769 = vunpack.c.0.s8 %v2768
    %v2770 = vlaneseq
    %v2771 = vshrl.u32 %v2770, 7
    %v2772 = vsub.s32 %v2769, %v2771
    %v2773 = vrot.slane %v2757, %v2772
    %v2775 = vunpack.c.l.s4 1966171168
    %v2776 = vunpack.c.0.s8 %v2775
    %v2777 = vlaneseq
    %v2778 = vshrl.u32 %v2777, 7
    %v2779 = vsub.s32 %v2776, %v2778
    %v2780 = vrot.slane %v2764, %v2779
    %v2782 = vunpack.c.l.s4 1966171168
    %v2783 = vunpack.c.0.s8 %v2782
    %v2784 = vlaneseq
    %v2785 = vshrl.u32 %v2784, 7
    %v2786 = vsub.s32 %v2783, %v2785
    %v2787 = vrot.slane %v2765, %v2786
    %v2789 = vunpack.c.l.s4 1966171168
    %v2790 = vunpack.c.0.s8 %v2789
    %v2791 = vlaneseq
    %v2792 = vshrl.u32 %v2791, 7
    %v2793 = vsub.s32 %v2790, %v2792
    %v2794 = vrot.slane %v2766, %v2793
    %v2795 = vcombine.high %v2773, %v2773
    %v2796 = vcombine.high %v2780, %v2780
    %v2797 = vcombine.high %v2787, %v2787
    %v2798 = vcombine.high %v2794, %v2794
    %v2799 = vcombine.high %v36, %v36
    %v2801 = vunpack.c.l.s4 1966171168
    %v2802 = vunpack.c.0.s8 %v2801
    %v2803 = vlaneseq
    %v2804 = vshrl.u32 %v2803, 7
    %v2805 = vsub.s32 %v2802, %v2804
    %v2806 = vrot.slane %v36, %v2805
    %v2808 = vunpack.c.l.s4 1966171168
    %v2809 = vunpack.c.0.s8 %v2808
    %v2810 = vlaneseq
    %v2811 = vshrl.u32 %v2810, 7
    %v2812 = vsub.s32 %v2809, %v2811
    %v2813 = vrot.slane %v2799, %v2812
    %v2814 = vcombine.high %v2806, %v2806
    %v2815 = vcombine.high %v2813, %v2813
    %v2817 = vunpack.c.l.s4 1966171168
    %v2818 = vunpack.c.0.s8 %v2817
    %v2819 = vlaneseq
    %v2820 = vshrl.u32 %v2819, 7
    %v2821 = vsub.s32 %v2818, %v2820
    %v2822 = vrot.slane %v2806, %v2821
    %v2824 = vunpack.c.l.s4 1966171168
    %v2825 = vunpack.c.0.s8 %v2824
    %v2826 = vlaneseq
    %v2827 = vshrl.u32 %v2826, 7
    %v2828 = vsub.s32 %v2825, %v2827
    %v2829 = vrot.slane %v2813, %v2828
    %v2831 = vunpack.c.l.s4 1966171168
    %v2832 = vunpack.c.0.s8 %v2831
    %v2833 = vlaneseq
    %v2834 = vshrl.u32 %v2833, 7
    %v2835 = vsub.s32 %v2832, %v2834
    %v2836 = vrot.slane %v2814, %v2835
    %v2838 = vunpack.c.l.s4 1966171168
    %v2839 = vunpack.c.0.s8 %v2838
    %v2840 = vlaneseq
    %v2841 = vshrl.u32 %v2840, 7
    %v2842 = vsub.s32 %v2839, %v2841
    %v2843 = vrot.slane %v2815, %v2842
    %v2844 = vcombine.high %v2822, %v2822
    %v2845 = vcombine.high %v2829, %v2829
    %v2846 = vcombine.high %v2836, %v2836
    %v2847 = vcombine.high %v2843, %v2843
    %v2848 = vcombine.high %v37, %v37
    %v2850 = vunpack.c.l.s4 1966171168
    %v2851 = vunpack.c.0.s8 %v2850
    %v2852 = vlaneseq
    %v2853 = vshrl.u32 %v2852, 7
    %v2854 = vsub.s32 %v2851, %v2853
    %v2855 = vrot.slane %v37, %v2854
    %v2857 = vunpack.c.l.s4 1966171168
    %v2858 = vunpack.c.0.s8 %v2857
    %v2859 = vlaneseq
    %v2860 = vshrl.u32 %v2859, 7
    %v2861 = vsub.s32 %v2858, %v2860
    %v2862 = vrot.slane %v2848, %v2861
    %v2863 = vcombine.high %v2855, %v2855
    %v2864 = vcombine.high %v2862, %v2862
    %v2866 = vunpack.c.l.s4 1966171168
    %v2867 = vunpack.c.0.s8 %v2866
    %v2868 = vlaneseq
    %v2869 = vshrl.u32 %v2868, 7
    %v2870 = vsub.s32 %v2867, %v2869
    %v2871 = vrot.slane %v2855, %v2870
    %v2873 = vunpack.c.l.s4 1966171168
    %v2874 = vunpack.c.0.s8 %v2873
    %v2875 = vlaneseq
    %v2876 = vshrl.u32 %v2875, 7
    %v2877 = vsub.s32 %v2874, %v2876
    %v2878 = vrot.slane %v2862, %v2877
    %v2880 = vunpack.c.l.s4 1966171168
    %v2881 = vunpack.c.0.s8 %v2880
    %v2882 = vlaneseq
    %v2883 = vshrl.u32 %v2882, 7
    %v2884 = vsub.s32 %v2881, %v2883
    %v2885 = vrot.slane %v2863, %v2884
    %v2887 = vunpack.c.l.s4 1966171168
    %v2888 = vunpack.c.0.s8 %v2887
    %v2889 = vlaneseq
    %v2890 = vshrl.u32 %v2889, 7
    %v2891 = vsub.s32 %v2888, %v2890
    %v2892 = vrot.slane %v2864, %v2891
    %v2893 = vcombine.high %v2871, %v2871
    %v2894 = vcombine.high %v2878, %v2878
    %v2895 = vcombine.high %v2885, %v2885
    %v2896 = vcombine.high %v2892, %v2892
    %v2898 = vunpack.c.l.s4 1966171168
    %v2899 = vunpack.c.0.s8 %v2898
    %v2900 = vlaneseq
    %v2901 = vshrl.u32 %v2900, 7
    %v2902 = vsub.s32 %v2899, %v2901
    %v2903 = vrot.slane %v38, %v2902
    %v2905 = vunpack.c.l.s4 1966171168
    %v2906 = vunpack.c.0.s8 %v2905
    %v2907 = vlaneseq
    %v2908 = vshrl.u32 %v2907, 7
    %v2909 = vsub.s32 %v2906, %v2908
    %v2910 = vrot.slane %v2903, %v2909
    %v5089 = vunpack.c.l.b16 %v39
    %v5090 = vunpack.c.l.b16 %v40
    %v5091 = vunpack.c.l.b16 %v41
    %v5092 = vunpack.c.l.b16 %v42
    %v5093 = vunpack.c.l.b16 %v43
    %v5094 = vunpack.c.l.b16 %v44
    %v5095 = vunpack.c.l.b16 %v45
    %v5096 = vunpack.c.l.b16 %v46
    %v5097 = vunpack.c.l.b16 %v47
    %v5098 = vunpack.c.l.b16 %v48
    %v5099 = vunpack.c.l.b16 %v49
    %v5100 = vunpack.c.l.b16 %v50
    %v5101 = vunpack.c.l.b16 %v51
    %v5102 = vunpack.c.l.b16 %v52
    %v5103 = vunpack.c.l.b16 %v53
    %v5104 = vunpack.c.l.b16 %v54
    %v5105 = vunpack.c.l.b16 %v55
    %v5106 = vunpack.c.l.b16 %v56
    %v5107 = vunpack.c.l.b16 %v57
    %v5108 = vunpack.c.l.b16 %v58
    %v5109 = vunpack.c.l.b16 %v59
    %v5110 = vunpack.c.l.b16 %v60
    %v5111 = vunpack.c.l.b16 %v61
    %v5112 = vunpack.c.l.b16 %v62
    %v5113 = vunpack.c.l.b16 %v63
    %v5114 = vunpack.c.l.b16 %v64
    %v5115 = vunpack.c.l.b16 %v65
    %v5116 = vunpack.c.l.b16 %v66
    %v5117 = vunpack.c.l.b16 %v67
    %v5118 = vunpack.c.l.b16 %v68
    %v5119 = vunpack.c.l.b16 %v69
    %v5120 = vunpack.c.l.b16 %v70
    %v5121 = vunpack.c.l.b16 %v71
    %v5122 = vunpack.c.l.b16 %v72
    %v5123 = vunpack.c.l.b16 %v73
    %v5124 = vunpack.c.l.b16 %v74
    %v5125 = vunpack.c.l.b16 %v75
    %v5126 = vunpack.c.l.b16 %v76
    %v5127 = vunpack.c.l.b16 %v77
    %v5128 = vunpack.c.l.b16 %v78
    %v5129 = vunpack.c.l.b16 %v79
    %v5130 = vunpack.c.l.b16 %v80
    %v5131 = vunpack.c.l.b16 %v81
    %v5132 = vunpack.c.l.b16 %v82
    %v5133 = vunpack.c.l.b16 %v83
    %v5134 = vunpack.c.l.b16 %v84
    %v5135 = vunpack.c.l.b16 %v85
    %v5136 = vunpack.c.l.b16 %v86
    %v5137 = vunpack.c.l.b16 %v87
    %v5138 = vunpack.c.l.b16 %v88
    %v5139 = vunpack.c.l.b16 %v89
    %v5140 = vunpack.c.l.b16 %v90
    %v5141 = vunpack.c.l.b16 %v91
    %v5142 = vunpack.c.l.b16 %v92
    %v5143 = vunpack.c.l.b16 %v93
    %v5144 = vunpack.c.l.b16 %v94
    %v5145 = vunpack.c.l.b16 %v95
    %v5146 = vunpack.c.l.b16 %v96
    %v5147 = vunpack.c.l.b16 %v97
    %v5148 = vunpack.c.l.b16 %v98
    %v5149 = vunpack.c.l.b16 %v99
    %v5150 = vunpack.c.l.b16 %v100
    %v5151 = vunpack.c.l.b16 %v101
    %v5152 = vunpack.c.l.b16 %v102
    %v5153 = vunpack.c.l.b16 %v103
    %v5154 = vunpack.c.l.b16 %v104
    %v5155 = vunpack.c.l.b16 %v105
    %v5156 = vunpack.c.l.b16 %v106
    %v5157 = vunpack.c.l.b16 %v107
    %v5158 = vunpack.c.l.b16 %v108
    %v5159 = vunpack.c.l.b16 %v109
    %v5160 = vunpack.c.l.b16 %v110
    %v5161 = vunpack.c.l.b16 %v111
    %v5162 = vunpack.c.l.b16 %v112
    %v5163 = vunpack.c.l.b16 %v113
    %v5164 = vunpack.c.l.b16 %v114
    %v5165 = vunpack.c.l.b16 %v115
    %v5166 = vunpack.c.l.b16 %v116
    %v5167 = vunpack.c.l.b16 %v117
    %v5168 = vunpack.c.l.b16 %v118
    %v5169 = vunpack.c.l.b16 %v119
    %v5170 = vunpack.c.l.b16 %v120
    %v5171 = vunpack.c.l.b16 %v121
    %v5172 = vunpack.c.l.b16 %v122
    %v5173 = vunpack.c.l.b16 %v123
    %v5174 = vunpack.c.l.b16 %v124
    %v5175 = vunpack.c.l.b16 %v125
    %v5176 = vunpack.c.l.b16 %v126
    %v5177 = vunpack.c.l.b16 %v127
    %v5178 = vunpack.c.l.b16 %v128
    %v5179 = vunpack.c.l.b16 %v129
    %v5180 = vunpack.c.l.b16 %v130
    %v5181 = vunpack.c.l.b16 %v131
    %v5182 = vunpack.c.l.b16 %v132
    %v5183 = vunpack.c.l.b16 %v133
    %v5184 = vunpack.c.l.b16 %v134
    %v5185 = vunpack.c.l.b16 %v135
    %v5186 = vunpack.c.l.b16 %v136
    %v5187 = vunpack.c.l.b16 %v137
    %v5188 = vunpack.c.l.b16 %v138
    %v5189 = vunpack.c.l.b16 %v139
    %v5190 = vunpack.c.l.b16 %v140
    %v5191 = vunpack.c.l.b16 %v141
    %v5192 = vunpack.c.l.b16 %v142
    %v5193 = vunpack.c.l.b16 %v143
    %v5194 = vunpack.c.l.b16 %v144
    %v5195 = vunpack.c.l.b16 %v145
    %v5196 = vunpack.c.l.b16 %v146
    %v5197 = vunpack.c.l.b16 %v147
    %v5198 = vunpack.c.l.b16 %v148
    %v5199 = vunpack.c.l.b16 %v149
    %v5200 = vunpack.c.l.b16 %v150
    %v5201 = vunpack.c.l.b16 %v151
    %v5202 = vunpack.c.l.b16 %v152
    %v5203 = vunpack.c.l.b16 %v153
    %v5204 = vunpack.c.l.b16 %v154
    %v5205 = vunpack.c.l.b16 %v155
    %v5206 = vunpack.c.l.b16 %v156
    %v5207 = vunpack.c.l.b16 %v157
    %v5208 = vunpack.c.l.b16 %v158
    %v5209 = vunpack.c.l.b16 %v159
    %v5210 = vunpack.c.l.b16 %v160
    %v5211 = vunpack.c.l.b16 %v161
    %v5212 = vunpack.c.l.b16 %v162
    %v5213 = vunpack.c.l.b16 %v163
    %v5214 = vunpack.c.l.b16 %v164
    %v5215 = vunpack.c.l.b16 %v165
    %v5216 = vunpack.c.l.b16 %v166
    %v5217 = vunpack.c.l.b16 %v167
    %v5218 = vunpack.c.l.b16 %v168
    %v5219 = vunpack.c.l.b16 %v169
    %v5220 = vunpack.c.l.b16 %v170
    %v5221 = vunpack.c.l.b16 %v171
    %v5222 = vunpack.c.l.b16 %v172
    %v5223 = vunpack.c.l.b16 %v173
    %v5224 = vunpack.c.l.b16 %v174
    %v5225 = vunpack.c.l.b16 %v175
    %v5226 = vunpack.c.l.b16 %v176
    %v5227 = vunpack.c.l.b16 %v177
    %v5228 = vunpack.c.l.b16 %v178
    %v5229 = vunpack.c.l.b16 %v179
    %v5230 = vunpack.c.l.b16 %v180
    %v5231 = vunpack.c.l.b16 %v181
    %v5232 = vunpack.c.l.b16 %v182
    %v5233 = vunpack.c.l.b16 %v183
    %v5234 = vunpack.c.l.b16 %v184
    %v5235 = vunpack.c.l.b16 %v185
    %v5236 = vunpack.c.l.b16 %v186
    %v5237 = vunpack.c.l.b16 %v187
    %v5238 = vunpack.c.l.b16 %v188
    %v5239 = vunpack.c.l.b16 %v189
    %v5240 = vunpack.c.l.b16 %v190
    %v5241 = vunpack.c.l.b16 %v191
    %v5242 = vunpack.c.l.b16 %v192
    %v5243 = vunpack.c.l.b16 %v193
    %v5244 = vunpack.c.l.b16 %v194
    %v5245 = vunpack.c.l.b16 %v195
    %v5246 = vunpack.c.l.b16 %v196
    %v5247 = vunpack.c.l.b16 %v197
    %v5248 = vunpack.c.l.b16 %v198
    %v5249 = vunpack.c.l.b16 %v199
    %v5250 = vunpack.c.l.b16 %v200
    %v5251 = vunpack.c.l.b16 %v201
    %v5252 = vunpack.c.l.b16 %v202
    %v5253 = vunpack.c.l.b16 %v203
    %v5254 = vunpack.c.l.b16 %v204
    %v5255 = vunpack.c.l.b16 %v205
    %v5256 = vunpack.c.l.b16 %v206
    %v5257 = vunpack.c.l.b16 %v207
    %v5258 = vunpack.c.l.b16 %v208
    %v5259 = vunpack.c.l.b16 %v209
    %v5260 = vunpack.c.l.b16 %v210
    %v5261 = vunpack.c.l.b16 %v211
    %v5262 = vunpack.c.l.b16 %v212
    %v5263 = vunpack.c.l.b16 %v213
    %v5264 = vunpack.c.l.b16 %v214
    %v5265 = vunpack.c.l.b16 %v215
    %v5266 = vunpack.c.l.b16 %v216
    %v5267 = vunpack.c.l.b16 %v217
    %v5268 = vunpack.c.l.b16 %v218
    %v5269 = vunpack.c.l.b16 %v219
    %v5270 = vunpack.c.l.b16 %v220
    %v5271 = vunpack.c.l.b16 %v221
    %v5272 = vunpack.c.l.b16 %v222
    %v5273 = vunpack.c.l.b16 %v223
    %v5274 = vunpack.c.l.b16 %v224
    %v5275 = vunpack.c.l.b16 %v225
    %v5276 = vunpack.c.l.b16 %v226
    %v5277 = vunpack.c.l.b16 %v227
    %v5278 = vunpack.c.l.b16 %v228
    %v5279 = vunpack.c.l.b16 %v229
    %v5280 = vunpack.c.l.b16 %v230
    %v5281 = vunpack.c.l.b16 %v231
    %v5282 = vunpack.c.l.b16 %v232
    %v5283 = vunpack.c.l.b16 %v233
    %v5284 = vunpack.c.l.b16 %v234
    %v5285 = vunpack.c.l.b16 %v235
    %v5286 = vunpack.c.l.b16 %v236
    %v5287 = vunpack.c.l.b16 %v237
    %v5288 = vunpack.c.l.b16 %v238
    %v5289 = vunpack.c.l.b16 %v239
    %v5290 = vunpack.c.l.b16 %v240
    %v5291 = vunpack.c.l.b16 %v241
    %v5292 = vunpack.c.l.b16 %v242
    %v5293 = vunpack.c.l.b16 %v243
    %v5294 = vunpack.c.l.b16 %v244
    %v5295 = vunpack.c.l.b16 %v245
    %v5296 = vunpack.c.l.b16 %v246
    %v5297 = vunpack.c.l.b16 %v247
    %v5298 = vunpack.c.l.b16 %v248
    %v5299 = vunpack.c.l.b16 %v249
    %v5300 = vunpack.c.l.b16 %v250
    %v5301 = vunpack.c.l.b16 %v251
    %v5302 = vunpack.c.l.b16 %v252
    %v5303 = vunpack.c.l.b16 %v253
    %v5304 = vunpack.c.l.b16 %v254
    %v5305 = vunpack.c.l.b16 %v255
    %v5306 = vunpack.c.l.b16 %v256
    %v5307 = vunpack.c.l.b16 %v257
    %v5308 = vunpack.c.l.b16 %v258
    %v5309 = vunpack.c.l.b16 %v259
    %v5310 = vunpack.c.l.b16 %v260
    %v5311 = vunpack.c.l.b16 %v261
    %v5312 = vunpack.c.l.b16 %v262
    %v5313 = vunpack.c.l.b16 %v263
    %v5314 = vunpack.c.l.b16 %v264
    %v5315 = vunpack.c.l.b16 %v265
    %v5316 = vunpack.c.l.b16 %v266
    %v5317 = vunpack.c.l.b16 %v267
    %v5318 = vunpack.c.l.b16 %v268
    %v5319 = vunpack.c.l.b16 %v269
    %v5320 = vunpack.c.l.b16 %v270
    %v5321 = vunpack.c.l.b16 %v271
    %v5322 = vunpack.c.l.b16 %v272
    %v5323 = vunpack.c.l.b16 %v273
    %v5324 = vunpack.c.l.b16 %v274
    %v5325 = vunpack.c.l.b16 %v275
    %v5326 = vunpack.c.l.b16 %v276
    %v5327 = vunpack.c.l.b16 %v277
    %v5328 = vunpack.c.l.b16 %v278
    %v5329 = vunpack.c.l.b16 %v279
    %v5330 = vunpack.c.l.b16 %v280
    %v5331 = vunpack.c.l.b16 %v281
    %v5332 = vunpack.c.l.b16 %v282
    %v5333 = vunpack.c.l.b16 %v283
    %v5334 = vunpack.c.l.b16 %v284
    %v5335 = vunpack.c.l.b16 %v285
    %v5336 = vunpack.c.l.b16 %v286
    %v5337 = vunpack.c.l.b16 %v287
    %v5338 = vunpack.c.l.b16 %v288
    %v5339 = vunpack.c.l.b16 %v289
    %v5340 = vunpack.c.l.b16 %v290
    %v5341 = vunpack.c.l.b16 %v291
    %v5342 = vunpack.c.l.b16 %v292
    %v5343 = vunpack.c.l.b16 %v293
    %v5344 = vunpack.c.l.b16 %v294
    %v5345 = vunpack.c.l.b16 %v295
    %v5346 = vunpack.c.l.b16 %v296
    %v5347 = vunpack.c.l.b16 %v297
    %v5348 = vunpack.c.l.b16 %v298
    %v5349 = vunpack.c.l.b16 %v299
    %v5350 = vunpack.c.l.b16 %v300
    %v5351 = vunpack.c.l.b16 %v301
    %v5352 = vunpack.c.l.b16 %v302
    %v5353 = vunpack.c.l.b16 %v303
    %v5354 = vunpack.c.l.b16 %v304
    %v5355 = vunpack.c.l.b16 %v305
    %v5356 = vunpack.c.l.b16 %v306
    %v5357 = vunpack.c.l.b16 %v307
    %v5358 = vunpack.c.l.b16 %v308
    %v5359 = vunpack.c.l.b16 %v309
    %v5360 = vunpack.c.l.b16 %v310
    %v5361 = vunpack.c.l.b16 %v311
    %v5362 = vunpack.c.l.b16 %v312
    %v5363 = vunpack.c.l.b16 %v313
    %v5364 = vunpack.c.l.b16 %v314
    %v5365 = vunpack.c.l.b16 %v315
    %v5366 = vunpack.c.l.b16 %v316
    %v5367 = vunpack.c.l.b16 %v317
    %v5368 = vunpack.c.l.b16 %v318
    %v5369 = vunpack.c.l.b16 %v319
    %v5370 = vunpack.c.l.b16 %v320
    %v5371 = vunpack.c.l.b16 %v321
    %v5372 = vunpack.c.l.b16 %v322
    %v5373 = vunpack.c.l.b16 %v323
    %v5374 = vunpack.c.l.b16 %v324
    %v5375 = vunpack.c.l.b16 %v325
    %v5376 = vunpack.c.l.b16 %v326
    %v5377 = vunpack.c.l.b16 %v327
    %v5378 = vunpack.c.l.b16 %v328
    %v5379 = vunpack.c.l.b16 %v329
    %v5380 = vunpack.c.l.b16 %v330
    %v5381 = vunpack.c.l.b16 %v331
    %v5382 = vunpack.c.l.b16 %v332
    %v5383 = vunpack.c.l.b16 %v333
    %v5384 = vunpack.c.l.b16 %v334
    %v5385 = vunpack.c.l.b16 %v335
    %v5386 = vunpack.c.l.b16 %v336
    %v5387 = vunpack.c.l.b16 %v337
    %v5388 = vunpack.c.l.b16 %v338
    %v5389 = vunpack.c.l.b16 %v339
    %v5390 = vunpack.c.l.b16 %v340
    %v5391 = vunpack.c.l.b16 %v341
    %v5392 = vunpack.c.l.b16 %v342
    %v5393 = vunpack.c.l.b16 %v343
    %v5394 = vunpack.c.l.b16 %v344
    %v5395 = vunpack.c.l.b16 %v345
    %v5396 = vunpack.c.l.b16 %v346
    %v5397 = vunpack.c.l.b16 %v347
    %v5398 = vunpack.c.l.b16 %v348
    %v5399 = vunpack.c.l.b16 %v349
    %v5400 = vunpack.c.l.b16 %v350
    %v5401 = vunpack.c.l.b16 %v351
    %v5402 = vunpack.c.l.b16 %v352
    %v5403 = vunpack.c.l.b16 %v353
    %v5404 = vunpack.c.l.b16 %v354
    %v5405 = vunpack.c.l.b16 %v355
    %v5406 = vunpack.c.l.b16 %v356
    %v5407 = vunpack.c.l.b16 %v357
    %v5408 = vunpack.c.l.b16 %v358
    %v5409 = vunpack.c.l.b16 %v359
    %v5410 = vunpack.c.l.b16 %v360
    %v5411 = vunpack.c.l.b16 %v361
    %v5412 = vunpack.c.l.b16 %v362
    %v5413 = vunpack.c.l.b16 %v363
    %v5414 = vunpack.c.l.b16 %v364
    %v5415 = vunpack.c.l.b16 %v365
    %v5416 = vunpack.c.l.b16 %v366
    %v5417 = vunpack.c.l.b16 %v367
    %v5418 = vunpack.c.l.b16 %v368
    %v5419 = vunpack.c.l.b16 %v369
    %v5420 = vunpack.c.l.b16 %v370
    %v5421 = vunpack.c.l.b16 %v371
    %v5422 = vunpack.c.l.b16 %v372
    %v5423 = vunpack.c.l.b16 %v373
    %v5424 = vunpack.c.l.b16 %v374
    %v5425 = vunpack.c.l.b16 %v375
    %v5426 = vunpack.c.l.b16 %v376
    %v5427 = vunpack.c.l.b16 %v377
    %v5428 = vunpack.c.l.b16 %v378
    %v5429 = vunpack.c.l.b16 %v379
    %v5430 = vunpack.c.l.b16 %v380
    %v5431 = vunpack.c.l.b16 %v381
    %v5432 = vunpack.c.l.b16 %v382
    %v5433 = vunpack.c.l.b16 %v383
    %v5434 = vunpack.c.l.b16 %v384
    %v5435 = vunpack.c.l.b16 %v385
    %v5436 = vunpack.c.l.b16 %v386
    %v5437 = vunpack.c.l.b16 %v387
    %v5438 = vunpack.c.l.b16 %v388
    %v5439 = vunpack.c.l.b16 %v389
    %v5440 = vunpack.c.l.b16 %v390
    %v5441 = vunpack.c.l.b16 %v391
    %v5442 = vunpack.c.l.b16 %v392
    %v5443 = vunpack.c.l.b16 %v393
    %v5444 = vunpack.c.l.b16 %v394
    %v5445 = vunpack.c.l.b16 %v395
    %v5446 = vunpack.c.l.b16 %v396
    %v5447 = vunpack.c.l.b16 %v397
    %v5448 = vunpack.c.l.b16 %v398
    %v5449 = vunpack.c.l.b16 %v399
    %v5450 = vunpack.c.l.b16 %v400
    %v5451 = vunpack.c.l.b16 %v401
    %v5452 = vunpack.c.l.b16 %v402
    %v5453 = vunpack.c.l.b16 %v403
    %v5454 = vunpack.c.l.b16 %v404
    %v5455 = vunpack.c.l.b16 %v405
    %v5456 = vunpack.c.l.b16 %v406
    %v5457 = vunpack.c.l.b16 %v407
    %v5458 = vunpack.c.l.b16 %v408
    %v5459 = vunpack.c.l.b16 %v409
    %v5460 = vunpack.c.l.b16 %v410
    %v5461 = vunpack.c.l.b16 %v411
    %v5462 = vunpack.c.l.b16 %v412
    %v5463 = vunpack.c.l.b16 %v413
    %v5464 = vunpack.c.l.b16 %v414
    %v5465 = vunpack.c.l.b16 %v415
    %v5466 = vunpack.c.l.b16 %v416
    %v5467 = vunpack.c.l.b16 %v417
    %v5468 = vunpack.c.l.b16 %v418
    %v5469 = vunpack.c.l.b16 %v419
    %v5470 = vunpack.c.l.b16 %v420
    %v5471 = vunpack.c.l.b16 %v421
    %v5472 = vunpack.c.l.b16 %v422
    %v5473 = vunpack.c.l.b16 %v423
    %v5474 = vunpack.c.l.b16 %v424
    %v5475 = vunpack.c.l.b16 %v425
    %v5476 = vunpack.c.l.b16 %v426
    %v5477 = vunpack.c.l.b16 %v427
    %v5478 = vunpack.c.l.b16 %v428
    %v5479 = vunpack.c.l.b16 %v429
    %v5480 = vunpack.c.l.b16 %v430
    %v5481 = vunpack.c.l.b16 %v431
    %v5482 = vunpack.c.l.b16 %v432
    %v5483 = vunpack.c.l.b16 %v433
    %v5484 = vunpack.c.l.b16 %v434
    %v5485 = vunpack.c.l.b16 %v435
    %v5486 = vunpack.c.l.b16 %v436
    %v5487 = vunpack.c.l.b16 %v437
    %v5488 = vunpack.c.l.b16 %v438
    %v5489 = vunpack.c.l.b16 %v439
    %v5490 = vunpack.c.l.b16 %v440
    %v5491 = vunpack.c.l.b16 %v441
    %v5492 = vunpack.c.l.b16 %v442
    %v5493 = vunpack.c.l.b16 %v443
    %v5494 = vunpack.c.l.b16 %v444
    %v5495 = vunpack.c.l.b16 %v445
    %v5496 = vunpack.c.l.b16 %v446
    %v5497 = vunpack.c.l.b16 %v447
    %v5498 = vunpack.c.l.b16 %v448
    %v5499 = vunpack.c.l.b16 %v449
    %v5500 = vunpack.c.l.b16 %v450
    %v5501 = vunpack.c.l.b16 %v451
    %v5502 = vunpack.c.l.b16 %v452
    %v5503 = vunpack.c.l.b16 %v453
    %v5504 = vunpack.c.l.b16 %v454
    %v5505 = vunpack.c.l.b16 %v455
    %v5506 = vunpack.c.l.b16 %v456
    %v5507 = vunpack.c.l.b16 %v457
    %v5508 = vunpack.c.l.b16 %v458
    %v5509 = vunpack.c.l.b16 %v459
    %v5510 = vunpack.c.l.b16 %v460
    %v5511 = vunpack.c.l.b16 %v461
    %v5512 = vunpack.c.l.b16 %v462
    %v5513 = vunpack.c.l.b16 %v463
    %v5514 = vunpack.c.l.b16 %v464
    %v5515 = vunpack.c.l.b16 %v465
    %v5516 = vunpack.c.l.b16 %v466
    %v5517 = vunpack.c.l.b16 %v467
    %v5518 = vunpack.c.l.b16 %v468
    %v5519 = vunpack.c.l.b16 %v469
    %v5520 = vunpack.c.l.b16 %v470
    %v5521 = vunpack.c.l.b16 %v471
    %v5522 = vunpack.c.l.b16 %v472
    %v5523 = vunpack.c.l.b16 %v473
    %v5524 = vunpack.c.l.b16 %v474
    %v5525 = vunpack.c.l.b16 %v475
    %v5526 = vunpack.c.l.b16 %v476
    %v5527 = vunpack.c.l.b16 %v477
    %v5528 = vunpack.c.l.b16 %v478
    %v5529 = vunpack.c.l.b16 %v479
    %v5530 = vunpack.c.l.b16 %v480
    %v5531 = vunpack.c.l.b16 %v481
    %v5532 = vunpack.c.l.b16 %v482
    %v5533 = vunpack.c.l.b16 %v483
    %v5534 = vunpack.c.l.b16 %v484
    %v5535 = vunpack.c.l.b16 %v485
    %v5536 = vunpack.c.l.b16 %v486
    %v5537 = vunpack.c.l.b16 %v487
    %v5538 = vunpack.c.l.b16 %v488
    %v5539 = vunpack.c.l.b16 %v489
    %v5540 = vunpack.c.l.b16 %v490
    %v5541 = vunpack.c.l.b16 %v491
    %v5542 = vunpack.c.l.b16 %v492
    %v5543 = vunpack.c.l.b16 %v493
    %v5544 = vunpack.c.l.b16 %v494
    %v5545 = vunpack.c.l.b16 %v495
    %v5546 = vunpack.c.l.b16 %v496
    %v5547 = vunpack.c.l.b16 %v497
    %v5548 = vunpack.c.l.b16 %v498
    %v5549 = vunpack.c.l.b16 %v499
    %v5550 = vunpack.c.l.b16 %v500
    %v5551 = vunpack.c.l.b16 %v501
    %v5552 = vunpack.c.l.b16 %v502
    %v5553 = vunpack.c.l.b16 %v503
    %v5554 = vunpack.c.l.b16 %v504
    %v5555 = vunpack.c.l.b16 %v505
    %v5556 = vunpack.c.l.b16 %v506
    %v5557 = vunpack.c.l.b16 %v507
    %v5558 = vunpack.c.l.b16 %v508
    %v5559 = vunpack.c.l.b16 %v509
    %v5560 = vunpack.c.l.b16 %v510
    %v5561 = vunpack.c.l.b16 %v511
    %v5562 = vunpack.c.l.b16 %v512
    %v5563 = vunpack.c.l.b16 %v513
    %v5564 = vunpack.c.l.b16 %v514
    %v5565 = vunpack.c.l.b16 %v515
    %v5566 = vunpack.c.l.b16 %v516
    %v5567 = vunpack.c.l.b16 %v517
    %v5568 = vunpack.c.l.b16 %v518
    %v5569 = vunpack.c.l.b16 %v519
    %v5570 = vunpack.c.l.b16 %v520
    %v5571 = vunpack.c.l.b16 %v521
    %v5572 = vunpack.c.l.b16 %v522
    %v5573 = vunpack.c.l.b16 %v523
    %v5574 = vunpack.c.l.b16 %v524
    %v5575 = vunpack.c.l.b16 %v525
    %v5576 = vunpack.c.l.b16 %v526
    %v5577 = vunpack.c.l.b16 %v527
    %v5578 = vunpack.c.l.b16 %v528
    %v5579 = vunpack.c.l.b16 %v529
    %v5580 = vunpack.c.l.b16 %v530
    %v5581 = vunpack.c.l.b16 %v531
    %v5582 = vunpack.c.l.b16 %v532
    %v5583 = vunpack.c.l.b16 %v533
    %v5584 = vunpack.c.l.b16 %v534
    %v5585 = vunpack.c.l.b16 %v535
    %v5586 = vunpack.c.l.b16 %v536
    %v5587 = vunpack.c.l.b16 %v537
    %v5588 = vunpack.c.l.b16 %v538
    %v5589 = vunpack.c.l.b16 %v539
    %v5590 = vunpack.c.l.b16 %v540
    %v5591 = vunpack.c.l.b16 %v541
    %v5592 = vunpack.c.l.b16 %v542
    %v5593 = vunpack.c.l.b16 %v543
    %v5594 = vunpack.c.l.b16 %v544
    %v5595 = vunpack.c.l.b16 %v545
    %v5596 = vunpack.c.l.b16 %v546
    %v5597 = vunpack.c.l.b16 %v547
    %v5598 = vunpack.c.l.b16 %v548
    %v5599 = vunpack.c.l.b16 %v549
    %v5600 = vunpack.c.l.b16 %v550
    %v5601 = vunpack.c.l.b16 %v551
    %v5602 = vunpack.c.l.b16 %v552
    %v5603 = vunpack.c.l.b16 %v553
    %v5604 = vunpack.c.l.b16 %v554
    %v5605 = vunpack.c.l.b16 %v555
    %v5606 = vunpack.c.l.b16 %v556
    %v5607 = vunpack.c.l.b16 %v557
    %v5608 = vunpack.c.l.b16 %v558
    %v5609 = vunpack.c.l.b16 %v559
    %v5610 = vunpack.c.l.b16 %v560
    %v5611 = vunpack.c.l.b16 %v561
    %v5612 = vunpack.c.l.b16 %v562
    %v5613 = vunpack.c.l.b16 %v563
    %v5614 = vunpack.c.l.b16 %v564
    %v5615 = vunpack.c.l.b16 %v565
    %v5616 = vunpack.c.l.b16 %v566
    %v5617 = vunpack.c.l.b16 %v567
    %v5618 = vunpack.c.l.b16 %v568
    %v5619 = vunpack.c.l.b16 %v569
    %v5620 = vunpack.c.l.b16 %v570
    %v5621 = vunpack.c.l.b16 %v571
    %v5622 = vunpack.c.l.b16 %v572
    %v5623 = vunpack.c.l.b16 %v573
    %v5624 = vunpack.c.l.b16 %v574
    %v5625 = vunpack.c.l.b16 %v575
    %v5626 = vunpack.c.l.b16 %v576
    %v5627 = vunpack.c.l.b16 %v577
    %v5628 = vunpack.c.l.b16 %v578
    %v5629 = vunpack.c.l.b16 %v579
    %v5630 = vunpack.c.l.b16 %v580
    %v5631 = vunpack.c.l.b16 %v581
    %v5632 = vunpack.c.l.b16 %v582
    %v5633 = vunpack.c.l.b16 %v583
    %v5634 = vunpack.c.l.b16 %v584
    %v5635 = vunpack.c.l.b16 %v585
    %v5636 = vunpack.c.l.b16 %v586
    %v5637 = vunpack.c.l.b16 %v587
    %v5638 = vunpack.c.l.b16 %v588
    %v5639 = vunpack.c.l.b16 %v589
    %v5640 = vunpack.c.l.b16 %v590
    %v5641 = vunpack.c.l.b16 %v591
    %v5642 = vunpack.c.l.b16 %v592
    %v5643 = vunpack.c.l.b16 %v593
    %v5644 = vunpack.c.l.b16 %v594
    %v5645 = vunpack.c.l.b16 %v595
    %v5646 = vunpack.c.l.b16 %v596
    %v5647 = vunpack.c.l.b16 %v597
    %v5648 = vunpack.c.l.b16 %v598
    %v5649 = vunpack.c.l.b16 %v599
    %v5650 = vunpack.c.l.b16 %v600
    %v5651 = vunpack.c.l.b16 %v601
    %v5652 = vunpack.c.l.b16 %v602
    %v5653 = vunpack.c.l.b16 %v603
    %v5654 = vunpack.c.l.b16 %v604
    %v5655 = vunpack.c.l.b16 %v605
    %v5656 = vunpack.c.l.b16 %v606
    %v5657 = vunpack.c.l.b16 %v607
    %v5658 = vunpack.c.l.b16 %v608
    %v5659 = vunpack.c.l.b16 %v609
    %v5660 = vunpack.c.l.b16 %v610
    %v5661 = vunpack.c.l.b16 %v611
    %v5662 = vunpack.c.l.b16 %v612
    %v5663 = vunpack.c.l.b16 %v613
    %v5664 = vunpack.c.l.b16 %v614
    %v5665 = vunpack.c.l.b16 %v615
    %v5666 = vunpack.c.l.b16 %v616
    %v5667 = vunpack.c.l.b16 %v617
    %v5668 = vunpack.c.l.b16 %v618
    %v5669 = vunpack.c.l.b16 %v619
    %v5670 = vunpack.c.l.b16 %v620
    %v5671 = vunpack.c.l.b16 %v621
    %v5672 = vunpack.c.l.b16 %v622
    %v5673 = vunpack.c.l.b16 %v623
    %v5674 = vunpack.c.l.b16 %v624
    %v5675 = vunpack.c.l.b16 %v625
    %v5676 = vunpack.c.l.b16 %v626
    %v5677 = vunpack.c.l.b16 %v627
    %v5678 = vunpack.c.l.b16 %v628
    %v5679 = vunpack.c.l.b16 %v629
    %v5680 = vunpack.c.l.b16 %v630
    %v5681 = vunpack.c.l.b16 %v631
    %v5682 = vunpack.c.l.b16 %v632
    %v5683 = vunpack.c.l.b16 %v633
    %v5684 = vunpack.c.l.b16 %v634
    %v5685 = vunpack.c.l.b16 %v635
    %v5686 = vunpack.c.l.b16 %v636
    %v5687 = vunpack.c.l.b16 %v637
    %v5688 = vunpack.c.l.b16 %v638
    %v5689 = vunpack.c.l.b16 %v639
    %v5690 = vunpack.c.l.b16 %v640
    %v5691 = vunpack.c.l.b16 %v641
    %v5692 = vunpack.c.l.b16 %v642
    %v5693 = vunpack.c.l.b16 %v643
    %v5694 = vunpack.c.l.b16 %v644
    %v5695 = vunpack.c.l.b16 %v645
    %v5696 = vunpack.c.l.b16 %v646
    %v5697 = vunpack.c.l.b16 %v647
    %v5698 = vunpack.c.l.b16 %v648
    %v5699 = vunpack.c.l.b16 %v649
    %v5700 = vunpack.c.l.b16 %v650
    %v5701 = vunpack.c.l.b16 %v651
    %v5702 = vunpack.c.l.b16 %v652
    %v5703 = vunpack.c.l.b16 %v653
    %v5704 = vunpack.c.l.b16 %v654
    %v5705 = vunpack.c.l.b16 %v655
    %v5706 = vunpack.c.l.b16 %v656
    %v5707 = vunpack.c.l.b16 %v657
    %v5708 = vunpack.c.l.b16 %v658
    %v5709 = vunpack.c.l.b16 %v659
    %v5710 = vunpack.c.l.b16 %v660
    %v5711 = vunpack.c.l.b16 %v661
    %v5712 = vunpack.c.l.b16 %v662
    %v5713 = vunpack.c.l.b16 %v663
    %v5714 = vunpack.c.l.b16 %v664
    %v5715 = vunpack.c.l.b16 %v665
    %v5716 = vunpack.c.l.b16 %v666
    %v5717 = vunpack.c.l.b16 %v667
    %v5718 = vunpack.c.l.b16 %v668
    %v5719 = vunpack.c.l.b16 %v669
    %v5720 = vunpack.c.l.b16 %v670
    %v5721 = vunpack.c.l.b16 %v671
    %v5722 = vunpack.c.l.b16 %v672
    %v5723 = vunpack.c.l.b16 %v673
    %v5724 = vunpack.c.l.b16 %v674
    %v5725 = vunpack.c.l.b16 %v675
    %v5726 = vunpack.c.l.b16 %v676
    %v5727 = vunpack.c.l.b16 %v677
    %v5728 = vunpack.c.l.b16 %v678
    %v5729 = vunpack.c.l.b16 %v679
    %v5730 = vunpack.c.l.b16 %v680
    %v5731 = vunpack.c.l.b16 %v681
    %v5732 = vunpack.c.l.b16 %v682
    %v5733 = vunpack.c.l.b16 %v683
    %v5734 = vunpack.c.l.b16 %v684
    %v5735 = vunpack.c.l.b16 %v685
    %v5736 = vunpack.c.l.b16 %v686
    %v5737 = vunpack.c.l.b16 %v687
    %v5738 = vunpack.c.l.b16 %v688
    %v5739 = vunpack.c.l.b16 %v689
    %v5740 = vunpack.c.l.b16 %v690
    %v5741 = vunpack.c.l.b16 %v691
    %v5742 = vunpack.c.l.b16 %v692
    %v5743 = vunpack.c.l.b16 %v693
    %v5744 = vunpack.c.l.b16 %v694
    %v5745 = vunpack.c.l.b16 %v695
    %v5746 = vunpack.c.l.b16 %v696
    %v5747 = vunpack.c.l.b16 %v697
    %v5748 = vunpack.c.l.b16 %v698
    %v5749 = vunpack.c.l.b16 %v699
    %v5750 = vunpack.c.l.b16 %v700
    %v5751 = vunpack.c.l.b16 %v701
    %v5752 = vunpack.c.l.b16 %v702
    %v5753 = vunpack.c.l.b16 %v703
    %v5754 = vunpack.c.l.b16 %v704
    %v5755 = vunpack.c.l.b16 %v705
    %v5756 = vunpack.c.l.b16 %v706
    %v5757 = vunpack.c.l.b16 %v707
    %v5758 = vunpack.c.l.b16 %v708
    %v5759 = vunpack.c.l.b16 %v709
    %v5760 = vunpack.c.l.b16 %v710
    %v5761 = vunpack.c.l.b16 %v711
    %v5762 = vunpack.c.l.b16 %v712
    %v5763 = vunpack.c.l.b16 %v713
    %v5764 = vunpack.c.l.b16 %v714
    %v5765 = vunpack.c.l.b16 %v715
    %v5766 = vunpack.c.l.b16 %v716
    %v5767 = vunpack.c.l.b16 %v717
    %v5768 = vunpack.c.l.b16 %v718
    %v5769 = vunpack.c.l.b16 %v719
    %v5770 = vunpack.c.l.b16 %v720
    %v5771 = vunpack.c.l.b16 %v721
    %v5772 = vunpack.c.l.b16 %v722
    %v5773 = vunpack.c.l.b16 %v723
    %v5774 = vunpack.c.l.b16 %v724
    %v5775 = vunpack.c.l.b16 %v725
    %v5776 = vunpack.c.l.b16 %v726
    %v5777 = vunpack.c.l.b16 %v727
    %v5778 = vunpack.c.l.b16 %v728
    %v5779 = vunpack.c.l.b16 %v729
    %v5780 = vunpack.c.l.b16 %v730
    %v5781 = vunpack.c.l.b16 %v731
    %v5782 = vunpack.c.l.b16 %v732
    %v5783 = vunpack.c.l.b16 %v733
    %v5784 = vunpack.c.l.b16 %v734
    %v5785 = vunpack.c.l.b16 %v735
    %v5786 = vunpack.c.l.b16 %v736
    %v5787 = vunpack.c.l.b16 %v737
    %v5788 = vunpack.c.l.b16 %v738
    %v5789 = vunpack.c.l.b16 %v739
    %v5790 = vunpack.c.l.b16 %v740
    %v5791 = vunpack.c.l.b16 %v741
    %v5792 = vunpack.c.l.b16 %v742
    %v5793 = vunpack.c.l.b16 %v743
    %v5794 = vunpack.c.l.b16 %v744
    %v5795 = vunpack.c.l.b16 %v745
    %v5796 = vunpack.c.l.b16 %v746
    %v5797 = vunpack.c.l.b16 %v747
    %v5798 = vunpack.c.l.b16 %v748
    %v5799 = vunpack.c.l.b16 %v749
    %v5800 = vunpack.c.l.b16 %v750
    %v5801 = vunpack.c.l.b16 %v751
    %v5802 = vunpack.c.l.b16 %v752
    %v5803 = vunpack.c.l.b16 %v753
    %v5804 = vunpack.c.l.b16 %v754
    %v5805 = vunpack.c.l.b16 %v755
    %v5806 = vunpack.c.l.b16 %v756
    %v5807 = vunpack.c.l.b16 %v757
    %v5808 = vunpack.c.l.b16 %v758
    %v5809 = vunpack.c.l.b16 %v759
    %v5810 = vunpack.c.l.b16 %v760
    %v5811 = vunpack.c.l.b16 %v761
    %v5812 = vunpack.c.l.b16 %v762
    %v5813 = vunpack.c.l.b16 %v763
    %v5814 = vunpack.c.l.b16 %v764
    %v5815 = vunpack.c.l.b16 %v765
    %v5816 = vunpack.c.l.b16 %v766
    %v5817 = vunpack.c.l.b16 %v767
    %v5818 = vunpack.c.l.b16 %v768
    %v5819 = vunpack.c.l.b16 %v769
    %v5820 = vunpack.c.l.b16 %v770
    %v5821 = vunpack.c.l.b16 %v771
    %v5822 = vunpack.c.l.b16 %v772
    %v5823 = vunpack.c.l.b16 %v773
    %v5824 = vunpack.c.l.b16 %v774
    %v5825 = vunpack.c.l.b16 %v775
    %v5826 = vunpack.c.l.b16 %v776
    %v5827 = vunpack.c.l.b16 %v777
    %v5828 = vunpack.c.l.b16 %v778
    %v5829 = vunpack.c.l.b16 %v779
    %v5830 = vunpack.c.l.b16 %v780
    %v5831 = vunpack.c.l.b16 %v781
    %v5832 = vunpack.c.l.b16 %v782
    %v5833 = vunpack.c.l.b16 %v783
    %v5834 = vunpack.c.l.b16 %v784
    %v5835 = vunpack.c.l.b16 %v785
    %v5836 = vunpack.c.l.b16 %v786
    %v5837 = vunpack.c.l.b16 %v787
    %v5838 = vunpack.c.l.b16 %v788
    %v5839 = vunpack.c.l.b16 %v789
    %v5840 = vunpack.c.l.b16 %v790
    %v5841 = vunpack.c.l.b16 %v791
    %v5842 = vunpack.c.l.b16 %v792
    %v5843 = vunpack.c.l.b16 %v793
    %v5844 = vunpack.c.l.b16 %v794
    %v5845 = vunpack.c.l.b16 %v795
    %v5846 = vunpack.c.l.b16 %v796
    %v5847 = vunpack.c.l.b16 %v797
    %v5848 = vunpack.c.l.b16 %v798
    %v5849 = vunpack.c.l.b16 %v799
    %v5850 = vunpack.c.l.b16 %v800
    %v5851 = vunpack.c.l.b16 %v801
    %v5852 = vunpack.c.l.b16 %v802
    %v5853 = vunpack.c.l.b16 %v803
    %v5854 = vunpack.c.l.b16 %v804
    %v5855 = vunpack.c.l.b16 %v805
    %v5856 = vunpack.c.l.b16 %v806
    %v5857 = vunpack.c.l.b16 %v807
    %v5858 = vunpack.c.l.b16 %v808
    %v5859 = vunpack.c.l.b16 %v809
    %v5860 = vunpack.c.l.b16 %v810
    %v5861 = vunpack.c.l.b16 %v811
    %v5862 = vunpack.c.l.b16 %v812
    %v5863 = vunpack.c.l.b16 %v813
    %v5864 = vunpack.c.l.b16 %v814
    %v5865 = vunpack.c.l.b16 %v815
    %v5866 = vunpack.c.l.b16 %v816
    %v5867 = vunpack.c.l.b16 %v817
    %v5868 = vunpack.c.l.b16 %v818
    %v5869 = vunpack.c.l.b16 %v819
    %v5870 = vunpack.c.l.b16 %v820
    %v5871 = vunpack.c.l.b16 %v821
    %v5872 = vunpack.c.l.b16 %v822
    %v5873 = vunpack.c.l.b16 %v823
    %v5874 = vunpack.c.l.b16 %v824
    %v5875 = vunpack.c.l.b16 %v825
    %v5876 = vunpack.c.l.b16 %v826
    %v5877 = vunpack.c.l.b16 %v827
    %v5878 = vunpack.c.l.b16 %v828
    %v5879 = vunpack.c.l.b16 %v829
    %v5880 = vunpack.c.l.b16 %v830
    %v5881 = vunpack.c.l.b16 %v831
    %v5882 = vunpack.c.l.b16 %v832
    %v5883 = vunpack.c.l.b16 %v833
    %v5884 = vunpack.c.l.b16 %v834
    %v5885 = vunpack.c.l.b16 %v835
    %v5886 = vunpack.c.l.b16 %v836
    %v5887 = vunpack.c.l.b16 %v837
    %v5888 = vunpack.c.l.b16 %v838
    %v5889 = vunpack.c.l.b16 %v839
    %v5890 = vunpack.c.l.b16 %v840
    %v5891 = vunpack.c.l.b16 %v841
    %v5892 = vunpack.c.l.b16 %v842
    %v5893 = vunpack.c.l.b16 %v843
    %v5894 = vunpack.c.l.b16 %v844
    %v5895 = vunpack.c.l.b16 %v845
    %v5896 = vunpack.c.l.b16 %v846
    %v5897 = vunpack.c.l.b16 %v847
    %v5898 = vunpack.c.l.b16 %v848
    %v5899 = vunpack.c.l.b16 %v849
    %v5900 = vunpack.c.l.b16 %v850
    %v5901 = vunpack.c.l.b16 %v851
    %v5902 = vunpack.c.l.b16 %v852
    %v5903 = vunpack.c.l.b16 %v853
    %v5904 = vunpack.c.l.b16 %v854
    %v5905 = vunpack.c.l.b16 %v855
    %v5906 = vunpack.c.l.b16 %v856
    %v5907 = vunpack.c.l.b16 %v857
    %v5908 = vunpack.c.l.b16 %v858
    %v5909 = vunpack.c.l.b16 %v859
    %v5910 = vunpack.c.l.b16 %v860
    %v5911 = vunpack.c.l.b16 %v861
    %v5912 = vunpack.c.l.b16 %v862
    %v5913 = vunpack.c.l.b16 %v863
    %v5914 = vunpack.c.l.b16 %v864
    %v5915 = vunpack.c.l.b16 %v865
    %v5916 = vunpack.c.l.b16 %v866
    %v5917 = vunpack.c.l.b16 %v867
    %v5918 = vunpack.c.l.b16 %v868
    %v5919 = vunpack.c.l.b16 %v869
    %v5920 = vunpack.c.l.b16 %v870
    %v5921 = vunpack.c.l.b16 %v871
    %v5922 = vunpack.c.l.b16 %v872
    %v5923 = vunpack.c.l.b16 %v873
    %v5924 = vunpack.c.l.b16 %v874
    %v5925 = vunpack.c.l.b16 %v875
    %v5926 = vunpack.c.l.b16 %v876
    %v5927 = vunpack.c.l.b16 %v877
    %v5928 = vunpack.c.l.b16 %v878
    %v5929 = vunpack.c.l.b16 %v879
    %v5930 = vunpack.c.l.b16 %v880
    %v5931 = vunpack.c.l.b16 %v881
    %v5932 = vunpack.c.l.b16 %v882
    %v5933 = vunpack.c.l.b16 %v883
    %v5934 = vunpack.c.l.b16 %v884
    %v5935 = vunpack.c.l.b16 %v885
    %v5936 = vunpack.c.l.b16 %v886
    %v5937 = vunpack.c.l.b16 %v887
    %v5938 = vunpack.c.l.b16 %v888
    %v5939 = vunpack.c.l.b16 %v889
    %v5940 = vunpack.c.l.b16 %v890
    %v5941 = vunpack.c.l.b16 %v891
    %v5942 = vunpack.c.l.b16 %v892
    %v5943 = vunpack.c.l.b16 %v893
    %v5944 = vunpack.c.l.b16 %v894
    %v5945 = vunpack.c.l.b16 %v895
    %v5946 = vunpack.c.l.b16 %v896
    %v5947 = vunpack.c.l.b16 %v897
    %v5948 = vunpack.c.l.b16 %v898
    %v5949 = vunpack.c.l.b16 %v899
    %v5950 = vunpack.c.l.b16 %v900
    %v5951 = vunpack.c.l.b16 %v901
    %v5952 = vunpack.c.l.b16 %v902
    %v5953 = vunpack.c.l.b16 %v903
    %v5954 = vunpack.c.l.b16 %v904
    %v5955 = vunpack.c.l.b16 %v905
    %v5956 = vunpack.c.l.b16 %v906
    %v5957 = vunpack.c.l.b16 %v907
    %v5958 = vunpack.c.l.b16 %v908
    %v5959 = vunpack.c.l.b16 %v909
    %v5960 = vunpack.c.l.b16 %v910
    %v5961 = vunpack.c.l.b16 %v911
    %v5962 = vunpack.c.l.b16 %v912
    %v5963 = vunpack.c.l.b16 %v913
    %v5964 = vunpack.c.l.b16 %v914
    %v5965 = vunpack.c.l.b16 %v915
    %v5966 = vunpack.c.l.b16 %v916
    %v5967 = vunpack.c.l.b16 %v917
    %v5968 = vunpack.c.l.b16 %v918
    %v5969 = vunpack.c.l.b16 %v919
    %v5970 = vunpack.c.l.b16 %v920
    %v5971 = vunpack.c.l.b16 %v921
    %v5972 = vunpack.c.l.b16 %v922
    %v5973 = vunpack.c.l.b16 %v923
    %v5974 = vunpack.c.l.b16 %v924
    %v5975 = vunpack.c.l.b16 %v925
    %v5976 = vunpack.c.l.b16 %v926
    %v5977 = vunpack.c.l.b16 %v927
    %v5978 = vunpack.c.l.b16 %v928
    %v5979 = vunpack.c.l.b16 %v929
    %v5980 = vunpack.c.l.b16 %v930
    %v5981 = vunpack.c.l.b16 %v931
    %v5982 = vunpack.c.l.b16 %v932
    %v5983 = vunpack.c.l.b16 %v933
    %v5984 = vunpack.c.l.b16 %v934
    %v5985 = vunpack.c.l.b16 %v935
    %v5986 = vunpack.c.l.b16 %v936
    %v5987 = vunpack.c.l.b16 %v937
    %v5988 = vunpack.c.l.b16 %v938
    %v5989 = vunpack.c.l.b16 %v939
    %v5990 = vunpack.c.l.b16 %v940
    %v5991 = vunpack.c.l.b16 %v941
    %v5992 = vunpack.c.l.b16 %v942
    %v5993 = vunpack.c.l.b16 %v943
    %v5994 = vunpack.c.l.b16 %v944
    %v5995 = vunpack.c.l.b16 %v945
    %v5996 = vunpack.c.l.b16 %v946
    %v5997 = vunpack.c.l.b16 %v947
    %v5998 = vunpack.c.l.b16 %v948
    %v5999 = vunpack.c.l.b16 %v949
    %v6000 = vunpack.c.l.b16 %v950
    %v6001 = vunpack.c.l.b16 %v951
    %v6002 = vunpack.c.l.b16 %v952
    %v6003 = vunpack.c.l.b16 %v953
    %v6004 = vunpack.c.l.b16 %v954
    %v6005 = vunpack.c.l.b16 %v955
    %v6006 = vunpack.c.l.b16 %v956
    %v6007 = vunpack.c.l.b16 %v957
    %v6008 = vunpack.c.l.b16 %v958
    %v6009 = vunpack.c.l.b16 %v959
    %v6010 = vunpack.c.l.b16 %v960
    %v6011 = vunpack.c.l.b16 %v961
    %v6012 = vunpack.c.l.b16 %v962
    %v6013 = vunpack.c.l.b16 %v963
    %v6014 = vunpack.c.l.b16 %v964
    %v6015 = vunpack.c.l.b16 %v965
    %v6016 = vunpack.c.l.b16 %v966
    %v6017 = vunpack.c.l.b16 %v967
    %v6018 = vunpack.c.l.b16 %v968
    %v6019 = vunpack.c.l.b16 %v969
    %v6020 = vunpack.c.l.b16 %v970
    %v6021 = vunpack.c.l.b16 %v971
    %v6022 = vunpack.c.l.b16 %v972
    %v6023 = vunpack.c.l.b16 %v973
    %v6024 = vunpack.c.l.b16 %v974
    %v6025 = vunpack.c.l.b16 %v975
    %v6026 = vunpack.c.l.b16 %v976
    %v6027 = vunpack.c.l.b16 %v977
    %v6028 = vunpack.c.l.b16 %v978
    %v6029 = vunpack.c.l.b16 %v979
    %v6030 = vunpack.c.l.b16 %v980
    %v6031 = vunpack.c.l.b16 %v981
    %v6032 = vunpack.c.l.b16 %v982
    %v6033 = vunpack.c.l.b16 %v983
    %v6034 = vunpack.c.l.b16 %v984
    %v6035 = vunpack.c.l.b16 %v985
    %v6036 = vunpack.c.l.b16 %v986
    %v6037 = vunpack.c.l.b16 %v987
    %v6038 = vunpack.c.l.b16 %v988
    %v6039 = vunpack.c.l.b16 %v989
    %v6040 = vunpack.c.l.b16 %v990
    %v6041 = vunpack.c.l.b16 %v991
    %v6042 = vunpack.c.l.b16 %v992
    %v6043 = vunpack.c.l.b16 %v993
    %v6044 = vunpack.c.l.b16 %v994
    %v6045 = vunpack.c.l.b16 %v995
    %v6046 = vunpack.c.l.b16 %v996
    %v6047 = vunpack.c.l.b16 %v997
    %v6048 = vunpack.c.l.b16 %v998
    %v6049 = vunpack.c.l.b16 %v999
    %v6050 = vunpack.c.l.b16 %v1000
    %v6051 = vunpack.c.l.b16 %v1001
    %v6052 = vunpack.c.l.b16 %v1002
    %v6053 = vunpack.c.l.b16 %v1003
    %v6054 = vunpack.c.l.b16 %v1004
    %v6055 = vunpack.c.l.b16 %v1005
    %v6056 = vunpack.c.l.b16 %v1006
    %v6057 = vunpack.c.l.b16 %v1007
    %v6058 = vunpack.c.l.b16 %v1008
    %v6059 = vunpack.c.l.b16 %v1009
    %v6060 = vunpack.c.l.b16 %v1010
    %v6061 = vunpack.c.l.b16 %v1011
    %v6062 = vunpack.c.l.b16 %v1012
    %v6063 = vunpack.c.l.b16 %v1013
    %v6064 = vunpack.c.l.b16 %v1014
    %v6065 = vunpack.c.l.b16 %v1015
    %v6066 = vunpack.c.l.b16 %v1016
    %v6067 = vunpack.c.l.b16 %v1017
    %v6068 = vunpack.c.l.b16 %v1018
    %v6069 = vunpack.c.l.b16 %v1019
    %v6070 = vunpack.c.l.b16 %v1020
    %v6071 = vunpack.c.l.b16 %v1021
    %v6072 = vunpack.c.l.b16 %v1022
    %v6073 = vunpack.c.l.b16 %v1023
    %v6074 = vunpack.c.l.b16 %v1024
    %v6075 = vunpack.c.l.b16 %v1025
    %v6076 = vunpack.c.l.b16 %v1026
    %v6077 = vunpack.c.l.b16 %v1027
    %v6078 = vunpack.c.l.b16 %v1028
    %v6079 = vunpack.c.l.b16 %v1029
    %v6080 = vunpack.c.l.b16 %v1030
    %v6081 = vunpack.c.l.b16 %v1031
    %v6082 = vunpack.c.l.b16 %v1032
    %v6083 = vunpack.c.l.b16 %v1033
    %v6084 = vunpack.c.l.b16 %v1034
    %v6085 = vunpack.c.l.b16 %v1035
    %v6086 = vunpack.c.l.b16 %v1036
    %v6087 = vunpack.c.l.b16 %v1037
    %v6088 = vunpack.c.l.b16 %v1038
    %v6089 = vunpack.c.l.b16 %v1039
    %v6090 = vunpack.c.l.b16 %v1040
    %v6091 = vunpack.c.l.b16 %v1041
    %v6092 = vunpack.c.l.b16 %v1042
    %v6093 = vunpack.c.l.b16 %v1043
    %v6094 = vunpack.c.l.b16 %v1044
    %v6095 = vunpack.c.l.b16 %v1045
    %v6096 = vunpack.c.l.b16 %v1046
    %v6097 = vunpack.c.l.b16 %v1047
    %v6098 = vunpack.c.l.b16 %v1048
    %v6099 = vunpack.c.l.b16 %v1049
    %v6100 = vunpack.c.l.b16 %v1050
    %v6101 = vunpack.c.l.b16 %v1051
    %v6102 = vunpack.c.l.b16 %v1052
    %v6103 = vunpack.c.l.b16 %v1053
    %v6104 = vunpack.c.l.b16 %v1054
    %v6105 = vunpack.c.l.b16 %v1055
    %v6106 = vunpack.c.l.b16 %v1056
    %v6107 = vunpack.c.l.b16 %v1057
    %v6108 = vunpack.c.l.b16 %v1058
    %v6109 = vunpack.c.l.b16 %v1059
    %v6110 = vunpack.c.l.b16 %v1060
    %v6111 = vunpack.c.l.b16 %v1061
    %v6112 = vunpack.c.l.b16 %v1062
    %v6113 = vunpack.c.l.b16 %v1063
    %v6114 = vunpack.c.l.b16 %v1064
    %v6115 = vunpack.c.l.b16 %v1065
    %v6116 = vunpack.c.l.b16 %v1066
    %v6117 = vunpack.c.l.b16 %v1067
    %v6118 = vunpack.c.l.b16 %v1068
    %v6119 = vunpack.c.l.b16 %v1069
    %v6120 = vunpack.c.l.b16 %v1070
    %v6121 = vunpack.c.l.b16 %v1071
    %v6122 = vunpack.c.l.b16 %v1072
    %v6123 = vunpack.c.l.b16 %v1073
    %v6124 = vunpack.c.l.b16 %v1074
    %v6125 = vunpack.c.l.b16 %v1075
    %v6126 = vunpack.c.l.b16 %v1076
    %v6127 = vunpack.c.l.b16 %v1077
    %v6128 = vunpack.c.l.b16 %v1078
    %v6129 = vunpack.c.l.b16 %v1079
    %v6130 = vunpack.c.l.b16 %v1080
    %v6131 = vunpack.c.l.b16 %v1081
    %v6132 = vunpack.c.l.b16 %v1082
    %v6133 = vunpack.c.l.b16 %v1083
    %v6134 = vunpack.c.l.b16 %v1084
    %v6135 = vunpack.c.l.b16 %v1085
    %v6136 = vunpack.c.l.b16 %v1086
    %v6137 = vunpack.c.l.b16 %v1087
    %v6138 = vunpack.c.l.b16 %v1088
    %v6139 = vunpack.c.l.b16 %v1089
    %v6140 = vunpack.c.l.b16 %v1090
    %v6141 = vunpack.c.l.b16 %v1091
    %v6142 = vunpack.c.l.b16 %v1092
    %v6143 = vunpack.c.l.b16 %v1093
    %v6144 = vunpack.c.l.b16 %v1094
    %v6145 = vunpack.c.l.b16 %v1095
    %v6146 = vunpack.c.l.b16 %v1096
    %v6147 = vunpack.c.l.b16 %v1097
    %v6148 = vunpack.c.l.b16 %v1098
    %v6149 = vunpack.c.l.b16 %v1099
    %v6150 = vunpack.c.l.b16 %v1100
    %v6151 = vunpack.c.l.b16 %v1101
    %v6152 = vunpack.c.l.b16 %v1102
    %v6153 = vunpack.c.l.b16 %v1103
    %v6154 = vunpack.c.l.b16 %v1104
    %v6155 = vunpack.c.l.b16 %v1105
    %v6156 = vunpack.c.l.b16 %v1106
    %v6157 = vunpack.c.l.b16 %v1107
    %v6158 = vunpack.c.l.b16 %v1108
    %v6159 = vunpack.c.l.b16 %v1109
    %v6160 = vunpack.c.l.b16 %v1110
    %v6161 = vunpack.c.l.b16 %v1111
    %v6162 = vunpack.c.l.b16 %v1112
    %v6163 = vunpack.c.l.b16 %v1113
    %v6164 = vunpack.c.l.b16 %v1114
    %v6165 = vunpack.c.l.b16 %v1115
    %v6166 = vunpack.c.l.b16 %v1116
    %v6167 = vunpack.c.l.b16 %v1117
    %v6168 = vunpack.c.l.b16 %v1118
    %v6169 = vunpack.c.l.b16 %v1119
    %v6170 = vunpack.c.l.b16 %v1120
    %v6171 = vunpack.c.l.b16 %v1121
    %v6172 = vunpack.c.l.b16 %v1122
    %v6173 = vunpack.c.l.b16 %v1123
    %v6174 = vunpack.c.l.b16 %v1124
    %v6175 = vunpack.c.l.b16 %v1125
    %v6176 = vunpack.c.l.b16 %v1126
    %v6177 = vunpack.c.l.b16 %v1127
    %v6178 = vunpack.c.l.b16 %v1128
    %v6179 = vunpack.c.l.b16 %v1129
    %v6180 = vunpack.c.l.b16 %v1130
    %v6181 = vunpack.c.l.b16 %v1131
    %v6182 = vunpack.c.l.b16 %v1132
    %v6183 = vunpack.c.l.b16 %v1133
    %v6184 = vunpack.c.l.b16 %v1134
    %v6185 = vunpack.c.l.b16 %v1135
    %v6186 = vunpack.c.l.b16 %v1136
    %v6187 = vunpack.c.l.b16 %v1137
    %v6188 = vunpack.c.l.b16 %v1138
    %v6189 = vunpack.c.l.b16 %v1139
    %v6190 = vunpack.c.l.b16 %v1140
    %v6191 = vunpack.c.l.b16 %v1141
    %v6192 = vunpack.c.l.b16 %v1142
    %v6193 = vunpack.c.l.b16 %v1143
    %v6194 = vunpack.c.l.b16 %v1144
    %v6195 = vunpack.c.l.b16 %v1145
    %v6196 = vunpack.c.l.b16 %v1146
    %v6197 = vunpack.c.l.b16 %v1147
    %v6198 = vunpack.c.l.b16 %v1148
    %v6199 = vunpack.c.l.b16 %v1149
    %v6200 = vunpack.c.l.b16 %v1150
    %v6201 = vunpack.c.l.b16 %v1151
    %v6202 = vunpack.c.l.b16 %v1152
    %v6203 = vunpack.c.l.b16 %v1153
    %v6204 = vunpack.c.l.b16 %v1154
    %v6205 = vunpack.c.l.b16 %v1155
    %v6206 = vunpack.c.l.b16 %v1156
    %v6207 = vunpack.c.l.b16 %v1157
    %v6208 = vunpack.c.l.b16 %v1158
    %v6209 = vunpack.c.l.b16 %v1159
    %v6210 = vunpack.c.l.b16 %v1160
    %v6211 = vunpack.c.l.b16 %v1161
    %v6212 = vunpack.c.l.b16 %v1162
    %v6213 = vunpack.c.l.b16 %v1163
    %v6214 = vunpack.c.l.b16 %v1164
    %v6215 = vunpack.c.l.b16 %v1165
    %v6216 = vunpack.c.l.b16 %v1166
    %v6217 = vunpack.c.l.b16 %v1167
    %v6218 = vunpack.c.l.b16 %v1168
    %v6219 = vunpack.c.l.b16 %v1169
    %v6220 = vunpack.c.l.b16 %v1170
    %v6221 = vunpack.c.l.b16 %v1171
    %v6222 = vunpack.c.l.b16 %v1172
    %v6223 = vunpack.c.l.b16 %v1173
    %v6224 = vunpack.c.l.b16 %v1174
    %v6225 = vunpack.c.l.b16 %v1175
    %v6226 = vunpack.c.l.b16 %v1176
    %v6227 = vunpack.c.l.b16 %v1177
    %v6228 = vunpack.c.l.b16 %v1178
    %v6229 = vunpack.c.l.b16 %v1179
    %v6230 = vunpack.c.l.b16 %v1180
    %v6231 = vunpack.c.l.b16 %v1181
    %v6232 = vunpack.c.l.b16 %v1182
    %v6233 = vunpack.c.l.b16 %v1183
    %v6234 = vunpack.c.l.b16 %v1184
    %v6235 = vunpack.c.l.b16 %v1185
    %v6236 = vunpack.c.l.b16 %v1186
    %v6237 = vunpack.c.l.b16 %v1187
    %v6238 = vunpack.c.l.b16 %v1188
    %v6239 = vunpack.c.l.b16 %v1189
    %v6240 = vunpack.c.l.b16 %v1190
    %v6241 = vunpack.c.l.b16 %v1191
    %v6242 = vunpack.c.l.b16 %v1192
    %v6243 = vunpack.c.l.b16 %v1193
    %v6244 = vunpack.c.l.b16 %v1194
    %v6245 = vunpack.c.l.b16 %v1195
    %v6246 = vunpack.c.l.b16 %v1196
    %v6247 = vunpack.c.l.b16 %v1197
    %v6248 = vunpack.c.l.b16 %v1198
    %v6249 = vunpack.c.l.b16 %v1199
    %v6250 = vunpack.c.l.b16 %v1200
    %v6251 = vunpack.c.l.b16 %v1201
    %v6252 = vunpack.c.l.b16 %v1202
    %v6253 = vunpack.c.l.b16 %v1203
    %v6254 = vunpack.c.l.b16 %v1204
    %v6255 = vunpack.c.l.b16 %v1205
    %v6256 = vunpack.c.l.b16 %v1206
    %v6257 = vunpack.c.l.b16 %v1207
    %v6258 = vunpack.c.l.b16 %v1208
    %v6259 = vunpack.c.l.b16 %v1209
    %v6260 = vunpack.c.l.b16 %v1210
    %v6261 = vunpack.c.l.b16 %v1211
    %v6262 = vunpack.c.l.b16 %v1212
    %v6263 = vunpack.c.l.b16 %v1213
    %v6264 = vunpack.c.l.b16 %v1214
    %v6265 = vunpack.c.l.b16 %v1215
    %v6266 = vunpack.c.l.b16 %v1216
    %v6267 = vunpack.c.l.b16 %v1217
    %v6268 = vunpack.c.l.b16 %v1218
    %v6269 = vunpack.c.l.b16 %v1219
    %v6270 = vunpack.c.l.b16 %v1220
    %v6271 = vunpack.c.l.b16 %v1221
    %v6272 = vunpack.c.l.b16 %v1222
    %v6273 = vunpack.c.l.b16 %v1223
    %v6274 = vunpack.c.l.b16 %v1224
    %v6275 = vunpack.c.l.b16 %v1225
    %v6276 = vunpack.c.l.b16 %v1226
    %v6277 = vunpack.c.l.b16 %v1227
    %v6278 = vunpack.c.l.b16 %v1228
    %v6279 = vunpack.c.l.b16 %v1229
    %v6280 = vunpack.c.l.b16 %v1230
    %v6281 = vunpack.c.l.b16 %v1231
    %v6282 = vunpack.c.l.b16 %v1232
    %v6283 = vunpack.c.l.b16 %v1233
    %v6284 = vunpack.c.l.b16 %v1234
    %v6285 = vunpack.c.l.b16 %v1235
    %v6286 = vunpack.c.l.b16 %v1236
    %v6287 = vunpack.c.l.b16 %v1237
    %v6288 = vunpack.c.l.b16 %v1238
    %v6289 = vunpack.c.l.b16 %v1239
    %v6290 = vunpack.c.l.b16 %v1240
    %v6291 = vunpack.c.l.b16 %v1241
    %v6292 = vunpack.c.l.b16 %v1242
    %v6293 = vunpack.c.l.b16 %v1243
    %v6294 = vunpack.c.l.b16 %v1244
    %v6295 = vunpack.c.l.b16 %v1245
    %v6296 = vunpack.c.l.b16 %v1246
    %v6297 = vunpack.c.l.b16 %v1247
    %v6298 = vunpack.c.l.b16 %v1248
    %v6299 = vunpack.c.l.b16 %v1249
    %v6300 = vunpack.c.l.b16 %v1250
    %v6301 = vunpack.c.l.b16 %v1251
    %v6302 = vunpack.c.l.b16 %v1252
    %v6303 = vunpack.c.l.b16 %v1253
    %v6304 = vunpack.c.l.b16 %v1254
    %v6305 = vunpack.c.l.b16 %v1255
    %v6306 = vunpack.c.l.b16 %v1256
    %v6307 = vunpack.c.l.b16 %v1257
    %v6308 = vunpack.c.l.b16 %v1258
    %v6309 = vunpack.c.l.b16 %v1259
    %v6310 = vunpack.c.l.b16 %v1260
    %v6311 = vunpack.c.l.b16 %v1261
    %v6312 = vunpack.c.l.b16 %v1262
    %v6313 = vunpack.c.l.b16 %v1263
    %v6314 = vunpack.c.l.b16 %v1264
    %v6315 = vunpack.c.l.b16 %v1265
    %v6316 = vunpack.c.l.b16 %v1266
    %v6317 = vunpack.c.l.b16 %v1267
    %v6318 = vunpack.c.l.b16 %v1268
    %v6319 = vunpack.c.l.b16 %v1269
    %v6320 = vunpack.c.l.b16 %v1270
    %v6321 = vunpack.c.l.b16 %v1271
    %v6322 = vunpack.c.l.b16 %v1272
    %v6323 = vunpack.c.l.b16 %v1273
    %v6324 = vunpack.c.l.b16 %v1274
    %v6325 = vunpack.c.l.b16 %v1275
    %v6326 = vunpack.c.l.b16 %v1276
    %v6327 = vunpack.c.l.b16 %v1277
    %v6328 = vunpack.c.l.b16 %v1278
    %v6329 = vunpack.c.l.b16 %v1279
    %v6330 = vunpack.c.l.b16 %v1280
    %v6331 = vunpack.c.l.b16 %v1281
    %v6332 = vunpack.c.l.b16 %v1282
    %v6333 = vunpack.c.l.b16 %v1283
    %v6334 = vunpack.c.l.b16 %v1284
    %v6335 = vunpack.c.l.b16 %v1285
    %v6336 = vunpack.c.l.b16 %v1286
    %v6337 = vunpack.c.l.b16 %v1287
    %v6338 = vunpack.c.l.b16 %v1288
    %v6339 = vunpack.c.l.b16 %v1289
    %v6340 = vunpack.c.l.b16 %v1290
    %v6341 = vunpack.c.l.b16 %v1291
    %v6342 = vunpack.c.l.b16 %v1292
    %v6343 = vunpack.c.l.b16 %v1293
    %v6344 = vunpack.c.l.b16 %v1294
    %v6345 = vunpack.c.l.b16 %v1295
    %v6346 = vunpack.c.l.b16 %v1296
    %v6347 = vunpack.c.l.b16 %v1297
    %v6348 = vunpack.c.l.b16 %v1298
    %v6349 = vunpack.c.l.b16 %v1299
    %v6350 = vunpack.c.l.b16 %v1300
    %v6351 = vunpack.c.l.b16 %v1301
    %v6352 = vunpack.c.l.b16 %v1302
    %v6353 = vunpack.c.l.b16 %v1303
    %v6354 = vunpack.c.l.b16 %v1304
    %v6355 = vunpack.c.l.b16 %v1305
    %v6356 = vunpack.c.l.b16 %v1306
    %v6357 = vunpack.c.l.b16 %v1307
    %v6358 = vunpack.c.l.b16 %v1308
    %v6359 = vunpack.c.l.b16 %v1309
    %v6360 = vunpack.c.l.b16 %v1310
    %v6361 = vunpack.c.l.b16 %v1311
    %v6362 = vunpack.c.l.b16 %v1312
    %v6363 = vunpack.c.l.b16 %v1313
    %v6364 = vunpack.c.l.b16 %v1314
    %v6365 = vunpack.c.l.b16 %v1315
    %v6366 = vunpack.c.l.b16 %v1316
    %v6367 = vunpack.c.l.b16 %v1317
    %v6368 = vunpack.c.l.b16 %v1318
    %v6369 = vunpack.c.l.b16 %v1319
    %v6370 = vunpack.c.l.b16 %v1320
    %v6371 = vunpack.c.l.b16 %v1321
    %v6372 = vunpack.c.l.b16 %v1322
    %v6373 = vunpack.c.l.b16 %v1323
    %v6374 = vunpack.c.l.b16 %v1324
    %v6375 = vunpack.c.l.b16 %v1325
    %v6376 = vunpack.c.l.b16 %v1326
    %v6377 = vunpack.c.l.b16 %v1327
    %v6378 = vunpack.c.l.b16 %v1328
    %v6379 = vunpack.c.l.b16 %v1329
    %v6380 = vunpack.c.l.b16 %v1330
    %v6381 = vunpack.c.l.b16 %v1331
    %v6382 = vunpack.c.l.b16 %v1332
    %v6383 = vunpack.c.l.b16 %v1333
    %v6384 = vunpack.c.l.b16 %v1334
    %v6385 = vunpack.c.l.b16 %v1335
    %v6386 = vunpack.c.l.b16 %v1336
    %v6387 = vunpack.c.l.b16 %v1337
    %v6388 = vunpack.c.l.b16 %v1338
    %v6389 = vunpack.c.l.b16 %v1339
    %v6390 = vunpack.c.l.b16 %v1340
    %v6391 = vunpack.c.l.b16 %v1341
    %v6392 = vunpack.c.l.b16 %v1342
    %v6393 = vunpack.c.l.b16 %v1343
    %v6394 = vunpack.c.l.b16 %v1344
    %v6395 = vunpack.c.l.b16 %v1345
    %v6396 = vunpack.c.l.b16 %v1346
    %v6397 = vunpack.c.l.b16 %v1347
    %v6398 = vunpack.c.l.b16 %v1348
    %v6399 = vunpack.c.l.b16 %v1349
    %v6400 = vunpack.c.l.b16 %v1350
    %v6401 = vunpack.c.l.b16 %v1351
    %v6402 = vunpack.c.l.b16 %v1352
    %v6403 = vunpack.c.l.b16 %v1353
    %v6404 = vunpack.c.l.b16 %v1354
    %v6405 = vunpack.c.l.b16 %v1355
    %v6406 = vunpack.c.l.b16 %v1356
    %v6407 = vunpack.c.l.b16 %v1357
    %v6408 = vunpack.c.l.b16 %v1358
    %v6409 = vunpack.c.l.b16 %v1359
    %v6410 = vunpack.c.l.b16 %v1360
    %v6411 = vunpack.c.l.b16 %v1361
    %v6412 = vunpack.c.l.b16 %v1362
    %v6413 = vunpack.c.l.b16 %v1363
    %v6414 = vunpack.c.l.b16 %v1364
    %v6415 = vunpack.c.l.b16 %v1365
    %v6416 = vunpack.c.l.b16 %v1366
    %v6417 = vunpack.c.l.b16 %v1367
    %v6418 = vunpack.c.l.b16 %v1368
    %v6419 = vunpack.c.l.b16 %v1369
    %v6420 = vunpack.c.l.b16 %v1370
    %v6421 = vunpack.c.l.b16 %v1371
    %v6422 = vunpack.c.l.b16 %v1372
    %v6423 = vunpack.c.l.b16 %v1373
    %v6424 = vunpack.c.l.b16 %v1374
    %v6425 = vunpack.c.l.b16 %v1375
    %v6426 = vunpack.c.l.b16 %v1376
    %v6427 = vunpack.c.l.b16 %v1377
    %v6428 = vunpack.c.l.b16 %v1378
    %v6429 = vunpack.c.l.b16 %v1379
    %v6430 = vunpack.c.l.b16 %v1380
    %v6431 = vunpack.c.l.b16 %v1381
    %v6432 = vunpack.c.l.b16 %v1382
    %v6433 = vunpack.c.l.b16 %v1383
    %v6434 = vunpack.c.l.b16 %v1384
    %v6435 = vunpack.c.l.b16 %v1385
    %v6436 = vunpack.c.l.b16 %v1386
    %v6437 = vunpack.c.l.b16 %v1387
    %v6438 = vunpack.c.l.b16 %v1388
    %v6439 = vunpack.c.l.b16 %v1389
    %v6440 = vunpack.c.l.b16 %v1390
    %v6441 = vunpack.c.l.b16 %v1391
    %v6442 = vunpack.c.l.b16 %v1392
    %v6443 = vunpack.c.l.b16 %v1393
    %v6444 = vunpack.c.l.b16 %v1394
    %v6445 = vunpack.c.l.b16 %v1395
    %v6446 = vunpack.c.l.b16 %v1396
    %v6447 = vunpack.c.l.b16 %v1397
    %v6448 = vunpack.c.l.b16 %v1398
    %v6449 = vunpack.c.l.b16 %v1399
    %v6450 = vunpack.c.l.b16 %v1400
    %v6451 = vunpack.c.l.b16 %v1401
    %v6452 = vunpack.c.l.b16 %v1402
    %v6453 = vunpack.c.l.b16 %v1403
    %v6454 = vunpack.c.l.b16 %v1404
    %v6455 = vunpack.c.l.b16 %v1405
    %v6456 = vunpack.c.l.b16 %v1406
    %v6457 = vunpack.c.l.b16 %v1407
    %v6458 = vunpack.c.l.b16 %v1408
    %v6459 = vunpack.c.l.b16 %v1409
    %v6460 = vunpack.c.l.b16 %v1410
    %v6461 = vunpack.c.l.b16 %v1411
    %v6462 = vunpack.c.l.b16 %v1412
    %v6463 = vunpack.c.l.b16 %v1413
    %v6464 = vunpack.c.l.b16 %v1414
    %v6465 = vunpack.c.l.b16 %v1415
    %v6466 = vunpack.c.l.b16 %v1416
    %v6467 = vunpack.c.l.b16 %v1417
    %v6468 = vunpack.c.l.b16 %v1418
    %v6469 = vunpack.c.l.b16 %v1419
    %v6470 = vunpack.c.l.b16 %v1420
    %v6471 = vunpack.c.l.b16 %v1421
    %v6472 = vunpack.c.l.b16 %v1422
    %v6473 = vunpack.c.l.b16 %v1423
    %v6474 = vunpack.c.l.b16 %v1424
    %v6475 = vunpack.c.l.b16 %v1425
    %v6476 = vunpack.c.l.b16 %v1426
    %v6477 = vunpack.c.l.b16 %v1427
    %v6478 = vunpack.c.l.b16 %v1428
    %v6479 = vunpack.c.l.b16 %v1429
    %v6480 = vunpack.c.l.b16 %v1430
    %v6481 = vunpack.c.l.b16 %v1431
    %v6482 = vunpack.c.l.b16 %v1432
    %v6483 = vunpack.c.l.b16 %v1433
    %v6484 = vunpack.c.l.b16 %v1434
    %v6485 = vunpack.c.l.b16 %v1435
    %v6486 = vunpack.c.l.b16 %v1436
    %v6487 = vunpack.c.l.b16 %v1437
    %v6488 = vunpack.c.l.b16 %v1438
    %v6489 = vunpack.c.l.b16 %v1439
    %v6490 = vunpack.c.l.b16 %v1440
    %v6491 = vunpack.c.l.b16 %v1441
    %v6492 = vunpack.c.l.b16 %v1442
    %v6493 = vunpack.c.l.b16 %v1443
    %v6494 = vunpack.c.l.b16 %v1444
    %v6495 = vunpack.c.l.b16 %v1445
    %v6496 = vunpack.c.l.b16 %v1446
    %v6497 = vunpack.c.l.b16 %v1447
    %v6498 = vunpack.c.l.b16 %v1448
    %v6499 = vunpack.c.l.b16 %v1449
    %v6500 = vunpack.c.l.b16 %v1450
    %v6501 = vunpack.c.l.b16 %v1451
    %v6502 = vunpack.c.l.b16 %v1452
    %v6503 = vunpack.c.l.b16 %v1453
    %v6504 = vunpack.c.l.b16 %v1454
    %v6505 = vunpack.c.l.b16 %v1455
    %v6506 = vunpack.c.l.b16 %v1456
    %v6507 = vunpack.c.l.b16 %v1457
    %v6508 = vunpack.c.l.b16 %v1458
    %v6509 = vunpack.c.l.b16 %v1459
    %v6510 = vunpack.c.l.b16 %v1460
    %v6511 = vunpack.c.l.b16 %v1461
    %v6512 = vunpack.c.l.b16 %v1462
    %v6513 = vunpack.c.l.b16 %v1463
    %v6514 = vunpack.c.l.b16 %v1464
    %v6515 = vunpack.c.l.b16 %v1465
    %v6516 = vunpack.c.l.b16 %v1466
    %v6517 = vunpack.c.l.b16 %v1467
    %v6518 = vunpack.c.l.b16 %v1468
    %v6519 = vunpack.c.l.b16 %v1469
    %v6520 = vunpack.c.l.b16 %v1470
    %v6521 = vunpack.c.l.b16 %v1471
    %v6522 = vunpack.c.l.b16 %v1472
    %v6523 = vunpack.c.l.b16 %v1473
    %v6524 = vunpack.c.l.b16 %v1474
    %v6525 = vunpack.c.l.b16 %v1475
    %v6526 = vunpack.c.l.b16 %v1476
    %v6527 = vunpack.c.l.b16 %v1477
    %v6528 = vunpack.c.l.b16 %v1478
    %v6529 = vunpack.c.l.b16 %v1479
    %v6530 = vunpack.c.l.b16 %v1480
    %v6531 = vunpack.c.l.b16 %v1481
    %v6532 = vunpack.c.l.b16 %v1482
    %v6533 = vunpack.c.l.b16 %v1483
    %v6534 = vunpack.c.l.b16 %v1484
    %v6535 = vunpack.c.l.b16 %v1485
    %v6536 = vunpack.c.l.b16 %v1486
    %v6537 = vunpack.c.l.b16 %v1487
    %v6538 = vunpack.c.l.b16 %v1488
    %v6539 = vunpack.c.l.b16 %v1489
    %v6540 = vunpack.c.l.b16 %v1490
    %v6541 = vunpack.c.l.b16 %v1491
    %v6542 = vunpack.c.l.b16 %v1492
    %v6543 = vunpack.c.l.b16 %v1493
    %v6544 = vunpack.c.l.b16 %v1494
    %v6545 = vunpack.c.l.b16 %v1495
    %v6546 = vunpack.c.l.b16 %v1496
    %v6547 = vunpack.c.l.b16 %v1497
    %v6548 = vunpack.c.l.b16 %v1498
    %v6549 = vunpack.c.l.b16 %v1499
    %v6550 = vunpack.c.l.b16 %v1500
    %v6551 = vunpack.c.l.b16 %v1501
    %v6552 = vunpack.c.l.b16 %v1502
    %v6553 = vunpack.c.l.b16 %v1503
    %v6554 = vunpack.c.l.b16 %v1504
    %v6555 = vunpack.c.l.b16 %v1505
    %v6556 = vunpack.c.l.b16 %v1506
    %v6557 = vunpack.c.l.b16 %v1507
    %v6558 = vunpack.c.l.b16 %v1508
    %v6559 = vunpack.c.l.b16 %v1509
    %v6560 = vunpack.c.l.b16 %v1510
    %v6561 = vunpack.c.l.b16 %v1511
    %v6562 = vunpack.c.l.b16 %v1512
    %v6563 = vunpack.c.l.b16 %v1513
    %v6564 = vunpack.c.l.b16 %v1514
    %v6565 = vunpack.c.l.b16 %v1515
    %v6566 = vunpack.c.l.b16 %v1516
    %v6567 = vunpack.c.l.b16 %v1517
    %v6568 = vunpack.c.l.b16 %v1518
    %v6569 = vunpack.c.l.b16 %v1519
    %v6570 = vunpack.c.l.b16 %v1520
    %v6571 = vunpack.c.l.b16 %v1521
    %v6572 = vunpack.c.l.b16 %v1522
    %v6573 = vunpack.c.l.b16 %v1523
    %v6574 = vunpack.c.l.b16 %v1524
    %v6575 = vunpack.c.l.b16 %v1525
    %v6576 = vunpack.c.l.b16 %v1526
    %v6577 = vunpack.c.l.b16 %v1527
    %v6578 = vunpack.c.l.b16 %v1528
    %v6579 = vunpack.c.l.b16 %v1529
    %v6580 = vunpack.c.l.b16 %v1530
    %v6581 = vunpack.c.l.b16 %v1531
    %v6582 = vunpack.c.l.b16 %v1532
    %v6583 = vunpack.c.l.b16 %v1533
    %v6584 = vunpack.c.l.b16 %v1534
    %v6585 = vunpack.c.l.b16 %v1535
    %v6586 = vunpack.c.l.b16 %v1536
    %v6587 = vunpack.c.l.b16 %v1537
    %v6588 = vunpack.c.l.b16 %v1538
    %v6589 = vunpack.c.l.b16 %v1539
    %v6590 = vunpack.c.l.b16 %v1540
    %v6591 = vunpack.c.l.b16 %v1541
    %v6592 = vunpack.c.l.b16 %v1542
    %v6593 = vunpack.c.l.b16 %v1543
    %v6594 = vunpack.c.l.b16 %v1544
    %v6595 = vunpack.c.l.b16 %v1545
    %v6596 = vunpack.c.l.b16 %v1546
    %v6597 = vunpack.c.l.b16 %v1547
    %v6598 = vunpack.c.l.b16 %v1548
    %v6599 = vunpack.c.l.b16 %v1549
    %v6600 = vunpack.c.l.b16 %v1550
    %v6601 = vunpack.c.l.b16 %v1551
    %v6602 = vunpack.c.l.b16 %v1552
    %v6603 = vunpack.c.l.b16 %v1553
    %v6604 = vunpack.c.l.b16 %v1554
    %v6605 = vunpack.c.l.b16 %v1555
    %v6606 = vunpack.c.l.b16 %v1556
    %v6607 = vunpack.c.l.b16 %v1557
    %v6608 = vunpack.c.l.b16 %v1558
    %v6609 = vunpack.c.l.b16 %v1559
    %v6610 = vunpack.c.l.b16 %v1560
    %v6611 = vunpack.c.l.b16 %v1561
    %v6612 = vunpack.c.l.b16 %v1562
    %v6613 = vunpack.c.l.b16 %v1563
    %v6614 = vunpack.c.l.b16 %v1564
    %v6615 = vunpack.c.l.b16 %v1565
    %v6616 = vunpack.c.l.b16 %v1566
    %v6617 = vunpack.c.l.b16 %v1567
    %v6618 = vunpack.c.l.b16 %v1568
    %v6619 = vunpack.c.l.b16 %v1569
    %v6620 = vunpack.c.l.b16 %v1570
    %v6621 = vunpack.c.l.b16 %v1571
    %v6622 = vunpack.c.l.b16 %v1572
    %v6623 = vunpack.c.l.b16 %v1573
    %v6624 = vunpack.c.l.b16 %v1574
    %v6625 = vunpack.c.l.b16 %v1575
    %v6626 = vunpack.c.l.b16 %v1576
    %v6627 = vunpack.c.l.b16 %v1577
    %v6628 = vunpack.c.l.b16 %v1578
    %v6629 = vunpack.c.l.b16 %v1579
    %v6630 = vunpack.c.l.b16 %v1580
    %v6631 = vunpack.c.l.b16 %v1581
    %v6632 = vunpack.c.l.b16 %v1582
    %v6633 = vunpack.c.l.b16 %v1583
    %v6634 = vunpack.c.l.b16 %v1584
    %v6635 = vunpack.c.l.b16 %v1585
    %v6636 = vunpack.c.l.b16 %v1586
    %v6637 = vunpack.c.l.b16 %v1587
    %v6638 = vunpack.c.l.b16 %v1588
    %v6639 = vunpack.c.l.b16 %v1589
    %v6640 = vunpack.c.l.b16 %v1590
    %v6641 = vunpack.c.l.b16 %v1591
    %v6642 = vunpack.c.l.b16 %v1592
    %v6643 = vunpack.c.l.b16 %v1593
    %v6644 = vunpack.c.l.b16 %v1594
    %v6645 = vunpack.c.l.b16 %v1595
    %v6646 = vunpack.c.l.b16 %v1596
    %v6647 = vunpack.c.l.b16 %v1597
    %v6648 = vunpack.c.l.b16 %v1598
    %v6649 = vunpack.c.l.b16 %v1599
    %v6650 = vunpack.c.l.b16 %v1600
    %v6651 = vunpack.c.l.b16 %v1601
    %v6652 = vunpack.c.l.b16 %v1602
    %v6653 = vunpack.c.l.b16 %v1603
    %v6654 = vunpack.c.l.b16 %v1604
    %v6655 = vunpack.c.l.b16 %v1605
    %v6656 = vunpack.c.l.b16 %v1606
    %v6657 = vunpack.c.l.b16 %v1607
    %v6658 = vunpack.c.l.b16 %v1608
    %v6659 = vunpack.c.l.b16 %v1609
    %v6660 = vunpack.c.l.b16 %v1610
    %v6661 = vunpack.c.l.b16 %v1611
    %v6662 = vunpack.c.l.b16 %v1612
    %v6663 = vunpack.c.l.b16 %v1613
    %v6664 = vunpack.c.l.b16 %v1614
    %v6665 = vunpack.c.l.b16 %v1615
    %v6666 = vunpack.c.l.b16 %v1616
    %v6667 = vunpack.c.l.b16 %v1617
    %v6668 = vunpack.c.l.b16 %v1618
    %v6669 = vunpack.c.l.b16 %v1619
    %v6670 = vunpack.c.l.b16 %v1620
    %v6671 = vunpack.c.l.b16 %v1621
    %v6672 = vunpack.c.l.b16 %v1622
    %v6673 = vunpack.c.l.b16 %v1623
    %v6674 = vunpack.c.l.b16 %v1624
    %v6675 = vunpack.c.l.b16 %v1625
    %v6676 = vunpack.c.l.b16 %v1626
    %v6677 = vunpack.c.l.b16 %v1627
    %v6678 = vunpack.c.l.b16 %v1628
    %v6679 = vunpack.c.l.b16 %v1629
    %v6680 = vunpack.c.l.b16 %v1630
    %v6681 = vunpack.c.l.b16 %v1631
    %v6682 = vunpack.c.l.b16 %v1632
    %v6683 = vunpack.c.l.b16 %v1633
    %v6684 = vunpack.c.l.b16 %v1634
    %v6685 = vunpack.c.l.b16 %v1635
    %v6686 = vunpack.c.l.b16 %v1636
    %v6687 = vunpack.c.l.b16 %v1637
    %v6688 = vunpack.c.l.b16 %v1638
    %v6689 = vunpack.c.l.b16 %v1639
    %v6690 = vunpack.c.l.b16 %v1640
    %v6691 = vunpack.c.l.b16 %v1641
    %v6692 = vunpack.c.l.b16 %v1642
    %v6693 = vunpack.c.l.b16 %v1643
    %v6694 = vunpack.c.l.b16 %v1644
    %v6695 = vunpack.c.l.b16 %v1645
    %v6696 = vunpack.c.l.b16 %v1646
    %v6697 = vunpack.c.l.b16 %v1647
    %v6698 = vunpack.c.l.b16 %v1648
    %v6699 = vunpack.c.l.b16 %v1649
    %v6700 = vunpack.c.l.b16 %v1650
    %v6701 = vunpack.c.l.b16 %v1651
    %v6702 = vunpack.c.l.b16 %v1652
    %v6703 = vunpack.c.l.b16 %v1653
    %v6704 = vunpack.c.l.b16 %v1654
    %v6705 = vunpack.c.l.b16 %v1655
    %v6706 = vunpack.c.l.b16 %v1656
    %v6707 = vunpack.c.l.b16 %v1657
    %v6708 = vunpack.c.l.b16 %v1658
    %v6709 = vunpack.c.l.b16 %v1659
    %v6710 = vunpack.c.l.b16 %v1660
    %v6711 = vunpack.c.l.b16 %v1661
    %v6712 = vunpack.c.l.b16 %v1662
    %v6713 = vunpack.c.l.b16 %v1663
    %v6714 = vunpack.c.l.b16 %v1664
    %v6715 = vunpack.c.l.b16 %v1665
    %v6716 = vunpack.c.l.b16 %v1666
    %v6717 = vunpack.c.l.b16 %v1667
    %v6718 = vunpack.c.l.b16 %v1668
    %v6719 = vunpack.c.l.b16 %v1669
    %v6720 = vunpack.c.l.b16 %v1670
    %v6721 = vunpack.c.l.b16 %v1671
    %v6722 = vunpack.c.l.b16 %v1672
    %v6723 = vunpack.c.l.b16 %v1673
    %v6724 = vunpack.c.l.b16 %v1674
    %v6725 = vunpack.c.l.b16 %v1675
    %v6726 = vunpack.c.l.b16 %v1676
    %v6727 = vunpack.c.l.b16 %v1677
    %v6728 = vunpack.c.l.b16 %v1678
    %v6729 = vunpack.c.l.b16 %v1679
    %v6730 = vunpack.c.l.b16 %v1680
    %v6731 = vunpack.c.l.b16 %v1681
    %v6732 = vunpack.c.l.b16 %v1682
    %v6733 = vunpack.c.l.b16 %v1683
    %v6734 = vunpack.c.l.b16 %v1684
    %v6735 = vunpack.c.l.b16 %v1685
    %v6736 = vunpack.c.l.b16 %v1686
    %v6737 = vunpack.c.l.b16 %v1687
    %v6738 = vunpack.c.l.b16 %v1688
    %v6739 = vunpack.c.l.b16 %v1689
    %v6740 = vunpack.c.l.b16 %v1690
    %v6741 = vunpack.c.l.b16 %v1691
    %v6742 = vunpack.c.l.b16 %v1692
    %v6743 = vunpack.c.l.b16 %v1693
    %v6744 = vunpack.c.l.b16 %v1694
    %v6745 = vunpack.c.l.b16 %v1695
    %v6746 = vunpack.c.l.b16 %v1696
    %v6747 = vunpack.c.l.b16 %v1697
    %v6748 = vunpack.c.l.b16 %v1698
    %v6749 = vunpack.c.l.b16 %v1699
    %v6750 = vunpack.c.l.b16 %v1700
    %v6751 = vunpack.c.l.b16 %v1701
    %v6752 = vunpack.c.l.b16 %v1702
    %v6753 = vunpack.c.l.b16 %v1703
    %v6754 = vunpack.c.l.b16 %v1704
    %v6755 = vunpack.c.l.b16 %v1705
    %v6756 = vunpack.c.l.b16 %v1706
    %v6757 = vunpack.c.l.b16 %v1707
    %v6758 = vunpack.c.l.b16 %v1708
    %v6759 = vunpack.c.l.b16 %v1709
    %v6760 = vunpack.c.l.b16 %v1710
    %v6761 = vunpack.c.l.b16 %v1711
    %v6762 = vunpack.c.l.b16 %v1712
    %v6763 = vunpack.c.l.b16 %v1713
    %v6764 = vunpack.c.l.b16 %v1714
    %v6765 = vunpack.c.l.b16 %v1715
    %v6766 = vunpack.c.l.b16 %v1716
    %v6767 = vunpack.c.l.b16 %v1717
    %v6768 = vunpack.c.l.b16 %v1718
    %v6769 = vunpack.c.l.b16 %v1719
    %v6770 = vunpack.c.l.b16 %v1720
    %v6771 = vunpack.c.l.b16 %v1721
    %v6772 = vunpack.c.l.b16 %v1722
    %v6773 = vunpack.c.l.b16 %v1723
    %v6774 = vunpack.c.l.b16 %v1724
    %v6775 = vunpack.c.l.b16 %v1725
    %v6776 = vunpack.c.l.b16 %v1726
    %v6777 = vunpack.c.l.b16 %v1727
    %v6778 = vunpack.c.l.b16 %v1728
    %v6779 = vunpack.c.l.b16 %v1729
    %v6780 = vunpack.c.l.b16 %v1730
    %v6781 = vunpack.c.l.b16 %v1731
    %v6782 = vunpack.c.l.b16 %v1732
    %v6783 = vunpack.c.l.b16 %v1733
    %v6784 = vunpack.c.l.b16 %v1734
    %v6785 = vunpack.c.l.b16 %v1735
    %v6786 = vunpack.c.l.b16 %v1736
    %v6787 = vunpack.c.l.b16 %v1737
    %v6788 = vunpack.c.l.b16 %v1738
    %v6789 = vunpack.c.l.b16 %v1739
    %v6790 = vunpack.c.l.b16 %v1740
    %v6791 = vunpack.c.l.b16 %v1741
    %v6792 = vunpack.c.l.b16 %v1742
    %v6793 = vunpack.c.l.b16 %v1743
    %v6794 = vunpack.c.l.b16 %v1744
    %v6795 = vunpack.c.l.b16 %v1745
    %v6796 = vunpack.c.l.b16 %v1746
    %v6797 = vunpack.c.l.b16 %v1747
    %v6798 = vunpack.c.l.b16 %v1748
    %v6799 = vunpack.c.l.b16 %v1749
    %v6800 = vunpack.c.l.b16 %v1750
    %v6801 = vunpack.c.l.b16 %v1751
    %v6802 = vunpack.c.l.b16 %v1752
    %v6803 = vunpack.c.l.b16 %v1753
    %v6804 = vunpack.c.l.b16 %v1754
    %v6805 = vunpack.c.l.b16 %v1755
    %v6806 = vunpack.c.l.b16 %v1756
    %v6807 = vunpack.c.l.b16 %v1757
    %v6808 = vunpack.c.l.b16 %v1758
    %v6809 = vunpack.c.l.b16 %v1759
    %v6810 = vunpack.c.l.b16 %v1760
    %v6811 = vunpack.c.l.b16 %v1761
    %v6812 = vunpack.c.l.b16 %v1762
    %v6813 = vunpack.c.l.b16 %v1763
    %v6814 = vunpack.c.l.b16 %v1764
    %v6815 = vunpack.c.l.b16 %v1765
    %v6816 = vunpack.c.l.b16 %v1766
    %v6817 = vunpack.c.l.b16 %v1767
    %v6818 = vunpack.c.l.b16 %v1768
    %v6819 = vunpack.c.l.b16 %v1769
    %v6820 = vunpack.c.l.b16 %v1770
    %v6821 = vunpack.c.l.b16 %v1771
    %v6822 = vunpack.c.l.b16 %v1772
    %v6823 = vunpack.c.l.b16 %v1773
    %v6824 = vunpack.c.l.b16 %v1774
    %v6825 = vunpack.c.l.b16 %v1775
    %v6826 = vunpack.c.l.b16 %v1776
    %v6827 = vunpack.c.l.b16 %v1777
    %v6828 = vunpack.c.l.b16 %v1778
    %v6829 = vunpack.c.l.b16 %v1779
    %v6830 = vunpack.c.l.b16 %v1780
    %v6831 = vunpack.c.l.b16 %v1781
    %v6832 = vunpack.c.l.b16 %v1782
    %v6833 = vunpack.c.l.b16 %v1783
    %v6834 = vunpack.c.l.b16 %v1784
    %v6835 = vunpack.c.l.b16 %v1785
    %v6836 = vunpack.c.l.b16 %v1786
    %v6837 = vunpack.c.l.b16 %v1787
    %v6838 = vunpack.c.l.b16 %v1788
    %v6839 = vunpack.c.l.b16 %v1789
    %v6840 = vunpack.c.l.b16 %v1790
    %v6841 = vunpack.c.l.b16 %v1791
    %v6842 = vunpack.c.l.b16 %v1792
    %v6843 = vunpack.c.l.b16 %v1793
    %v6844 = vunpack.c.l.b16 %v1794
    %v6845 = vunpack.c.l.b16 %v1795
    %v6846 = vunpack.c.l.b16 %v1796
    %v6847 = vunpack.c.l.b16 %v1797
    %v6848 = vunpack.c.l.b16 %v1798
    %v6849 = vunpack.c.l.b16 %v1799
    %v6850 = vunpack.c.l.b16 %v1800
    %v6851 = vunpack.c.l.b16 %v1801
    %v6852 = vunpack.c.l.b16 %v1802
    %v6853 = vunpack.c.l.b16 %v1803
    %v6854 = vunpack.c.l.b16 %v1804
    %v6855 = vunpack.c.l.b16 %v1805
    %v6856 = vunpack.c.l.b16 %v1806
    %v6857 = vunpack.c.l.b16 %v1807
    %v6858 = vunpack.c.l.b16 %v1808
    %v6859 = vunpack.c.l.b16 %v1809
    %v6860 = vunpack.c.l.b16 %v1810
    %v6861 = vunpack.c.l.b16 %v1811
    %v6862 = vunpack.c.l.b16 %v1812
    %v6863 = vunpack.c.l.b16 %v1813
    %v6864 = vunpack.c.l.b16 %v1814
    %v6865 = vunpack.c.l.b16 %v1815
    %v6866 = vunpack.c.l.b16 %v1816
    %v6867 = vunpack.c.l.b16 %v1817
    %v6868 = vunpack.c.l.b16 %v1818
    %v6869 = vunpack.c.l.b16 %v1819
    %v6870 = vunpack.c.l.b16 %v1820
    %v6871 = vunpack.c.l.b16 %v1821
    %v6872 = vunpack.c.l.b16 %v1822
    %v6873 = vunpack.c.l.b16 %v1823
    %v6874 = vunpack.c.l.b16 %v1824
    %v6875 = vunpack.c.l.b16 %v1825
    %v6876 = vunpack.c.l.b16 %v1826
    %v6877 = vunpack.c.l.b16 %v1827
    %v6878 = vunpack.c.l.b16 %v1828
    %v6879 = vunpack.c.l.b16 %v1829
    %v6880 = vunpack.c.l.b16 %v1830
    %v6881 = vunpack.c.l.b16 %v1831
    %v6882 = vunpack.c.l.b16 %v1832
    %v6883 = vunpack.c.l.b16 %v1833
    %v6884 = vunpack.c.l.b16 %v1834
    %v6885 = vunpack.c.l.b16 %v1835
    %v6886 = vunpack.c.l.b16 %v1836
    %v6887 = vunpack.c.l.b16 %v1837
    %v6888 = vunpack.c.l.b16 %v1838
    %v6889 = vunpack.c.l.b16 %v1839
    %v6890 = vunpack.c.l.b16 %v1840
    %v6891 = vunpack.c.l.b16 %v1841
    %v6892 = vunpack.c.l.b16 %v1842
    %v6893 = vunpack.c.l.b16 %v1843
    %v6894 = vunpack.c.l.b16 %v1844
    %v6895 = vunpack.c.l.b16 %v1845
    %v6896 = vunpack.c.l.b16 %v1846
    %v6897 = vunpack.c.l.b16 %v1847
    %v6898 = vunpack.c.l.b16 %v1848
    %v6899 = vunpack.c.l.b16 %v1849
    %v6900 = vunpack.c.l.b16 %v1850
    %v6901 = vunpack.c.l.b16 %v1851
    %v6902 = vunpack.c.l.b16 %v1852
    %v6903 = vunpack.c.l.b16 %v1853
    %v6904 = vunpack.c.l.b16 %v1854
    %v6905 = vunpack.c.l.b16 %v1855
    %v6906 = vunpack.c.l.b16 %v1856
    %v6907 = vunpack.c.l.b16 %v1857
    %v6908 = vunpack.c.l.b16 %v1858
    %v6909 = vunpack.c.l.b16 %v1859
    %v6910 = vunpack.c.l.b16 %v1860
    %v6911 = vunpack.c.l.b16 %v1861
    %v6912 = vunpack.c.l.b16 %v1862
    %v6913 = vunpack.c.l.b16 %v1863
    %v6914 = vunpack.c.l.b16 %v1864
    %v6915 = vunpack.c.l.b16 %v1865
    %v6916 = vunpack.c.l.b16 %v1866
    %v6917 = vunpack.c.l.b16 %v1867
    %v6918 = vunpack.c.l.b16 %v1868
    %v6919 = vunpack.c.l.b16 %v1869
    %v6920 = vunpack.c.l.b16 %v1870
    %v6921 = vunpack.c.l.b16 %v1871
    %v6922 = vunpack.c.l.b16 %v1872
    %v6923 = vunpack.c.l.b16 %v1873
    %v6924 = vunpack.c.l.b16 %v1874
    %v6925 = vunpack.c.l.b16 %v1875
    %v6926 = vunpack.c.l.b16 %v1876
    %v6927 = vunpack.c.l.b16 %v1877
    %v6928 = vunpack.c.l.b16 %v1878
    %v6929 = vunpack.c.l.b16 %v1879
    %v6930 = vunpack.c.l.b16 %v1880
    %v6931 = vunpack.c.l.b16 %v1881
    %v6932 = vunpack.c.l.b16 %v1882
    %v6933 = vunpack.c.l.b16 %v1883
    %v6934 = vunpack.c.l.b16 %v1884
    %v6935 = vunpack.c.l.b16 %v1885
    %v6936 = vunpack.c.l.b16 %v1886
    %v6937 = vunpack.c.l.b16 %v1887
    %v6938 = vunpack.c.l.b16 %v1888
    %v6939 = vunpack.c.l.b16 %v1889
    %v6940 = vunpack.c.l.b16 %v1890
    %v6941 = vunpack.c.l.b16 %v1891
    %v6942 = vunpack.c.l.b16 %v1892
    %v6943 = vunpack.c.l.b16 %v1893
    %v6944 = vunpack.c.l.b16 %v1894
    %v6945 = vunpack.c.l.b16 %v1895
    %v6946 = vunpack.c.l.b16 %v1896
    %v6947 = vunpack.c.l.b16 %v1897
    %v6948 = vunpack.c.l.b16 %v1898
    %v6949 = vunpack.c.l.b16 %v1899
    %v6950 = vunpack.c.l.b16 %v1900
    %v6951 = vunpack.c.l.b16 %v1901
    %v6952 = vunpack.c.l.b16 %v1902
    %v6953 = vunpack.c.l.b16 %v1903
    %v6954 = vunpack.c.l.b16 %v1904
    %v6955 = vunpack.c.l.b16 %v1905
    %v6956 = vunpack.c.l.b16 %v1906
    %v6957 = vunpack.c.l.b16 %v1907
    %v6958 = vunpack.c.l.b16 %v1908
    %v6959 = vunpack.c.l.b16 %v1909
    %v6960 = vunpack.c.l.b16 %v1910
    %v6961 = vunpack.c.l.b16 %v1911
    %v6962 = vunpack.c.l.b16 %v1912
    %v6963 = vunpack.c.l.b16 %v1913
    %v6964 = vunpack.c.l.b16 %v1914
    %v6965 = vunpack.c.l.b16 %v1915
    %v6966 = vunpack.c.l.b16 %v1916
    %v6967 = vunpack.c.l.b16 %v1917
    %v6968 = vunpack.c.l.b16 %v1918
    %v6969 = vunpack.c.l.b16 %v1919
    %v6970 = vunpack.c.l.b16 %v1920
    %v6971 = vunpack.c.l.b16 %v1921
    %v6972 = vunpack.c.l.b16 %v1922
    %v6973 = vunpack.c.l.b16 %v1923
    %v6974 = vunpack.c.l.b16 %v1924
    %v6975 = vunpack.c.l.b16 %v1925
    %v6976 = vunpack.c.l.b16 %v1926
    %v6977 = vunpack.c.l.b16 %v1927
    %v6978 = vunpack.c.l.b16 %v1928
    %v6979 = vunpack.c.l.b16 %v1929
    %v6980 = vunpack.c.l.b16 %v1930
    %v6981 = vunpack.c.l.b16 %v1931
    %v6982 = vunpack.c.l.b16 %v1932
    %v6983 = vunpack.c.l.b16 %v1933
    %v6984 = vunpack.c.l.b16 %v1934
    %v6985 = vunpack.c.l.b16 %v1935
    %v6986 = vunpack.c.l.b16 %v1936
    %v6987 = vunpack.c.l.b16 %v1937
    %v6988 = vunpack.c.l.b16 %v1938
    %v6989 = vunpack.c.l.b16 %v1939
    %v6990 = vunpack.c.l.b16 %v1940
    %v6991 = vunpack.c.l.b16 %v1941
    %v6992 = vunpack.c.l.b16 %v1942
    %v6993 = vunpack.c.l.b16 %v1943
    %v6994 = vunpack.c.l.b16 %v1944
    %v6995 = vunpack.c.l.b16 %v1945
    %v6996 = vunpack.c.l.b16 %v1946
    %v6997 = vunpack.c.l.b16 %v1947
    %v6998 = vunpack.c.l.b16 %v1948
    %v6999 = vunpack.c.l.b16 %v1949
    %v7000 = vunpack.c.l.b16 %v1950
    %v7001 = vunpack.c.l.b16 %v1951
    %v7002 = vunpack.c.l.b16 %v1952
    %v7003 = vunpack.c.l.b16 %v1953
    %v7004 = vunpack.c.l.b16 %v1954
    %v7005 = vunpack.c.l.b16 %v1955
    %v7006 = vunpack.c.l.b16 %v1956
    %v7007 = vunpack.c.l.b16 %v1957
    %v7008 = vunpack.c.l.b16 %v1958
    %v7009 = vunpack.c.l.b16 %v1959
    %v7010 = vunpack.c.l.b16 %v1960
    %v7011 = vunpack.c.l.b16 %v1961
    %v7012 = vunpack.c.l.b16 %v1962
    %v7013 = vunpack.c.l.b16 %v1963
    %v7014 = vunpack.c.l.b16 %v1964
    %v7015 = vunpack.c.l.b16 %v1965
    %v7016 = vunpack.c.l.b16 %v1966
    %v7017 = vunpack.c.l.b16 %v1967
    %v7018 = vunpack.c.l.b16 %v1968
    %v7019 = vunpack.c.l.b16 %v1969
    %v7020 = vunpack.c.l.b16 %v1970
    %v7021 = vunpack.c.l.b16 %v1971
    %v7022 = vunpack.c.l.b16 %v1972
    %v7023 = vunpack.c.l.b16 %v1973
    %v7024 = vunpack.c.l.b16 %v1974
    %v7025 = vunpack.c.l.b16 %v1975
    %v7026 = vunpack.c.l.b16 %v1976
    %v7027 = vunpack.c.l.b16 %v1977
    %v7028 = vunpack.c.l.b16 %v1978
    %v7029 = vunpack.c.l.b16 %v1979
    %v7030 = vunpack.c.l.b16 %v1980
    %v7031 = vunpack.c.l.b16 %v1981
    %v7032 = vunpack.c.l.b16 %v1982
    %v7033 = vunpack.c.l.b16 %v1983
    %v7034 = vunpack.c.l.b16 %v1984
    %v7035 = vunpack.c.l.b16 %v1985
    %v7036 = vunpack.c.l.b16 %v1986
    %v7037 = vunpack.c.l.b16 %v1987
    %v7038 = vunpack.c.l.b16 %v1988
    %v7039 = vunpack.c.l.b16 %v1989
    %v7040 = vunpack.c.l.b16 %v1990
    %v7041 = vunpack.c.l.b16 %v1991
    %v7042 = vunpack.c.l.b16 %v1992
    %v7043 = vunpack.c.l.b16 %v1993
    %v7044 = vunpack.c.l.b16 %v1994
    %v7045 = vunpack.c.l.b16 %v1995
    %v7046 = vunpack.c.l.b16 %v1996
    %v7047 = vunpack.c.l.b16 %v1997
    %v7048 = vunpack.c.l.b16 %v1998
    %v7049 = vunpack.c.l.b16 %v1999
    %v7050 = vunpack.c.l.b16 %v2000
    %v7051 = vunpack.c.l.b16 %v2001
    %v7052 = vunpack.c.l.b16 %v2002
    %v7053 = vunpack.c.l.b16 %v2003
    %v7054 = vunpack.c.l.b16 %v2004
    %v7055 = vunpack.c.l.b16 %v2005
    %v7056 = vunpack.c.l.b16 %v2006
    %v7057 = vunpack.c.l.b16 %v2007
    %v7058 = vunpack.c.l.b16 %v2008
    %v7059 = vunpack.c.l.b16 %v2009
    %v7060 = vunpack.c.l.b16 %v2010
    %v7061 = vunpack.c.l.b16 %v2011
    %v7062 = vunpack.c.l.b16 %v2012
    %v7063 = vunpack.c.l.b16 %v2013
    %v7064 = vunpack.c.l.b16 %v2014
    %v7065 = vunpack.c.l.b16 %v2015
    %v7066 = vunpack.c.l.b16 %v2016
    %v7067 = vunpack.c.l.b16 %v2017
    %v7068 = vunpack.c.l.b16 %v2018
    %v7069 = vunpack.c.l.b16 %v2019
    %v7070 = vunpack.c.l.b16 %v2020
    %v7071 = vunpack.c.l.b16 %v2021
    %v7072 = vunpack.c.l.b16 %v2022
    %v7073 = vunpack.c.l.b16 %v2023
    %v7074 = vunpack.c.l.b16 %v2024
    %v7075 = vunpack.c.l.b16 %v2025
    %v7076 = vunpack.c.l.b16 %v2026
    %v7077 = vunpack.c.l.b16 %v2027
    %v7078 = vunpack.c.l.b16 %v2028
    %v7079 = vunpack.c.l.b16 %v2029
    %v7080 = vunpack.c.l.b16 %v2030
    %v7081 = vunpack.c.l.b16 %v2031
    %v7082 = vunpack.c.l.b16 %v2032
    %v7083 = vunpack.c.l.b16 %v2033
    %v7084 = vunpack.c.l.b16 %v2034
    %v7085 = vunpack.c.l.b16 %v2035
    %v7086 = vunpack.c.l.b16 %v2036
    %v7087 = vunpack.c.l.b16 %v2037
    %v7088 = vunpack.c.l.b16 %v2038
    %v7089 = vunpack.c.l.b16 %v2039
    %v7090 = vunpack.c.l.b16 %v2040
    %v7091 = vunpack.c.l.b16 %v2041
    %v7092 = vunpack.c.l.b16 %v2042
    %v7093 = vunpack.c.l.b16 %v2043
    %v7094 = vunpack.c.l.b16 %v2044
    %v7095 = vunpack.c.l.b16 %v2045
    %v7096 = vunpack.c.l.b16 %v2046
    %v7097 = vunpack.c.l.b16 %v2047
    %v7098 = vunpack.c.l.b16 %v2048
    %v7099 = vunpack.c.l.b16 %v2049
    %v7100 = vunpack.c.l.b16 %v2050
    %v7101 = vunpack.c.l.b16 %v2051
    %v7102 = vunpack.c.l.b16 %v2052
    %v7103 = vunpack.c.l.b16 %v2053
    %v7104 = vunpack.c.l.b16 %v2054
    %v7105 = vunpack.c.l.b16 %v2055
    %v7106 = vunpack.c.l.b16 %v2056
    %v7107 = vunpack.c.l.b16 %v2057
    %v7108 = vunpack.c.l.b16 %v2058
    %v7109 = vunpack.c.l.b16 %v2059
    %v7110 = vunpack.c.l.b16 %v2060
    %v7111 = vunpack.c.l.b16 %v2061
    %v7112 = vunpack.c.l.b16 %v2062
    %v7113 = vunpack.c.l.b16 %v2063
    %v7114 = vunpack.c.l.b16 %v2064
    %v7115 = vunpack.c.l.b16 %v2065
    %v7116 = vunpack.c.l.b16 %v2066
    %v7117 = vunpack.c.l.b16 %v2067
    %v7118 = vunpack.c.l.b16 %v2068
    %v7119 = vunpack.c.l.b16 %v2069
    %v7120 = vunpack.c.l.b16 %v2070
    %v7121 = vunpack.c.l.b16 %v2071
    %v7122 = vunpack.c.l.b16 %v2072
    %v7123 = vunpack.c.l.b16 %v2073
    %v7124 = vunpack.c.l.b16 %v2074
    %v7125 = vunpack.c.l.b16 %v2075
    %v7126 = vunpack.c.l.b16 %v2076
    %v7127 = vunpack.c.l.b16 %v2077
    %v7128 = vunpack.c.l.b16 %v2078
    %v7129 = vunpack.c.l.b16 %v2079
    %v7130 = vunpack.c.l.b16 %v2080
    %v7131 = vunpack.c.l.b16 %v2081
    %v7132 = vunpack.c.l.b16 %v2082
    %v7133 = vunpack.c.l.b16 %v2083
    %v7134 = vunpack.c.l.b16 %v2084
    %v7135 = vunpack.c.l.b16 %v2085
    %v7136 = vunpack.c.l.b16 %v2086
    %v7137 = vunpack.c.l.b16 %v2087
    %v7138 = vunpack.c.l.b16 %v2088
    %v7139 = vpack.c.b16 %v5090, %v5089
    %v7140 = vpack.c.b16 %v5092, %v5091
    %v7141 = vpack.c.b16 %v5094, %v5093
    %v7142 = vpack.c.b16 %v5096, %v5095
    %v7143 = vpack.c.b16 %v5098, %v5097
    %v7144 = vpack.c.b16 %v5100, %v5099
    %v7145 = vpack.c.b16 %v5102, %v5101
    %v7146 = vpack.c.b16 %v5104, %v5103
    %v7147 = vpack.c.b16 %v5106, %v5105
    %v7148 = vpack.c.b16 %v5108, %v5107
    %v7149 = vpack.c.b16 %v5110, %v5109
    %v7150 = vpack.c.b16 %v5112, %v5111
    %v7151 = vpack.c.b16 %v5114, %v5113
    %v7152 = vpack.c.b16 %v5116, %v5115
    %v7153 = vpack.c.b16 %v5118, %v5117
    %v7154 = vpack.c.b16 %v5120, %v5119
    %v7155 = vpack.c.b16 %v5122, %v5121
    %v7156 = vpack.c.b16 %v5124, %v5123
    %v7157 = vpack.c.b16 %v5126, %v5125
    %v7158 = vpack.c.b16 %v5128, %v5127
    %v7159 = vpack.c.b16 %v5130, %v5129
    %v7160 = vpack.c.b16 %v5132, %v5131
    %v7161 = vpack.c.b16 %v5134, %v5133
    %v7162 = vpack.c.b16 %v5136, %v5135
    %v7163 = vpack.c.b16 %v5138, %v5137
    %v7164 = vpack.c.b16 %v5140, %v5139
    %v7165 = vpack.c.b16 %v5142, %v5141
    %v7166 = vpack.c.b16 %v5144, %v5143
    %v7167 = vpack.c.b16 %v5146, %v5145
    %v7168 = vpack.c.b16 %v5148, %v5147
    %v7169 = vpack.c.b16 %v5150, %v5149
    %v7170 = vpack.c.b16 %v5152, %v5151
    %v7171 = vpack.c.b16 %v5154, %v5153
    %v7172 = vpack.c.b16 %v5156, %v5155
    %v7173 = vpack.c.b16 %v5158, %v5157
    %v7174 = vpack.c.b16 %v5160, %v5159
    %v7175 = vpack.c.b16 %v5162, %v5161
    %v7176 = vpack.c.b16 %v5164, %v5163
    %v7177 = vpack.c.b16 %v5166, %v5165
    %v7178 = vpack.c.b16 %v5168, %v5167
    %v7179 = vpack.c.b16 %v5170, %v5169
    %v7180 = vpack.c.b16 %v5172, %v5171
    %v7181 = vpack.c.b16 %v5174, %v5173
    %v7182 = vpack.c.b16 %v5176, %v5175
    %v7183 = vpack.c.b16 %v5178, %v5177
    %v7184 = vpack.c.b16 %v5180, %v5179
    %v7185 = vpack.c.b16 %v5182, %v5181
    %v7186 = vpack.c.b16 %v5184, %v5183
    %v7187 = vpack.c.b16 %v5186, %v5185
    %v7188 = vpack.c.b16 %v5188, %v5187
    %v7189 = vpack.c.b16 %v5190, %v5189
    %v7190 = vpack.c.b16 %v5192, %v5191
    %v7191 = vpack.c.b16 %v5194, %v5193
    %v7192 = vpack.c.b16 %v5196, %v5195
    %v7193 = vpack.c.b16 %v5198, %v5197
    %v7194 = vpack.c.b16 %v5200, %v5199
    %v7195 = vpack.c.b16 %v5202, %v5201
    %v7196 = vpack.c.b16 %v5204, %v5203
    %v7197 = vpack.c.b16 %v5206, %v5205
    %v7198 = vpack.c.b16 %v5208, %v5207
    %v7199 = vpack.c.b16 %v5210, %v5209
    %v7200 = vpack.c.b16 %v5212, %v5211
    %v7201 = vpack.c.b16 %v5214, %v5213
    %v7202 = vpack.c.b16 %v5216, %v5215
    %v7203 = vpack.c.b16 %v5218, %v5217
    %v7204 = vpack.c.b16 %v5220, %v5219
    %v7205 = vpack.c.b16 %v5222, %v5221
    %v7206 = vpack.c.b16 %v5224, %v5223
    %v7207 = vpack.c.b16 %v5226, %v5225
    %v7208 = vpack.c.b16 %v5228, %v5227
    %v7209 = vpack.c.b16 %v5230, %v5229
    %v7210 = vpack.c.b16 %v5232, %v5231
    %v7211 = vpack.c.b16 %v5234, %v5233
    %v7212 = vpack.c.b16 %v5236, %v5235
    %v7213 = vpack.c.b16 %v5238, %v5237
    %v7214 = vpack.c.b16 %v5240, %v5239
    %v7215 = vpack.c.b16 %v5242, %v5241
    %v7216 = vpack.c.b16 %v5244, %v5243
    %v7217 = vpack.c.b16 %v5246, %v5245
    %v7218 = vpack.c.b16 %v5248, %v5247
    %v7219 = vpack.c.b16 %v5250, %v5249
    %v7220 = vpack.c.b16 %v5252, %v5251
    %v7221 = vpack.c.b16 %v5254, %v5253
    %v7222 = vpack.c.b16 %v5256, %v5255
    %v7223 = vpack.c.b16 %v5258, %v5257
    %v7224 = vpack.c.b16 %v5260, %v5259
    %v7225 = vpack.c.b16 %v5262, %v5261
    %v7226 = vpack.c.b16 %v5264, %v5263
    %v7227 = vpack.c.b16 %v5266, %v5265
    %v7228 = vpack.c.b16 %v5268, %v5267
    %v7229 = vpack.c.b16 %v5270, %v5269
    %v7230 = vpack.c.b16 %v5272, %v5271
    %v7231 = vpack.c.b16 %v5274, %v5273
    %v7232 = vpack.c.b16 %v5276, %v5275
    %v7233 = vpack.c.b16 %v5278, %v5277
    %v7234 = vpack.c.b16 %v5280, %v5279
    %v7235 = vpack.c.b16 %v5282, %v5281
    %v7236 = vpack.c.b16 %v5284, %v5283
    %v7237 = vpack.c.b16 %v5286, %v5285
    %v7238 = vpack.c.b16 %v5288, %v5287
    %v7239 = vpack.c.b16 %v5290, %v5289
    %v7240 = vpack.c.b16 %v5292, %v5291
    %v7241 = vpack.c.b16 %v5294, %v5293
    %v7242 = vpack.c.b16 %v5296, %v5295
    %v7243 = vpack.c.b16 %v5298, %v5297
    %v7244 = vpack.c.b16 %v5300, %v5299
    %v7245 = vpack.c.b16 %v5302, %v5301
    %v7246 = vpack.c.b16 %v5304, %v5303
    %v7247 = vpack.c.b16 %v5306, %v5305
    %v7248 = vpack.c.b16 %v5308, %v5307
    %v7249 = vpack.c.b16 %v5310, %v5309
    %v7250 = vpack.c.b16 %v5312, %v5311
    %v7251 = vpack.c.b16 %v5314, %v5313
    %v7252 = vpack.c.b16 %v5316, %v5315
    %v7253 = vpack.c.b16 %v5318, %v5317
    %v7254 = vpack.c.b16 %v5320, %v5319
    %v7255 = vpack.c.b16 %v5322, %v5321
    %v7256 = vpack.c.b16 %v5324, %v5323
    %v7257 = vpack.c.b16 %v5326, %v5325
    %v7258 = vpack.c.b16 %v5328, %v5327
    %v7259 = vpack.c.b16 %v5330, %v5329
    %v7260 = vpack.c.b16 %v5332, %v5331
    %v7261 = vpack.c.b16 %v5334, %v5333
    %v7262 = vpack.c.b16 %v5336, %v5335
    %v7263 = vpack.c.b16 %v5338, %v5337
    %v7264 = vpack.c.b16 %v5340, %v5339
    %v7265 = vpack.c.b16 %v5342, %v5341
    %v7266 = vpack.c.b16 %v5344, %v5343
    %v7267 = vpack.c.b16 %v5346, %v5345
    %v7268 = vpack.c.b16 %v5348, %v5347
    %v7269 = vpack.c.b16 %v5350, %v5349
    %v7270 = vpack.c.b16 %v5352, %v5351
    %v7271 = vpack.c.b16 %v5354, %v5353
    %v7272 = vpack.c.b16 %v5356, %v5355
    %v7273 = vpack.c.b16 %v5358, %v5357
    %v7274 = vpack.c.b16 %v5360, %v5359
    %v7275 = vpack.c.b16 %v5362, %v5361
    %v7276 = vpack.c.b16 %v5364, %v5363
    %v7277 = vpack.c.b16 %v5366, %v5365
    %v7278 = vpack.c.b16 %v5368, %v5367
    %v7279 = vpack.c.b16 %v5370, %v5369
    %v7280 = vpack.c.b16 %v5372, %v5371
    %v7281 = vpack.c.b16 %v5374, %v5373
    %v7282 = vpack.c.b16 %v5376, %v5375
    %v7283 = vpack.c.b16 %v5378, %v5377
    %v7284 = vpack.c.b16 %v5380, %v5379
    %v7285 = vpack.c.b16 %v5382, %v5381
    %v7286 = vpack.c.b16 %v5384, %v5383
    %v7287 = vpack.c.b16 %v5386, %v5385
    %v7288 = vpack.c.b16 %v5388, %v5387
    %v7289 = vpack.c.b16 %v5390, %v5389
    %v7290 = vpack.c.b16 %v5392, %v5391
    %v7291 = vpack.c.b16 %v5394, %v5393
    %v7292 = vpack.c.b16 %v5396, %v5395
    %v7293 = vpack.c.b16 %v5398, %v5397
    %v7294 = vpack.c.b16 %v5400, %v5399
    %v7295 = vpack.c.b16 %v5402, %v5401
    %v7296 = vpack.c.b16 %v5404, %v5403
    %v7297 = vpack.c.b16 %v5406, %v5405
    %v7298 = vpack.c.b16 %v5408, %v5407
    %v7299 = vpack.c.b16 %v5410, %v5409
    %v7300 = vpack.c.b16 %v5412, %v5411
    %v7301 = vpack.c.b16 %v5414, %v5413
    %v7302 = vpack.c.b16 %v5416, %v5415
    %v7303 = vpack.c.b16 %v5418, %v5417
    %v7304 = vpack.c.b16 %v5420, %v5419
    %v7305 = vpack.c.b16 %v5422, %v5421
    %v7306 = vpack.c.b16 %v5424, %v5423
    %v7307 = vpack.c.b16 %v5426, %v5425
    %v7308 = vpack.c.b16 %v5428, %v5427
    %v7309 = vpack.c.b16 %v5430, %v5429
    %v7310 = vpack.c.b16 %v5432, %v5431
    %v7311 = vpack.c.b16 %v5434, %v5433
    %v7312 = vpack.c.b16 %v5436, %v5435
    %v7313 = vpack.c.b16 %v5438, %v5437
    %v7314 = vpack.c.b16 %v5440, %v5439
    %v7315 = vpack.c.b16 %v5442, %v5441
    %v7316 = vpack.c.b16 %v5444, %v5443
    %v7317 = vpack.c.b16 %v5446, %v5445
    %v7318 = vpack.c.b16 %v5448, %v5447
    %v7319 = vpack.c.b16 %v5450, %v5449
    %v7320 = vpack.c.b16 %v5452, %v5451
    %v7321 = vpack.c.b16 %v5454, %v5453
    %v7322 = vpack.c.b16 %v5456, %v5455
    %v7323 = vpack.c.b16 %v5458, %v5457
    %v7324 = vpack.c.b16 %v5460, %v5459
    %v7325 = vpack.c.b16 %v5462, %v5461
    %v7326 = vpack.c.b16 %v5464, %v5463
    %v7327 = vpack.c.b16 %v5466, %v5465
    %v7328 = vpack.c.b16 %v5468, %v5467
    %v7329 = vpack.c.b16 %v5470, %v5469
    %v7330 = vpack.c.b16 %v5472, %v5471
    %v7331 = vpack.c.b16 %v5474, %v5473
    %v7332 = vpack.c.b16 %v5476, %v5475
    %v7333 = vpack.c.b16 %v5478, %v5477
    %v7334 = vpack.c.b16 %v5480, %v5479
    %v7335 = vpack.c.b16 %v5482, %v5481
    %v7336 = vpack.c.b16 %v5484, %v5483
    %v7337 = vpack.c.b16 %v5486, %v5485
    %v7338 = vpack.c.b16 %v5488, %v5487
    %v7339 = vpack.c.b16 %v5490, %v5489
    %v7340 = vpack.c.b16 %v5492, %v5491
    %v7341 = vpack.c.b16 %v5494, %v5493
    %v7342 = vpack.c.b16 %v5496, %v5495
    %v7343 = vpack.c.b16 %v5498, %v5497
    %v7344 = vpack.c.b16 %v5500, %v5499
    %v7345 = vpack.c.b16 %v5502, %v5501
    %v7346 = vpack.c.b16 %v5504, %v5503
    %v7347 = vpack.c.b16 %v5506, %v5505
    %v7348 = vpack.c.b16 %v5508, %v5507
    %v7349 = vpack.c.b16 %v5510, %v5509
    %v7350 = vpack.c.b16 %v5512, %v5511
    %v7351 = vpack.c.b16 %v5514, %v5513
    %v7352 = vpack.c.b16 %v5516, %v5515
    %v7353 = vpack.c.b16 %v5518, %v5517
    %v7354 = vpack.c.b16 %v5520, %v5519
    %v7355 = vpack.c.b16 %v5522, %v5521
    %v7356 = vpack.c.b16 %v5524, %v5523
    %v7357 = vpack.c.b16 %v5526, %v5525
    %v7358 = vpack.c.b16 %v5528, %v5527
    %v7359 = vpack.c.b16 %v5530, %v5529
    %v7360 = vpack.c.b16 %v5532, %v5531
    %v7361 = vpack.c.b16 %v5534, %v5533
    %v7362 = vpack.c.b16 %v5536, %v5535
    %v7363 = vpack.c.b16 %v5538, %v5537
    %v7364 = vpack.c.b16 %v5540, %v5539
    %v7365 = vpack.c.b16 %v5542, %v5541
    %v7366 = vpack.c.b16 %v5544, %v5543
    %v7367 = vpack.c.b16 %v5546, %v5545
    %v7368 = vpack.c.b16 %v5548, %v5547
    %v7369 = vpack.c.b16 %v5550, %v5549
    %v7370 = vpack.c.b16 %v5552, %v5551
    %v7371 = vpack.c.b16 %v5554, %v5553
    %v7372 = vpack.c.b16 %v5556, %v5555
    %v7373 = vpack.c.b16 %v5558, %v5557
    %v7374 = vpack.c.b16 %v5560, %v5559
    %v7375 = vpack.c.b16 %v5562, %v5561
    %v7376 = vpack.c.b16 %v5564, %v5563
    %v7377 = vpack.c.b16 %v5566, %v5565
    %v7378 = vpack.c.b16 %v5568, %v5567
    %v7379 = vpack.c.b16 %v5570, %v5569
    %v7380 = vpack.c.b16 %v5572, %v5571
    %v7381 = vpack.c.b16 %v5574, %v5573
    %v7382 = vpack.c.b16 %v5576, %v5575
    %v7383 = vpack.c.b16 %v5578, %v5577
    %v7384 = vpack.c.b16 %v5580, %v5579
    %v7385 = vpack.c.b16 %v5582, %v5581
    %v7386 = vpack.c.b16 %v5584, %v5583
    %v7387 = vpack.c.b16 %v5586, %v5585
    %v7388 = vpack.c.b16 %v5588, %v5587
    %v7389 = vpack.c.b16 %v5590, %v5589
    %v7390 = vpack.c.b16 %v5592, %v5591
    %v7391 = vpack.c.b16 %v5594, %v5593
    %v7392 = vpack.c.b16 %v5596, %v5595
    %v7393 = vpack.c.b16 %v5598, %v5597
    %v7394 = vpack.c.b16 %v5600, %v5599
    %v7395 = vpack.c.b16 %v5602, %v5601
    %v7396 = vpack.c.b16 %v5604, %v5603
    %v7397 = vpack.c.b16 %v5606, %v5605
    %v7398 = vpack.c.b16 %v5608, %v5607
    %v7399 = vpack.c.b16 %v5610, %v5609
    %v7400 = vpack.c.b16 %v5612, %v5611
    %v7401 = vpack.c.b16 %v5614, %v5613
    %v7402 = vpack.c.b16 %v5616, %v5615
    %v7403 = vpack.c.b16 %v5618, %v5617
    %v7404 = vpack.c.b16 %v5620, %v5619
    %v7405 = vpack.c.b16 %v5622, %v5621
    %v7406 = vpack.c.b16 %v5624, %v5623
    %v7407 = vpack.c.b16 %v5626, %v5625
    %v7408 = vpack.c.b16 %v5628, %v5627
    %v7409 = vpack.c.b16 %v5630, %v5629
    %v7410 = vpack.c.b16 %v5632, %v5631
    %v7411 = vpack.c.b16 %v5634, %v5633
    %v7412 = vpack.c.b16 %v5636, %v5635
    %v7413 = vpack.c.b16 %v5638, %v5637
    %v7414 = vpack.c.b16 %v5640, %v5639
    %v7415 = vpack.c.b16 %v5642, %v5641
    %v7416 = vpack.c.b16 %v5644, %v5643
    %v7417 = vpack.c.b16 %v5646, %v5645
    %v7418 = vpack.c.b16 %v5648, %v5647
    %v7419 = vpack.c.b16 %v5650, %v5649
    %v7420 = vpack.c.b16 %v5652, %v5651
    %v7421 = vpack.c.b16 %v5654, %v5653
    %v7422 = vpack.c.b16 %v5656, %v5655
    %v7423 = vpack.c.b16 %v5658, %v5657
    %v7424 = vpack.c.b16 %v5660, %v5659
    %v7425 = vpack.c.b16 %v5662, %v5661
    %v7426 = vpack.c.b16 %v5664, %v5663
    %v7427 = vpack.c.b16 %v5666, %v5665
    %v7428 = vpack.c.b16 %v5668, %v5667
    %v7429 = vpack.c.b16 %v5670, %v5669
    %v7430 = vpack.c.b16 %v5672, %v5671
    %v7431 = vpack.c.b16 %v5674, %v5673
    %v7432 = vpack.c.b16 %v5676, %v5675
    %v7433 = vpack.c.b16 %v5678, %v5677
    %v7434 = vpack.c.b16 %v5680, %v5679
    %v7435 = vpack.c.b16 %v5682, %v5681
    %v7436 = vpack.c.b16 %v5684, %v5683
    %v7437 = vpack.c.b16 %v5686, %v5685
    %v7438 = vpack.c.b16 %v5688, %v5687
    %v7439 = vpack.c.b16 %v5690, %v5689
    %v7440 = vpack.c.b16 %v5692, %v5691
    %v7441 = vpack.c.b16 %v5694, %v5693
    %v7442 = vpack.c.b16 %v5696, %v5695
    %v7443 = vpack.c.b16 %v5698, %v5697
    %v7444 = vpack.c.b16 %v5700, %v5699
    %v7445 = vpack.c.b16 %v5702, %v5701
    %v7446 = vpack.c.b16 %v5704, %v5703
    %v7447 = vpack.c.b16 %v5706, %v5705
    %v7448 = vpack.c.b16 %v5708, %v5707
    %v7449 = vpack.c.b16 %v5710, %v5709
    %v7450 = vpack.c.b16 %v5712, %v5711
    %v7451 = vpack.c.b16 %v5714, %v5713
    %v7452 = vpack.c.b16 %v5716, %v5715
    %v7453 = vpack.c.b16 %v5718, %v5717
    %v7454 = vpack.c.b16 %v5720, %v5719
    %v7455 = vpack.c.b16 %v5722, %v5721
    %v7456 = vpack.c.b16 %v5724, %v5723
    %v7457 = vpack.c.b16 %v5726, %v5725
    %v7458 = vpack.c.b16 %v5728, %v5727
    %v7459 = vpack.c.b16 %v5730, %v5729
    %v7460 = vpack.c.b16 %v5732, %v5731
    %v7461 = vpack.c.b16 %v5734, %v5733
    %v7462 = vpack.c.b16 %v5736, %v5735
    %v7463 = vpack.c.b16 %v5738, %v5737
    %v7464 = vpack.c.b16 %v5740, %v5739
    %v7465 = vpack.c.b16 %v5742, %v5741
    %v7466 = vpack.c.b16 %v5744, %v5743
    %v7467 = vpack.c.b16 %v5746, %v5745
    %v7468 = vpack.c.b16 %v5748, %v5747
    %v7469 = vpack.c.b16 %v5750, %v5749
    %v7470 = vpack.c.b16 %v5752, %v5751
    %v7471 = vpack.c.b16 %v5754, %v5753
    %v7472 = vpack.c.b16 %v5756, %v5755
    %v7473 = vpack.c.b16 %v5758, %v5757
    %v7474 = vpack.c.b16 %v5760, %v5759
    %v7475 = vpack.c.b16 %v5762, %v5761
    %v7476 = vpack.c.b16 %v5764, %v5763
    %v7477 = vpack.c.b16 %v5766, %v5765
    %v7478 = vpack.c.b16 %v5768, %v5767
    %v7479 = vpack.c.b16 %v5770, %v5769
    %v7480 = vpack.c.b16 %v5772, %v5771
    %v7481 = vpack.c.b16 %v5774, %v5773
    %v7482 = vpack.c.b16 %v5776, %v5775
    %v7483 = vpack.c.b16 %v5778, %v5777
    %v7484 = vpack.c.b16 %v5780, %v5779
    %v7485 = vpack.c.b16 %v5782, %v5781
    %v7486 = vpack.c.b16 %v5784, %v5783
    %v7487 = vpack.c.b16 %v5786, %v5785
    %v7488 = vpack.c.b16 %v5788, %v5787
    %v7489 = vpack.c.b16 %v5790, %v5789
    %v7490 = vpack.c.b16 %v5792, %v5791
    %v7491 = vpack.c.b16 %v5794, %v5793
    %v7492 = vpack.c.b16 %v5796, %v5795
    %v7493 = vpack.c.b16 %v5798, %v5797
    %v7494 = vpack.c.b16 %v5800, %v5799
    %v7495 = vpack.c.b16 %v5802, %v5801
    %v7496 = vpack.c.b16 %v5804, %v5803
    %v7497 = vpack.c.b16 %v5806, %v5805
    %v7498 = vpack.c.b16 %v5808, %v5807
    %v7499 = vpack.c.b16 %v5810, %v5809
    %v7500 = vpack.c.b16 %v5812, %v5811
    %v7501 = vpack.c.b16 %v5814, %v5813
    %v7502 = vpack.c.b16 %v5816, %v5815
    %v7503 = vpack.c.b16 %v5818, %v5817
    %v7504 = vpack.c.b16 %v5820, %v5819
    %v7505 = vpack.c.b16 %v5822, %v5821
    %v7506 = vpack.c.b16 %v5824, %v5823
    %v7507 = vpack.c.b16 %v5826, %v5825
    %v7508 = vpack.c.b16 %v5828, %v5827
    %v7509 = vpack.c.b16 %v5830, %v5829
    %v7510 = vpack.c.b16 %v5832, %v5831
    %v7511 = vpack.c.b16 %v5834, %v5833
    %v7512 = vpack.c.b16 %v5836, %v5835
    %v7513 = vpack.c.b16 %v5838, %v5837
    %v7514 = vpack.c.b16 %v5840, %v5839
    %v7515 = vpack.c.b16 %v5842, %v5841
    %v7516 = vpack.c.b16 %v5844, %v5843
    %v7517 = vpack.c.b16 %v5846, %v5845
    %v7518 = vpack.c.b16 %v5848, %v5847
    %v7519 = vpack.c.b16 %v5850, %v5849
    %v7520 = vpack.c.b16 %v5852, %v5851
    %v7521 = vpack.c.b16 %v5854, %v5853
    %v7522 = vpack.c.b16 %v5856, %v5855
    %v7523 = vpack.c.b16 %v5858, %v5857
    %v7524 = vpack.c.b16 %v5860, %v5859
    %v7525 = vpack.c.b16 %v5862, %v5861
    %v7526 = vpack.c.b16 %v5864, %v5863
    %v7527 = vpack.c.b16 %v5866, %v5865
    %v7528 = vpack.c.b16 %v5868, %v5867
    %v7529 = vpack.c.b16 %v5870, %v5869
    %v7530 = vpack.c.b16 %v5872, %v5871
    %v7531 = vpack.c.b16 %v5874, %v5873
    %v7532 = vpack.c.b16 %v5876, %v5875
    %v7533 = vpack.c.b16 %v5878, %v5877
    %v7534 = vpack.c.b16 %v5880, %v5879
    %v7535 = vpack.c.b16 %v5882, %v5881
    %v7536 = vpack.c.b16 %v5884, %v5883
    %v7537 = vpack.c.b16 %v5886, %v5885
    %v7538 = vpack.c.b16 %v5888, %v5887
    %v7539 = vpack.c.b16 %v5890, %v5889
    %v7540 = vpack.c.b16 %v5892, %v5891
    %v7541 = vpack.c.b16 %v5894, %v5893
    %v7542 = vpack.c.b16 %v5896, %v5895
    %v7543 = vpack.c.b16 %v5898, %v5897
    %v7544 = vpack.c.b16 %v5900, %v5899
    %v7545 = vpack.c.b16 %v5902, %v5901
    %v7546 = vpack.c.b16 %v5904, %v5903
    %v7547 = vpack.c.b16 %v5906, %v5905
    %v7548 = vpack.c.b16 %v5908, %v5907
    %v7549 = vpack.c.b16 %v5910, %v5909
    %v7550 = vpack.c.b16 %v5912, %v5911
    %v7551 = vpack.c.b16 %v5914, %v5913
    %v7552 = vpack.c.b16 %v5916, %v5915
    %v7553 = vpack.c.b16 %v5918, %v5917
    %v7554 = vpack.c.b16 %v5920, %v5919
    %v7555 = vpack.c.b16 %v5922, %v5921
    %v7556 = vpack.c.b16 %v5924, %v5923
    %v7557 = vpack.c.b16 %v5926, %v5925
    %v7558 = vpack.c.b16 %v5928, %v5927
    %v7559 = vpack.c.b16 %v5930, %v5929
    %v7560 = vpack.c.b16 %v5932, %v5931
    %v7561 = vpack.c.b16 %v5934, %v5933
    %v7562 = vpack.c.b16 %v5936, %v5935
    %v7563 = vpack.c.b16 %v5938, %v5937
    %v7564 = vpack.c.b16 %v5940, %v5939
    %v7565 = vpack.c.b16 %v5942, %v5941
    %v7566 = vpack.c.b16 %v5944, %v5943
    %v7567 = vpack.c.b16 %v5946, %v5945
    %v7568 = vpack.c.b16 %v5948, %v5947
    %v7569 = vpack.c.b16 %v5950, %v5949
    %v7570 = vpack.c.b16 %v5952, %v5951
    %v7571 = vpack.c.b16 %v5954, %v5953
    %v7572 = vpack.c.b16 %v5956, %v5955
    %v7573 = vpack.c.b16 %v5958, %v5957
    %v7574 = vpack.c.b16 %v5960, %v5959
    %v7575 = vpack.c.b16 %v5962, %v5961
    %v7576 = vpack.c.b16 %v5964, %v5963
    %v7577 = vpack.c.b16 %v5966, %v5965
    %v7578 = vpack.c.b16 %v5968, %v5967
    %v7579 = vpack.c.b16 %v5970, %v5969
    %v7580 = vpack.c.b16 %v5972, %v5971
    %v7581 = vpack.c.b16 %v5974, %v5973
    %v7582 = vpack.c.b16 %v5976, %v5975
    %v7583 = vpack.c.b16 %v5978, %v5977
    %v7584 = vpack.c.b16 %v5980, %v5979
    %v7585 = vpack.c.b16 %v5982, %v5981
    %v7586 = vpack.c.b16 %v5984, %v5983
    %v7587 = vpack.c.b16 %v5986, %v5985
    %v7588 = vpack.c.b16 %v5988, %v5987
    %v7589 = vpack.c.b16 %v5990, %v5989
    %v7590 = vpack.c.b16 %v5992, %v5991
    %v7591 = vpack.c.b16 %v5994, %v5993
    %v7592 = vpack.c.b16 %v5996, %v5995
    %v7593 = vpack.c.b16 %v5998, %v5997
    %v7594 = vpack.c.b16 %v6000, %v5999
    %v7595 = vpack.c.b16 %v6002, %v6001
    %v7596 = vpack.c.b16 %v6004, %v6003
    %v7597 = vpack.c.b16 %v6006, %v6005
    %v7598 = vpack.c.b16 %v6008, %v6007
    %v7599 = vpack.c.b16 %v6010, %v6009
    %v7600 = vpack.c.b16 %v6012, %v6011
    %v7601 = vpack.c.b16 %v6014, %v6013
    %v7602 = vpack.c.b16 %v6016, %v6015
    %v7603 = vpack.c.b16 %v6018, %v6017
    %v7604 = vpack.c.b16 %v6020, %v6019
    %v7605 = vpack.c.b16 %v6022, %v6021
    %v7606 = vpack.c.b16 %v6024, %v6023
    %v7607 = vpack.c.b16 %v6026, %v6025
    %v7608 = vpack.c.b16 %v6028, %v6027
    %v7609 = vpack.c.b16 %v6030, %v6029
    %v7610 = vpack.c.b16 %v6032, %v6031
    %v7611 = vpack.c.b16 %v6034, %v6033
    %v7612 = vpack.c.b16 %v6036, %v6035
    %v7613 = vpack.c.b16 %v6038, %v6037
    %v7614 = vpack.c.b16 %v6040, %v6039
    %v7615 = vpack.c.b16 %v6042, %v6041
    %v7616 = vpack.c.b16 %v6044, %v6043
    %v7617 = vpack.c.b16 %v6046, %v6045
    %v7618 = vpack.c.b16 %v6048, %v6047
    %v7619 = vpack.c.b16 %v6050, %v6049
    %v7620 = vpack.c.b16 %v6052, %v6051
    %v7621 = vpack.c.b16 %v6054, %v6053
    %v7622 = vpack.c.b16 %v6056, %v6055
    %v7623 = vpack.c.b16 %v6058, %v6057
    %v7624 = vpack.c.b16 %v6060, %v6059
    %v7625 = vpack.c.b16 %v6062, %v6061
    %v7626 = vpack.c.b16 %v6064, %v6063
    %v7627 = vpack.c.b16 %v6066, %v6065
    %v7628 = vpack.c.b16 %v6068, %v6067
    %v7629 = vpack.c.b16 %v6070, %v6069
    %v7630 = vpack.c.b16 %v6072, %v6071
    %v7631 = vpack.c.b16 %v6074, %v6073
    %v7632 = vpack.c.b16 %v6076, %v6075
    %v7633 = vpack.c.b16 %v6078, %v6077
    %v7634 = vpack.c.b16 %v6080, %v6079
    %v7635 = vpack.c.b16 %v6082, %v6081
    %v7636 = vpack.c.b16 %v6084, %v6083
    %v7637 = vpack.c.b16 %v6086, %v6085
    %v7638 = vpack.c.b16 %v6088, %v6087
    %v7639 = vpack.c.b16 %v6090, %v6089
    %v7640 = vpack.c.b16 %v6092, %v6091
    %v7641 = vpack.c.b16 %v6094, %v6093
    %v7642 = vpack.c.b16 %v6096, %v6095
    %v7643 = vpack.c.b16 %v6098, %v6097
    %v7644 = vpack.c.b16 %v6100, %v6099
    %v7645 = vpack.c.b16 %v6102, %v6101
    %v7646 = vpack.c.b16 %v6104, %v6103
    %v7647 = vpack.c.b16 %v6106, %v6105
    %v7648 = vpack.c.b16 %v6108, %v6107
    %v7649 = vpack.c.b16 %v6110, %v6109
    %v7650 = vpack.c.b16 %v6112, %v6111
    %v7651 = vpack.c.b16 %v6114, %v6113
    %v7652 = vpack.c.b16 %v6116, %v6115
    %v7653 = vpack.c.b16 %v6118, %v6117
    %v7654 = vpack.c.b16 %v6120, %v6119
    %v7655 = vpack.c.b16 %v6122, %v6121
    %v7656 = vpack.c.b16 %v6124, %v6123
    %v7657 = vpack.c.b16 %v6126, %v6125
    %v7658 = vpack.c.b16 %v6128, %v6127
    %v7659 = vpack.c.b16 %v6130, %v6129
    %v7660 = vpack.c.b16 %v6132, %v6131
    %v7661 = vpack.c.b16 %v6134, %v6133
    %v7662 = vpack.c.b16 %v6136, %v6135
    %v7663 = vpack.c.b16 %v6138, %v6137
    %v7664 = vpack.c.b16 %v6140, %v6139
    %v7665 = vpack.c.b16 %v6142, %v6141
    %v7666 = vpack.c.b16 %v6144, %v6143
    %v7667 = vpack.c.b16 %v6146, %v6145
    %v7668 = vpack.c.b16 %v6148, %v6147
    %v7669 = vpack.c.b16 %v6150, %v6149
    %v7670 = vpack.c.b16 %v6152, %v6151
    %v7671 = vpack.c.b16 %v6154, %v6153
    %v7672 = vpack.c.b16 %v6156, %v6155
    %v7673 = vpack.c.b16 %v6158, %v6157
    %v7674 = vpack.c.b16 %v6160, %v6159
    %v7675 = vpack.c.b16 %v6162, %v6161
    %v7676 = vpack.c.b16 %v6164, %v6163
    %v7677 = vpack.c.b16 %v6166, %v6165
    %v7678 = vpack.c.b16 %v6168, %v6167
    %v7679 = vpack.c.b16 %v6170, %v6169
    %v7680 = vpack.c.b16 %v6172, %v6171
    %v7681 = vpack.c.b16 %v6174, %v6173
    %v7682 = vpack.c.b16 %v6176, %v6175
    %v7683 = vpack.c.b16 %v6178, %v6177
    %v7684 = vpack.c.b16 %v6180, %v6179
    %v7685 = vpack.c.b16 %v6182, %v6181
    %v7686 = vpack.c.b16 %v6184, %v6183
    %v7687 = vpack.c.b16 %v6186, %v6185
    %v7688 = vpack.c.b16 %v6188, %v6187
    %v7689 = vpack.c.b16 %v6190, %v6189
    %v7690 = vpack.c.b16 %v6192, %v6191
    %v7691 = vpack.c.b16 %v6194, %v6193
    %v7692 = vpack.c.b16 %v6196, %v6195
    %v7693 = vpack.c.b16 %v6198, %v6197
    %v7694 = vpack.c.b16 %v6200, %v6199
    %v7695 = vpack.c.b16 %v6202, %v6201
    %v7696 = vpack.c.b16 %v6204, %v6203
    %v7697 = vpack.c.b16 %v6206, %v6205
    %v7698 = vpack.c.b16 %v6208, %v6207
    %v7699 = vpack.c.b16 %v6210, %v6209
    %v7700 = vpack.c.b16 %v6212, %v6211
    %v7701 = vpack.c.b16 %v6214, %v6213
    %v7702 = vpack.c.b16 %v6216, %v6215
    %v7703 = vpack.c.b16 %v6218, %v6217
    %v7704 = vpack.c.b16 %v6220, %v6219
    %v7705 = vpack.c.b16 %v6222, %v6221
    %v7706 = vpack.c.b16 %v6224, %v6223
    %v7707 = vpack.c.b16 %v6226, %v6225
    %v7708 = vpack.c.b16 %v6228, %v6227
    %v7709 = vpack.c.b16 %v6230, %v6229
    %v7710 = vpack.c.b16 %v6232, %v6231
    %v7711 = vpack.c.b16 %v6234, %v6233
    %v7712 = vpack.c.b16 %v6236, %v6235
    %v7713 = vpack.c.b16 %v6238, %v6237
    %v7714 = vpack.c.b16 %v6240, %v6239
    %v7715 = vpack.c.b16 %v6242, %v6241
    %v7716 = vpack.c.b16 %v6244, %v6243
    %v7717 = vpack.c.b16 %v6246, %v6245
    %v7718 = vpack.c.b16 %v6248, %v6247
    %v7719 = vpack.c.b16 %v6250, %v6249
    %v7720 = vpack.c.b16 %v6252, %v6251
    %v7721 = vpack.c.b16 %v6254, %v6253
    %v7722 = vpack.c.b16 %v6256, %v6255
    %v7723 = vpack.c.b16 %v6258, %v6257
    %v7724 = vpack.c.b16 %v6260, %v6259
    %v7725 = vpack.c.b16 %v6262, %v6261
    %v7726 = vpack.c.b16 %v6264, %v6263
    %v7727 = vpack.c.b16 %v6266, %v6265
    %v7728 = vpack.c.b16 %v6268, %v6267
    %v7729 = vpack.c.b16 %v6270, %v6269
    %v7730 = vpack.c.b16 %v6272, %v6271
    %v7731 = vpack.c.b16 %v6274, %v6273
    %v7732 = vpack.c.b16 %v6276, %v6275
    %v7733 = vpack.c.b16 %v6278, %v6277
    %v7734 = vpack.c.b16 %v6280, %v6279
    %v7735 = vpack.c.b16 %v6282, %v6281
    %v7736 = vpack.c.b16 %v6284, %v6283
    %v7737 = vpack.c.b16 %v6286, %v6285
    %v7738 = vpack.c.b16 %v6288, %v6287
    %v7739 = vpack.c.b16 %v6290, %v6289
    %v7740 = vpack.c.b16 %v6292, %v6291
    %v7741 = vpack.c.b16 %v6294, %v6293
    %v7742 = vpack.c.b16 %v6296, %v6295
    %v7743 = vpack.c.b16 %v6298, %v6297
    %v7744 = vpack.c.b16 %v6300, %v6299
    %v7745 = vpack.c.b16 %v6302, %v6301
    %v7746 = vpack.c.b16 %v6304, %v6303
    %v7747 = vpack.c.b16 %v6306, %v6305
    %v7748 = vpack.c.b16 %v6308, %v6307
    %v7749 = vpack.c.b16 %v6310, %v6309
    %v7750 = vpack.c.b16 %v6312, %v6311
    %v7751 = vpack.c.b16 %v6314, %v6313
    %v7752 = vpack.c.b16 %v6316, %v6315
    %v7753 = vpack.c.b16 %v6318, %v6317
    %v7754 = vpack.c.b16 %v6320, %v6319
    %v7755 = vpack.c.b16 %v6322, %v6321
    %v7756 = vpack.c.b16 %v6324, %v6323
    %v7757 = vpack.c.b16 %v6326, %v6325
    %v7758 = vpack.c.b16 %v6328, %v6327
    %v7759 = vpack.c.b16 %v6330, %v6329
    %v7760 = vpack.c.b16 %v6332, %v6331
    %v7761 = vpack.c.b16 %v6334, %v6333
    %v7762 = vpack.c.b16 %v6336, %v6335
    %v7763 = vpack.c.b16 %v6338, %v6337
    %v7764 = vpack.c.b16 %v6340, %v6339
    %v7765 = vpack.c.b16 %v6342, %v6341
    %v7766 = vpack.c.b16 %v6344, %v6343
    %v7767 = vpack.c.b16 %v6346, %v6345
    %v7768 = vpack.c.b16 %v6348, %v6347
    %v7769 = vpack.c.b16 %v6350, %v6349
    %v7770 = vpack.c.b16 %v6352, %v6351
    %v7771 = vpack.c.b16 %v6354, %v6353
    %v7772 = vpack.c.b16 %v6356, %v6355
    %v7773 = vpack.c.b16 %v6358, %v6357
    %v7774 = vpack.c.b16 %v6360, %v6359
    %v7775 = vpack.c.b16 %v6362, %v6361
    %v7776 = vpack.c.b16 %v6364, %v6363
    %v7777 = vpack.c.b16 %v6366, %v6365
    %v7778 = vpack.c.b16 %v6368, %v6367
    %v7779 = vpack.c.b16 %v6370, %v6369
    %v7780 = vpack.c.b16 %v6372, %v6371
    %v7781 = vpack.c.b16 %v6374, %v6373
    %v7782 = vpack.c.b16 %v6376, %v6375
    %v7783 = vpack.c.b16 %v6378, %v6377
    %v7784 = vpack.c.b16 %v6380, %v6379
    %v7785 = vpack.c.b16 %v6382, %v6381
    %v7786 = vpack.c.b16 %v6384, %v6383
    %v7787 = vpack.c.b16 %v6386, %v6385
    %v7788 = vpack.c.b16 %v6388, %v6387
    %v7789 = vpack.c.b16 %v6390, %v6389
    %v7790 = vpack.c.b16 %v6392, %v6391
    %v7791 = vpack.c.b16 %v6394, %v6393
    %v7792 = vpack.c.b16 %v6396, %v6395
    %v7793 = vpack.c.b16 %v6398, %v6397
    %v7794 = vpack.c.b16 %v6400, %v6399
    %v7795 = vpack.c.b16 %v6402, %v6401
    %v7796 = vpack.c.b16 %v6404, %v6403
    %v7797 = vpack.c.b16 %v6406, %v6405
    %v7798 = vpack.c.b16 %v6408, %v6407
    %v7799 = vpack.c.b16 %v6410, %v6409
    %v7800 = vpack.c.b16 %v6412, %v6411
    %v7801 = vpack.c.b16 %v6414, %v6413
    %v7802 = vpack.c.b16 %v6416, %v6415
    %v7803 = vpack.c.b16 %v6418, %v6417
    %v7804 = vpack.c.b16 %v6420, %v6419
    %v7805 = vpack.c.b16 %v6422, %v6421
    %v7806 = vpack.c.b16 %v6424, %v6423
    %v7807 = vpack.c.b16 %v6426, %v6425
    %v7808 = vpack.c.b16 %v6428, %v6427
    %v7809 = vpack.c.b16 %v6430, %v6429
    %v7810 = vpack.c.b16 %v6432, %v6431
    %v7811 = vpack.c.b16 %v6434, %v6433
    %v7812 = vpack.c.b16 %v6436, %v6435
    %v7813 = vpack.c.b16 %v6438, %v6437
    %v7814 = vpack.c.b16 %v6440, %v6439
    %v7815 = vpack.c.b16 %v6442, %v6441
    %v7816 = vpack.c.b16 %v6444, %v6443
    %v7817 = vpack.c.b16 %v6446, %v6445
    %v7818 = vpack.c.b16 %v6448, %v6447
    %v7819 = vpack.c.b16 %v6450, %v6449
    %v7820 = vpack.c.b16 %v6452, %v6451
    %v7821 = vpack.c.b16 %v6454, %v6453
    %v7822 = vpack.c.b16 %v6456, %v6455
    %v7823 = vpack.c.b16 %v6458, %v6457
    %v7824 = vpack.c.b16 %v6460, %v6459
    %v7825 = vpack.c.b16 %v6462, %v6461
    %v7826 = vpack.c.b16 %v6464, %v6463
    %v7827 = vpack.c.b16 %v6466, %v6465
    %v7828 = vpack.c.b16 %v6468, %v6467
    %v7829 = vpack.c.b16 %v6470, %v6469
    %v7830 = vpack.c.b16 %v6472, %v6471
    %v7831 = vpack.c.b16 %v6474, %v6473
    %v7832 = vpack.c.b16 %v6476, %v6475
    %v7833 = vpack.c.b16 %v6478, %v6477
    %v7834 = vpack.c.b16 %v6480, %v6479
    %v7835 = vpack.c.b16 %v6482, %v6481
    %v7836 = vpack.c.b16 %v6484, %v6483
    %v7837 = vpack.c.b16 %v6486, %v6485
    %v7838 = vpack.c.b16 %v6488, %v6487
    %v7839 = vpack.c.b16 %v6490, %v6489
    %v7840 = vpack.c.b16 %v6492, %v6491
    %v7841 = vpack.c.b16 %v6494, %v6493
    %v7842 = vpack.c.b16 %v6496, %v6495
    %v7843 = vpack.c.b16 %v6498, %v6497
    %v7844 = vpack.c.b16 %v6500, %v6499
    %v7845 = vpack.c.b16 %v6502, %v6501
    %v7846 = vpack.c.b16 %v6504, %v6503
    %v7847 = vpack.c.b16 %v6506, %v6505
    %v7848 = vpack.c.b16 %v6508, %v6507
    %v7849 = vpack.c.b16 %v6510, %v6509
    %v7850 = vpack.c.b16 %v6512, %v6511
    %v7851 = vpack.c.b16 %v6514, %v6513
    %v7852 = vpack.c.b16 %v6516, %v6515
    %v7853 = vpack.c.b16 %v6518, %v6517
    %v7854 = vpack.c.b16 %v6520, %v6519
    %v7855 = vpack.c.b16 %v6522, %v6521
    %v7856 = vpack.c.b16 %v6524, %v6523
    %v7857 = vpack.c.b16 %v6526, %v6525
    %v7858 = vpack.c.b16 %v6528, %v6527
    %v7859 = vpack.c.b16 %v6530, %v6529
    %v7860 = vpack.c.b16 %v6532, %v6531
    %v7861 = vpack.c.b16 %v6534, %v6533
    %v7862 = vpack.c.b16 %v6536, %v6535
    %v7863 = vpack.c.b16 %v6538, %v6537
    %v7864 = vpack.c.b16 %v6540, %v6539
    %v7865 = vpack.c.b16 %v6542, %v6541
    %v7866 = vpack.c.b16 %v6544, %v6543
    %v7867 = vpack.c.b16 %v6546, %v6545
    %v7868 = vpack.c.b16 %v6548, %v6547
    %v7869 = vpack.c.b16 %v6550, %v6549
    %v7870 = vpack.c.b16 %v6552, %v6551
    %v7871 = vpack.c.b16 %v6554, %v6553
    %v7872 = vpack.c.b16 %v6556, %v6555
    %v7873 = vpack.c.b16 %v6558, %v6557
    %v7874 = vpack.c.b16 %v6560, %v6559
    %v7875 = vpack.c.b16 %v6562, %v6561
    %v7876 = vpack.c.b16 %v6564, %v6563
    %v7877 = vpack.c.b16 %v6566, %v6565
    %v7878 = vpack.c.b16 %v6568, %v6567
    %v7879 = vpack.c.b16 %v6570, %v6569
    %v7880 = vpack.c.b16 %v6572, %v6571
    %v7881 = vpack.c.b16 %v6574, %v6573
    %v7882 = vpack.c.b16 %v6576, %v6575
    %v7883 = vpack.c.b16 %v6578, %v6577
    %v7884 = vpack.c.b16 %v6580, %v6579
    %v7885 = vpack.c.b16 %v6582, %v6581
    %v7886 = vpack.c.b16 %v6584, %v6583
    %v7887 = vpack.c.b16 %v6586, %v6585
    %v7888 = vpack.c.b16 %v6588, %v6587
    %v7889 = vpack.c.b16 %v6590, %v6589
    %v7890 = vpack.c.b16 %v6592, %v6591
    %v7891 = vpack.c.b16 %v6594, %v6593
    %v7892 = vpack.c.b16 %v6596, %v6595
    %v7893 = vpack.c.b16 %v6598, %v6597
    %v7894 = vpack.c.b16 %v6600, %v6599
    %v7895 = vpack.c.b16 %v6602, %v6601
    %v7896 = vpack.c.b16 %v6604, %v6603
    %v7897 = vpack.c.b16 %v6606, %v6605
    %v7898 = vpack.c.b16 %v6608, %v6607
    %v7899 = vpack.c.b16 %v6610, %v6609
    %v7900 = vpack.c.b16 %v6612, %v6611
    %v7901 = vpack.c.b16 %v6614, %v6613
    %v7902 = vpack.c.b16 %v6616, %v6615
    %v7903 = vpack.c.b16 %v6618, %v6617
    %v7904 = vpack.c.b16 %v6620, %v6619
    %v7905 = vpack.c.b16 %v6622, %v6621
    %v7906 = vpack.c.b16 %v6624, %v6623
    %v7907 = vpack.c.b16 %v6626, %v6625
    %v7908 = vpack.c.b16 %v6628, %v6627
    %v7909 = vpack.c.b16 %v6630, %v6629
    %v7910 = vpack.c.b16 %v6632, %v6631
    %v7911 = vpack.c.b16 %v6634, %v6633
    %v7912 = vpack.c.b16 %v6636, %v6635
    %v7913 = vpack.c.b16 %v6638, %v6637
    %v7914 = vpack.c.b16 %v6640, %v6639
    %v7915 = vpack.c.b16 %v6642, %v6641
    %v7916 = vpack.c.b16 %v6644, %v6643
    %v7917 = vpack.c.b16 %v6646, %v6645
    %v7918 = vpack.c.b16 %v6648, %v6647
    %v7919 = vpack.c.b16 %v6650, %v6649
    %v7920 = vpack.c.b16 %v6652, %v6651
    %v7921 = vpack.c.b16 %v6654, %v6653
    %v7922 = vpack.c.b16 %v6656, %v6655
    %v7923 = vpack.c.b16 %v6658, %v6657
    %v7924 = vpack.c.b16 %v6660, %v6659
    %v7925 = vpack.c.b16 %v6662, %v6661
    %v7926 = vpack.c.b16 %v6664, %v6663
    %v7927 = vpack.c.b16 %v6666, %v6665
    %v7928 = vpack.c.b16 %v6668, %v6667
    %v7929 = vpack.c.b16 %v6670, %v6669
    %v7930 = vpack.c.b16 %v6672, %v6671
    %v7931 = vpack.c.b16 %v6674, %v6673
    %v7932 = vpack.c.b16 %v6676, %v6675
    %v7933 = vpack.c.b16 %v6678, %v6677
    %v7934 = vpack.c.b16 %v6680, %v6679
    %v7935 = vpack.c.b16 %v6682, %v6681
    %v7936 = vpack.c.b16 %v6684, %v6683
    %v7937 = vpack.c.b16 %v6686, %v6685
    %v7938 = vpack.c.b16 %v6688, %v6687
    %v7939 = vpack.c.b16 %v6690, %v6689
    %v7940 = vpack.c.b16 %v6692, %v6691
    %v7941 = vpack.c.b16 %v6694, %v6693
    %v7942 = vpack.c.b16 %v6696, %v6695
    %v7943 = vpack.c.b16 %v6698, %v6697
    %v7944 = vpack.c.b16 %v6700, %v6699
    %v7945 = vpack.c.b16 %v6702, %v6701
    %v7946 = vpack.c.b16 %v6704, %v6703
    %v7947 = vpack.c.b16 %v6706, %v6705
    %v7948 = vpack.c.b16 %v6708, %v6707
    %v7949 = vpack.c.b16 %v6710, %v6709
    %v7950 = vpack.c.b16 %v6712, %v6711
    %v7951 = vpack.c.b16 %v6714, %v6713
    %v7952 = vpack.c.b16 %v6716, %v6715
    %v7953 = vpack.c.b16 %v6718, %v6717
    %v7954 = vpack.c.b16 %v6720, %v6719
    %v7955 = vpack.c.b16 %v6722, %v6721
    %v7956 = vpack.c.b16 %v6724, %v6723
    %v7957 = vpack.c.b16 %v6726, %v6725
    %v7958 = vpack.c.b16 %v6728, %v6727
    %v7959 = vpack.c.b16 %v6730, %v6729
    %v7960 = vpack.c.b16 %v6732, %v6731
    %v7961 = vpack.c.b16 %v6734, %v6733
    %v7962 = vpack.c.b16 %v6736, %v6735
    %v7963 = vpack.c.b16 %v6738, %v6737
    %v7964 = vpack.c.b16 %v6740, %v6739
    %v7965 = vpack.c.b16 %v6742, %v6741
    %v7966 = vpack.c.b16 %v6744, %v6743
    %v7967 = vpack.c.b16 %v6746, %v6745
    %v7968 = vpack.c.b16 %v6748, %v6747
    %v7969 = vpack.c.b16 %v6750, %v6749
    %v7970 = vpack.c.b16 %v6752, %v6751
    %v7971 = vpack.c.b16 %v6754, %v6753
    %v7972 = vpack.c.b16 %v6756, %v6755
    %v7973 = vpack.c.b16 %v6758, %v6757
    %v7974 = vpack.c.b16 %v6760, %v6759
    %v7975 = vpack.c.b16 %v6762, %v6761
    %v7976 = vpack.c.b16 %v6764, %v6763
    %v7977 = vpack.c.b16 %v6766, %v6765
    %v7978 = vpack.c.b16 %v6768, %v6767
    %v7979 = vpack.c.b16 %v6770, %v6769
    %v7980 = vpack.c.b16 %v6772, %v6771
    %v7981 = vpack.c.b16 %v6774, %v6773
    %v7982 = vpack.c.b16 %v6776, %v6775
    %v7983 = vpack.c.b16 %v6778, %v6777
    %v7984 = vpack.c.b16 %v6780, %v6779
    %v7985 = vpack.c.b16 %v6782, %v6781
    %v7986 = vpack.c.b16 %v6784, %v6783
    %v7987 = vpack.c.b16 %v6786, %v6785
    %v7988 = vpack.c.b16 %v6788, %v6787
    %v7989 = vpack.c.b16 %v6790, %v6789
    %v7990 = vpack.c.b16 %v6792, %v6791
    %v7991 = vpack.c.b16 %v6794, %v6793
    %v7992 = vpack.c.b16 %v6796, %v6795
    %v7993 = vpack.c.b16 %v6798, %v6797
    %v7994 = vpack.c.b16 %v6800, %v6799
    %v7995 = vpack.c.b16 %v6802, %v6801
    %v7996 = vpack.c.b16 %v6804, %v6803
    %v7997 = vpack.c.b16 %v6806, %v6805
    %v7998 = vpack.c.b16 %v6808, %v6807
    %v7999 = vpack.c.b16 %v6810, %v6809
    %v8000 = vpack.c.b16 %v6812, %v6811
    %v8001 = vpack.c.b16 %v6814, %v6813
    %v8002 = vpack.c.b16 %v6816, %v6815
    %v8003 = vpack.c.b16 %v6818, %v6817
    %v8004 = vpack.c.b16 %v6820, %v6819
    %v8005 = vpack.c.b16 %v6822, %v6821
    %v8006 = vpack.c.b16 %v6824, %v6823
    %v8007 = vpack.c.b16 %v6826, %v6825
    %v8008 = vpack.c.b16 %v6828, %v6827
    %v8009 = vpack.c.b16 %v6830, %v6829
    %v8010 = vpack.c.b16 %v6832, %v6831
    %v8011 = vpack.c.b16 %v6834, %v6833
    %v8012 = vpack.c.b16 %v6836, %v6835
    %v8013 = vpack.c.b16 %v6838, %v6837
    %v8014 = vpack.c.b16 %v6840, %v6839
    %v8015 = vpack.c.b16 %v6842, %v6841
    %v8016 = vpack.c.b16 %v6844, %v6843
    %v8017 = vpack.c.b16 %v6846, %v6845
    %v8018 = vpack.c.b16 %v6848, %v6847
    %v8019 = vpack.c.b16 %v6850, %v6849
    %v8020 = vpack.c.b16 %v6852, %v6851
    %v8021 = vpack.c.b16 %v6854, %v6853
    %v8022 = vpack.c.b16 %v6856, %v6855
    %v8023 = vpack.c.b16 %v6858, %v6857
    %v8024 = vpack.c.b16 %v6860, %v6859
    %v8025 = vpack.c.b16 %v6862, %v6861
    %v8026 = vpack.c.b16 %v6864, %v6863
    %v8027 = vpack.c.b16 %v6866, %v6865
    %v8028 = vpack.c.b16 %v6868, %v6867
    %v8029 = vpack.c.b16 %v6870, %v6869
    %v8030 = vpack.c.b16 %v6872, %v6871
    %v8031 = vpack.c.b16 %v6874, %v6873
    %v8032 = vpack.c.b16 %v6876, %v6875
    %v8033 = vpack.c.b16 %v6878, %v6877
    %v8034 = vpack.c.b16 %v6880, %v6879
    %v8035 = vpack.c.b16 %v6882, %v6881
    %v8036 = vpack.c.b16 %v6884, %v6883
    %v8037 = vpack.c.b16 %v6886, %v6885
    %v8038 = vpack.c.b16 %v6888, %v6887
    %v8039 = vpack.c.b16 %v6890, %v6889
    %v8040 = vpack.c.b16 %v6892, %v6891
    %v8041 = vpack.c.b16 %v6894, %v6893
    %v8042 = vpack.c.b16 %v6896, %v6895
    %v8043 = vpack.c.b16 %v6898, %v6897
    %v8044 = vpack.c.b16 %v6900, %v6899
    %v8045 = vpack.c.b16 %v6902, %v6901
    %v8046 = vpack.c.b16 %v6904, %v6903
    %v8047 = vpack.c.b16 %v6906, %v6905
    %v8048 = vpack.c.b16 %v6908, %v6907
    %v8049 = vpack.c.b16 %v6910, %v6909
    %v8050 = vpack.c.b16 %v6912, %v6911
    %v8051 = vpack.c.b16 %v6914, %v6913
    %v8052 = vpack.c.b16 %v6916, %v6915
    %v8053 = vpack.c.b16 %v6918, %v6917
    %v8054 = vpack.c.b16 %v6920, %v6919
    %v8055 = vpack.c.b16 %v6922, %v6921
    %v8056 = vpack.c.b16 %v6924, %v6923
    %v8057 = vpack.c.b16 %v6926, %v6925
    %v8058 = vpack.c.b16 %v6928, %v6927
    %v8059 = vpack.c.b16 %v6930, %v6929
    %v8060 = vpack.c.b16 %v6932, %v6931
    %v8061 = vpack.c.b16 %v6934, %v6933
    %v8062 = vpack.c.b16 %v6936, %v6935
    %v8063 = vpack.c.b16 %v6938, %v6937
    %v8064 = vpack.c.b16 %v6940, %v6939
    %v8065 = vpack.c.b16 %v6942, %v6941
    %v8066 = vpack.c.b16 %v6944, %v6943
    %v8067 = vpack.c.b16 %v6946, %v6945
    %v8068 = vpack.c.b16 %v6948, %v6947
    %v8069 = vpack.c.b16 %v6950, %v6949
    %v8070 = vpack.c.b16 %v6952, %v6951
    %v8071 = vpack.c.b16 %v6954, %v6953
    %v8072 = vpack.c.b16 %v6956, %v6955
    %v8073 = vpack.c.b16 %v6958, %v6957
    %v8074 = vpack.c.b16 %v6960, %v6959
    %v8075 = vpack.c.b16 %v6962, %v6961
    %v8076 = vpack.c.b16 %v6964, %v6963
    %v8077 = vpack.c.b16 %v6966, %v6965
    %v8078 = vpack.c.b16 %v6968, %v6967
    %v8079 = vpack.c.b16 %v6970, %v6969
    %v8080 = vpack.c.b16 %v6972, %v6971
    %v8081 = vpack.c.b16 %v6974, %v6973
    %v8082 = vpack.c.b16 %v6976, %v6975
    %v8083 = vpack.c.b16 %v6978, %v6977
    %v8084 = vpack.c.b16 %v6980, %v6979
    %v8085 = vpack.c.b16 %v6982, %v6981
    %v8086 = vpack.c.b16 %v6984, %v6983
    %v8087 = vpack.c.b16 %v6986, %v6985
    %v8088 = vpack.c.b16 %v6988, %v6987
    %v8089 = vpack.c.b16 %v6990, %v6989
    %v8090 = vpack.c.b16 %v6992, %v6991
    %v8091 = vpack.c.b16 %v6994, %v6993
    %v8092 = vpack.c.b16 %v6996, %v6995
    %v8093 = vpack.c.b16 %v6998, %v6997
    %v8094 = vpack.c.b16 %v7000, %v6999
    %v8095 = vpack.c.b16 %v7002, %v7001
    %v8096 = vpack.c.b16 %v7004, %v7003
    %v8097 = vpack.c.b16 %v7006, %v7005
    %v8098 = vpack.c.b16 %v7008, %v7007
    %v8099 = vpack.c.b16 %v7010, %v7009
    %v8100 = vpack.c.b16 %v7012, %v7011
    %v8101 = vpack.c.b16 %v7014, %v7013
    %v8102 = vpack.c.b16 %v7016, %v7015
    %v8103 = vpack.c.b16 %v7018, %v7017
    %v8104 = vpack.c.b16 %v7020, %v7019
    %v8105 = vpack.c.b16 %v7022, %v7021
    %v8106 = vpack.c.b16 %v7024, %v7023
    %v8107 = vpack.c.b16 %v7026, %v7025
    %v8108 = vpack.c.b16 %v7028, %v7027
    %v8109 = vpack.c.b16 %v7030, %v7029
    %v8110 = vpack.c.b16 %v7032, %v7031
    %v8111 = vpack.c.b16 %v7034, %v7033
    %v8112 = vpack.c.b16 %v7036, %v7035
    %v8113 = vpack.c.b16 %v7038, %v7037
    %v8114 = vpack.c.b16 %v7040, %v7039
    %v8115 = vpack.c.b16 %v7042, %v7041
    %v8116 = vpack.c.b16 %v7044, %v7043
    %v8117 = vpack.c.b16 %v7046, %v7045
    %v8118 = vpack.c.b16 %v7048, %v7047
    %v8119 = vpack.c.b16 %v7050, %v7049
    %v8120 = vpack.c.b16 %v7052, %v7051
    %v8121 = vpack.c.b16 %v7054, %v7053
    %v8122 = vpack.c.b16 %v7056, %v7055
    %v8123 = vpack.c.b16 %v7058, %v7057
    %v8124 = vpack.c.b16 %v7060, %v7059
    %v8125 = vpack.c.b16 %v7062, %v7061
    %v8126 = vpack.c.b16 %v7064, %v7063
    %v8127 = vpack.c.b16 %v7066, %v7065
    %v8128 = vpack.c.b16 %v7068, %v7067
    %v8129 = vpack.c.b16 %v7070, %v7069
    %v8130 = vpack.c.b16 %v7072, %v7071
    %v8131 = vpack.c.b16 %v7074, %v7073
    %v8132 = vpack.c.b16 %v7076, %v7075
    %v8133 = vpack.c.b16 %v7078, %v7077
    %v8134 = vpack.c.b16 %v7080, %v7079
    %v8135 = vpack.c.b16 %v7082, %v7081
    %v8136 = vpack.c.b16 %v7084, %v7083
    %v8137 = vpack.c.b16 %v7086, %v7085
    %v8138 = vpack.c.b16 %v7088, %v7087
    %v8139 = vpack.c.b16 %v7090, %v7089
    %v8140 = vpack.c.b16 %v7092, %v7091
    %v8141 = vpack.c.b16 %v7094, %v7093
    %v8142 = vpack.c.b16 %v7096, %v7095
    %v8143 = vpack.c.b16 %v7098, %v7097
    %v8144 = vpack.c.b16 %v7100, %v7099
    %v8145 = vpack.c.b16 %v7102, %v7101
    %v8146 = vpack.c.b16 %v7104, %v7103
    %v8147 = vpack.c.b16 %v7106, %v7105
    %v8148 = vpack.c.b16 %v7108, %v7107
    %v8149 = vpack.c.b16 %v7110, %v7109
    %v8150 = vpack.c.b16 %v7112, %v7111
    %v8151 = vpack.c.b16 %v7114, %v7113
    %v8152 = vpack.c.b16 %v7116, %v7115
    %v8153 = vpack.c.b16 %v7118, %v7117
    %v8154 = vpack.c.b16 %v7120, %v7119
    %v8155 = vpack.c.b16 %v7122, %v7121
    %v8156 = vpack.c.b16 %v7124, %v7123
    %v8157 = vpack.c.b16 %v7126, %v7125
    %v8158 = vpack.c.b16 %v7128, %v7127
    %v8159 = vpack.c.b16 %v7130, %v7129
    %v8160 = vpack.c.b16 %v7132, %v7131
    %v8161 = vpack.c.b16 %v7134, %v7133
    %v8162 = vpack.c.b16 %v7136, %v7135
    %v8163 = vpack.c.b16 %v7138, %v7137
    %vm9189 = vcmask 130048
    %v9191 = vsel %vm9189, %v2910, 0
    %9193 = vmatprep.subr.bf16.mxu0 0
    %9194 = vmatpush1.bf16.msra.mxu0 %v7139
    %9195 = vmatprep.subr.bf16.mxu0 0
    %9196 = vmatpush1.bf16.msra.mxu0 %v7140
    %9197 = vmatprep.subr.bf16.mxu0 0
    %9198 = vmatpush1.bf16.msra.mxu0 %v7141
    %9199 = vmatprep.subr.bf16.mxu0 0
    %9200 = vmatpush1.bf16.msra.mxu0 %v7142
    %9201 = vmatprep.subr.bf16.mxu0 0
    %9202 = vmatpush1.bf16.msra.mxu0 %v7143
    %9203 = vmatprep.subr.bf16.mxu0 0
    %9204 = vmatpush1.bf16.msra.mxu0 %v7144
    %9205 = vmatprep.subr.bf16.mxu0 0
    %9206 = vmatpush1.bf16.msra.mxu0 %v7145
    %9207 = vmatprep.subr.bf16.mxu0 0
    %9208 = vmatpush1.bf16.msra.mxu0 %v7146
    %9209 = vmatprep.subr.bf16.mxu0 0
    %9210 = vmatpush1.bf16.msra.mxu0 %v7147
    %9211 = vmatprep.subr.bf16.mxu0 0
    %9212 = vmatpush1.bf16.msra.mxu0 %v7148
    %9213 = vmatprep.subr.bf16.mxu0 0
    %9214 = vmatpush1.bf16.msra.mxu0 %v7149
    %9215 = vmatprep.subr.bf16.mxu0 0
    %9216 = vmatpush1.bf16.msra.mxu0 %v7150
    %9217 = vmatprep.subr.bf16.mxu0 0
    %9218 = vmatpush1.bf16.msra.mxu0 %v7151
    %9219 = vmatprep.subr.bf16.mxu0 0
    %9220 = vmatpush1.bf16.msra.mxu0 %v7152
    %9221 = vmatprep.subr.bf16.mxu0 0
    %9222 = vmatpush1.bf16.msra.mxu0 %v7153
    %9223 = vmatprep.subr.bf16.mxu0 0
    %9224 = vmatpush1.bf16.msra.mxu0 %v7154
    %9225 = vmatprep.mubr.bf16.mxu0 %v2150
    %9226 = vmatmul.mubr.bf16.gmra.mrb[0].mxu0 %v2136
    %v9227 = vpop.f32.mrb[0].mxu0
    %v9228 = vadd.f32 %v2094, %v9227
    %v9229 = vpop.f32.mrb[0].mxu0
    %v9230 = vpop.f32.mrb[0].mxu0
    %v9231 = vpop.f32.mrb[0].mxu0
    %9232 = vdwg.mxu0
    %9233 = vmatprep.subr.bf16.mxu0 0
    %9234 = vmatpush1.bf16.msra.mxu0 %v7155
    %9235 = vmatprep.subr.bf16.mxu0 0
    %9236 = vmatpush1.bf16.msra.mxu0 %v7156
    %9237 = vmatprep.subr.bf16.mxu0 0
    %9238 = vmatpush1.bf16.msra.mxu0 %v7157
    %9239 = vmatprep.subr.bf16.mxu0 0
    %9240 = vmatpush1.bf16.msra.mxu0 %v7158
    %9241 = vmatprep.subr.bf16.mxu0 0
    %9242 = vmatpush1.bf16.msra.mxu0 %v7159
    %9243 = vmatprep.subr.bf16.mxu0 0
    %9244 = vmatpush1.bf16.msra.mxu0 %v7160
    %9245 = vmatprep.subr.bf16.mxu0 0
    %9246 = vmatpush1.bf16.msra.mxu0 %v7161
    %9247 = vmatprep.subr.bf16.mxu0 0
    %9248 = vmatpush1.bf16.msra.mxu0 %v7162
    %9249 = vmatprep.subr.bf16.mxu0 0
    %9250 = vmatpush1.bf16.msra.mxu0 %v7163
    %9251 = vmatprep.subr.bf16.mxu0 0
    %9252 = vmatpush1.bf16.msra.mxu0 %v7164
    %9253 = vmatprep.subr.bf16.mxu0 0
    %9254 = vmatpush1.bf16.msra.mxu0 %v7165
    %9255 = vmatprep.subr.bf16.mxu0 0
    %9256 = vmatpush1.bf16.msra.mxu0 %v7166
    %9257 = vmatprep.subr.bf16.mxu0 0
    %9258 = vmatpush1.bf16.msra.mxu0 %v7167
    %9259 = vmatprep.subr.bf16.mxu0 0
    %9260 = vmatpush1.bf16.msra.mxu0 %v7168
    %9261 = vmatprep.subr.bf16.mxu0 0
    %9262 = vmatpush1.bf16.msra.mxu0 %v7169
    %9263 = vmatprep.subr.bf16.mxu0 0
    %9264 = vmatpush1.bf16.msra.mxu0 %v7170
    %9265 = vmatprep.mubr.bf16.mxu0 %v2160
    %9266 = vmatmul.mubr.bf16.gmra.mrb[0].mxu0 %v2158
    %v9267 = vpop.f32.mrb[0].mxu0
    %v9268 = vadd.f32 %v9228, %v9267
    %v9269 = vpop.f32.mrb[0].mxu0
    %v9270 = vpop.f32.mrb[0].mxu0
    %v9271 = vpop.f32.mrb[0].mxu0
    %9272 = vdwg.mxu0
    %9273 = vmatprep.subr.bf16.mxu0 0
    %9274 = vmatpush1.bf16.msra.mxu0 %v7171
    %9275 = vmatprep.subr.bf16.mxu0 0
    %9276 = vmatpush1.bf16.msra.mxu0 %v7172
    %9277 = vmatprep.subr.bf16.mxu0 0
    %9278 = vmatpush1.bf16.msra.mxu0 %v7173
    %9279 = vmatprep.subr.bf16.mxu0 0
    %9280 = vmatpush1.bf16.msra.mxu0 %v7174
    %9281 = vmatprep.subr.bf16.mxu0 0
    %9282 = vmatpush1.bf16.msra.mxu0 %v7175
    %9283 = vmatprep.subr.bf16.mxu0 0
    %9284 = vmatpush1.bf16.msra.mxu0 %v7176
    %9285 = vmatprep.subr.bf16.mxu0 0
    %9286 = vmatpush1.bf16.msra.mxu0 %v7177
    %9287 = vmatprep.subr.bf16.mxu0 0
    %9288 = vmatpush1.bf16.msra.mxu0 %v7178
    %9289 = vmatprep.subr.bf16.mxu0 0
    %9290 = vmatpush1.bf16.msra.mxu0 %v7179
    %9291 = vmatprep.subr.bf16.mxu0 0
    %9292 = vmatpush1.bf16.msra.mxu0 %v7180
    %9293 = vmatprep.subr.bf16.mxu0 0
    %9294 = vmatpush1.bf16.msra.mxu0 %v7181
    %9295 = vmatprep.subr.bf16.mxu0 0
    %9296 = vmatpush1.bf16.msra.mxu0 %v7182
    %9297 = vmatprep.subr.bf16.mxu0 0
    %9298 = vmatpush1.bf16.msra.mxu0 %v7183
    %9299 = vmatprep.subr.bf16.mxu0 0
    %9300 = vmatpush1.bf16.msra.mxu0 %v7184
    %9301 = vmatprep.subr.bf16.mxu0 0
    %9302 = vmatpush1.bf16.msra.mxu0 %v7185
    %9303 = vmatprep.subr.bf16.mxu0 0
    %9304 = vmatpush1.bf16.msra.mxu0 %v7186
    %9305 = vmatprep.mubr.bf16.mxu0 %v2157
    %9306 = vmatmul.mubr.bf16.gmra.mrb[0].mxu0 %v2143
    %v9307 = vpop.f32.mrb[0].mxu0
    %v9308 = vadd.f32 %v9268, %v9307
    %v9309 = vpop.f32.mrb[0].mxu0
    %v9310 = vpop.f32.mrb[0].mxu0
    %v9311 = vpop.f32.mrb[0].mxu0
    %9312 = vdwg.mxu0
    %9313 = vmatprep.subr.bf16.mxu0 0
    %9314 = vmatpush1.bf16.msra.mxu0 %v7187
    %9315 = vmatprep.subr.bf16.mxu0 0
    %9316 = vmatpush1.bf16.msra.mxu0 %v7188
    %9317 = vmatprep.subr.bf16.mxu0 0
    %9318 = vmatpush1.bf16.msra.mxu0 %v7189
    %9319 = vmatprep.subr.bf16.mxu0 0
    %9320 = vmatpush1.bf16.msra.mxu0 %v7190
    %9321 = vmatprep.subr.bf16.mxu0 0
    %9322 = vmatpush1.bf16.msra.mxu0 %v7191
    %9323 = vmatprep.subr.bf16.mxu0 0
    %9324 = vmatpush1.bf16.msra.mxu0 %v7192
    %9325 = vmatprep.subr.bf16.mxu0 0
    %9326 = vmatpush1.bf16.msra.mxu0 %v7193
    %9327 = vmatprep.subr.bf16.mxu0 0
    %9328 = vmatpush1.bf16.msra.mxu0 %v7194
    %9329 = vmatprep.subr.bf16.mxu0 0
    %9330 = vmatpush1.bf16.msra.mxu0 %v7195
    %9331 = vmatprep.subr.bf16.mxu0 0
    %9332 = vmatpush1.bf16.msra.mxu0 %v7196
    %9333 = vmatprep.subr.bf16.mxu0 0
    %9334 = vmatpush1.bf16.msra.mxu0 %v7197
    %9335 = vmatprep.subr.bf16.mxu0 0
    %9336 = vmatpush1.bf16.msra.mxu0 %v7198
    %9337 = vmatprep.subr.bf16.mxu0 0
    %9338 = vmatpush1.bf16.msra.mxu0 %v7199
    %9339 = vmatprep.subr.bf16.mxu0 0
    %9340 = vmatpush1.bf16.msra.mxu0 %v7200
    %9341 = vmatprep.subr.bf16.mxu0 0
    %9342 = vmatpush1.bf16.msra.mxu0 %v7201
    %9343 = vmatprep.subr.bf16.mxu0 0
    %9344 = vmatpush1.bf16.msra.mxu0 %v7202
    %9345 = vmatprep.mubr.bf16.mxu0 %v2161
    %9346 = vmatmul.mubr.bf16.gmra.mrb[0].mxu0 %v2159
    %v9347 = vpop.f32.mrb[0].mxu0
    %v9348 = vadd.f32 %v9308, %v9347
    %v9349 = vpop.f32.mrb[0].mxu0
    %v9350 = vpop.f32.mrb[0].mxu0
    %v9351 = vpop.f32.mrb[0].mxu0
    %9352 = vdwg.mxu0
    %9353 = vmatprep.subr.bf16.mxu0 0
    %9354 = vmatpush1.bf16.msra.mxu0 %v7203
    %9355 = vmatprep.subr.bf16.mxu0 0
    %9356 = vmatpush1.bf16.msra.mxu0 %v7204
    %9357 = vmatprep.subr.bf16.mxu0 0
    %9358 = vmatpush1.bf16.msra.mxu0 %v7205
    %9359 = vmatprep.subr.bf16.mxu0 0
    %9360 = vmatpush1.bf16.msra.mxu0 %v7206
    %9361 = vmatprep.subr.bf16.mxu0 0
    %9362 = vmatpush1.bf16.msra.mxu0 %v7207
    %9363 = vmatprep.subr.bf16.mxu0 0
    %9364 = vmatpush1.bf16.msra.mxu0 %v7208
    %9365 = vmatprep.subr.bf16.mxu0 0
    %9366 = vmatpush1.bf16.msra.mxu0 %v7209
    %9367 = vmatprep.subr.bf16.mxu0 0
    %9368 = vmatpush1.bf16.msra.mxu0 %v7210
    %9369 = vmatprep.subr.bf16.mxu0 0
    %9370 = vmatpush1.bf16.msra.mxu0 %v7211
    %9371 = vmatprep.subr.bf16.mxu0 0
    %9372 = vmatpush1.bf16.msra.mxu0 %v7212
    %9373 = vmatprep.subr.bf16.mxu0 0
    %9374 = vmatpush1.bf16.msra.mxu0 %v7213
    %9375 = vmatprep.subr.bf16.mxu0 0
    %9376 = vmatpush1.bf16.msra.mxu0 %v7214
    %9377 = vmatprep.subr.bf16.mxu0 0
    %9378 = vmatpush1.bf16.msra.mxu0 %v7215
    %9379 = vmatprep.subr.bf16.mxu0 0
    %9380 = vmatpush1.bf16.msra.mxu0 %v7216
    %9381 = vmatprep.subr.bf16.mxu0 0
    %9382 = vmatpush1.bf16.msra.mxu0 %v7217
    %9383 = vmatprep.subr.bf16.mxu0 0
    %9384 = vmatpush1.bf16.msra.mxu0 %v7218
    %9385 = vmatprep.mubr.bf16.mxu0 %v2199
    %9386 = vmatmul.mubr.bf16.gmra.mrb[0].mxu0 %v2185
    %v9387 = vpop.f32.mrb[0].mxu0
    %v9388 = vadd.f32 %v9348, %v9387
    %v9389 = vpop.f32.mrb[0].mxu0
    %v9390 = vpop.f32.mrb[0].mxu0
    %v9391 = vpop.f32.mrb[0].mxu0
    %9392 = vdwg.mxu0
    %9393 = vmatprep.subr.bf16.mxu0 0
    %9394 = vmatpush1.bf16.msra.mxu0 %v7219
    %9395 = vmatprep.subr.bf16.mxu0 0
    %9396 = vmatpush1.bf16.msra.mxu0 %v7220
    %9397 = vmatprep.subr.bf16.mxu0 0
    %9398 = vmatpush1.bf16.msra.mxu0 %v7221
    %9399 = vmatprep.subr.bf16.mxu0 0
    %9400 = vmatpush1.bf16.msra.mxu0 %v7222
    %9401 = vmatprep.subr.bf16.mxu0 0
    %9402 = vmatpush1.bf16.msra.mxu0 %v7223
    %9403 = vmatprep.subr.bf16.mxu0 0
    %9404 = vmatpush1.bf16.msra.mxu0 %v7224
    %9405 = vmatprep.subr.bf16.mxu0 0
    %9406 = vmatpush1.bf16.msra.mxu0 %v7225
    %9407 = vmatprep.subr.bf16.mxu0 0
    %9408 = vmatpush1.bf16.msra.mxu0 %v7226
    %9409 = vmatprep.subr.bf16.mxu0 0
    %9410 = vmatpush1.bf16.msra.mxu0 %v7227
    %9411 = vmatprep.subr.bf16.mxu0 0
    %9412 = vmatpush1.bf16.msra.mxu0 %v7228
    %9413 = vmatprep.subr.bf16.mxu0 0
    %9414 = vmatpush1.bf16.msra.mxu0 %v7229
    %9415 = vmatprep.subr.bf16.mxu0 0
    %9416 = vmatpush1.bf16.msra.mxu0 %v7230
    %9417 = vmatprep.subr.bf16.mxu0 0
    %9418 = vmatpush1.bf16.msra.mxu0 %v7231
    %9419 = vmatprep.subr.bf16.mxu0 0
    %9420 = vmatpush1.bf16.msra.mxu0 %v7232
    %9421 = vmatprep.subr.bf16.mxu0 0
    %9422 = vmatpush1.bf16.msra.mxu0 %v7233
    %9423 = vmatprep.subr.bf16.mxu0 0
    %9424 = vmatpush1.bf16.msra.mxu0 %v7234
    %9425 = vmatprep.mubr.bf16.mxu0 %v2209
    %9426 = vmatmul.mubr.bf16.gmra.mrb[0].mxu0 %v2207
    %v9427 = vpop.f32.mrb[0].mxu0
    %v9428 = vadd.f32 %v9388, %v9427
    %v9429 = vpop.f32.mrb[0].mxu0
    %v9430 = vpop.f32.mrb[0].mxu0
    %v9431 = vpop.f32.mrb[0].mxu0
    %9432 = vdwg.mxu0
    %9433 = vmatprep.subr.bf16.mxu0 0
    %9434 = vmatpush1.bf16.msra.mxu0 %v7235
    %9435 = vmatprep.subr.bf16.mxu0 0
    %9436 = vmatpush1.bf16.msra.mxu0 %v7236
    %9437 = vmatprep.subr.bf16.mxu0 0
    %9438 = vmatpush1.bf16.msra.mxu0 %v7237
    %9439 = vmatprep.subr.bf16.mxu0 0
    %9440 = vmatpush1.bf16.msra.mxu0 %v7238
    %9441 = vmatprep.subr.bf16.mxu0 0
    %9442 = vmatpush1.bf16.msra.mxu0 %v7239
    %9443 = vmatprep.subr.bf16.mxu0 0
    %9444 = vmatpush1.bf16.msra.mxu0 %v7240
    %9445 = vmatprep.subr.bf16.mxu0 0
    %9446 = vmatpush1.bf16.msra.mxu0 %v7241
    %9447 = vmatprep.subr.bf16.mxu0 0
    %9448 = vmatpush1.bf16.msra.mxu0 %v7242
    %9449 = vmatprep.subr.bf16.mxu0 0
    %9450 = vmatpush1.bf16.msra.mxu0 %v7243
    %9451 = vmatprep.subr.bf16.mxu0 0
    %9452 = vmatpush1.bf16.msra.mxu0 %v7244
    %9453 = vmatprep.subr.bf16.mxu0 0
    %9454 = vmatpush1.bf16.msra.mxu0 %v7245
    %9455 = vmatprep.subr.bf16.mxu0 0
    %9456 = vmatpush1.bf16.msra.mxu0 %v7246
    %9457 = vmatprep.subr.bf16.mxu0 0
    %9458 = vmatpush1.bf16.msra.mxu0 %v7247
    %9459 = vmatprep.subr.bf16.mxu0 0
    %9460 = vmatpush1.bf16.msra.mxu0 %v7248
    %9461 = vmatprep.subr.bf16.mxu0 0
    %9462 = vmatpush1.bf16.msra.mxu0 %v7249
    %9463 = vmatprep.subr.bf16.mxu0 0
    %9464 = vmatpush1.bf16.msra.mxu0 %v7250
    %9465 = vmatprep.mubr.bf16.mxu0 %v2206
    %9466 = vmatmul.mubr.bf16.gmra.mrb[0].mxu0 %v2192
    %v9467 = vpop.f32.mrb[0].mxu0
    %v9468 = vadd.f32 %v9428, %v9467
    %v9469 = vpop.f32.mrb[0].mxu0
    %v9470 = vpop.f32.mrb[0].mxu0
    %v9471 = vpop.f32.mrb[0].mxu0
    %9472 = vdwg.mxu0
    %9473 = vmatprep.subr.bf16.mxu0 0
    %9474 = vmatpush1.bf16.msra.mxu0 %v7251
    %9475 = vmatprep.subr.bf16.mxu0 0
    %9476 = vmatpush1.bf16.msra.mxu0 %v7252
    %9477 = vmatprep.subr.bf16.mxu0 0
    %9478 = vmatpush1.bf16.msra.mxu0 %v7253
    %9479 = vmatprep.subr.bf16.mxu0 0
    %9480 = vmatpush1.bf16.msra.mxu0 %v7254
    %9481 = vmatprep.subr.bf16.mxu0 0
    %9482 = vmatpush1.bf16.msra.mxu0 %v7255
    %9483 = vmatprep.subr.bf16.mxu0 0
    %9484 = vmatpush1.bf16.msra.mxu0 %v7256
    %9485 = vmatprep.subr.bf16.mxu0 0
    %9486 = vmatpush1.bf16.msra.mxu0 %v7257
    %9487 = vmatprep.subr.bf16.mxu0 0
    %9488 = vmatpush1.bf16.msra.mxu0 %v7258
    %9489 = vmatprep.subr.bf16.mxu0 0
    %9490 = vmatpush1.bf16.msra.mxu0 %v7259
    %9491 = vmatprep.subr.bf16.mxu0 0
    %9492 = vmatpush1.bf16.msra.mxu0 %v7260
    %9493 = vmatprep.subr.bf16.mxu0 0
    %9494 = vmatpush1.bf16.msra.mxu0 %v7261
    %9495 = vmatprep.subr.bf16.mxu0 0
    %9496 = vmatpush1.bf16.msra.mxu0 %v7262
    %9497 = vmatprep.subr.bf16.mxu0 0
    %9498 = vmatpush1.bf16.msra.mxu0 %v7263
    %9499 = vmatprep.subr.bf16.mxu0 0
    %9500 = vmatpush1.bf16.msra.mxu0 %v7264
    %9501 = vmatprep.subr.bf16.mxu0 0
    %9502 = vmatpush1.bf16.msra.mxu0 %v7265
    %9503 = vmatprep.subr.bf16.mxu0 0
    %9504 = vmatpush1.bf16.msra.mxu0 %v7266
    %9505 = vmatprep.mubr.bf16.mxu0 %v2210
    %9506 = vmatmul.mubr.bf16.gmra.mrb[0].mxu0 %v2208
    %v9507 = vpop.f32.mrb[0].mxu0
    %v9508 = vadd.f32 %v9468, %v9507
    %v9509 = vpop.f32.mrb[0].mxu0
    %v9510 = vpop.f32.mrb[0].mxu0
    %v9511 = vpop.f32.mrb[0].mxu0
    %9512 = vdwg.mxu0
    %9513 = vmatprep.subr.bf16.mxu0 0
    %9514 = vmatpush1.bf16.msra.mxu0 %v7267
    %9515 = vmatprep.subr.bf16.mxu0 0
    %9516 = vmatpush1.bf16.msra.mxu0 %v7268
    %9517 = vmatprep.subr.bf16.mxu0 0
    %9518 = vmatpush1.bf16.msra.mxu0 %v7269
    %9519 = vmatprep.subr.bf16.mxu0 0
    %9520 = vmatpush1.bf16.msra.mxu0 %v7270
    %9521 = vmatprep.subr.bf16.mxu0 0
    %9522 = vmatpush1.bf16.msra.mxu0 %v7271
    %9523 = vmatprep.subr.bf16.mxu0 0
    %9524 = vmatpush1.bf16.msra.mxu0 %v7272
    %9525 = vmatprep.subr.bf16.mxu0 0
    %9526 = vmatpush1.bf16.msra.mxu0 %v7273
    %9527 = vmatprep.subr.bf16.mxu0 0
    %9528 = vmatpush1.bf16.msra.mxu0 %v7274
    %9529 = vmatprep.subr.bf16.mxu0 0
    %9530 = vmatpush1.bf16.msra.mxu0 %v7275
    %9531 = vmatprep.subr.bf16.mxu0 0
    %9532 = vmatpush1.bf16.msra.mxu0 %v7276
    %9533 = vmatprep.subr.bf16.mxu0 0
    %9534 = vmatpush1.bf16.msra.mxu0 %v7277
    %9535 = vmatprep.subr.bf16.mxu0 0
    %9536 = vmatpush1.bf16.msra.mxu0 %v7278
    %9537 = vmatprep.subr.bf16.mxu0 0
    %9538 = vmatpush1.bf16.msra.mxu0 %v7279
    %9539 = vmatprep.subr.bf16.mxu0 0
    %9540 = vmatpush1.bf16.msra.mxu0 %v7280
    %9541 = vmatprep.subr.bf16.mxu0 0
    %9542 = vmatpush1.bf16.msra.mxu0 %v7281
    %9543 = vmatprep.subr.bf16.mxu0 0
    %9544 = vmatpush1.bf16.msra.mxu0 %v7282
    %9545 = vmatprep.mubr.bf16.mxu0 %v2248
    %9546 = vmatmul.mubr.bf16.gmra.mrb[0].mxu0 %v2234
    %v9547 = vpop.f32.mrb[0].mxu0
    %v9548 = vadd.f32 %v9508, %v9547
    %v9549 = vpop.f32.mrb[0].mxu0
    %v9550 = vpop.f32.mrb[0].mxu0
    %v9551 = vpop.f32.mrb[0].mxu0
    %9552 = vdwg.mxu0
    %9553 = vmatprep.subr.bf16.mxu0 0
    %9554 = vmatpush1.bf16.msra.mxu0 %v7283
    %9555 = vmatprep.subr.bf16.mxu0 0
    %9556 = vmatpush1.bf16.msra.mxu0 %v7284
    %9557 = vmatprep.subr.bf16.mxu0 0
    %9558 = vmatpush1.bf16.msra.mxu0 %v7285
    %9559 = vmatprep.subr.bf16.mxu0 0
    %9560 = vmatpush1.bf16.msra.mxu0 %v7286
    %9561 = vmatprep.subr.bf16.mxu0 0
    %9562 = vmatpush1.bf16.msra.mxu0 %v7287
    %9563 = vmatprep.subr.bf16.mxu0 0
    %9564 = vmatpush1.bf16.msra.mxu0 %v7288
    %9565 = vmatprep.subr.bf16.mxu0 0
    %9566 = vmatpush1.bf16.msra.mxu0 %v7289
    %9567 = vmatprep.subr.bf16.mxu0 0
    %9568 = vmatpush1.bf16.msra.mxu0 %v7290
    %9569 = vmatprep.subr.bf16.mxu0 0
    %9570 = vmatpush1.bf16.msra.mxu0 %v7291
    %9571 = vmatprep.subr.bf16.mxu0 0
    %9572 = vmatpush1.bf16.msra.mxu0 %v7292
    %9573 = vmatprep.subr.bf16.mxu0 0
    %9574 = vmatpush1.bf16.msra.mxu0 %v7293
    %9575 = vmatprep.subr.bf16.mxu0 0
    %9576 = vmatpush1.bf16.msra.mxu0 %v7294
    %9577 = vmatprep.subr.bf16.mxu0 0
    %9578 = vmatpush1.bf16.msra.mxu0 %v7295
    %9579 = vmatprep.subr.bf16.mxu0 0
    %9580 = vmatpush1.bf16.msra.mxu0 %v7296
    %9581 = vmatprep.subr.bf16.mxu0 0
    %9582 = vmatpush1.bf16.msra.mxu0 %v7297
    %9583 = vmatprep.subr.bf16.mxu0 0
    %9584 = vmatpush1.bf16.msra.mxu0 %v7298
    %9585 = vmatprep.mubr.bf16.mxu0 %v2258
    %9586 = vmatmul.mubr.bf16.gmra.mrb[0].mxu0 %v2256
    %v9587 = vpop.f32.mrb[0].mxu0
    %v9588 = vadd.f32 %v9548, %v9587
    %v9589 = vpop.f32.mrb[0].mxu0
    %v9590 = vpop.f32.mrb[0].mxu0
    %v9591 = vpop.f32.mrb[0].mxu0
    %9592 = vdwg.mxu0
    %9593 = vmatprep.subr.bf16.mxu0 0
    %9594 = vmatpush1.bf16.msra.mxu0 %v7299
    %9595 = vmatprep.subr.bf16.mxu0 0
    %9596 = vmatpush1.bf16.msra.mxu0 %v7300
    %9597 = vmatprep.subr.bf16.mxu0 0
    %9598 = vmatpush1.bf16.msra.mxu0 %v7301
    %9599 = vmatprep.subr.bf16.mxu0 0
    %9600 = vmatpush1.bf16.msra.mxu0 %v7302
    %9601 = vmatprep.subr.bf16.mxu0 0
    %9602 = vmatpush1.bf16.msra.mxu0 %v7303
    %9603 = vmatprep.subr.bf16.mxu0 0
    %9604 = vmatpush1.bf16.msra.mxu0 %v7304
    %9605 = vmatprep.subr.bf16.mxu0 0
    %9606 = vmatpush1.bf16.msra.mxu0 %v7305
    %9607 = vmatprep.subr.bf16.mxu0 0
    %9608 = vmatpush1.bf16.msra.mxu0 %v7306
    %9609 = vmatprep.subr.bf16.mxu0 0
    %9610 = vmatpush1.bf16.msra.mxu0 %v7307
    %9611 = vmatprep.subr.bf16.mxu0 0
    %9612 = vmatpush1.bf16.msra.mxu0 %v7308
    %9613 = vmatprep.subr.bf16.mxu0 0
    %9614 = vmatpush1.bf16.msra.mxu0 %v7309
    %9615 = vmatprep.subr.bf16.mxu0 0
    %9616 = vmatpush1.bf16.msra.mxu0 %v7310
    %9617 = vmatprep.subr.bf16.mxu0 0
    %9618 = vmatpush1.bf16.msra.mxu0 %v7311
    %9619 = vmatprep.subr.bf16.mxu0 0
    %9620 = vmatpush1.bf16.msra.mxu0 %v7312
    %9621 = vmatprep.subr.bf16.mxu0 0
    %9622 = vmatpush1.bf16.msra.mxu0 %v7313
    %9623 = vmatprep.subr.bf16.mxu0 0
    %9624 = vmatpush1.bf16.msra.mxu0 %v7314
    %9625 = vmatprep.mubr.bf16.mxu0 %v2255
    %9626 = vmatmul.mubr.bf16.gmra.mrb[0].mxu0 %v2241
    %v9627 = vpop.f32.mrb[0].mxu0
    %v9628 = vadd.f32 %v9588, %v9627
    %v9629 = vpop.f32.mrb[0].mxu0
    %v9630 = vpop.f32.mrb[0].mxu0
    %v9631 = vpop.f32.mrb[0].mxu0
    %9632 = vdwg.mxu0
    %9633 = vmatprep.subr.bf16.mxu0 0
    %9634 = vmatpush1.bf16.msra.mxu0 %v7315
    %9635 = vmatprep.subr.bf16.mxu0 0
    %9636 = vmatpush1.bf16.msra.mxu0 %v7316
    %9637 = vmatprep.subr.bf16.mxu0 0
    %9638 = vmatpush1.bf16.msra.mxu0 %v7317
    %9639 = vmatprep.subr.bf16.mxu0 0
    %9640 = vmatpush1.bf16.msra.mxu0 %v7318
    %9641 = vmatprep.subr.bf16.mxu0 0
    %9642 = vmatpush1.bf16.msra.mxu0 %v7319
    %9643 = vmatprep.subr.bf16.mxu0 0
    %9644 = vmatpush1.bf16.msra.mxu0 %v7320
    %9645 = vmatprep.subr.bf16.mxu0 0
    %9646 = vmatpush1.bf16.msra.mxu0 %v7321
    %9647 = vmatprep.subr.bf16.mxu0 0
    %9648 = vmatpush1.bf16.msra.mxu0 %v7322
    %9649 = vmatprep.subr.bf16.mxu0 0
    %9650 = vmatpush1.bf16.msra.mxu0 %v7323
    %9651 = vmatprep.subr.bf16.mxu0 0
    %9652 = vmatpush1.bf16.msra.mxu0 %v7324
    %9653 = vmatprep.subr.bf16.mxu0 0
    %9654 = vmatpush1.bf16.msra.mxu0 %v7325
    %9655 = vmatprep.subr.bf16.mxu0 0
    %9656 = vmatpush1.bf16.msra.mxu0 %v7326
    %9657 = vmatprep.subr.bf16.mxu0 0
    %9658 = vmatpush1.bf16.msra.mxu0 %v7327
    %9659 = vmatprep.subr.bf16.mxu0 0
    %9660 = vmatpush1.bf16.msra.mxu0 %v7328
    %9661 = vmatprep.subr.bf16.mxu0 0
    %9662 = vmatpush1.bf16.msra.mxu0 %v7329
    %9663 = vmatprep.subr.bf16.mxu0 0
    %9664 = vmatpush1.bf16.msra.mxu0 %v7330
    %9665 = vmatprep.mubr.bf16.mxu0 %v2259
    %9666 = vmatmul.mubr.bf16.gmra.mrb[0].mxu0 %v2257
    %v9667 = vpop.f32.mrb[0].mxu0
    %v9668 = vadd.f32 %v9628, %v9667
    %v9669 = vpop.f32.mrb[0].mxu0
    %v9670 = vpop.f32.mrb[0].mxu0
    %v9671 = vpop.f32.mrb[0].mxu0
    %9672 = vdwg.mxu0
    %9673 = vmatprep.subr.bf16.mxu0 0
    %9674 = vmatpush1.bf16.msra.mxu0 %v7331
    %9675 = vmatprep.subr.bf16.mxu0 0
    %9676 = vmatpush1.bf16.msra.mxu0 %v7332
    %9677 = vmatprep.subr.bf16.mxu0 0
    %9678 = vmatpush1.bf16.msra.mxu0 %v7333
    %9679 = vmatprep.subr.bf16.mxu0 0
    %9680 = vmatpush1.bf16.msra.mxu0 %v7334
    %9681 = vmatprep.subr.bf16.mxu0 0
    %9682 = vmatpush1.bf16.msra.mxu0 %v7335
    %9683 = vmatprep.subr.bf16.mxu0 0
    %9684 = vmatpush1.bf16.msra.mxu0 %v7336
    %9685 = vmatprep.subr.bf16.mxu0 0
    %9686 = vmatpush1.bf16.msra.mxu0 %v7337
    %9687 = vmatprep.subr.bf16.mxu0 0
    %9688 = vmatpush1.bf16.msra.mxu0 %v7338
    %9689 = vmatprep.subr.bf16.mxu0 0
    %9690 = vmatpush1.bf16.msra.mxu0 %v7339
    %9691 = vmatprep.subr.bf16.mxu0 0
    %9692 = vmatpush1.bf16.msra.mxu0 %v7340
    %9693 = vmatprep.subr.bf16.mxu0 0
    %9694 = vmatpush1.bf16.msra.mxu0 %v7341
    %9695 = vmatprep.subr.bf16.mxu0 0
    %9696 = vmatpush1.bf16.msra.mxu0 %v7342
    %9697 = vmatprep.subr.bf16.mxu0 0
    %9698 = vmatpush1.bf16.msra.mxu0 %v7343
    %9699 = vmatprep.subr.bf16.mxu0 0
    %9700 = vmatpush1.bf16.msra.mxu0 %v7344
    %9701 = vmatprep.subr.bf16.mxu0 0
    %9702 = vmatpush1.bf16.msra.mxu0 %v7345
    %9703 = vmatprep.subr.bf16.mxu0 0
    %9704 = vmatpush1.bf16.msra.mxu0 %v7346
    %9705 = vmatprep.mubr.bf16.mxu0 %v2297
    %9706 = vmatmul.mubr.bf16.gmra.mrb[0].mxu0 %v2283
    %v9707 = vpop.f32.mrb[0].mxu0
    %v9708 = vadd.f32 %v9668, %v9707
    %v9709 = vpop.f32.mrb[0].mxu0
    %v9710 = vpop.f32.mrb[0].mxu0
    %v9711 = vpop.f32.mrb[0].mxu0
    %9712 = vdwg.mxu0
    %9713 = vmatprep.subr.bf16.mxu0 0
    %9714 = vmatpush1.bf16.msra.mxu0 %v7347
    %9715 = vmatprep.subr.bf16.mxu0 0
    %9716 = vmatpush1.bf16.msra.mxu0 %v7348
    %9717 = vmatprep.subr.bf16.mxu0 0
    %9718 = vmatpush1.bf16.msra.mxu0 %v7349
    %9719 = vmatprep.subr.bf16.mxu0 0
    %9720 = vmatpush1.bf16.msra.mxu0 %v7350
    %9721 = vmatprep.subr.bf16.mxu0 0
    %9722 = vmatpush1.bf16.msra.mxu0 %v7351
    %9723 = vmatprep.subr.bf16.mxu0 0
    %9724 = vmatpush1.bf16.msra.mxu0 %v7352
    %9725 = vmatprep.subr.bf16.mxu0 0
    %9726 = vmatpush1.bf16.msra.mxu0 %v7353
    %9727 = vmatprep.subr.bf16.mxu0 0
    %9728 = vmatpush1.bf16.msra.mxu0 %v7354
    %9729 = vmatprep.subr.bf16.mxu0 0
    %9730 = vmatpush1.bf16.msra.mxu0 %v7355
    %9731 = vmatprep.subr.bf16.mxu0 0
    %9732 = vmatpush1.bf16.msra.mxu0 %v7356
    %9733 = vmatprep.subr.bf16.mxu0 0
    %9734 = vmatpush1.bf16.msra.mxu0 %v7357
    %9735 = vmatprep.subr.bf16.mxu0 0
    %9736 = vmatpush1.bf16.msra.mxu0 %v7358
    %9737 = vmatprep.subr.bf16.mxu0 0
    %9738 = vmatpush1.bf16.msra.mxu0 %v7359
    %9739 = vmatprep.subr.bf16.mxu0 0
    %9740 = vmatpush1.bf16.msra.mxu0 %v7360
    %9741 = vmatprep.subr.bf16.mxu0 0
    %9742 = vmatpush1.bf16.msra.mxu0 %v7361
    %9743 = vmatprep.subr.bf16.mxu0 0
    %9744 = vmatpush1.bf16.msra.mxu0 %v7362
    %9745 = vmatprep.mubr.bf16.mxu0 %v2307
    %9746 = vmatmul.mubr.bf16.gmra.mrb[0].mxu0 %v2305
    %v9747 = vpop.f32.mrb[0].mxu0
    %v9748 = vadd.f32 %v9708, %v9747
    %v9749 = vpop.f32.mrb[0].mxu0
    %v9750 = vpop.f32.mrb[0].mxu0
    %v9751 = vpop.f32.mrb[0].mxu0
    %9752 = vdwg.mxu0
    %9753 = vmatprep.subr.bf16.mxu0 0
    %9754 = vmatpush1.bf16.msra.mxu0 %v7363
    %9755 = vmatprep.subr.bf16.mxu0 0
    %9756 = vmatpush1.bf16.msra.mxu0 %v7364
    %9757 = vmatprep.subr.bf16.mxu0 0
    %9758 = vmatpush1.bf16.msra.mxu0 %v7365
    %9759 = vmatprep.subr.bf16.mxu0 0
    %9760 = vmatpush1.bf16.msra.mxu0 %v7366
    %9761 = vmatprep.subr.bf16.mxu0 0
    %9762 = vmatpush1.bf16.msra.mxu0 %v7367
    %9763 = vmatprep.subr.bf16.mxu0 0
    %9764 = vmatpush1.bf16.msra.mxu0 %v7368
    %9765 = vmatprep.subr.bf16.mxu0 0
    %9766 = vmatpush1.bf16.msra.mxu0 %v7369
    %9767 = vmatprep.subr.bf16.mxu0 0
    %9768 = vmatpush1.bf16.msra.mxu0 %v7370
    %9769 = vmatprep.subr.bf16.mxu0 0
    %9770 = vmatpush1.bf16.msra.mxu0 %v7371
    %9771 = vmatprep.subr.bf16.mxu0 0
    %9772 = vmatpush1.bf16.msra.mxu0 %v7372
    %9773 = vmatprep.subr.bf16.mxu0 0
    %9774 = vmatpush1.bf16.msra.mxu0 %v7373
    %9775 = vmatprep.subr.bf16.mxu0 0
    %9776 = vmatpush1.bf16.msra.mxu0 %v7374
    %9777 = vmatprep.subr.bf16.mxu0 0
    %9778 = vmatpush1.bf16.msra.mxu0 %v7375
    %9779 = vmatprep.subr.bf16.mxu0 0
    %9780 = vmatpush1.bf16.msra.mxu0 %v7376
    %9781 = vmatprep.subr.bf16.mxu0 0
    %9782 = vmatpush1.bf16.msra.mxu0 %v7377
    %9783 = vmatprep.subr.bf16.mxu0 0
    %9784 = vmatpush1.bf16.msra.mxu0 %v7378
    %9785 = vmatprep.mubr.bf16.mxu0 %v2304
    %9786 = vmatmul.mubr.bf16.gmra.mrb[0].mxu0 %v2290
    %v9787 = vpop.f32.mrb[0].mxu0
    %v9788 = vadd.f32 %v9748, %v9787
    %v9789 = vpop.f32.mrb[0].mxu0
    %v9790 = vpop.f32.mrb[0].mxu0
    %v9791 = vpop.f32.mrb[0].mxu0
    %9792 = vdwg.mxu0
    %9793 = vmatprep.subr.bf16.mxu0 0
    %9794 = vmatpush1.bf16.msra.mxu0 %v7379
    %9795 = vmatprep.subr.bf16.mxu0 0
    %9796 = vmatpush1.bf16.msra.mxu0 %v7380
    %9797 = vmatprep.subr.bf16.mxu0 0
    %9798 = vmatpush1.bf16.msra.mxu0 %v7381
    %9799 = vmatprep.subr.bf16.mxu0 0
    %9800 = vmatpush1.bf16.msra.mxu0 %v7382
    %9801 = vmatprep.subr.bf16.mxu0 0
    %9802 = vmatpush1.bf16.msra.mxu0 %v7383
    %9803 = vmatprep.subr.bf16.mxu0 0
    %9804 = vmatpush1.bf16.msra.mxu0 %v7384
    %9805 = vmatprep.subr.bf16.mxu0 0
    %9806 = vmatpush1.bf16.msra.mxu0 %v7385
    %9807 = vmatprep.subr.bf16.mxu0 0
    %9808 = vmatpush1.bf16.msra.mxu0 %v7386
    %9809 = vmatprep.subr.bf16.mxu0 0
    %9810 = vmatpush1.bf16.msra.mxu0 %v7387
    %9811 = vmatprep.subr.bf16.mxu0 0
    %9812 = vmatpush1.bf16.msra.mxu0 %v7388
    %9813 = vmatprep.subr.bf16.mxu0 0
    %9814 = vmatpush1.bf16.msra.mxu0 %v7389
    %9815 = vmatprep.subr.bf16.mxu0 0
    %9816 = vmatpush1.bf16.msra.mxu0 %v7390
    %9817 = vmatprep.subr.bf16.mxu0 0
    %9818 = vmatpush1.bf16.msra.mxu0 %v7391
    %9819 = vmatprep.subr.bf16.mxu0 0
    %9820 = vmatpush1.bf16.msra.mxu0 %v7392
    %9821 = vmatprep.subr.bf16.mxu0 0
    %9822 = vmatpush1.bf16.msra.mxu0 %v7393
    %9823 = vmatprep.subr.bf16.mxu0 0
    %9824 = vmatpush1.bf16.msra.mxu0 %v7394
    %9825 = vmatprep.mubr.bf16.mxu0 %v2308
    %9826 = vmatmul.mubr.bf16.gmra.mrb[0].mxu0 %v2306
    %v9827 = vpop.f32.mrb[0].mxu0
    %v9828 = vadd.f32 %v9788, %v9827
    %v9829 = vpop.f32.mrb[0].mxu0
    %v9830 = vpop.f32.mrb[0].mxu0
    %v9831 = vpop.f32.mrb[0].mxu0
    %9832 = vdwg.mxu0
    %9833 = vmatprep.subr.bf16.mxu0 0
    %9834 = vmatpush1.bf16.msra.mxu0 %v7395
    %9835 = vmatprep.subr.bf16.mxu0 0
    %9836 = vmatpush1.bf16.msra.mxu0 %v7396
    %9837 = vmatprep.subr.bf16.mxu0 0
    %9838 = vmatpush1.bf16.msra.mxu0 %v7397
    %9839 = vmatprep.subr.bf16.mxu0 0
    %9840 = vmatpush1.bf16.msra.mxu0 %v7398
    %9841 = vmatprep.subr.bf16.mxu0 0
    %9842 = vmatpush1.bf16.msra.mxu0 %v7399
    %9843 = vmatprep.subr.bf16.mxu0 0
    %9844 = vmatpush1.bf16.msra.mxu0 %v7400
    %9845 = vmatprep.subr.bf16.mxu0 0
    %9846 = vmatpush1.bf16.msra.mxu0 %v7401
    %9847 = vmatprep.subr.bf16.mxu0 0
    %9848 = vmatpush1.bf16.msra.mxu0 %v7402
    %9849 = vmatprep.subr.bf16.mxu0 0
    %9850 = vmatpush1.bf16.msra.mxu0 %v7403
    %9851 = vmatprep.subr.bf16.mxu0 0
    %9852 = vmatpush1.bf16.msra.mxu0 %v7404
    %9853 = vmatprep.subr.bf16.mxu0 0
    %9854 = vmatpush1.bf16.msra.mxu0 %v7405
    %9855 = vmatprep.subr.bf16.mxu0 0
    %9856 = vmatpush1.bf16.msra.mxu0 %v7406
    %9857 = vmatprep.subr.bf16.mxu0 0
    %9858 = vmatpush1.bf16.msra.mxu0 %v7407
    %9859 = vmatprep.subr.bf16.mxu0 0
    %9860 = vmatpush1.bf16.msra.mxu0 %v7408
    %9861 = vmatprep.subr.bf16.mxu0 0
    %9862 = vmatpush1.bf16.msra.mxu0 %v7409
    %9863 = vmatprep.subr.bf16.mxu0 0
    %9864 = vmatpush1.bf16.msra.mxu0 %v7410
    %9865 = vmatprep.mubr.bf16.mxu0 %v2346
    %9866 = vmatmul.mubr.bf16.gmra.mrb[0].mxu0 %v2332
    %v9867 = vpop.f32.mrb[0].mxu0
    %v9868 = vadd.f32 %v9828, %v9867
    %v9869 = vpop.f32.mrb[0].mxu0
    %v9870 = vpop.f32.mrb[0].mxu0
    %v9871 = vpop.f32.mrb[0].mxu0
    %9872 = vdwg.mxu0
    %9873 = vmatprep.subr.bf16.mxu0 0
    %9874 = vmatpush1.bf16.msra.mxu0 %v7411
    %9875 = vmatprep.subr.bf16.mxu0 0
    %9876 = vmatpush1.bf16.msra.mxu0 %v7412
    %9877 = vmatprep.subr.bf16.mxu0 0
    %9878 = vmatpush1.bf16.msra.mxu0 %v7413
    %9879 = vmatprep.subr.bf16.mxu0 0
    %9880 = vmatpush1.bf16.msra.mxu0 %v7414
    %9881 = vmatprep.subr.bf16.mxu0 0
    %9882 = vmatpush1.bf16.msra.mxu0 %v7415
    %9883 = vmatprep.subr.bf16.mxu0 0
    %9884 = vmatpush1.bf16.msra.mxu0 %v7416
    %9885 = vmatprep.subr.bf16.mxu0 0
    %9886 = vmatpush1.bf16.msra.mxu0 %v7417
    %9887 = vmatprep.subr.bf16.mxu0 0
    %9888 = vmatpush1.bf16.msra.mxu0 %v7418
    %9889 = vmatprep.subr.bf16.mxu0 0
    %9890 = vmatpush1.bf16.msra.mxu0 %v7419
    %9891 = vmatprep.subr.bf16.mxu0 0
    %9892 = vmatpush1.bf16.msra.mxu0 %v7420
    %9893 = vmatprep.subr.bf16.mxu0 0
    %9894 = vmatpush1.bf16.msra.mxu0 %v7421
    %9895 = vmatprep.subr.bf16.mxu0 0
    %9896 = vmatpush1.bf16.msra.mxu0 %v7422
    %9897 = vmatprep.subr.bf16.mxu0 0
    %9898 = vmatpush1.bf16.msra.mxu0 %v7423
    %9899 = vmatprep.subr.bf16.mxu0 0
    %9900 = vmatpush1.bf16.msra.mxu0 %v7424
    %9901 = vmatprep.subr.bf16.mxu0 0
    %9902 = vmatpush1.bf16.msra.mxu0 %v7425
    %9903 = vmatprep.subr.bf16.mxu0 0
    %9904 = vmatpush1.bf16.msra.mxu0 %v7426
    %9905 = vmatprep.mubr.bf16.mxu0 %v2356
    %9906 = vmatmul.mubr.bf16.gmra.mrb[0].mxu0 %v2354
    %v9907 = vpop.f32.mrb[0].mxu0
    %v9908 = vadd.f32 %v9868, %v9907
    %v9909 = vpop.f32.mrb[0].mxu0
    %v9910 = vpop.f32.mrb[0].mxu0
    %v9911 = vpop.f32.mrb[0].mxu0
    %9912 = vdwg.mxu0
    %9913 = vmatprep.subr.bf16.mxu0 0
    %9914 = vmatpush1.bf16.msra.mxu0 %v7427
    %9915 = vmatprep.subr.bf16.mxu0 0
    %9916 = vmatpush1.bf16.msra.mxu0 %v7428
    %9917 = vmatprep.subr.bf16.mxu0 0
    %9918 = vmatpush1.bf16.msra.mxu0 %v7429
    %9919 = vmatprep.subr.bf16.mxu0 0
    %9920 = vmatpush1.bf16.msra.mxu0 %v7430
    %9921 = vmatprep.subr.bf16.mxu0 0
    %9922 = vmatpush1.bf16.msra.mxu0 %v7431
    %9923 = vmatprep.subr.bf16.mxu0 0
    %9924 = vmatpush1.bf16.msra.mxu0 %v7432
    %9925 = vmatprep.subr.bf16.mxu0 0
    %9926 = vmatpush1.bf16.msra.mxu0 %v7433
    %9927 = vmatprep.subr.bf16.mxu0 0
    %9928 = vmatpush1.bf16.msra.mxu0 %v7434
    %9929 = vmatprep.subr.bf16.mxu0 0
    %9930 = vmatpush1.bf16.msra.mxu0 %v7435
    %9931 = vmatprep.subr.bf16.mxu0 0
    %9932 = vmatpush1.bf16.msra.mxu0 %v7436
    %9933 = vmatprep.subr.bf16.mxu0 0
    %9934 = vmatpush1.bf16.msra.mxu0 %v7437
    %9935 = vmatprep.subr.bf16.mxu0 0
    %9936 = vmatpush1.bf16.msra.mxu0 %v7438
    %9937 = vmatprep.subr.bf16.mxu0 0
    %9938 = vmatpush1.bf16.msra.mxu0 %v7439
    %9939 = vmatprep.subr.bf16.mxu0 0
    %9940 = vmatpush1.bf16.msra.mxu0 %v7440
    %9941 = vmatprep.subr.bf16.mxu0 0
    %9942 = vmatpush1.bf16.msra.mxu0 %v7441
    %9943 = vmatprep.subr.bf16.mxu0 0
    %9944 = vmatpush1.bf16.msra.mxu0 %v7442
    %9945 = vmatprep.mubr.bf16.mxu0 %v2353
    %9946 = vmatmul.mubr.bf16.gmra.mrb[0].mxu0 %v2339
    %v9947 = vpop.f32.mrb[0].mxu0
    %v9948 = vadd.f32 %v9908, %v9947
    %v9949 = vpop.f32.mrb[0].mxu0
    %v9950 = vpop.f32.mrb[0].mxu0
    %v9951 = vpop.f32.mrb[0].mxu0
    %9952 = vdwg.mxu0
    %9953 = vmatprep.subr.bf16.mxu0 0
    %9954 = vmatpush1.bf16.msra.mxu0 %v7443
    %9955 = vmatprep.subr.bf16.mxu0 0
    %9956 = vmatpush1.bf16.msra.mxu0 %v7444
    %9957 = vmatprep.subr.bf16.mxu0 0
    %9958 = vmatpush1.bf16.msra.mxu0 %v7445
    %9959 = vmatprep.subr.bf16.mxu0 0
    %9960 = vmatpush1.bf16.msra.mxu0 %v7446
    %9961 = vmatprep.subr.bf16.mxu0 0
    %9962 = vmatpush1.bf16.msra.mxu0 %v7447
    %9963 = vmatprep.subr.bf16.mxu0 0
    %9964 = vmatpush1.bf16.msra.mxu0 %v7448
    %9965 = vmatprep.subr.bf16.mxu0 0
    %9966 = vmatpush1.bf16.msra.mxu0 %v7449
    %9967 = vmatprep.subr.bf16.mxu0 0
    %9968 = vmatpush1.bf16.msra.mxu0 %v7450
    %9969 = vmatprep.subr.bf16.mxu0 0
    %9970 = vmatpush1.bf16.msra.mxu0 %v7451
    %9971 = vmatprep.subr.bf16.mxu0 0
    %9972 = vmatpush1.bf16.msra.mxu0 %v7452
    %9973 = vmatprep.subr.bf16.mxu0 0
    %9974 = vmatpush1.bf16.msra.mxu0 %v7453
    %9975 = vmatprep.subr.bf16.mxu0 0
    %9976 = vmatpush1.bf16.msra.mxu0 %v7454
    %9977 = vmatprep.subr.bf16.mxu0 0
    %9978 = vmatpush1.bf16.msra.mxu0 %v7455
    %9979 = vmatprep.subr.bf16.mxu0 0
    %9980 = vmatpush1.bf16.msra.mxu0 %v7456
    %9981 = vmatprep.subr.bf16.mxu0 0
    %9982 = vmatpush1.bf16.msra.mxu0 %v7457
    %9983 = vmatprep.subr.bf16.mxu0 0
    %9984 = vmatpush1.bf16.msra.mxu0 %v7458
    %9985 = vmatprep.mubr.bf16.mxu0 %v2357
    %9986 = vmatmul.mubr.bf16.gmra.mrb[0].mxu0 %v2355
    %v9987 = vpop.f32.mrb[0].mxu0
    %v9988 = vadd.f32 %v9948, %v9987
    %v9989 = vpop.f32.mrb[0].mxu0
    %v9990 = vpop.f32.mrb[0].mxu0
    %v9991 = vpop.f32.mrb[0].mxu0
    %9992 = vdwg.mxu0
    %9993 = vmatprep.subr.bf16.mxu0 0
    %9994 = vmatpush1.bf16.msra.mxu0 %v7459
    %9995 = vmatprep.subr.bf16.mxu0 0
    %9996 = vmatpush1.bf16.msra.mxu0 %v7460
    %9997 = vmatprep.subr.bf16.mxu0 0
    %9998 = vmatpush1.bf16.msra.mxu0 %v7461
    %9999 = vmatprep.subr.bf16.mxu0 0
    %10000 = vmatpush1.bf16.msra.mxu0 %v7462
    %10001 = vmatprep.subr.bf16.mxu0 0
    %10002 = vmatpush1.bf16.msra.mxu0 %v7463
    %10003 = vmatprep.subr.bf16.mxu0 0
    %10004 = vmatpush1.bf16.msra.mxu0 %v7464
    %10005 = vmatprep.subr.bf16.mxu0 0
    %10006 = vmatpush1.bf16.msra.mxu0 %v7465
    %10007 = vmatprep.subr.bf16.mxu0 0
    %10008 = vmatpush1.bf16.msra.mxu0 %v7466
    %10009 = vmatprep.subr.bf16.mxu0 0
    %10010 = vmatpush1.bf16.msra.mxu0 %v7467
    %10011 = vmatprep.subr.bf16.mxu0 0
    %10012 = vmatpush1.bf16.msra.mxu0 %v7468
    %10013 = vmatprep.subr.bf16.mxu0 0
    %10014 = vmatpush1.bf16.msra.mxu0 %v7469
    %10015 = vmatprep.subr.bf16.mxu0 0
    %10016 = vmatpush1.bf16.msra.mxu0 %v7470
    %10017 = vmatprep.subr.bf16.mxu0 0
    %10018 = vmatpush1.bf16.msra.mxu0 %v7471
    %10019 = vmatprep.subr.bf16.mxu0 0
    %10020 = vmatpush1.bf16.msra.mxu0 %v7472
    %10021 = vmatprep.subr.bf16.mxu0 0
    %10022 = vmatpush1.bf16.msra.mxu0 %v7473
    %10023 = vmatprep.subr.bf16.mxu0 0
    %10024 = vmatpush1.bf16.msra.mxu0 %v7474
    %10025 = vmatprep.mubr.bf16.mxu0 %v2395
    %10026 = vmatmul.mubr.bf16.gmra.mrb[0].mxu0 %v2381
    %v10027 = vpop.f32.mrb[0].mxu0
    %v10028 = vadd.f32 %v9988, %v10027
    %v10029 = vpop.f32.mrb[0].mxu0
    %v10030 = vpop.f32.mrb[0].mxu0
    %v10031 = vpop.f32.mrb[0].mxu0
    %10032 = vdwg.mxu0
    %10033 = vmatprep.subr.bf16.mxu0 0
    %10034 = vmatpush1.bf16.msra.mxu0 %v7475
    %10035 = vmatprep.subr.bf16.mxu0 0
    %10036 = vmatpush1.bf16.msra.mxu0 %v7476
    %10037 = vmatprep.subr.bf16.mxu0 0
    %10038 = vmatpush1.bf16.msra.mxu0 %v7477
    %10039 = vmatprep.subr.bf16.mxu0 0
    %10040 = vmatpush1.bf16.msra.mxu0 %v7478
    %10041 = vmatprep.subr.bf16.mxu0 0
    %10042 = vmatpush1.bf16.msra.mxu0 %v7479
    %10043 = vmatprep.subr.bf16.mxu0 0
    %10044 = vmatpush1.bf16.msra.mxu0 %v7480
    %10045 = vmatprep.subr.bf16.mxu0 0
    %10046 = vmatpush1.bf16.msra.mxu0 %v7481
    %10047 = vmatprep.subr.bf16.mxu0 0
    %10048 = vmatpush1.bf16.msra.mxu0 %v7482
    %10049 = vmatprep.subr.bf16.mxu0 0
    %10050 = vmatpush1.bf16.msra.mxu0 %v7483
    %10051 = vmatprep.subr.bf16.mxu0 0
    %10052 = vmatpush1.bf16.msra.mxu0 %v7484
    %10053 = vmatprep.subr.bf16.mxu0 0
    %10054 = vmatpush1.bf16.msra.mxu0 %v7485
    %10055 = vmatprep.subr.bf16.mxu0 0
    %10056 = vmatpush1.bf16.msra.mxu0 %v7486
    %10057 = vmatprep.subr.bf16.mxu0 0
    %10058 = vmatpush1.bf16.msra.mxu0 %v7487
    %10059 = vmatprep.subr.bf16.mxu0 0
    %10060 = vmatpush1.bf16.msra.mxu0 %v7488
    %10061 = vmatprep.subr.bf16.mxu0 0
    %10062 = vmatpush1.bf16.msra.mxu0 %v7489
    %10063 = vmatprep.subr.bf16.mxu0 0
    %10064 = vmatpush1.bf16.msra.mxu0 %v7490
    %10065 = vmatprep.mubr.bf16.mxu0 %v2405
    %10066 = vmatmul.mubr.bf16.gmra.mrb[0].mxu0 %v2403
    %v10067 = vpop.f32.mrb[0].mxu0
    %v10068 = vadd.f32 %v10028, %v10067
    %v10069 = vpop.f32.mrb[0].mxu0
    %v10070 = vpop.f32.mrb[0].mxu0
    %v10071 = vpop.f32.mrb[0].mxu0
    %10072 = vdwg.mxu0
    %10073 = vmatprep.subr.bf16.mxu0 0
    %10074 = vmatpush1.bf16.msra.mxu0 %v7491
    %10075 = vmatprep.subr.bf16.mxu0 0
    %10076 = vmatpush1.bf16.msra.mxu0 %v7492
    %10077 = vmatprep.subr.bf16.mxu0 0
    %10078 = vmatpush1.bf16.msra.mxu0 %v7493
    %10079 = vmatprep.subr.bf16.mxu0 0
    %10080 = vmatpush1.bf16.msra.mxu0 %v7494
    %10081 = vmatprep.subr.bf16.mxu0 0
    %10082 = vmatpush1.bf16.msra.mxu0 %v7495
    %10083 = vmatprep.subr.bf16.mxu0 0
    %10084 = vmatpush1.bf16.msra.mxu0 %v7496
    %10085 = vmatprep.subr.bf16.mxu0 0
    %10086 = vmatpush1.bf16.msra.mxu0 %v7497
    %10087 = vmatprep.subr.bf16.mxu0 0
    %10088 = vmatpush1.bf16.msra.mxu0 %v7498
    %10089 = vmatprep.subr.bf16.mxu0 0
    %10090 = vmatpush1.bf16.msra.mxu0 %v7499
    %10091 = vmatprep.subr.bf16.mxu0 0
    %10092 = vmatpush1.bf16.msra.mxu0 %v7500
    %10093 = vmatprep.subr.bf16.mxu0 0
    %10094 = vmatpush1.bf16.msra.mxu0 %v7501
    %10095 = vmatprep.subr.bf16.mxu0 0
    %10096 = vmatpush1.bf16.msra.mxu0 %v7502
    %10097 = vmatprep.subr.bf16.mxu0 0
    %10098 = vmatpush1.bf16.msra.mxu0 %v7503
    %10099 = vmatprep.subr.bf16.mxu0 0
    %10100 = vmatpush1.bf16.msra.mxu0 %v7504
    %10101 = vmatprep.subr.bf16.mxu0 0
    %10102 = vmatpush1.bf16.msra.mxu0 %v7505
    %10103 = vmatprep.subr.bf16.mxu0 0
    %10104 = vmatpush1.bf16.msra.mxu0 %v7506
    %10105 = vmatprep.mubr.bf16.mxu0 %v2402
    %10106 = vmatmul.mubr.bf16.gmra.mrb[0].mxu0 %v2388
    %v10107 = vpop.f32.mrb[0].mxu0
    %v10108 = vadd.f32 %v10068, %v10107
    %v10109 = vpop.f32.mrb[0].mxu0
    %v10110 = vpop.f32.mrb[0].mxu0
    %v10111 = vpop.f32.mrb[0].mxu0
    %10112 = vdwg.mxu0
    %10113 = vmatprep.subr.bf16.mxu0 0
    %10114 = vmatpush1.bf16.msra.mxu0 %v7507
    %10115 = vmatprep.subr.bf16.mxu0 0
    %10116 = vmatpush1.bf16.msra.mxu0 %v7508
    %10117 = vmatprep.subr.bf16.mxu0 0
    %10118 = vmatpush1.bf16.msra.mxu0 %v7509
    %10119 = vmatprep.subr.bf16.mxu0 0
    %10120 = vmatpush1.bf16.msra.mxu0 %v7510
    %10121 = vmatprep.subr.bf16.mxu0 0
    %10122 = vmatpush1.bf16.msra.mxu0 %v7511
    %10123 = vmatprep.subr.bf16.mxu0 0
    %10124 = vmatpush1.bf16.msra.mxu0 %v7512
    %10125 = vmatprep.subr.bf16.mxu0 0
    %10126 = vmatpush1.bf16.msra.mxu0 %v7513
    %10127 = vmatprep.subr.bf16.mxu0 0
    %10128 = vmatpush1.bf16.msra.mxu0 %v7514
    %10129 = vmatprep.subr.bf16.mxu0 0
    %10130 = vmatpush1.bf16.msra.mxu0 %v7515
    %10131 = vmatprep.subr.bf16.mxu0 0
    %10132 = vmatpush1.bf16.msra.mxu0 %v7516
    %10133 = vmatprep.subr.bf16.mxu0 0
    %10134 = vmatpush1.bf16.msra.mxu0 %v7517
    %10135 = vmatprep.subr.bf16.mxu0 0
    %10136 = vmatpush1.bf16.msra.mxu0 %v7518
    %10137 = vmatprep.subr.bf16.mxu0 0
    %10138 = vmatpush1.bf16.msra.mxu0 %v7519
    %10139 = vmatprep.subr.bf16.mxu0 0
    %10140 = vmatpush1.bf16.msra.mxu0 %v7520
    %10141 = vmatprep.subr.bf16.mxu0 0
    %10142 = vmatpush1.bf16.msra.mxu0 %v7521
    %10143 = vmatprep.subr.bf16.mxu0 0
    %10144 = vmatpush1.bf16.msra.mxu0 %v7522
    %10145 = vmatprep.mubr.bf16.mxu0 %v2406
    %10146 = vmatmul.mubr.bf16.gmra.mrb[0].mxu0 %v2404
    %v10147 = vpop.f32.mrb[0].mxu0
    %v10148 = vadd.f32 %v10108, %v10147
    %v10149 = vpop.f32.mrb[0].mxu0
    %v10150 = vpop.f32.mrb[0].mxu0
    %v10151 = vpop.f32.mrb[0].mxu0
    %10152 = vdwg.mxu0
    %10153 = vmatprep.subr.bf16.mxu0 0
    %10154 = vmatpush1.bf16.msra.mxu0 %v7523
    %10155 = vmatprep.subr.bf16.mxu0 0
    %10156 = vmatpush1.bf16.msra.mxu0 %v7524
    %10157 = vmatprep.subr.bf16.mxu0 0
    %10158 = vmatpush1.bf16.msra.mxu0 %v7525
    %10159 = vmatprep.subr.bf16.mxu0 0
    %10160 = vmatpush1.bf16.msra.mxu0 %v7526
    %10161 = vmatprep.subr.bf16.mxu0 0
    %10162 = vmatpush1.bf16.msra.mxu0 %v7527
    %10163 = vmatprep.subr.bf16.mxu0 0
    %10164 = vmatpush1.bf16.msra.mxu0 %v7528
    %10165 = vmatprep.subr.bf16.mxu0 0
    %10166 = vmatpush1.bf16.msra.mxu0 %v7529
    %10167 = vmatprep.subr.bf16.mxu0 0
    %10168 = vmatpush1.bf16.msra.mxu0 %v7530
    %10169 = vmatprep.subr.bf16.mxu0 0
    %10170 = vmatpush1.bf16.msra.mxu0 %v7531
    %10171 = vmatprep.subr.bf16.mxu0 0
    %10172 = vmatpush1.bf16.msra.mxu0 %v7532
    %10173 = vmatprep.subr.bf16.mxu0 0
    %10174 = vmatpush1.bf16.msra.mxu0 %v7533
    %10175 = vmatprep.subr.bf16.mxu0 0
    %10176 = vmatpush1.bf16.msra.mxu0 %v7534
    %10177 = vmatprep.subr.bf16.mxu0 0
    %10178 = vmatpush1.bf16.msra.mxu0 %v7535
    %10179 = vmatprep.subr.bf16.mxu0 0
    %10180 = vmatpush1.bf16.msra.mxu0 %v7536
    %10181 = vmatprep.subr.bf16.mxu0 0
    %10182 = vmatpush1.bf16.msra.mxu0 %v7537
    %10183 = vmatprep.subr.bf16.mxu0 0
    %10184 = vmatpush1.bf16.msra.mxu0 %v7538
    %10185 = vmatprep.mubr.bf16.mxu0 %v2444
    %10186 = vmatmul.mubr.bf16.gmra.mrb[0].mxu0 %v2430
    %v10187 = vpop.f32.mrb[0].mxu0
    %v10188 = vadd.f32 %v10148, %v10187
    %v10189 = vpop.f32.mrb[0].mxu0
    %v10190 = vpop.f32.mrb[0].mxu0
    %v10191 = vpop.f32.mrb[0].mxu0
    %10192 = vdwg.mxu0
    %10193 = vmatprep.subr.bf16.mxu0 0
    %10194 = vmatpush1.bf16.msra.mxu0 %v7539
    %10195 = vmatprep.subr.bf16.mxu0 0
    %10196 = vmatpush1.bf16.msra.mxu0 %v7540
    %10197 = vmatprep.subr.bf16.mxu0 0
    %10198 = vmatpush1.bf16.msra.mxu0 %v7541
    %10199 = vmatprep.subr.bf16.mxu0 0
    %10200 = vmatpush1.bf16.msra.mxu0 %v7542
    %10201 = vmatprep.subr.bf16.mxu0 0
    %10202 = vmatpush1.bf16.msra.mxu0 %v7543
    %10203 = vmatprep.subr.bf16.mxu0 0
    %10204 = vmatpush1.bf16.msra.mxu0 %v7544
    %10205 = vmatprep.subr.bf16.mxu0 0
    %10206 = vmatpush1.bf16.msra.mxu0 %v7545
    %10207 = vmatprep.subr.bf16.mxu0 0
    %10208 = vmatpush1.bf16.msra.mxu0 %v7546
    %10209 = vmatprep.subr.bf16.mxu0 0
    %10210 = vmatpush1.bf16.msra.mxu0 %v7547
    %10211 = vmatprep.subr.bf16.mxu0 0
    %10212 = vmatpush1.bf16.msra.mxu0 %v7548
    %10213 = vmatprep.subr.bf16.mxu0 0
    %10214 = vmatpush1.bf16.msra.mxu0 %v7549
    %10215 = vmatprep.subr.bf16.mxu0 0
    %10216 = vmatpush1.bf16.msra.mxu0 %v7550
    %10217 = vmatprep.subr.bf16.mxu0 0
    %10218 = vmatpush1.bf16.msra.mxu0 %v7551
    %10219 = vmatprep.subr.bf16.mxu0 0
    %10220 = vmatpush1.bf16.msra.mxu0 %v7552
    %10221 = vmatprep.subr.bf16.mxu0 0
    %10222 = vmatpush1.bf16.msra.mxu0 %v7553
    %10223 = vmatprep.subr.bf16.mxu0 0
    %10224 = vmatpush1.bf16.msra.mxu0 %v7554
    %10225 = vmatprep.mubr.bf16.mxu0 %v2454
    %10226 = vmatmul.mubr.bf16.gmra.mrb[0].mxu0 %v2452
    %v10227 = vpop.f32.mrb[0].mxu0
    %v10228 = vadd.f32 %v10188, %v10227
    %v10229 = vpop.f32.mrb[0].mxu0
    %v10230 = vpop.f32.mrb[0].mxu0
    %v10231 = vpop.f32.mrb[0].mxu0
    %10232 = vdwg.mxu0
    %10233 = vmatprep.subr.bf16.mxu0 0
    %10234 = vmatpush1.bf16.msra.mxu0 %v7555
    %10235 = vmatprep.subr.bf16.mxu0 0
    %10236 = vmatpush1.bf16.msra.mxu0 %v7556
    %10237 = vmatprep.subr.bf16.mxu0 0
    %10238 = vmatpush1.bf16.msra.mxu0 %v7557
    %10239 = vmatprep.subr.bf16.mxu0 0
    %10240 = vmatpush1.bf16.msra.mxu0 %v7558
    %10241 = vmatprep.subr.bf16.mxu0 0
    %10242 = vmatpush1.bf16.msra.mxu0 %v7559
    %10243 = vmatprep.subr.bf16.mxu0 0
    %10244 = vmatpush1.bf16.msra.mxu0 %v7560
    %10245 = vmatprep.subr.bf16.mxu0 0
    %10246 = vmatpush1.bf16.msra.mxu0 %v7561
    %10247 = vmatprep.subr.bf16.mxu0 0
    %10248 = vmatpush1.bf16.msra.mxu0 %v7562
    %10249 = vmatprep.subr.bf16.mxu0 0
    %10250 = vmatpush1.bf16.msra.mxu0 %v7563
    %10251 = vmatprep.subr.bf16.mxu0 0
    %10252 = vmatpush1.bf16.msra.mxu0 %v7564
    %10253 = vmatprep.subr.bf16.mxu0 0
    %10254 = vmatpush1.bf16.msra.mxu0 %v7565
    %10255 = vmatprep.subr.bf16.mxu0 0
    %10256 = vmatpush1.bf16.msra.mxu0 %v7566
    %10257 = vmatprep.subr.bf16.mxu0 0
    %10258 = vmatpush1.bf16.msra.mxu0 %v7567
    %10259 = vmatprep.subr.bf16.mxu0 0
    %10260 = vmatpush1.bf16.msra.mxu0 %v7568
    %10261 = vmatprep.subr.bf16.mxu0 0
    %10262 = vmatpush1.bf16.msra.mxu0 %v7569
    %10263 = vmatprep.subr.bf16.mxu0 0
    %10264 = vmatpush1.bf16.msra.mxu0 %v7570
    %10265 = vmatprep.mubr.bf16.mxu0 %v2451
    %10266 = vmatmul.mubr.bf16.gmra.mrb[0].mxu0 %v2437
    %v10267 = vpop.f32.mrb[0].mxu0
    %v10268 = vadd.f32 %v10228, %v10267
    %v10269 = vpop.f32.mrb[0].mxu0
    %v10270 = vpop.f32.mrb[0].mxu0
    %v10271 = vpop.f32.mrb[0].mxu0
    %10272 = vdwg.mxu0
    %10273 = vmatprep.subr.bf16.mxu0 0
    %10274 = vmatpush1.bf16.msra.mxu0 %v7571
    %10275 = vmatprep.subr.bf16.mxu0 0
    %10276 = vmatpush1.bf16.msra.mxu0 %v7572
    %10277 = vmatprep.subr.bf16.mxu0 0
    %10278 = vmatpush1.bf16.msra.mxu0 %v7573
    %10279 = vmatprep.subr.bf16.mxu0 0
    %10280 = vmatpush1.bf16.msra.mxu0 %v7574
    %10281 = vmatprep.subr.bf16.mxu0 0
    %10282 = vmatpush1.bf16.msra.mxu0 %v7575
    %10283 = vmatprep.subr.bf16.mxu0 0
    %10284 = vmatpush1.bf16.msra.mxu0 %v7576
    %10285 = vmatprep.subr.bf16.mxu0 0
    %10286 = vmatpush1.bf16.msra.mxu0 %v7577
    %10287 = vmatprep.subr.bf16.mxu0 0
    %10288 = vmatpush1.bf16.msra.mxu0 %v7578
    %10289 = vmatprep.subr.bf16.mxu0 0
    %10290 = vmatpush1.bf16.msra.mxu0 %v7579
    %10291 = vmatprep.subr.bf16.mxu0 0
    %10292 = vmatpush1.bf16.msra.mxu0 %v7580
    %10293 = vmatprep.subr.bf16.mxu0 0
    %10294 = vmatpush1.bf16.msra.mxu0 %v7581
    %10295 = vmatprep.subr.bf16.mxu0 0
    %10296 = vmatpush1.bf16.msra.mxu0 %v7582
    %10297 = vmatprep.subr.bf16.mxu0 0
    %10298 = vmatpush1.bf16.msra.mxu0 %v7583
    %10299 = vmatprep.subr.bf16.mxu0 0
    %10300 = vmatpush1.bf16.msra.mxu0 %v7584
    %10301 = vmatprep.subr.bf16.mxu0 0
    %10302 = vmatpush1.bf16.msra.mxu0 %v7585
    %10303 = vmatprep.subr.bf16.mxu0 0
    %10304 = vmatpush1.bf16.msra.mxu0 %v7586
    %10305 = vmatprep.mubr.bf16.mxu0 %v2455
    %10306 = vmatmul.mubr.bf16.gmra.mrb[0].mxu0 %v2453
    %v10307 = vpop.f32.mrb[0].mxu0
    %v10308 = vadd.f32 %v10268, %v10307
    %v10309 = vpop.f32.mrb[0].mxu0
    %v10310 = vpop.f32.mrb[0].mxu0
    %v10311 = vpop.f32.mrb[0].mxu0
    %10312 = vdwg.mxu0
    %10313 = vmatprep.subr.bf16.mxu0 0
    %10314 = vmatpush1.bf16.msra.mxu0 %v7587
    %10315 = vmatprep.subr.bf16.mxu0 0
    %10316 = vmatpush1.bf16.msra.mxu0 %v7588
    %10317 = vmatprep.subr.bf16.mxu0 0
    %10318 = vmatpush1.bf16.msra.mxu0 %v7589
    %10319 = vmatprep.subr.bf16.mxu0 0
    %10320 = vmatpush1.bf16.msra.mxu0 %v7590
    %10321 = vmatprep.subr.bf16.mxu0 0
    %10322 = vmatpush1.bf16.msra.mxu0 %v7591
    %10323 = vmatprep.subr.bf16.mxu0 0
    %10324 = vmatpush1.bf16.msra.mxu0 %v7592
    %10325 = vmatprep.subr.bf16.mxu0 0
    %10326 = vmatpush1.bf16.msra.mxu0 %v7593
    %10327 = vmatprep.subr.bf16.mxu0 0
    %10328 = vmatpush1.bf16.msra.mxu0 %v7594
    %10329 = vmatprep.subr.bf16.mxu0 0
    %10330 = vmatpush1.bf16.msra.mxu0 %v7595
    %10331 = vmatprep.subr.bf16.mxu0 0
    %10332 = vmatpush1.bf16.msra.mxu0 %v7596
    %10333 = vmatprep.subr.bf16.mxu0 0
    %10334 = vmatpush1.bf16.msra.mxu0 %v7597
    %10335 = vmatprep.subr.bf16.mxu0 0
    %10336 = vmatpush1.bf16.msra.mxu0 %v7598
    %10337 = vmatprep.subr.bf16.mxu0 0
    %10338 = vmatpush1.bf16.msra.mxu0 %v7599
    %10339 = vmatprep.subr.bf16.mxu0 0
    %10340 = vmatpush1.bf16.msra.mxu0 %v7600
    %10341 = vmatprep.subr.bf16.mxu0 0
    %10342 = vmatpush1.bf16.msra.mxu0 %v7601
    %10343 = vmatprep.subr.bf16.mxu0 0
    %10344 = vmatpush1.bf16.msra.mxu0 %v7602
    %10345 = vmatprep.mubr.bf16.mxu0 %v2493
    %10346 = vmatmul.mubr.bf16.gmra.mrb[0].mxu0 %v2479
    %v10347 = vpop.f32.mrb[0].mxu0
    %v10348 = vadd.f32 %v10308, %v10347
    %v10349 = vpop.f32.mrb[0].mxu0
    %v10350 = vpop.f32.mrb[0].mxu0
    %v10351 = vpop.f32.mrb[0].mxu0
    %10352 = vdwg.mxu0
    %10353 = vmatprep.subr.bf16.mxu0 0
    %10354 = vmatpush1.bf16.msra.mxu0 %v7603
    %10355 = vmatprep.subr.bf16.mxu0 0
    %10356 = vmatpush1.bf16.msra.mxu0 %v7604
    %10357 = vmatprep.subr.bf16.mxu0 0
    %10358 = vmatpush1.bf16.msra.mxu0 %v7605
    %10359 = vmatprep.subr.bf16.mxu0 0
    %10360 = vmatpush1.bf16.msra.mxu0 %v7606
    %10361 = vmatprep.subr.bf16.mxu0 0
    %10362 = vmatpush1.bf16.msra.mxu0 %v7607
    %10363 = vmatprep.subr.bf16.mxu0 0
    %10364 = vmatpush1.bf16.msra.mxu0 %v7608
    %10365 = vmatprep.subr.bf16.mxu0 0
    %10366 = vmatpush1.bf16.msra.mxu0 %v7609
    %10367 = vmatprep.subr.bf16.mxu0 0
    %10368 = vmatpush1.bf16.msra.mxu0 %v7610
    %10369 = vmatprep.subr.bf16.mxu0 0
    %10370 = vmatpush1.bf16.msra.mxu0 %v7611
    %10371 = vmatprep.subr.bf16.mxu0 0
    %10372 = vmatpush1.bf16.msra.mxu0 %v7612
    %10373 = vmatprep.subr.bf16.mxu0 0
    %10374 = vmatpush1.bf16.msra.mxu0 %v7613
    %10375 = vmatprep.subr.bf16.mxu0 0
    %10376 = vmatpush1.bf16.msra.mxu0 %v7614
    %10377 = vmatprep.subr.bf16.mxu0 0
    %10378 = vmatpush1.bf16.msra.mxu0 %v7615
    %10379 = vmatprep.subr.bf16.mxu0 0
    %10380 = vmatpush1.bf16.msra.mxu0 %v7616
    %10381 = vmatprep.subr.bf16.mxu0 0
    %10382 = vmatpush1.bf16.msra.mxu0 %v7617
    %10383 = vmatprep.subr.bf16.mxu0 0
    %10384 = vmatpush1.bf16.msra.mxu0 %v7618
    %10385 = vmatprep.mubr.bf16.mxu0 %v2503
    %10386 = vmatmul.mubr.bf16.gmra.mrb[0].mxu0 %v2501
    %v10387 = vpop.f32.mrb[0].mxu0
    %v10388 = vadd.f32 %v10348, %v10387
    %v10389 = vpop.f32.mrb[0].mxu0
    %v10390 = vpop.f32.mrb[0].mxu0
    %v10391 = vpop.f32.mrb[0].mxu0
    %10392 = vdwg.mxu0
    %10393 = vmatprep.subr.bf16.mxu0 0
    %10394 = vmatpush1.bf16.msra.mxu0 %v7619
    %10395 = vmatprep.subr.bf16.mxu0 0
    %10396 = vmatpush1.bf16.msra.mxu0 %v7620
    %10397 = vmatprep.subr.bf16.mxu0 0
    %10398 = vmatpush1.bf16.msra.mxu0 %v7621
    %10399 = vmatprep.subr.bf16.mxu0 0
    %10400 = vmatpush1.bf16.msra.mxu0 %v7622
    %10401 = vmatprep.subr.bf16.mxu0 0
    %10402 = vmatpush1.bf16.msra.mxu0 %v7623
    %10403 = vmatprep.subr.bf16.mxu0 0
    %10404 = vmatpush1.bf16.msra.mxu0 %v7624
    %10405 = vmatprep.subr.bf16.mxu0 0
    %10406 = vmatpush1.bf16.msra.mxu0 %v7625
    %10407 = vmatprep.subr.bf16.mxu0 0
    %10408 = vmatpush1.bf16.msra.mxu0 %v7626
    %10409 = vmatprep.subr.bf16.mxu0 0
    %10410 = vmatpush1.bf16.msra.mxu0 %v7627
    %10411 = vmatprep.subr.bf16.mxu0 0
    %10412 = vmatpush1.bf16.msra.mxu0 %v7628
    %10413 = vmatprep.subr.bf16.mxu0 0
    %10414 = vmatpush1.bf16.msra.mxu0 %v7629
    %10415 = vmatprep.subr.bf16.mxu0 0
    %10416 = vmatpush1.bf16.msra.mxu0 %v7630
    %10417 = vmatprep.subr.bf16.mxu0 0
    %10418 = vmatpush1.bf16.msra.mxu0 %v7631
    %10419 = vmatprep.subr.bf16.mxu0 0
    %10420 = vmatpush1.bf16.msra.mxu0 %v7632
    %10421 = vmatprep.subr.bf16.mxu0 0
    %10422 = vmatpush1.bf16.msra.mxu0 %v7633
    %10423 = vmatprep.subr.bf16.mxu0 0
    %10424 = vmatpush1.bf16.msra.mxu0 %v7634
    %10425 = vmatprep.mubr.bf16.mxu0 %v2500
    %10426 = vmatmul.mubr.bf16.gmra.mrb[0].mxu0 %v2486
    %v10427 = vpop.f32.mrb[0].mxu0
    %v10428 = vadd.f32 %v10388, %v10427
    %v10429 = vpop.f32.mrb[0].mxu0
    %v10430 = vpop.f32.mrb[0].mxu0
    %v10431 = vpop.f32.mrb[0].mxu0
    %10432 = vdwg.mxu0
    %10433 = vmatprep.subr.bf16.mxu0 0
    %10434 = vmatpush1.bf16.msra.mxu0 %v7635
    %10435 = vmatprep.subr.bf16.mxu0 0
    %10436 = vmatpush1.bf16.msra.mxu0 %v7636
    %10437 = vmatprep.subr.bf16.mxu0 0
    %10438 = vmatpush1.bf16.msra.mxu0 %v7637
    %10439 = vmatprep.subr.bf16.mxu0 0
    %10440 = vmatpush1.bf16.msra.mxu0 %v7638
    %10441 = vmatprep.subr.bf16.mxu0 0
    %10442 = vmatpush1.bf16.msra.mxu0 %v7639
    %10443 = vmatprep.subr.bf16.mxu0 0
    %10444 = vmatpush1.bf16.msra.mxu0 %v7640
    %10445 = vmatprep.subr.bf16.mxu0 0
    %10446 = vmatpush1.bf16.msra.mxu0 %v7641
    %10447 = vmatprep.subr.bf16.mxu0 0
    %10448 = vmatpush1.bf16.msra.mxu0 %v7642
    %10449 = vmatprep.subr.bf16.mxu0 0
    %10450 = vmatpush1.bf16.msra.mxu0 %v7643
    %10451 = vmatprep.subr.bf16.mxu0 0
    %10452 = vmatpush1.bf16.msra.mxu0 %v7644
    %10453 = vmatprep.subr.bf16.mxu0 0
    %10454 = vmatpush1.bf16.msra.mxu0 %v7645
    %10455 = vmatprep.subr.bf16.mxu0 0
    %10456 = vmatpush1.bf16.msra.mxu0 %v7646
    %10457 = vmatprep.subr.bf16.mxu0 0
    %10458 = vmatpush1.bf16.msra.mxu0 %v7647
    %10459 = vmatprep.subr.bf16.mxu0 0
    %10460 = vmatpush1.bf16.msra.mxu0 %v7648
    %10461 = vmatprep.subr.bf16.mxu0 0
    %10462 = vmatpush1.bf16.msra.mxu0 %v7649
    %10463 = vmatprep.subr.bf16.mxu0 0
    %10464 = vmatpush1.bf16.msra.mxu0 %v7650
    %10465 = vmatprep.mubr.bf16.mxu0 %v2504
    %10466 = vmatmul.mubr.bf16.gmra.mrb[0].mxu0 %v2502
    %v10467 = vpop.f32.mrb[0].mxu0
    %v10468 = vadd.f32 %v10428, %v10467
    %v10469 = vpop.f32.mrb[0].mxu0
    %v10470 = vpop.f32.mrb[0].mxu0
    %v10471 = vpop.f32.mrb[0].mxu0
    %10472 = vdwg.mxu0
    %10473 = vmatprep.subr.bf16.mxu0 0
    %10474 = vmatpush1.bf16.msra.mxu0 %v7651
    %10475 = vmatprep.subr.bf16.mxu0 0
    %10476 = vmatpush1.bf16.msra.mxu0 %v7652
    %10477 = vmatprep.subr.bf16.mxu0 0
    %10478 = vmatpush1.bf16.msra.mxu0 %v7653
    %10479 = vmatprep.subr.bf16.mxu0 0
    %10480 = vmatpush1.bf16.msra.mxu0 %v7654
    %10481 = vmatprep.subr.bf16.mxu0 0
    %10482 = vmatpush1.bf16.msra.mxu0 %v7655
    %10483 = vmatprep.subr.bf16.mxu0 0
    %10484 = vmatpush1.bf16.msra.mxu0 %v7656
    %10485 = vmatprep.subr.bf16.mxu0 0
    %10486 = vmatpush1.bf16.msra.mxu0 %v7657
    %10487 = vmatprep.subr.bf16.mxu0 0
    %10488 = vmatpush1.bf16.msra.mxu0 %v7658
    %10489 = vmatprep.subr.bf16.mxu0 0
    %10490 = vmatpush1.bf16.msra.mxu0 %v7659
    %10491 = vmatprep.subr.bf16.mxu0 0
    %10492 = vmatpush1.bf16.msra.mxu0 %v7660
    %10493 = vmatprep.subr.bf16.mxu0 0
    %10494 = vmatpush1.bf16.msra.mxu0 %v7661
    %10495 = vmatprep.subr.bf16.mxu0 0
    %10496 = vmatpush1.bf16.msra.mxu0 %v7662
    %10497 = vmatprep.subr.bf16.mxu0 0
    %10498 = vmatpush1.bf16.msra.mxu0 %v7663
    %10499 = vmatprep.subr.bf16.mxu0 0
    %10500 = vmatpush1.bf16.msra.mxu0 %v7664
    %10501 = vmatprep.subr.bf16.mxu0 0
    %10502 = vmatpush1.bf16.msra.mxu0 %v7665
    %10503 = vmatprep.subr.bf16.mxu0 0
    %10504 = vmatpush1.bf16.msra.mxu0 %v7666
    %10505 = vmatprep.mubr.bf16.mxu0 %v2542
    %10506 = vmatmul.mubr.bf16.gmra.mrb[0].mxu0 %v2528
    %v10507 = vpop.f32.mrb[0].mxu0
    %v10508 = vadd.f32 %v10468, %v10507
    %v10509 = vpop.f32.mrb[0].mxu0
    %v10510 = vpop.f32.mrb[0].mxu0
    %v10511 = vpop.f32.mrb[0].mxu0
    %10512 = vdwg.mxu0
    %10513 = vmatprep.subr.bf16.mxu0 0
    %10514 = vmatpush1.bf16.msra.mxu0 %v7667
    %10515 = vmatprep.subr.bf16.mxu0 0
    %10516 = vmatpush1.bf16.msra.mxu0 %v7668
    %10517 = vmatprep.subr.bf16.mxu0 0
    %10518 = vmatpush1.bf16.msra.mxu0 %v7669
    %10519 = vmatprep.subr.bf16.mxu0 0
    %10520 = vmatpush1.bf16.msra.mxu0 %v7670
    %10521 = vmatprep.subr.bf16.mxu0 0
    %10522 = vmatpush1.bf16.msra.mxu0 %v7671
    %10523 = vmatprep.subr.bf16.mxu0 0
    %10524 = vmatpush1.bf16.msra.mxu0 %v7672
    %10525 = vmatprep.subr.bf16.mxu0 0
    %10526 = vmatpush1.bf16.msra.mxu0 %v7673
    %10527 = vmatprep.subr.bf16.mxu0 0
    %10528 = vmatpush1.bf16.msra.mxu0 %v7674
    %10529 = vmatprep.subr.bf16.mxu0 0
    %10530 = vmatpush1.bf16.msra.mxu0 %v7675
    %10531 = vmatprep.subr.bf16.mxu0 0
    %10532 = vmatpush1.bf16.msra.mxu0 %v7676
    %10533 = vmatprep.subr.bf16.mxu0 0
    %10534 = vmatpush1.bf16.msra.mxu0 %v7677
    %10535 = vmatprep.subr.bf16.mxu0 0
    %10536 = vmatpush1.bf16.msra.mxu0 %v7678
    %10537 = vmatprep.subr.bf16.mxu0 0
    %10538 = vmatpush1.bf16.msra.mxu0 %v7679
    %10539 = vmatprep.subr.bf16.mxu0 0
    %10540 = vmatpush1.bf16.msra.mxu0 %v7680
    %10541 = vmatprep.subr.bf16.mxu0 0
    %10542 = vmatpush1.bf16.msra.mxu0 %v7681
    %10543 = vmatprep.subr.bf16.mxu0 0
    %10544 = vmatpush1.bf16.msra.mxu0 %v7682
    %10545 = vmatprep.mubr.bf16.mxu0 %v2552
    %10546 = vmatmul.mubr.bf16.gmra.mrb[0].mxu0 %v2550
    %v10547 = vpop.f32.mrb[0].mxu0
    %v10548 = vadd.f32 %v10508, %v10547
    %v10549 = vpop.f32.mrb[0].mxu0
    %v10550 = vpop.f32.mrb[0].mxu0
    %v10551 = vpop.f32.mrb[0].mxu0
    %10552 = vdwg.mxu0
    %10553 = vmatprep.subr.bf16.mxu0 0
    %10554 = vmatpush1.bf16.msra.mxu0 %v7683
    %10555 = vmatprep.subr.bf16.mxu0 0
    %10556 = vmatpush1.bf16.msra.mxu0 %v7684
    %10557 = vmatprep.subr.bf16.mxu0 0
    %10558 = vmatpush1.bf16.msra.mxu0 %v7685
    %10559 = vmatprep.subr.bf16.mxu0 0
    %10560 = vmatpush1.bf16.msra.mxu0 %v7686
    %10561 = vmatprep.subr.bf16.mxu0 0
    %10562 = vmatpush1.bf16.msra.mxu0 %v7687
    %10563 = vmatprep.subr.bf16.mxu0 0
    %10564 = vmatpush1.bf16.msra.mxu0 %v7688
    %10565 = vmatprep.subr.bf16.mxu0 0
    %10566 = vmatpush1.bf16.msra.mxu0 %v7689
    %10567 = vmatprep.subr.bf16.mxu0 0
    %10568 = vmatpush1.bf16.msra.mxu0 %v7690
    %10569 = vmatprep.subr.bf16.mxu0 0
    %10570 = vmatpush1.bf16.msra.mxu0 %v7691
    %10571 = vmatprep.subr.bf16.mxu0 0
    %10572 = vmatpush1.bf16.msra.mxu0 %v7692
    %10573 = vmatprep.subr.bf16.mxu0 0
    %10574 = vmatpush1.bf16.msra.mxu0 %v7693
    %10575 = vmatprep.subr.bf16.mxu0 0
    %10576 = vmatpush1.bf16.msra.mxu0 %v7694
    %10577 = vmatprep.subr.bf16.mxu0 0
    %10578 = vmatpush1.bf16.msra.mxu0 %v7695
    %10579 = vmatprep.subr.bf16.mxu0 0
    %10580 = vmatpush1.bf16.msra.mxu0 %v7696
    %10581 = vmatprep.subr.bf16.mxu0 0
    %10582 = vmatpush1.bf16.msra.mxu0 %v7697
    %10583 = vmatprep.subr.bf16.mxu0 0
    %10584 = vmatpush1.bf16.msra.mxu0 %v7698
    %10585 = vmatprep.mubr.bf16.mxu0 %v2549
    %10586 = vmatmul.mubr.bf16.gmra.mrb[0].mxu0 %v2535
    %v10587 = vpop.f32.mrb[0].mxu0
    %v10588 = vadd.f32 %v10548, %v10587
    %v10589 = vpop.f32.mrb[0].mxu0
    %v10590 = vpop.f32.mrb[0].mxu0
    %v10591 = vpop.f32.mrb[0].mxu0
    %10592 = vdwg.mxu0
    %10593 = vmatprep.subr.bf16.mxu0 0
    %10594 = vmatpush1.bf16.msra.mxu0 %v7699
    %10595 = vmatprep.subr.bf16.mxu0 0
    %10596 = vmatpush1.bf16.msra.mxu0 %v7700
    %10597 = vmatprep.subr.bf16.mxu0 0
    %10598 = vmatpush1.bf16.msra.mxu0 %v7701
    %10599 = vmatprep.subr.bf16.mxu0 0
    %10600 = vmatpush1.bf16.msra.mxu0 %v7702
    %10601 = vmatprep.subr.bf16.mxu0 0
    %10602 = vmatpush1.bf16.msra.mxu0 %v7703
    %10603 = vmatprep.subr.bf16.mxu0 0
    %10604 = vmatpush1.bf16.msra.mxu0 %v7704
    %10605 = vmatprep.subr.bf16.mxu0 0
    %10606 = vmatpush1.bf16.msra.mxu0 %v7705
    %10607 = vmatprep.subr.bf16.mxu0 0
    %10608 = vmatpush1.bf16.msra.mxu0 %v7706
    %10609 = vmatprep.subr.bf16.mxu0 0
    %10610 = vmatpush1.bf16.msra.mxu0 %v7707
    %10611 = vmatprep.subr.bf16.mxu0 0
    %10612 = vmatpush1.bf16.msra.mxu0 %v7708
    %10613 = vmatprep.subr.bf16.mxu0 0
    %10614 = vmatpush1.bf16.msra.mxu0 %v7709
    %10615 = vmatprep.subr.bf16.mxu0 0
    %10616 = vmatpush1.bf16.msra.mxu0 %v7710
    %10617 = vmatprep.subr.bf16.mxu0 0
    %10618 = vmatpush1.bf16.msra.mxu0 %v7711
    %10619 = vmatprep.subr.bf16.mxu0 0
    %10620 = vmatpush1.bf16.msra.mxu0 %v7712
    %10621 = vmatprep.subr.bf16.mxu0 0
    %10622 = vmatpush1.bf16.msra.mxu0 %v7713
    %10623 = vmatprep.subr.bf16.mxu0 0
    %10624 = vmatpush1.bf16.msra.mxu0 %v7714
    %10625 = vmatprep.mubr.bf16.mxu0 %v2553
    %10626 = vmatmul.mubr.bf16.gmra.mrb[0].mxu0 %v2551
    %v10627 = vpop.f32.mrb[0].mxu0
    %v10628 = vadd.f32 %v10588, %v10627
    %v10629 = vpop.f32.mrb[0].mxu0
    %v10630 = vpop.f32.mrb[0].mxu0
    %v10631 = vpop.f32.mrb[0].mxu0
    %10632 = vdwg.mxu0
    %10633 = vmatprep.subr.bf16.mxu0 0
    %10634 = vmatpush1.bf16.msra.mxu0 %v7715
    %10635 = vmatprep.subr.bf16.mxu0 0
    %10636 = vmatpush1.bf16.msra.mxu0 %v7716
    %10637 = vmatprep.subr.bf16.mxu0 0
    %10638 = vmatpush1.bf16.msra.mxu0 %v7717
    %10639 = vmatprep.subr.bf16.mxu0 0
    %10640 = vmatpush1.bf16.msra.mxu0 %v7718
    %10641 = vmatprep.subr.bf16.mxu0 0
    %10642 = vmatpush1.bf16.msra.mxu0 %v7719
    %10643 = vmatprep.subr.bf16.mxu0 0
    %10644 = vmatpush1.bf16.msra.mxu0 %v7720
    %10645 = vmatprep.subr.bf16.mxu0 0
    %10646 = vmatpush1.bf16.msra.mxu0 %v7721
    %10647 = vmatprep.subr.bf16.mxu0 0
    %10648 = vmatpush1.bf16.msra.mxu0 %v7722
    %10649 = vmatprep.subr.bf16.mxu0 0
    %10650 = vmatpush1.bf16.msra.mxu0 %v7723
    %10651 = vmatprep.subr.bf16.mxu0 0
    %10652 = vmatpush1.bf16.msra.mxu0 %v7724
    %10653 = vmatprep.subr.bf16.mxu0 0
    %10654 = vmatpush1.bf16.msra.mxu0 %v7725
    %10655 = vmatprep.subr.bf16.mxu0 0
    %10656 = vmatpush1.bf16.msra.mxu0 %v7726
    %10657 = vmatprep.subr.bf16.mxu0 0
    %10658 = vmatpush1.bf16.msra.mxu0 %v7727
    %10659 = vmatprep.subr.bf16.mxu0 0
    %10660 = vmatpush1.bf16.msra.mxu0 %v7728
    %10661 = vmatprep.subr.bf16.mxu0 0
    %10662 = vmatpush1.bf16.msra.mxu0 %v7729
    %10663 = vmatprep.subr.bf16.mxu0 0
    %10664 = vmatpush1.bf16.msra.mxu0 %v7730
    %10665 = vmatprep.mubr.bf16.mxu0 %v2591
    %10666 = vmatmul.mubr.bf16.gmra.mrb[0].mxu0 %v2577
    %v10667 = vpop.f32.mrb[0].mxu0
    %v10668 = vadd.f32 %v10628, %v10667
    %v10669 = vpop.f32.mrb[0].mxu0
    %v10670 = vpop.f32.mrb[0].mxu0
    %v10671 = vpop.f32.mrb[0].mxu0
    %10672 = vdwg.mxu0
    %10673 = vmatprep.subr.bf16.mxu0 0
    %10674 = vmatpush1.bf16.msra.mxu0 %v7731
    %10675 = vmatprep.subr.bf16.mxu0 0
    %10676 = vmatpush1.bf16.msra.mxu0 %v7732
    %10677 = vmatprep.subr.bf16.mxu0 0
    %10678 = vmatpush1.bf16.msra.mxu0 %v7733
    %10679 = vmatprep.subr.bf16.mxu0 0
    %10680 = vmatpush1.bf16.msra.mxu0 %v7734
    %10681 = vmatprep.subr.bf16.mxu0 0
    %10682 = vmatpush1.bf16.msra.mxu0 %v7735
    %10683 = vmatprep.subr.bf16.mxu0 0
    %10684 = vmatpush1.bf16.msra.mxu0 %v7736
    %10685 = vmatprep.subr.bf16.mxu0 0
    %10686 = vmatpush1.bf16.msra.mxu0 %v7737
    %10687 = vmatprep.subr.bf16.mxu0 0
    %10688 = vmatpush1.bf16.msra.mxu0 %v7738
    %10689 = vmatprep.subr.bf16.mxu0 0
    %10690 = vmatpush1.bf16.msra.mxu0 %v7739
    %10691 = vmatprep.subr.bf16.mxu0 0
    %10692 = vmatpush1.bf16.msra.mxu0 %v7740
    %10693 = vmatprep.subr.bf16.mxu0 0
    %10694 = vmatpush1.bf16.msra.mxu0 %v7741
    %10695 = vmatprep.subr.bf16.mxu0 0
    %10696 = vmatpush1.bf16.msra.mxu0 %v7742
    %10697 = vmatprep.subr.bf16.mxu0 0
    %10698 = vmatpush1.bf16.msra.mxu0 %v7743
    %10699 = vmatprep.subr.bf16.mxu0 0
    %10700 = vmatpush1.bf16.msra.mxu0 %v7744
    %10701 = vmatprep.subr.bf16.mxu0 0
    %10702 = vmatpush1.bf16.msra.mxu0 %v7745
    %10703 = vmatprep.subr.bf16.mxu0 0
    %10704 = vmatpush1.bf16.msra.mxu0 %v7746
    %10705 = vmatprep.mubr.bf16.mxu0 %v2601
    %10706 = vmatmul.mubr.bf16.gmra.mrb[0].mxu0 %v2599
    %v10707 = vpop.f32.mrb[0].mxu0
    %v10708 = vadd.f32 %v10668, %v10707
    %v10709 = vpop.f32.mrb[0].mxu0
    %v10710 = vpop.f32.mrb[0].mxu0
    %v10711 = vpop.f32.mrb[0].mxu0
    %10712 = vdwg.mxu0
    %10713 = vmatprep.subr.bf16.mxu0 0
    %10714 = vmatpush1.bf16.msra.mxu0 %v7747
    %10715 = vmatprep.subr.bf16.mxu0 0
    %10716 = vmatpush1.bf16.msra.mxu0 %v7748
    %10717 = vmatprep.subr.bf16.mxu0 0
    %10718 = vmatpush1.bf16.msra.mxu0 %v7749
    %10719 = vmatprep.subr.bf16.mxu0 0
    %10720 = vmatpush1.bf16.msra.mxu0 %v7750
    %10721 = vmatprep.subr.bf16.mxu0 0
    %10722 = vmatpush1.bf16.msra.mxu0 %v7751
    %10723 = vmatprep.subr.bf16.mxu0 0
    %10724 = vmatpush1.bf16.msra.mxu0 %v7752
    %10725 = vmatprep.subr.bf16.mxu0 0
    %10726 = vmatpush1.bf16.msra.mxu0 %v7753
    %10727 = vmatprep.subr.bf16.mxu0 0
    %10728 = vmatpush1.bf16.msra.mxu0 %v7754
    %10729 = vmatprep.subr.bf16.mxu0 0
    %10730 = vmatpush1.bf16.msra.mxu0 %v7755
    %10731 = vmatprep.subr.bf16.mxu0 0
    %10732 = vmatpush1.bf16.msra.mxu0 %v7756
    %10733 = vmatprep.subr.bf16.mxu0 0
    %10734 = vmatpush1.bf16.msra.mxu0 %v7757
    %10735 = vmatprep.subr.bf16.mxu0 0
    %10736 = vmatpush1.bf16.msra.mxu0 %v7758
    %10737 = vmatprep.subr.bf16.mxu0 0
    %10738 = vmatpush1.bf16.msra.mxu0 %v7759
    %10739 = vmatprep.subr.bf16.mxu0 0
    %10740 = vmatpush1.bf16.msra.mxu0 %v7760
    %10741 = vmatprep.subr.bf16.mxu0 0
    %10742 = vmatpush1.bf16.msra.mxu0 %v7761
    %10743 = vmatprep.subr.bf16.mxu0 0
    %10744 = vmatpush1.bf16.msra.mxu0 %v7762
    %10745 = vmatprep.mubr.bf16.mxu0 %v2598
    %10746 = vmatmul.mubr.bf16.gmra.mrb[0].mxu0 %v2584
    %v10747 = vpop.f32.mrb[0].mxu0
    %v10748 = vadd.f32 %v10708, %v10747
    %v10749 = vpop.f32.mrb[0].mxu0
    %v10750 = vpop.f32.mrb[0].mxu0
    %v10751 = vpop.f32.mrb[0].mxu0
    %10752 = vdwg.mxu0
    %10753 = vmatprep.subr.bf16.mxu0 0
    %10754 = vmatpush1.bf16.msra.mxu0 %v7763
    %10755 = vmatprep.subr.bf16.mxu0 0
    %10756 = vmatpush1.bf16.msra.mxu0 %v7764
    %10757 = vmatprep.subr.bf16.mxu0 0
    %10758 = vmatpush1.bf16.msra.mxu0 %v7765
    %10759 = vmatprep.subr.bf16.mxu0 0
    %10760 = vmatpush1.bf16.msra.mxu0 %v7766
    %10761 = vmatprep.subr.bf16.mxu0 0
    %10762 = vmatpush1.bf16.msra.mxu0 %v7767
    %10763 = vmatprep.subr.bf16.mxu0 0
    %10764 = vmatpush1.bf16.msra.mxu0 %v7768
    %10765 = vmatprep.subr.bf16.mxu0 0
    %10766 = vmatpush1.bf16.msra.mxu0 %v7769
    %10767 = vmatprep.subr.bf16.mxu0 0
    %10768 = vmatpush1.bf16.msra.mxu0 %v7770
    %10769 = vmatprep.subr.bf16.mxu0 0
    %10770 = vmatpush1.bf16.msra.mxu0 %v7771
    %10771 = vmatprep.subr.bf16.mxu0 0
    %10772 = vmatpush1.bf16.msra.mxu0 %v7772
    %10773 = vmatprep.subr.bf16.mxu0 0
    %10774 = vmatpush1.bf16.msra.mxu0 %v7773
    %10775 = vmatprep.subr.bf16.mxu0 0
    %10776 = vmatpush1.bf16.msra.mxu0 %v7774
    %10777 = vmatprep.subr.bf16.mxu0 0
    %10778 = vmatpush1.bf16.msra.mxu0 %v7775
    %10779 = vmatprep.subr.bf16.mxu0 0
    %10780 = vmatpush1.bf16.msra.mxu0 %v7776
    %10781 = vmatprep.subr.bf16.mxu0 0
    %10782 = vmatpush1.bf16.msra.mxu0 %v7777
    %10783 = vmatprep.subr.bf16.mxu0 0
    %10784 = vmatpush1.bf16.msra.mxu0 %v7778
    %10785 = vmatprep.mubr.bf16.mxu0 %v2602
    %10786 = vmatmul.mubr.bf16.gmra.mrb[0].mxu0 %v2600
    %v10787 = vpop.f32.mrb[0].mxu0
    %v10788 = vadd.f32 %v10748, %v10787
    %v10789 = vpop.f32.mrb[0].mxu0
    %v10790 = vpop.f32.mrb[0].mxu0
    %v10791 = vpop.f32.mrb[0].mxu0
    %10792 = vdwg.mxu0
    %10793 = vmatprep.subr.bf16.mxu0 0
    %10794 = vmatpush1.bf16.msra.mxu0 %v7779
    %10795 = vmatprep.subr.bf16.mxu0 0
    %10796 = vmatpush1.bf16.msra.mxu0 %v7780
    %10797 = vmatprep.subr.bf16.mxu0 0
    %10798 = vmatpush1.bf16.msra.mxu0 %v7781
    %10799 = vmatprep.subr.bf16.mxu0 0
    %10800 = vmatpush1.bf16.msra.mxu0 %v7782
    %10801 = vmatprep.subr.bf16.mxu0 0
    %10802 = vmatpush1.bf16.msra.mxu0 %v7783
    %10803 = vmatprep.subr.bf16.mxu0 0
    %10804 = vmatpush1.bf16.msra.mxu0 %v7784
    %10805 = vmatprep.subr.bf16.mxu0 0
    %10806 = vmatpush1.bf16.msra.mxu0 %v7785
    %10807 = vmatprep.subr.bf16.mxu0 0
    %10808 = vmatpush1.bf16.msra.mxu0 %v7786
    %10809 = vmatprep.subr.bf16.mxu0 0
    %10810 = vmatpush1.bf16.msra.mxu0 %v7787
    %10811 = vmatprep.subr.bf16.mxu0 0
    %10812 = vmatpush1.bf16.msra.mxu0 %v7788
    %10813 = vmatprep.subr.bf16.mxu0 0
    %10814 = vmatpush1.bf16.msra.mxu0 %v7789
    %10815 = vmatprep.subr.bf16.mxu0 0
    %10816 = vmatpush1.bf16.msra.mxu0 %v7790
    %10817 = vmatprep.subr.bf16.mxu0 0
    %10818 = vmatpush1.bf16.msra.mxu0 %v7791
    %10819 = vmatprep.subr.bf16.mxu0 0
    %10820 = vmatpush1.bf16.msra.mxu0 %v7792
    %10821 = vmatprep.subr.bf16.mxu0 0
    %10822 = vmatpush1.bf16.msra.mxu0 %v7793
    %10823 = vmatprep.subr.bf16.mxu0 0
    %10824 = vmatpush1.bf16.msra.mxu0 %v7794
    %10825 = vmatprep.mubr.bf16.mxu0 %v2640
    %10826 = vmatmul.mubr.bf16.gmra.mrb[0].mxu0 %v2626
    %v10827 = vpop.f32.mrb[0].mxu0
    %v10828 = vadd.f32 %v10788, %v10827
    %v10829 = vpop.f32.mrb[0].mxu0
    %v10830 = vpop.f32.mrb[0].mxu0
    %v10831 = vpop.f32.mrb[0].mxu0
    %10832 = vdwg.mxu0
    %10833 = vmatprep.subr.bf16.mxu0 0
    %10834 = vmatpush1.bf16.msra.mxu0 %v7795
    %10835 = vmatprep.subr.bf16.mxu0 0
    %10836 = vmatpush1.bf16.msra.mxu0 %v7796
    %10837 = vmatprep.subr.bf16.mxu0 0
    %10838 = vmatpush1.bf16.msra.mxu0 %v7797
    %10839 = vmatprep.subr.bf16.mxu0 0
    %10840 = vmatpush1.bf16.msra.mxu0 %v7798
    %10841 = vmatprep.subr.bf16.mxu0 0
    %10842 = vmatpush1.bf16.msra.mxu0 %v7799
    %10843 = vmatprep.subr.bf16.mxu0 0
    %10844 = vmatpush1.bf16.msra.mxu0 %v7800
    %10845 = vmatprep.subr.bf16.mxu0 0
    %10846 = vmatpush1.bf16.msra.mxu0 %v7801
    %10847 = vmatprep.subr.bf16.mxu0 0
    %10848 = vmatpush1.bf16.msra.mxu0 %v7802
    %10849 = vmatprep.subr.bf16.mxu0 0
    %10850 = vmatpush1.bf16.msra.mxu0 %v7803
    %10851 = vmatprep.subr.bf16.mxu0 0
    %10852 = vmatpush1.bf16.msra.mxu0 %v7804
    %10853 = vmatprep.subr.bf16.mxu0 0
    %10854 = vmatpush1.bf16.msra.mxu0 %v7805
    %10855 = vmatprep.subr.bf16.mxu0 0
    %10856 = vmatpush1.bf16.msra.mxu0 %v7806
    %10857 = vmatprep.subr.bf16.mxu0 0
    %10858 = vmatpush1.bf16.msra.mxu0 %v7807
    %10859 = vmatprep.subr.bf16.mxu0 0
    %10860 = vmatpush1.bf16.msra.mxu0 %v7808
    %10861 = vmatprep.subr.bf16.mxu0 0
    %10862 = vmatpush1.bf16.msra.mxu0 %v7809
    %10863 = vmatprep.subr.bf16.mxu0 0
    %10864 = vmatpush1.bf16.msra.mxu0 %v7810
    %10865 = vmatprep.mubr.bf16.mxu0 %v2650
    %10866 = vmatmul.mubr.bf16.gmra.mrb[0].mxu0 %v2648
    %v10867 = vpop.f32.mrb[0].mxu0
    %v10868 = vadd.f32 %v10828, %v10867
    %v10869 = vpop.f32.mrb[0].mxu0
    %v10870 = vpop.f32.mrb[0].mxu0
    %v10871 = vpop.f32.mrb[0].mxu0
    %10872 = vdwg.mxu0
    %10873 = vmatprep.subr.bf16.mxu0 0
    %10874 = vmatpush1.bf16.msra.mxu0 %v7811
    %10875 = vmatprep.subr.bf16.mxu0 0
    %10876 = vmatpush1.bf16.msra.mxu0 %v7812
    %10877 = vmatprep.subr.bf16.mxu0 0
    %10878 = vmatpush1.bf16.msra.mxu0 %v7813
    %10879 = vmatprep.subr.bf16.mxu0 0
    %10880 = vmatpush1.bf16.msra.mxu0 %v7814
    %10881 = vmatprep.subr.bf16.mxu0 0
    %10882 = vmatpush1.bf16.msra.mxu0 %v7815
    %10883 = vmatprep.subr.bf16.mxu0 0
    %10884 = vmatpush1.bf16.msra.mxu0 %v7816
    %10885 = vmatprep.subr.bf16.mxu0 0
    %10886 = vmatpush1.bf16.msra.mxu0 %v7817
    %10887 = vmatprep.subr.bf16.mxu0 0
    %10888 = vmatpush1.bf16.msra.mxu0 %v7818
    %10889 = vmatprep.subr.bf16.mxu0 0
    %10890 = vmatpush1.bf16.msra.mxu0 %v7819
    %10891 = vmatprep.subr.bf16.mxu0 0
    %10892 = vmatpush1.bf16.msra.mxu0 %v7820
    %10893 = vmatprep.subr.bf16.mxu0 0
    %10894 = vmatpush1.bf16.msra.mxu0 %v7821
    %10895 = vmatprep.subr.bf16.mxu0 0
    %10896 = vmatpush1.bf16.msra.mxu0 %v7822
    %10897 = vmatprep.subr.bf16.mxu0 0
    %10898 = vmatpush1.bf16.msra.mxu0 %v7823
    %10899 = vmatprep.subr.bf16.mxu0 0
    %10900 = vmatpush1.bf16.msra.mxu0 %v7824
    %10901 = vmatprep.subr.bf16.mxu0 0
    %10902 = vmatpush1.bf16.msra.mxu0 %v7825
    %10903 = vmatprep.subr.bf16.mxu0 0
    %10904 = vmatpush1.bf16.msra.mxu0 %v7826
    %10905 = vmatprep.mubr.bf16.mxu0 %v2647
    %10906 = vmatmul.mubr.bf16.gmra.mrb[0].mxu0 %v2633
    %v10907 = vpop.f32.mrb[0].mxu0
    %v10908 = vadd.f32 %v10868, %v10907
    %v10909 = vpop.f32.mrb[0].mxu0
    %v10910 = vpop.f32.mrb[0].mxu0
    %v10911 = vpop.f32.mrb[0].mxu0
    %10912 = vdwg.mxu0
    %10913 = vmatprep.subr.bf16.mxu0 0
    %10914 = vmatpush1.bf16.msra.mxu0 %v7827
    %10915 = vmatprep.subr.bf16.mxu0 0
    %10916 = vmatpush1.bf16.msra.mxu0 %v7828
    %10917 = vmatprep.subr.bf16.mxu0 0
    %10918 = vmatpush1.bf16.msra.mxu0 %v7829
    %10919 = vmatprep.subr.bf16.mxu0 0
    %10920 = vmatpush1.bf16.msra.mxu0 %v7830
    %10921 = vmatprep.subr.bf16.mxu0 0
    %10922 = vmatpush1.bf16.msra.mxu0 %v7831
    %10923 = vmatprep.subr.bf16.mxu0 0
    %10924 = vmatpush1.bf16.msra.mxu0 %v7832
    %10925 = vmatprep.subr.bf16.mxu0 0
    %10926 = vmatpush1.bf16.msra.mxu0 %v7833
    %10927 = vmatprep.subr.bf16.mxu0 0
    %10928 = vmatpush1.bf16.msra.mxu0 %v7834
    %10929 = vmatprep.subr.bf16.mxu0 0
    %10930 = vmatpush1.bf16.msra.mxu0 %v7835
    %10931 = vmatprep.subr.bf16.mxu0 0
    %10932 = vmatpush1.bf16.msra.mxu0 %v7836
    %10933 = vmatprep.subr.bf16.mxu0 0
    %10934 = vmatpush1.bf16.msra.mxu0 %v7837
    %10935 = vmatprep.subr.bf16.mxu0 0
    %10936 = vmatpush1.bf16.msra.mxu0 %v7838
    %10937 = vmatprep.subr.bf16.mxu0 0
    %10938 = vmatpush1.bf16.msra.mxu0 %v7839
    %10939 = vmatprep.subr.bf16.mxu0 0
    %10940 = vmatpush1.bf16.msra.mxu0 %v7840
    %10941 = vmatprep.subr.bf16.mxu0 0
    %10942 = vmatpush1.bf16.msra.mxu0 %v7841
    %10943 = vmatprep.subr.bf16.mxu0 0
    %10944 = vmatpush1.bf16.msra.mxu0 %v7842
    %10945 = vmatprep.mubr.bf16.mxu0 %v2651
    %10946 = vmatmul.mubr.bf16.gmra.mrb[0].mxu0 %v2649
    %v10947 = vpop.f32.mrb[0].mxu0
    %v10948 = vadd.f32 %v10908, %v10947
    %v10949 = vpop.f32.mrb[0].mxu0
    %v10950 = vpop.f32.mrb[0].mxu0
    %v10951 = vpop.f32.mrb[0].mxu0
    %10952 = vdwg.mxu0
    %10953 = vmatprep.subr.bf16.mxu0 0
    %10954 = vmatpush1.bf16.msra.mxu0 %v7843
    %10955 = vmatprep.subr.bf16.mxu0 0
    %10956 = vmatpush1.bf16.msra.mxu0 %v7844
    %10957 = vmatprep.subr.bf16.mxu0 0
    %10958 = vmatpush1.bf16.msra.mxu0 %v7845
    %10959 = vmatprep.subr.bf16.mxu0 0
    %10960 = vmatpush1.bf16.msra.mxu0 %v7846
    %10961 = vmatprep.subr.bf16.mxu0 0
    %10962 = vmatpush1.bf16.msra.mxu0 %v7847
    %10963 = vmatprep.subr.bf16.mxu0 0
    %10964 = vmatpush1.bf16.msra.mxu0 %v7848
    %10965 = vmatprep.subr.bf16.mxu0 0
    %10966 = vmatpush1.bf16.msra.mxu0 %v7849
    %10967 = vmatprep.subr.bf16.mxu0 0
    %10968 = vmatpush1.bf16.msra.mxu0 %v7850
    %10969 = vmatprep.subr.bf16.mxu0 0
    %10970 = vmatpush1.bf16.msra.mxu0 %v7851
    %10971 = vmatprep.subr.bf16.mxu0 0
    %10972 = vmatpush1.bf16.msra.mxu0 %v7852
    %10973 = vmatprep.subr.bf16.mxu0 0
    %10974 = vmatpush1.bf16.msra.mxu0 %v7853
    %10975 = vmatprep.subr.bf16.mxu0 0
    %10976 = vmatpush1.bf16.msra.mxu0 %v7854
    %10977 = vmatprep.subr.bf16.mxu0 0
    %10978 = vmatpush1.bf16.msra.mxu0 %v7855
    %10979 = vmatprep.subr.bf16.mxu0 0
    %10980 = vmatpush1.bf16.msra.mxu0 %v7856
    %10981 = vmatprep.subr.bf16.mxu0 0
    %10982 = vmatpush1.bf16.msra.mxu0 %v7857
    %10983 = vmatprep.subr.bf16.mxu0 0
    %10984 = vmatpush1.bf16.msra.mxu0 %v7858
    %10985 = vmatprep.mubr.bf16.mxu0 %v2689
    %10986 = vmatmul.mubr.bf16.gmra.mrb[0].mxu0 %v2675
    %v10987 = vpop.f32.mrb[0].mxu0
    %v10988 = vadd.f32 %v10948, %v10987
    %v10989 = vpop.f32.mrb[0].mxu0
    %v10990 = vpop.f32.mrb[0].mxu0
    %v10991 = vpop.f32.mrb[0].mxu0
    %10992 = vdwg.mxu0
    %10993 = vmatprep.subr.bf16.mxu0 0
    %10994 = vmatpush1.bf16.msra.mxu0 %v7859
    %10995 = vmatprep.subr.bf16.mxu0 0
    %10996 = vmatpush1.bf16.msra.mxu0 %v7860
    %10997 = vmatprep.subr.bf16.mxu0 0
    %10998 = vmatpush1.bf16.msra.mxu0 %v7861
    %10999 = vmatprep.subr.bf16.mxu0 0
    %11000 = vmatpush1.bf16.msra.mxu0 %v7862
    %11001 = vmatprep.subr.bf16.mxu0 0
    %11002 = vmatpush1.bf16.msra.mxu0 %v7863
    %11003 = vmatprep.subr.bf16.mxu0 0
    %11004 = vmatpush1.bf16.msra.mxu0 %v7864
    %11005 = vmatprep.subr.bf16.mxu0 0
    %11006 = vmatpush1.bf16.msra.mxu0 %v7865
    %11007 = vmatprep.subr.bf16.mxu0 0
    %11008 = vmatpush1.bf16.msra.mxu0 %v7866
    %11009 = vmatprep.subr.bf16.mxu0 0
    %11010 = vmatpush1.bf16.msra.mxu0 %v7867
    %11011 = vmatprep.subr.bf16.mxu0 0
    %11012 = vmatpush1.bf16.msra.mxu0 %v7868
    %11013 = vmatprep.subr.bf16.mxu0 0
    %11014 = vmatpush1.bf16.msra.mxu0 %v7869
    %11015 = vmatprep.subr.bf16.mxu0 0
    %11016 = vmatpush1.bf16.msra.mxu0 %v7870
    %11017 = vmatprep.subr.bf16.mxu0 0
    %11018 = vmatpush1.bf16.msra.mxu0 %v7871
    %11019 = vmatprep.subr.bf16.mxu0 0
    %11020 = vmatpush1.bf16.msra.mxu0 %v7872
    %11021 = vmatprep.subr.bf16.mxu0 0
    %11022 = vmatpush1.bf16.msra.mxu0 %v7873
    %11023 = vmatprep.subr.bf16.mxu0 0
    %11024 = vmatpush1.bf16.msra.mxu0 %v7874
    %11025 = vmatprep.mubr.bf16.mxu0 %v2699
    %11026 = vmatmul.mubr.bf16.gmra.mrb[0].mxu0 %v2697
    %v11027 = vpop.f32.mrb[0].mxu0
    %v11028 = vadd.f32 %v10988, %v11027
    %v11029 = vpop.f32.mrb[0].mxu0
    %v11030 = vpop.f32.mrb[0].mxu0
    %v11031 = vpop.f32.mrb[0].mxu0
    %11032 = vdwg.mxu0
    %11033 = vmatprep.subr.bf16.mxu0 0
    %11034 = vmatpush1.bf16.msra.mxu0 %v7875
    %11035 = vmatprep.subr.bf16.mxu0 0
    %11036 = vmatpush1.bf16.msra.mxu0 %v7876
    %11037 = vmatprep.subr.bf16.mxu0 0
    %11038 = vmatpush1.bf16.msra.mxu0 %v7877
    %11039 = vmatprep.subr.bf16.mxu0 0
    %11040 = vmatpush1.bf16.msra.mxu0 %v7878
    %11041 = vmatprep.subr.bf16.mxu0 0
    %11042 = vmatpush1.bf16.msra.mxu0 %v7879
    %11043 = vmatprep.subr.bf16.mxu0 0
    %11044 = vmatpush1.bf16.msra.mxu0 %v7880
    %11045 = vmatprep.subr.bf16.mxu0 0
    %11046 = vmatpush1.bf16.msra.mxu0 %v7881
    %11047 = vmatprep.subr.bf16.mxu0 0
    %11048 = vmatpush1.bf16.msra.mxu0 %v7882
    %11049 = vmatprep.subr.bf16.mxu0 0
    %11050 = vmatpush1.bf16.msra.mxu0 %v7883
    %11051 = vmatprep.subr.bf16.mxu0 0
    %11052 = vmatpush1.bf16.msra.mxu0 %v7884
    %11053 = vmatprep.subr.bf16.mxu0 0
    %11054 = vmatpush1.bf16.msra.mxu0 %v7885
    %11055 = vmatprep.subr.bf16.mxu0 0
    %11056 = vmatpush1.bf16.msra.mxu0 %v7886
    %11057 = vmatprep.subr.bf16.mxu0 0
    %11058 = vmatpush1.bf16.msra.mxu0 %v7887
    %11059 = vmatprep.subr.bf16.mxu0 0
    %11060 = vmatpush1.bf16.msra.mxu0 %v7888
    %11061 = vmatprep.subr.bf16.mxu0 0
    %11062 = vmatpush1.bf16.msra.mxu0 %v7889
    %11063 = vmatprep.subr.bf16.mxu0 0
    %11064 = vmatpush1.bf16.msra.mxu0 %v7890
    %11065 = vmatprep.mubr.bf16.mxu0 %v2696
    %11066 = vmatmul.mubr.bf16.gmra.mrb[0].mxu0 %v2682
    %v11067 = vpop.f32.mrb[0].mxu0
    %v11068 = vadd.f32 %v11028, %v11067
    %v11069 = vpop.f32.mrb[0].mxu0
    %v11070 = vpop.f32.mrb[0].mxu0
    %v11071 = vpop.f32.mrb[0].mxu0
    %11072 = vdwg.mxu0
    %11073 = vmatprep.subr.bf16.mxu0 0
    %11074 = vmatpush1.bf16.msra.mxu0 %v7891
    %11075 = vmatprep.subr.bf16.mxu0 0
    %11076 = vmatpush1.bf16.msra.mxu0 %v7892
    %11077 = vmatprep.subr.bf16.mxu0 0
    %11078 = vmatpush1.bf16.msra.mxu0 %v7893
    %11079 = vmatprep.subr.bf16.mxu0 0
    %11080 = vmatpush1.bf16.msra.mxu0 %v7894
    %11081 = vmatprep.subr.bf16.mxu0 0
    %11082 = vmatpush1.bf16.msra.mxu0 %v7895
    %11083 = vmatprep.subr.bf16.mxu0 0
    %11084 = vmatpush1.bf16.msra.mxu0 %v7896
    %11085 = vmatprep.subr.bf16.mxu0 0
    %11086 = vmatpush1.bf16.msra.mxu0 %v7897
    %11087 = vmatprep.subr.bf16.mxu0 0
    %11088 = vmatpush1.bf16.msra.mxu0 %v7898
    %11089 = vmatprep.subr.bf16.mxu0 0
    %11090 = vmatpush1.bf16.msra.mxu0 %v7899
    %11091 = vmatprep.subr.bf16.mxu0 0
    %11092 = vmatpush1.bf16.msra.mxu0 %v7900
    %11093 = vmatprep.subr.bf16.mxu0 0
    %11094 = vmatpush1.bf16.msra.mxu0 %v7901
    %11095 = vmatprep.subr.bf16.mxu0 0
    %11096 = vmatpush1.bf16.msra.mxu0 %v7902
    %11097 = vmatprep.subr.bf16.mxu0 0
    %11098 = vmatpush1.bf16.msra.mxu0 %v7903
    %11099 = vmatprep.subr.bf16.mxu0 0
    %11100 = vmatpush1.bf16.msra.mxu0 %v7904
    %11101 = vmatprep.subr.bf16.mxu0 0
    %11102 = vmatpush1.bf16.msra.mxu0 %v7905
    %11103 = vmatprep.subr.bf16.mxu0 0
    %11104 = vmatpush1.bf16.msra.mxu0 %v7906
    %11105 = vmatprep.mubr.bf16.mxu0 %v2700
    %11106 = vmatmul.mubr.bf16.gmra.mrb[0].mxu0 %v2698
    %v11107 = vpop.f32.mrb[0].mxu0
    %v11108 = vadd.f32 %v11068, %v11107
    %v11109 = vpop.f32.mrb[0].mxu0
    %v11110 = vpop.f32.mrb[0].mxu0
    %v11111 = vpop.f32.mrb[0].mxu0
    %11112 = vdwg.mxu0
    %11113 = vmatprep.subr.bf16.mxu0 0
    %11114 = vmatpush1.bf16.msra.mxu0 %v7907
    %11115 = vmatprep.subr.bf16.mxu0 0
    %11116 = vmatpush1.bf16.msra.mxu0 %v7908
    %11117 = vmatprep.subr.bf16.mxu0 0
    %11118 = vmatpush1.bf16.msra.mxu0 %v7909
    %11119 = vmatprep.subr.bf16.mxu0 0
    %11120 = vmatpush1.bf16.msra.mxu0 %v7910
    %11121 = vmatprep.subr.bf16.mxu0 0
    %11122 = vmatpush1.bf16.msra.mxu0 %v7911
    %11123 = vmatprep.subr.bf16.mxu0 0
    %11124 = vmatpush1.bf16.msra.mxu0 %v7912
    %11125 = vmatprep.subr.bf16.mxu0 0
    %11126 = vmatpush1.bf16.msra.mxu0 %v7913
    %11127 = vmatprep.subr.bf16.mxu0 0
    %11128 = vmatpush1.bf16.msra.mxu0 %v7914
    %11129 = vmatprep.subr.bf16.mxu0 0
    %11130 = vmatpush1.bf16.msra.mxu0 %v7915
    %11131 = vmatprep.subr.bf16.mxu0 0
    %11132 = vmatpush1.bf16.msra.mxu0 %v7916
    %11133 = vmatprep.subr.bf16.mxu0 0
    %11134 = vmatpush1.bf16.msra.mxu0 %v7917
    %11135 = vmatprep.subr.bf16.mxu0 0
    %11136 = vmatpush1.bf16.msra.mxu0 %v7918
    %11137 = vmatprep.subr.bf16.mxu0 0
    %11138 = vmatpush1.bf16.msra.mxu0 %v7919
    %11139 = vmatprep.subr.bf16.mxu0 0
    %11140 = vmatpush1.bf16.msra.mxu0 %v7920
    %11141 = vmatprep.subr.bf16.mxu0 0
    %11142 = vmatpush1.bf16.msra.mxu0 %v7921
    %11143 = vmatprep.subr.bf16.mxu0 0
    %11144 = vmatpush1.bf16.msra.mxu0 %v7922
    %11145 = vmatprep.mubr.bf16.mxu0 %v2738
    %11146 = vmatmul.mubr.bf16.gmra.mrb[0].mxu0 %v2724
    %v11147 = vpop.f32.mrb[0].mxu0
    %v11148 = vadd.f32 %v11108, %v11147
    %v11149 = vpop.f32.mrb[0].mxu0
    %v11150 = vpop.f32.mrb[0].mxu0
    %v11151 = vpop.f32.mrb[0].mxu0
    %11152 = vdwg.mxu0
    %11153 = vmatprep.subr.bf16.mxu0 0
    %11154 = vmatpush1.bf16.msra.mxu0 %v7923
    %11155 = vmatprep.subr.bf16.mxu0 0
    %11156 = vmatpush1.bf16.msra.mxu0 %v7924
    %11157 = vmatprep.subr.bf16.mxu0 0
    %11158 = vmatpush1.bf16.msra.mxu0 %v7925
    %11159 = vmatprep.subr.bf16.mxu0 0
    %11160 = vmatpush1.bf16.msra.mxu0 %v7926
    %11161 = vmatprep.subr.bf16.mxu0 0
    %11162 = vmatpush1.bf16.msra.mxu0 %v7927
    %11163 = vmatprep.subr.bf16.mxu0 0
    %11164 = vmatpush1.bf16.msra.mxu0 %v7928
    %11165 = vmatprep.subr.bf16.mxu0 0
    %11166 = vmatpush1.bf16.msra.mxu0 %v7929
    %11167 = vmatprep.subr.bf16.mxu0 0
    %11168 = vmatpush1.bf16.msra.mxu0 %v7930
    %11169 = vmatprep.subr.bf16.mxu0 0
    %11170 = vmatpush1.bf16.msra.mxu0 %v7931
    %11171 = vmatprep.subr.bf16.mxu0 0
    %11172 = vmatpush1.bf16.msra.mxu0 %v7932
    %11173 = vmatprep.subr.bf16.mxu0 0
    %11174 = vmatpush1.bf16.msra.mxu0 %v7933
    %11175 = vmatprep.subr.bf16.mxu0 0
    %11176 = vmatpush1.bf16.msra.mxu0 %v7934
    %11177 = vmatprep.subr.bf16.mxu0 0
    %11178 = vmatpush1.bf16.msra.mxu0 %v7935
    %11179 = vmatprep.subr.bf16.mxu0 0
    %11180 = vmatpush1.bf16.msra.mxu0 %v7936
    %11181 = vmatprep.subr.bf16.mxu0 0
    %11182 = vmatpush1.bf16.msra.mxu0 %v7937
    %11183 = vmatprep.subr.bf16.mxu0 0
    %11184 = vmatpush1.bf16.msra.mxu0 %v7938
    %11185 = vmatprep.mubr.bf16.mxu0 %v2748
    %11186 = vmatmul.mubr.bf16.gmra.mrb[0].mxu0 %v2746
    %v11187 = vpop.f32.mrb[0].mxu0
    %v11188 = vadd.f32 %v11148, %v11187
    %v11189 = vpop.f32.mrb[0].mxu0
    %v11190 = vpop.f32.mrb[0].mxu0
    %v11191 = vpop.f32.mrb[0].mxu0
    %11192 = vdwg.mxu0
    %11193 = vmatprep.subr.bf16.mxu0 0
    %11194 = vmatpush1.bf16.msra.mxu0 %v7939
    %11195 = vmatprep.subr.bf16.mxu0 0
    %11196 = vmatpush1.bf16.msra.mxu0 %v7940
    %11197 = vmatprep.subr.bf16.mxu0 0
    %11198 = vmatpush1.bf16.msra.mxu0 %v7941
    %11199 = vmatprep.subr.bf16.mxu0 0
    %11200 = vmatpush1.bf16.msra.mxu0 %v7942
    %11201 = vmatprep.subr.bf16.mxu0 0
    %11202 = vmatpush1.bf16.msra.mxu0 %v7943
    %11203 = vmatprep.subr.bf16.mxu0 0
    %11204 = vmatpush1.bf16.msra.mxu0 %v7944
    %11205 = vmatprep.subr.bf16.mxu0 0
    %11206 = vmatpush1.bf16.msra.mxu0 %v7945
    %11207 = vmatprep.subr.bf16.mxu0 0
    %11208 = vmatpush1.bf16.msra.mxu0 %v7946
    %11209 = vmatprep.subr.bf16.mxu0 0
    %11210 = vmatpush1.bf16.msra.mxu0 %v7947
    %11211 = vmatprep.subr.bf16.mxu0 0
    %11212 = vmatpush1.bf16.msra.mxu0 %v7948
    %11213 = vmatprep.subr.bf16.mxu0 0
    %11214 = vmatpush1.bf16.msra.mxu0 %v7949
    %11215 = vmatprep.subr.bf16.mxu0 0
    %11216 = vmatpush1.bf16.msra.mxu0 %v7950
    %11217 = vmatprep.subr.bf16.mxu0 0
    %11218 = vmatpush1.bf16.msra.mxu0 %v7951
    %11219 = vmatprep.subr.bf16.mxu0 0
    %11220 = vmatpush1.bf16.msra.mxu0 %v7952
    %11221 = vmatprep.subr.bf16.mxu0 0
    %11222 = vmatpush1.bf16.msra.mxu0 %v7953
    %11223 = vmatprep.subr.bf16.mxu0 0
    %11224 = vmatpush1.bf16.msra.mxu0 %v7954
    %11225 = vmatprep.mubr.bf16.mxu0 %v2745
    %11226 = vmatmul.mubr.bf16.gmra.mrb[0].mxu0 %v2731
    %v11227 = vpop.f32.mrb[0].mxu0
    %v11228 = vadd.f32 %v11188, %v11227
    %v11229 = vpop.f32.mrb[0].mxu0
    %v11230 = vpop.f32.mrb[0].mxu0
    %v11231 = vpop.f32.mrb[0].mxu0
    %11232 = vdwg.mxu0
    %11233 = vmatprep.subr.bf16.mxu0 0
    %11234 = vmatpush1.bf16.msra.mxu0 %v7955
    %11235 = vmatprep.subr.bf16.mxu0 0
    %11236 = vmatpush1.bf16.msra.mxu0 %v7956
    %11237 = vmatprep.subr.bf16.mxu0 0
    %11238 = vmatpush1.bf16.msra.mxu0 %v7957
    %11239 = vmatprep.subr.bf16.mxu0 0
    %11240 = vmatpush1.bf16.msra.mxu0 %v7958
    %11241 = vmatprep.subr.bf16.mxu0 0
    %11242 = vmatpush1.bf16.msra.mxu0 %v7959
    %11243 = vmatprep.subr.bf16.mxu0 0
    %11244 = vmatpush1.bf16.msra.mxu0 %v7960
    %11245 = vmatprep.subr.bf16.mxu0 0
    %11246 = vmatpush1.bf16.msra.mxu0 %v7961
    %11247 = vmatprep.subr.bf16.mxu0 0
    %11248 = vmatpush1.bf16.msra.mxu0 %v7962
    %11249 = vmatprep.subr.bf16.mxu0 0
    %11250 = vmatpush1.bf16.msra.mxu0 %v7963
    %11251 = vmatprep.subr.bf16.mxu0 0
    %11252 = vmatpush1.bf16.msra.mxu0 %v7964
    %11253 = vmatprep.subr.bf16.mxu0 0
    %11254 = vmatpush1.bf16.msra.mxu0 %v7965
    %11255 = vmatprep.subr.bf16.mxu0 0
    %11256 = vmatpush1.bf16.msra.mxu0 %v7966
    %11257 = vmatprep.subr.bf16.mxu0 0
    %11258 = vmatpush1.bf16.msra.mxu0 %v7967
    %11259 = vmatprep.subr.bf16.mxu0 0
    %11260 = vmatpush1.bf16.msra.mxu0 %v7968
    %11261 = vmatprep.subr.bf16.mxu0 0
    %11262 = vmatpush1.bf16.msra.mxu0 %v7969
    %11263 = vmatprep.subr.bf16.mxu0 0
    %11264 = vmatpush1.bf16.msra.mxu0 %v7970
    %11265 = vmatprep.mubr.bf16.mxu0 %v2749
    %11266 = vmatmul.mubr.bf16.gmra.mrb[0].mxu0 %v2747
    %v11267 = vpop.f32.mrb[0].mxu0
    %v11268 = vadd.f32 %v11228, %v11267
    %v11269 = vpop.f32.mrb[0].mxu0
    %v11270 = vpop.f32.mrb[0].mxu0
    %v11271 = vpop.f32.mrb[0].mxu0
    %11272 = vdwg.mxu0
    %11273 = vmatprep.subr.bf16.mxu0 0
    %11274 = vmatpush1.bf16.msra.mxu0 %v7971
    %11275 = vmatprep.subr.bf16.mxu0 0
    %11276 = vmatpush1.bf16.msra.mxu0 %v7972
    %11277 = vmatprep.subr.bf16.mxu0 0
    %11278 = vmatpush1.bf16.msra.mxu0 %v7973
    %11279 = vmatprep.subr.bf16.mxu0 0
    %11280 = vmatpush1.bf16.msra.mxu0 %v7974
    %11281 = vmatprep.subr.bf16.mxu0 0
    %11282 = vmatpush1.bf16.msra.mxu0 %v7975
    %11283 = vmatprep.subr.bf16.mxu0 0
    %11284 = vmatpush1.bf16.msra.mxu0 %v7976
    %11285 = vmatprep.subr.bf16.mxu0 0
    %11286 = vmatpush1.bf16.msra.mxu0 %v7977
    %11287 = vmatprep.subr.bf16.mxu0 0
    %11288 = vmatpush1.bf16.msra.mxu0 %v7978
    %11289 = vmatprep.subr.bf16.mxu0 0
    %11290 = vmatpush1.bf16.msra.mxu0 %v7979
    %11291 = vmatprep.subr.bf16.mxu0 0
    %11292 = vmatpush1.bf16.msra.mxu0 %v7980
    %11293 = vmatprep.subr.bf16.mxu0 0
    %11294 = vmatpush1.bf16.msra.mxu0 %v7981
    %11295 = vmatprep.subr.bf16.mxu0 0
    %11296 = vmatpush1.bf16.msra.mxu0 %v7982
    %11297 = vmatprep.subr.bf16.mxu0 0
    %11298 = vmatpush1.bf16.msra.mxu0 %v7983
    %11299 = vmatprep.subr.bf16.mxu0 0
    %11300 = vmatpush1.bf16.msra.mxu0 %v7984
    %11301 = vmatprep.subr.bf16.mxu0 0
    %11302 = vmatpush1.bf16.msra.mxu0 %v7985
    %11303 = vmatprep.subr.bf16.mxu0 0
    %11304 = vmatpush1.bf16.msra.mxu0 %v7986
    %11305 = vmatprep.mubr.bf16.mxu0 %v2787
    %11306 = vmatmul.mubr.bf16.gmra.mrb[0].mxu0 %v2773
    %v11307 = vpop.f32.mrb[0].mxu0
    %v11308 = vadd.f32 %v11268, %v11307
    %v11309 = vpop.f32.mrb[0].mxu0
    %v11310 = vpop.f32.mrb[0].mxu0
    %v11311 = vpop.f32.mrb[0].mxu0
    %11312 = vdwg.mxu0
    %11313 = vmatprep.subr.bf16.mxu0 0
    %11314 = vmatpush1.bf16.msra.mxu0 %v7987
    %11315 = vmatprep.subr.bf16.mxu0 0
    %11316 = vmatpush1.bf16.msra.mxu0 %v7988
    %11317 = vmatprep.subr.bf16.mxu0 0
    %11318 = vmatpush1.bf16.msra.mxu0 %v7989
    %11319 = vmatprep.subr.bf16.mxu0 0
    %11320 = vmatpush1.bf16.msra.mxu0 %v7990
    %11321 = vmatprep.subr.bf16.mxu0 0
    %11322 = vmatpush1.bf16.msra.mxu0 %v7991
    %11323 = vmatprep.subr.bf16.mxu0 0
    %11324 = vmatpush1.bf16.msra.mxu0 %v7992
    %11325 = vmatprep.subr.bf16.mxu0 0
    %11326 = vmatpush1.bf16.msra.mxu0 %v7993
    %11327 = vmatprep.subr.bf16.mxu0 0
    %11328 = vmatpush1.bf16.msra.mxu0 %v7994
    %11329 = vmatprep.subr.bf16.mxu0 0
    %11330 = vmatpush1.bf16.msra.mxu0 %v7995
    %11331 = vmatprep.subr.bf16.mxu0 0
    %11332 = vmatpush1.bf16.msra.mxu0 %v7996
    %11333 = vmatprep.subr.bf16.mxu0 0
    %11334 = vmatpush1.bf16.msra.mxu0 %v7997
    %11335 = vmatprep.subr.bf16.mxu0 0
    %11336 = vmatpush1.bf16.msra.mxu0 %v7998
    %11337 = vmatprep.subr.bf16.mxu0 0
    %11338 = vmatpush1.bf16.msra.mxu0 %v7999
    %11339 = vmatprep.subr.bf16.mxu0 0
    %11340 = vmatpush1.bf16.msra.mxu0 %v8000
    %11341 = vmatprep.subr.bf16.mxu0 0
    %11342 = vmatpush1.bf16.msra.mxu0 %v8001
    %11343 = vmatprep.subr.bf16.mxu0 0
    %11344 = vmatpush1.bf16.msra.mxu0 %v8002
    %11345 = vmatprep.mubr.bf16.mxu0 %v2797
    %11346 = vmatmul.mubr.bf16.gmra.mrb[0].mxu0 %v2795
    %v11347 = vpop.f32.mrb[0].mxu0
    %v11348 = vadd.f32 %v11308, %v11347
    %v11349 = vpop.f32.mrb[0].mxu0
    %v11350 = vpop.f32.mrb[0].mxu0
    %v11351 = vpop.f32.mrb[0].mxu0
    %11352 = vdwg.mxu0
    %11353 = vmatprep.subr.bf16.mxu0 0
    %11354 = vmatpush1.bf16.msra.mxu0 %v8003
    %11355 = vmatprep.subr.bf16.mxu0 0
    %11356 = vmatpush1.bf16.msra.mxu0 %v8004
    %11357 = vmatprep.subr.bf16.mxu0 0
    %11358 = vmatpush1.bf16.msra.mxu0 %v8005
    %11359 = vmatprep.subr.bf16.mxu0 0
    %11360 = vmatpush1.bf16.msra.mxu0 %v8006
    %11361 = vmatprep.subr.bf16.mxu0 0
    %11362 = vmatpush1.bf16.msra.mxu0 %v8007
    %11363 = vmatprep.subr.bf16.mxu0 0
    %11364 = vmatpush1.bf16.msra.mxu0 %v8008
    %11365 = vmatprep.subr.bf16.mxu0 0
    %11366 = vmatpush1.bf16.msra.mxu0 %v8009
    %11367 = vmatprep.subr.bf16.mxu0 0
    %11368 = vmatpush1.bf16.msra.mxu0 %v8010
    %11369 = vmatprep.subr.bf16.mxu0 0
    %11370 = vmatpush1.bf16.msra.mxu0 %v8011
    %11371 = vmatprep.subr.bf16.mxu0 0
    %11372 = vmatpush1.bf16.msra.mxu0 %v8012
    %11373 = vmatprep.subr.bf16.mxu0 0
    %11374 = vmatpush1.bf16.msra.mxu0 %v8013
    %11375 = vmatprep.subr.bf16.mxu0 0
    %11376 = vmatpush1.bf16.msra.mxu0 %v8014
    %11377 = vmatprep.subr.bf16.mxu0 0
    %11378 = vmatpush1.bf16.msra.mxu0 %v8015
    %11379 = vmatprep.subr.bf16.mxu0 0
    %11380 = vmatpush1.bf16.msra.mxu0 %v8016
    %11381 = vmatprep.subr.bf16.mxu0 0
    %11382 = vmatpush1.bf16.msra.mxu0 %v8017
    %11383 = vmatprep.subr.bf16.mxu0 0
    %11384 = vmatpush1.bf16.msra.mxu0 %v8018
    %11385 = vmatprep.mubr.bf16.mxu0 %v2794
    %11386 = vmatmul.mubr.bf16.gmra.mrb[0].mxu0 %v2780
    %v11387 = vpop.f32.mrb[0].mxu0
    %v11388 = vadd.f32 %v11348, %v11387
    %v11389 = vpop.f32.mrb[0].mxu0
    %v11390 = vpop.f32.mrb[0].mxu0
    %v11391 = vpop.f32.mrb[0].mxu0
    %11392 = vdwg.mxu0
    %11393 = vmatprep.subr.bf16.mxu0 0
    %11394 = vmatpush1.bf16.msra.mxu0 %v8019
    %11395 = vmatprep.subr.bf16.mxu0 0
    %11396 = vmatpush1.bf16.msra.mxu0 %v8020
    %11397 = vmatprep.subr.bf16.mxu0 0
    %11398 = vmatpush1.bf16.msra.mxu0 %v8021
    %11399 = vmatprep.subr.bf16.mxu0 0
    %11400 = vmatpush1.bf16.msra.mxu0 %v8022
    %11401 = vmatprep.subr.bf16.mxu0 0
    %11402 = vmatpush1.bf16.msra.mxu0 %v8023
    %11403 = vmatprep.subr.bf16.mxu0 0
    %11404 = vmatpush1.bf16.msra.mxu0 %v8024
    %11405 = vmatprep.subr.bf16.mxu0 0
    %11406 = vmatpush1.bf16.msra.mxu0 %v8025
    %11407 = vmatprep.subr.bf16.mxu0 0
    %11408 = vmatpush1.bf16.msra.mxu0 %v8026
    %11409 = vmatprep.subr.bf16.mxu0 0
    %11410 = vmatpush1.bf16.msra.mxu0 %v8027
    %11411 = vmatprep.subr.bf16.mxu0 0
    %11412 = vmatpush1.bf16.msra.mxu0 %v8028
    %11413 = vmatprep.subr.bf16.mxu0 0
    %11414 = vmatpush1.bf16.msra.mxu0 %v8029
    %11415 = vmatprep.subr.bf16.mxu0 0
    %11416 = vmatpush1.bf16.msra.mxu0 %v8030
    %11417 = vmatprep.subr.bf16.mxu0 0
    %11418 = vmatpush1.bf16.msra.mxu0 %v8031
    %11419 = vmatprep.subr.bf16.mxu0 0
    %11420 = vmatpush1.bf16.msra.mxu0 %v8032
    %11421 = vmatprep.subr.bf16.mxu0 0
    %11422 = vmatpush1.bf16.msra.mxu0 %v8033
    %11423 = vmatprep.subr.bf16.mxu0 0
    %11424 = vmatpush1.bf16.msra.mxu0 %v8034
    %11425 = vmatprep.mubr.bf16.mxu0 %v2798
    %11426 = vmatmul.mubr.bf16.gmra.mrb[0].mxu0 %v2796
    %v11427 = vpop.f32.mrb[0].mxu0
    %v11428 = vadd.f32 %v11388, %v11427
    %v11429 = vpop.f32.mrb[0].mxu0
    %v11430 = vpop.f32.mrb[0].mxu0
    %v11431 = vpop.f32.mrb[0].mxu0
    %11432 = vdwg.mxu0
    %11433 = vmatprep.subr.bf16.mxu0 0
    %11434 = vmatpush1.bf16.msra.mxu0 %v8035
    %11435 = vmatprep.subr.bf16.mxu0 0
    %11436 = vmatpush1.bf16.msra.mxu0 %v8036
    %11437 = vmatprep.subr.bf16.mxu0 0
    %11438 = vmatpush1.bf16.msra.mxu0 %v8037
    %11439 = vmatprep.subr.bf16.mxu0 0
    %11440 = vmatpush1.bf16.msra.mxu0 %v8038
    %11441 = vmatprep.subr.bf16.mxu0 0
    %11442 = vmatpush1.bf16.msra.mxu0 %v8039
    %11443 = vmatprep.subr.bf16.mxu0 0
    %11444 = vmatpush1.bf16.msra.mxu0 %v8040
    %11445 = vmatprep.subr.bf16.mxu0 0
    %11446 = vmatpush1.bf16.msra.mxu0 %v8041
    %11447 = vmatprep.subr.bf16.mxu0 0
    %11448 = vmatpush1.bf16.msra.mxu0 %v8042
    %11449 = vmatprep.subr.bf16.mxu0 0
    %11450 = vmatpush1.bf16.msra.mxu0 %v8043
    %11451 = vmatprep.subr.bf16.mxu0 0
    %11452 = vmatpush1.bf16.msra.mxu0 %v8044
    %11453 = vmatprep.subr.bf16.mxu0 0
    %11454 = vmatpush1.bf16.msra.mxu0 %v8045
    %11455 = vmatprep.subr.bf16.mxu0 0
    %11456 = vmatpush1.bf16.msra.mxu0 %v8046
    %11457 = vmatprep.subr.bf16.mxu0 0
    %11458 = vmatpush1.bf16.msra.mxu0 %v8047
    %11459 = vmatprep.subr.bf16.mxu0 0
    %11460 = vmatpush1.bf16.msra.mxu0 %v8048
    %11461 = vmatprep.subr.bf16.mxu0 0
    %11462 = vmatpush1.bf16.msra.mxu0 %v8049
    %11463 = vmatprep.subr.bf16.mxu0 0
    %11464 = vmatpush1.bf16.msra.mxu0 %v8050
    %11465 = vmatprep.mubr.bf16.mxu0 %v2836
    %11466 = vmatmul.mubr.bf16.gmra.mrb[0].mxu0 %v2822
    %v11467 = vpop.f32.mrb[0].mxu0
    %v11468 = vadd.f32 %v11428, %v11467
    %v11469 = vpop.f32.mrb[0].mxu0
    %v11470 = vpop.f32.mrb[0].mxu0
    %v11471 = vpop.f32.mrb[0].mxu0
    %11472 = vdwg.mxu0
    %11473 = vmatprep.subr.bf16.mxu0 0
    %11474 = vmatpush1.bf16.msra.mxu0 %v8051
    %11475 = vmatprep.subr.bf16.mxu0 0
    %11476 = vmatpush1.bf16.msra.mxu0 %v8052
    %11477 = vmatprep.subr.bf16.mxu0 0
    %11478 = vmatpush1.bf16.msra.mxu0 %v8053
    %11479 = vmatprep.subr.bf16.mxu0 0
    %11480 = vmatpush1.bf16.msra.mxu0 %v8054
    %11481 = vmatprep.subr.bf16.mxu0 0
    %11482 = vmatpush1.bf16.msra.mxu0 %v8055
    %11483 = vmatprep.subr.bf16.mxu0 0
    %11484 = vmatpush1.bf16.msra.mxu0 %v8056
    %11485 = vmatprep.subr.bf16.mxu0 0
    %11486 = vmatpush1.bf16.msra.mxu0 %v8057
    %11487 = vmatprep.subr.bf16.mxu0 0
    %11488 = vmatpush1.bf16.msra.mxu0 %v8058
    %11489 = vmatprep.subr.bf16.mxu0 0
    %11490 = vmatpush1.bf16.msra.mxu0 %v8059
    %11491 = vmatprep.subr.bf16.mxu0 0
    %11492 = vmatpush1.bf16.msra.mxu0 %v8060
    %11493 = vmatprep.subr.bf16.mxu0 0
    %11494 = vmatpush1.bf16.msra.mxu0 %v8061
    %11495 = vmatprep.subr.bf16.mxu0 0
    %11496 = vmatpush1.bf16.msra.mxu0 %v8062
    %11497 = vmatprep.subr.bf16.mxu0 0
    %11498 = vmatpush1.bf16.msra.mxu0 %v8063
    %11499 = vmatprep.subr.bf16.mxu0 0
    %11500 = vmatpush1.bf16.msra.mxu0 %v8064
    %11501 = vmatprep.subr.bf16.mxu0 0
    %11502 = vmatpush1.bf16.msra.mxu0 %v8065
    %11503 = vmatprep.subr.bf16.mxu0 0
    %11504 = vmatpush1.bf16.msra.mxu0 %v8066
    %11505 = vmatprep.mubr.bf16.mxu0 %v2846
    %11506 = vmatmul.mubr.bf16.gmra.mrb[0].mxu0 %v2844
    %v11507 = vpop.f32.mrb[0].mxu0
    %v11508 = vadd.f32 %v11468, %v11507
    %v11509 = vpop.f32.mrb[0].mxu0
    %v11510 = vpop.f32.mrb[0].mxu0
    %v11511 = vpop.f32.mrb[0].mxu0
    %11512 = vdwg.mxu0
    %11513 = vmatprep.subr.bf16.mxu0 0
    %11514 = vmatpush1.bf16.msra.mxu0 %v8067
    %11515 = vmatprep.subr.bf16.mxu0 0
    %11516 = vmatpush1.bf16.msra.mxu0 %v8068
    %11517 = vmatprep.subr.bf16.mxu0 0
    %11518 = vmatpush1.bf16.msra.mxu0 %v8069
    %11519 = vmatprep.subr.bf16.mxu0 0
    %11520 = vmatpush1.bf16.msra.mxu0 %v8070
    %11521 = vmatprep.subr.bf16.mxu0 0
    %11522 = vmatpush1.bf16.msra.mxu0 %v8071
    %11523 = vmatprep.subr.bf16.mxu0 0
    %11524 = vmatpush1.bf16.msra.mxu0 %v8072
    %11525 = vmatprep.subr.bf16.mxu0 0
    %11526 = vmatpush1.bf16.msra.mxu0 %v8073
    %11527 = vmatprep.subr.bf16.mxu0 0
    %11528 = vmatpush1.bf16.msra.mxu0 %v8074
    %11529 = vmatprep.subr.bf16.mxu0 0
    %11530 = vmatpush1.bf16.msra.mxu0 %v8075
    %11531 = vmatprep.subr.bf16.mxu0 0
    %11532 = vmatpush1.bf16.msra.mxu0 %v8076
    %11533 = vmatprep.subr.bf16.mxu0 0
    %11534 = vmatpush1.bf16.msra.mxu0 %v8077
    %11535 = vmatprep.subr.bf16.mxu0 0
    %11536 = vmatpush1.bf16.msra.mxu0 %v8078
    %11537 = vmatprep.subr.bf16.mxu0 0
    %11538 = vmatpush1.bf16.msra.mxu0 %v8079
    %11539 = vmatprep.subr.bf16.mxu0 0
    %11540 = vmatpush1.bf16.msra.mxu0 %v8080
    %11541 = vmatprep.subr.bf16.mxu0 0
    %11542 = vmatpush1.bf16.msra.mxu0 %v8081
    %11543 = vmatprep.subr.bf16.mxu0 0
    %11544 = vmatpush1.bf16.msra.mxu0 %v8082
    %11545 = vmatprep.mubr.bf16.mxu0 %v2843
    %11546 = vmatmul.mubr.bf16.gmra.mrb[0].mxu0 %v2829
    %v11547 = vpop.f32.mrb[0].mxu0
    %v11548 = vadd.f32 %v11508, %v11547
    %v11549 = vpop.f32.mrb[0].mxu0
    %v11550 = vpop.f32.mrb[0].mxu0
    %v11551 = vpop.f32.mrb[0].mxu0
    %11552 = vdwg.mxu0
    %11553 = vmatprep.subr.bf16.mxu0 0
    %11554 = vmatpush1.bf16.msra.mxu0 %v8083
    %11555 = vmatprep.subr.bf16.mxu0 0
    %11556 = vmatpush1.bf16.msra.mxu0 %v8084
    %11557 = vmatprep.subr.bf16.mxu0 0
    %11558 = vmatpush1.bf16.msra.mxu0 %v8085
    %11559 = vmatprep.subr.bf16.mxu0 0
    %11560 = vmatpush1.bf16.msra.mxu0 %v8086
    %11561 = vmatprep.subr.bf16.mxu0 0
    %11562 = vmatpush1.bf16.msra.mxu0 %v8087
    %11563 = vmatprep.subr.bf16.mxu0 0
    %11564 = vmatpush1.bf16.msra.mxu0 %v8088
    %11565 = vmatprep.subr.bf16.mxu0 0
    %11566 = vmatpush1.bf16.msra.mxu0 %v8089
    %11567 = vmatprep.subr.bf16.mxu0 0
    %11568 = vmatpush1.bf16.msra.mxu0 %v8090
    %11569 = vmatprep.subr.bf16.mxu0 0
    %11570 = vmatpush1.bf16.msra.mxu0 %v8091
    %11571 = vmatprep.subr.bf16.mxu0 0
    %11572 = vmatpush1.bf16.msra.mxu0 %v8092
    %11573 = vmatprep.subr.bf16.mxu0 0
    %11574 = vmatpush1.bf16.msra.mxu0 %v8093
    %11575 = vmatprep.subr.bf16.mxu0 0
    %11576 = vmatpush1.bf16.msra.mxu0 %v8094
    %11577 = vmatprep.subr.bf16.mxu0 0
    %11578 = vmatpush1.bf16.msra.mxu0 %v8095
    %11579 = vmatprep.subr.bf16.mxu0 0
    %11580 = vmatpush1.bf16.msra.mxu0 %v8096
    %11581 = vmatprep.subr.bf16.mxu0 0
    %11582 = vmatpush1.bf16.msra.mxu0 %v8097
    %11583 = vmatprep.subr.bf16.mxu0 0
    %11584 = vmatpush1.bf16.msra.mxu0 %v8098
    %11585 = vmatprep.mubr.bf16.mxu0 %v2847
    %11586 = vmatmul.mubr.bf16.gmra.mrb[0].mxu0 %v2845
    %v11587 = vpop.f32.mrb[0].mxu0
    %v11588 = vadd.f32 %v11548, %v11587
    %v11589 = vpop.f32.mrb[0].mxu0
    %v11590 = vpop.f32.mrb[0].mxu0
    %v11591 = vpop.f32.mrb[0].mxu0
    %11592 = vdwg.mxu0
    %11593 = vmatprep.subr.bf16.mxu0 0
    %11594 = vmatpush1.bf16.msra.mxu0 %v8099
    %11595 = vmatprep.subr.bf16.mxu0 0
    %11596 = vmatpush1.bf16.msra.mxu0 %v8100
    %11597 = vmatprep.subr.bf16.mxu0 0
    %11598 = vmatpush1.bf16.msra.mxu0 %v8101
    %11599 = vmatprep.subr.bf16.mxu0 0
    %11600 = vmatpush1.bf16.msra.mxu0 %v8102
    %11601 = vmatprep.subr.bf16.mxu0 0
    %11602 = vmatpush1.bf16.msra.mxu0 %v8103
    %11603 = vmatprep.subr.bf16.mxu0 0
    %11604 = vmatpush1.bf16.msra.mxu0 %v8104
    %11605 = vmatprep.subr.bf16.mxu0 0
    %11606 = vmatpush1.bf16.msra.mxu0 %v8105
    %11607 = vmatprep.subr.bf16.mxu0 0
    %11608 = vmatpush1.bf16.msra.mxu0 %v8106
    %11609 = vmatprep.subr.bf16.mxu0 0
    %11610 = vmatpush1.bf16.msra.mxu0 %v8107
    %11611 = vmatprep.subr.bf16.mxu0 0
    %11612 = vmatpush1.bf16.msra.mxu0 %v8108
    %11613 = vmatprep.subr.bf16.mxu0 0
    %11614 = vmatpush1.bf16.msra.mxu0 %v8109
    %11615 = vmatprep.subr.bf16.mxu0 0
    %11616 = vmatpush1.bf16.msra.mxu0 %v8110
    %11617 = vmatprep.subr.bf16.mxu0 0
    %11618 = vmatpush1.bf16.msra.mxu0 %v8111
    %11619 = vmatprep.subr.bf16.mxu0 0
    %11620 = vmatpush1.bf16.msra.mxu0 %v8112
    %11621 = vmatprep.subr.bf16.mxu0 0
    %11622 = vmatpush1.bf16.msra.mxu0 %v8113
    %11623 = vmatprep.subr.bf16.mxu0 0
    %11624 = vmatpush1.bf16.msra.mxu0 %v8114
    %11625 = vmatprep.mubr.bf16.mxu0 %v2885
    %11626 = vmatmul.mubr.bf16.gmra.mrb[0].mxu0 %v2871
    %v11627 = vpop.f32.mrb[0].mxu0
    %v11628 = vadd.f32 %v11588, %v11627
    %v11629 = vpop.f32.mrb[0].mxu0
    %v11630 = vpop.f32.mrb[0].mxu0
    %v11631 = vpop.f32.mrb[0].mxu0
    %11632 = vdwg.mxu0
    %11633 = vmatprep.subr.bf16.mxu0 0
    %11634 = vmatpush1.bf16.msra.mxu0 %v8115
    %11635 = vmatprep.subr.bf16.mxu0 0
    %11636 = vmatpush1.bf16.msra.mxu0 %v8116
    %11637 = vmatprep.subr.bf16.mxu0 0
    %11638 = vmatpush1.bf16.msra.mxu0 %v8117
    %11639 = vmatprep.subr.bf16.mxu0 0
    %11640 = vmatpush1.bf16.msra.mxu0 %v8118
    %11641 = vmatprep.subr.bf16.mxu0 0
    %11642 = vmatpush1.bf16.msra.mxu0 %v8119
    %11643 = vmatprep.subr.bf16.mxu0 0
    %11644 = vmatpush1.bf16.msra.mxu0 %v8120
    %11645 = vmatprep.subr.bf16.mxu0 0
    %11646 = vmatpush1.bf16.msra.mxu0 %v8121
    %11647 = vmatprep.subr.bf16.mxu0 0
    %11648 = vmatpush1.bf16.msra.mxu0 %v8122
    %11649 = vmatprep.subr.bf16.mxu0 0
    %11650 = vmatpush1.bf16.msra.mxu0 %v8123
    %11651 = vmatprep.subr.bf16.mxu0 0
    %11652 = vmatpush1.bf16.msra.mxu0 %v8124
    %11653 = vmatprep.subr.bf16.mxu0 0
    %11654 = vmatpush1.bf16.msra.mxu0 %v8125
    %11655 = vmatprep.subr.bf16.mxu0 0
    %11656 = vmatpush1.bf16.msra.mxu0 %v8126
    %11657 = vmatprep.subr.bf16.mxu0 0
    %11658 = vmatpush1.bf16.msra.mxu0 %v8127
    %11659 = vmatprep.subr.bf16.mxu0 0
    %11660 = vmatpush1.bf16.msra.mxu0 %v8128
    %11661 = vmatprep.subr.bf16.mxu0 0
    %11662 = vmatpush1.bf16.msra.mxu0 %v8129
    %11663 = vmatprep.subr.bf16.mxu0 0
    %11664 = vmatpush1.bf16.msra.mxu0 %v8130
    %11665 = vmatprep.mubr.bf16.mxu0 %v2895
    %11666 = vmatmul.mubr.bf16.gmra.mrb[0].mxu0 %v2893
    %v11667 = vpop.f32.mrb[0].mxu0
    %v11668 = vadd.f32 %v11628, %v11667
    %v11669 = vpop.f32.mrb[0].mxu0
    %v11670 = vpop.f32.mrb[0].mxu0
    %v11671 = vpop.f32.mrb[0].mxu0
    %11672 = vdwg.mxu0
    %11673 = vmatprep.subr.bf16.mxu0 0
    %11674 = vmatpush1.bf16.msra.mxu0 %v8131
    %11675 = vmatprep.subr.bf16.mxu0 0
    %11676 = vmatpush1.bf16.msra.mxu0 %v8132
    %11677 = vmatprep.subr.bf16.mxu0 0
    %11678 = vmatpush1.bf16.msra.mxu0 %v8133
    %11679 = vmatprep.subr.bf16.mxu0 0
    %11680 = vmatpush1.bf16.msra.mxu0 %v8134
    %11681 = vmatprep.subr.bf16.mxu0 0
    %11682 = vmatpush1.bf16.msra.mxu0 %v8135
    %11683 = vmatprep.subr.bf16.mxu0 0
    %11684 = vmatpush1.bf16.msra.mxu0 %v8136
    %11685 = vmatprep.subr.bf16.mxu0 0
    %11686 = vmatpush1.bf16.msra.mxu0 %v8137
    %11687 = vmatprep.subr.bf16.mxu0 0
    %11688 = vmatpush1.bf16.msra.mxu0 %v8138
    %11689 = vmatprep.subr.bf16.mxu0 0
    %11690 = vmatpush1.bf16.msra.mxu0 %v8139
    %11691 = vmatprep.subr.bf16.mxu0 0
    %11692 = vmatpush1.bf16.msra.mxu0 %v8140
    %11693 = vmatprep.subr.bf16.mxu0 0
    %11694 = vmatpush1.bf16.msra.mxu0 %v8141
    %11695 = vmatprep.subr.bf16.mxu0 0
    %11696 = vmatpush1.bf16.msra.mxu0 %v8142
    %11697 = vmatprep.subr.bf16.mxu0 0
    %11698 = vmatpush1.bf16.msra.mxu0 %v8143
    %11699 = vmatprep.subr.bf16.mxu0 0
    %11700 = vmatpush1.bf16.msra.mxu0 %v8144
    %11701 = vmatprep.subr.bf16.mxu0 0
    %11702 = vmatpush1.bf16.msra.mxu0 %v8145
    %11703 = vmatprep.subr.bf16.mxu0 0
    %11704 = vmatpush1.bf16.msra.mxu0 %v8146
    %11705 = vmatprep.mubr.bf16.mxu0 %v2892
    %11706 = vmatmul.mubr.bf16.gmra.mrb[0].mxu0 %v2878
    %v11707 = vpop.f32.mrb[0].mxu0
    %v11708 = vadd.f32 %v11668, %v11707
    %v11709 = vpop.f32.mrb[0].mxu0
    %v11710 = vpop.f32.mrb[0].mxu0
    %v11711 = vpop.f32.mrb[0].mxu0
    %11712 = vdwg.mxu0
    %11713 = vmatprep.subr.bf16.mxu0 0
    %11714 = vmatpush1.bf16.msra.mxu0 %v8147
    %11715 = vmatprep.subr.bf16.mxu0 0
    %11716 = vmatpush1.bf16.msra.mxu0 %v8148
    %11717 = vmatprep.subr.bf16.mxu0 0
    %11718 = vmatpush1.bf16.msra.mxu0 %v8149
    %11719 = vmatprep.subr.bf16.mxu0 0
    %11720 = vmatpush1.bf16.msra.mxu0 %v8150
    %11721 = vmatprep.subr.bf16.mxu0 0
    %11722 = vmatpush1.bf16.msra.mxu0 %v8151
    %11723 = vmatprep.subr.bf16.mxu0 0
    %11724 = vmatpush1.bf16.msra.mxu0 %v8152
    %11725 = vmatprep.subr.bf16.mxu0 0
    %11726 = vmatpush1.bf16.msra.mxu0 %v8153
    %11727 = vmatprep.subr.bf16.mxu0 0
    %11728 = vmatpush1.bf16.msra.mxu0 %v8154
    %11729 = vmatprep.subr.bf16.mxu0 0
    %11730 = vmatpush1.bf16.msra.mxu0 %v8155
    %11731 = vmatprep.subr.bf16.mxu0 0
    %11732 = vmatpush1.bf16.msra.mxu0 %v8156
    %11733 = vmatprep.subr.bf16.mxu0 0
    %11734 = vmatpush1.bf16.msra.mxu0 %v8157
    %11735 = vmatprep.subr.bf16.mxu0 0
    %11736 = vmatpush1.bf16.msra.mxu0 %v8158
    %11737 = vmatprep.subr.bf16.mxu0 0
    %11738 = vmatpush1.bf16.msra.mxu0 %v8159
    %11739 = vmatprep.subr.bf16.mxu0 0
    %11740 = vmatpush1.bf16.msra.mxu0 %v8160
    %11741 = vmatprep.subr.bf16.mxu0 0
    %11742 = vmatpush1.bf16.msra.mxu0 %v8161
    %11743 = vmatprep.subr.bf16.mxu0 0
    %11744 = vmatpush1.bf16.msra.mxu0 %v8162
    %11745 = vmatprep.mubr.bf16.mxu0 %v2896
    %11746 = vmatmul.mubr.bf16.gmra.mrb[0].mxu0 %v2894
    %v11747 = vpop.f32.mrb[0].mxu0
    %v11748 = vadd.f32 %v11708, %v11747
    %v11749 = vpop.f32.mrb[0].mxu0
    %v11750 = vpop.f32.mrb[0].mxu0
    %v11751 = vpop.f32.mrb[0].mxu0
    %11752 = vdwg.mxu0
    %11753 = vmatprep.subr.bf16.mxu0 0
    %11754 = vmatpush1.bf16.msra.mxu0 %v8163
    %11755 = vmatprep.subr.bf16.mxu0 0
    %11756 = vmatpush1.bf16.msra.mxu0 0
    %11757 = vmatprep.subr.bf16.mxu0 0
    %11758 = vmatpush1.bf16.msra.mxu0 0
    %11759 = vmatprep.subr.bf16.mxu0 0
    %11760 = vmatpush1.bf16.msra.mxu0 0
    %11761 = vmatprep.subr.bf16.mxu0 0
    %11762 = vmatpush1.bf16.msra.mxu0 0
    %11763 = vmatprep.subr.bf16.mxu0 0
    %11764 = vmatpush1.bf16.msra.mxu0 0
    %11765 = vmatprep.subr.bf16.mxu0 0
    %11766 = vmatpush1.bf16.msra.mxu0 0
    %11767 = vmatprep.subr.bf16.mxu0 0
    %11768 = vmatpush1.bf16.msra.mxu0 0
    %11769 = vmatprep.subr.bf16.mxu0 0
    %11770 = vmatpush1.bf16.msra.mxu0 0
    %11771 = vmatprep.subr.bf16.mxu0 0
    %11772 = vmatpush1.bf16.msra.mxu0 0
    %11773 = vmatprep.subr.bf16.mxu0 0
    %11774 = vmatpush1.bf16.msra.mxu0 0
    %11775 = vmatprep.subr.bf16.mxu0 0
    %11776 = vmatpush1.bf16.msra.mxu0 0
    %11777 = vmatprep.subr.bf16.mxu0 0
    %11778 = vmatpush1.bf16.msra.mxu0 0
    %11779 = vmatprep.subr.bf16.mxu0 0
    %11780 = vmatpush1.bf16.msra.mxu0 0
    %11781 = vmatprep.subr.bf16.mxu0 0
    %11782 = vmatpush1.bf16.msra.mxu0 0
    %11783 = vmatprep.subr.bf16.mxu0 0
    %11784 = vmatpush1.bf16.msra.mxu0 0
    %11785 = vmatprep.mubr.bf16.mxu0 0
    %11786 = vmatmul.mubr.bf16.gmra.mrb[0].mxu0 %v9191
    %v11787 = vpop.f32.mrb[0].mxu0
    %v11788 = vadd.f32 %v11748, %v11787
    %v11789 = vpop.f32.mrb[0].mxu0
    %v11790 = vpop.f32.mrb[0].mxu0
    %v11791 = vpop.f32.mrb[0].mxu0
    %11792 = vdwg.mxu0
    %v11793 = vmax.f32 %v11788, 0.0
    %v11794 = vld [vmem:[%s3] sm:$0xff]
    %v11795 = vld [vmem:[%s3 + $0x8] sm:$0xff]
    %v11796 = vld [vmem:[%s3 + $0x10] sm:$0xff]
    %v11797 = vld [vmem:[%s3 + $0x18] sm:$0xff]
    %v11798 = vld [vmem:[%s3 + $0x20] sm:$0xff]
    %v11799 = vld [vmem:[%s3 + $0x28] sm:$0xff]
    %v11800 = vld [vmem:[%s3 + $0x30] sm:$0xff]
    %v11801 = vld [vmem:[%s3 + $0x38] sm:$0xff]
    %v11802 = vld [vmem:[%s3 + $0x40] sm:$0xff]
    %v11803 = vld [vmem:[%s3 + $0x48] sm:$0xff]
    %v11804 = vld [vmem:[%s3 + $0x50] sm:$0xff]
    %v11805 = vld [vmem:[%s3 + $0x58] sm:$0xff]
    %v11806 = vld [vmem:[%s3 + $0x60] sm:$0xff]
    %v11807 = vld [vmem:[%s3 + $0x68] sm:$0xff]
    %v11808 = vld [vmem:[%s3 + $0x70] sm:$0xff]
    %v11809 = vld [vmem:[%s3 + $0x78] sm:$0xff]
    %v11810 = vld [vmem:[%s4] sm:$0x1]
    %v11812 = vlaneseq
    %v11813 = vshrl.u32 %v11812, 7
    %v11814 = vsub.s32 0, %v11813
    %v11815 = vrot.slane %v11810, %v11814
    %11817 = vmatprep.subr.mxu0 0.0
    %11818 = vmatpush1.msra.mxu0 %v11794
    %11819 = vmatprep.subr.mxu0 0.0
    %11820 = vmatpush1.msra.mxu0 %v11795
    %11821 = vmatprep.subr.mxu0 0.0
    %11822 = vmatpush1.msra.mxu0 %v11796
    %11823 = vmatprep.subr.mxu0 0.0
    %11824 = vmatpush1.msra.mxu0 %v11797
    %11825 = vmatprep.subr.mxu0 0.0
    %11826 = vmatpush1.msra.mxu0 %v11798
    %11827 = vmatprep.subr.mxu0 0.0
    %11828 = vmatpush1.msra.mxu0 %v11799
    %11829 = vmatprep.subr.mxu0 0.0
    %11830 = vmatpush1.msra.mxu0 %v11800
    %11831 = vmatprep.subr.mxu0 0.0
    %11832 = vmatpush1.msra.mxu0 %v11801
    %11833 = vmatprep.subr.mxu0 0.0
    %11834 = vmatpush1.msra.mxu0 %v11802
    %11835 = vmatprep.subr.mxu0 0.0
    %11836 = vmatpush1.msra.mxu0 %v11803
    %11837 = vmatprep.subr.mxu0 0.0
    %11838 = vmatpush1.msra.mxu0 %v11804
    %11839 = vmatprep.subr.mxu0 0.0
    %11840 = vmatpush1.msra.mxu0 %v11805
    %11841 = vmatprep.subr.mxu0 0.0
    %11842 = vmatpush1.msra.mxu0 %v11806
    %11843 = vmatprep.subr.mxu0 0.0
    %11844 = vmatpush1.msra.mxu0 %v11807
    %11845 = vmatprep.subr.mxu0 0.0
    %11846 = vmatpush1.msra.mxu0 %v11808
    %11847 = vmatprep.subr.mxu0 0.0
    %11848 = vmatpush1.msra.mxu0 %v11809
    %11849 = vmatprep.subr.mxu0 0.0
    %11850 = vmatpush1.msra.mxu0 0.0
    %11851 = vmatprep.subr.mxu0 0.0
    %11852 = vmatpush1.msra.mxu0 0.0
    %11853 = vmatprep.subr.mxu0 0.0
    %11854 = vmatpush1.msra.mxu0 0.0
    %11855 = vmatprep.subr.mxu0 0.0
    %11856 = vmatpush1.msra.mxu0 0.0
    %11857 = vmatprep.subr.mxu0 0.0
    %11858 = vmatpush1.msra.mxu0 0.0
    %11859 = vmatprep.subr.mxu0 0.0
    %11860 = vmatpush1.msra.mxu0 0.0
    %11861 = vmatprep.subr.mxu0 0.0
    %11862 = vmatpush1.msra.mxu0 0.0
    %11863 = vmatprep.subr.mxu0 0.0
    %11864 = vmatpush1.msra.mxu0 0.0
    %11865 = vmatprep.subr.mxu0 0.0
    %11866 = vmatpush1.msra.mxu0 0.0
    %11867 = vmatprep.subr.mxu0 0.0
    %11868 = vmatpush1.msra.mxu0 0.0
    %11869 = vmatprep.subr.mxu0 0.0
    %11870 = vmatpush1.msra.mxu0 0.0
    %11871 = vmatprep.subr.mxu0 0.0
    %11872 = vmatpush1.msra.mxu0 0.0
    %11873 = vmatprep.subr.mxu0 0.0
    %11874 = vmatpush1.msra.mxu0 0.0
    %11875 = vmatprep.subr.mxu0 0.0
    %11876 = vmatpush1.msra.mxu0 0.0
    %11877 = vmatprep.subr.mxu0 0.0
    %11878 = vmatpush1.msra.mxu0 0.0
    %11879 = vmatprep.subr.mxu0 0.0
    %11880 = vmatpush1.msra.mxu0 0.0
    %11881 = vmatprep.mubr.f32.mxu0 0.0
    %11882 = vmatmul.mubr.f32.gmra.mrb[0].mxu0 %v11793
    %v11883 = vpop.f32.mrb[0].mxu0
    %v11884 = vadd.f32 %v11815, %v11883
    %v11885 = vpop.f32.mrb[0].mxu0
    %11886 = vdwg.mxu0
    %vm11887 = vcmp.gt.f32.partialorder %v11884, 20.0
    %v11888 = vmin.f32 %v11884, 20.0
    %v11889 = vmul.f32 %v11888, 1.442695
    %v11890 = vpow.pop %v11889
    %v11891 = vadd.f32 %v11890, 1.0
    %v11892 = vlog2.pop %v11891
    %v11893 = vmul.f32 %v11892, 0.6931472
    %v11894 = vmul.f32 -0.5, %v11890
    %v11895 = vadd.f32 %v11894, 1.0
    %v11896 = vmul.f32 %v11895, %v11890
    %v11897 = vand.u32 2147483647, %v11890
    %vm11898 = vcmp.lt.f32.partialorder %v11897, 0.0004427343
    %v11899 = vsel %vm11898, %v11896, %v11893
    %v11900 = vsel %vm11887, %v11884, %v11899
    %vm11901 = vcmask 58368
    %11902 = vst.msk [vmem:[#allocation2] sm:$0x3] %vm11901, %v11900
    // Predicated region
    $region22: #{dummy_model_forward.3} parent=1 // pred_check
      _
    $region23: #{dummy_model_forward.3} parent=1 // pred_check_branch
      %11904 = sbr.rel (0) target = $region25
    $region24: #{dummy_model_forward.3} parent=1 // pred_region
      %s11906 = ssub.s32 32, 32
      %11907 = vsyncadd [#allocation3], %s11906
      %s11909 = sshll.u32 [#allocation2], 4
      %s11910 = int_to_ptr.vmem [resolvable:$true] %s11909
      %11912 = dma.vmem_to_hbm [thread:$0]  %s11910, 32, %s5, [#allocation3]
    $region25: #{dummy_model_forward.3} parent=1 // pred_fallthru
      _
    // Predicated region
    $region26: #{dummy_model_forward.3} parent=1 // pred_check
      _
    $region27: #{dummy_model_forward.3} parent=1 // pred_check_branch
      %11914 = sbr.rel (0) target = $region29
    $region28: #{dummy_model_forward.3} parent=1 // pred_region
      %11915 = dma.done [#allocation3], 32
    $region29: #{dummy_model_forward.3} parent=1 // pred_fallthru
      _
    %11916 = vsyncpa [#allocation3], 1

</llo_original>
